<compile_context>
chip_gen: v7x
topology: tpu7x:2x2x1
jax: 0.10.0
libtpu: 0.0.40
codegen_flags: <defaults>
</compile_context>

<pallas_src>
import math

import jax
import jax.numpy as jnp
from jax.experimental import pallas as pl
from jax.experimental.pallas import tpu as pltpu

IN_DIM = 2048
HID = 512
NUM_CLASSES = 21
CLS_PAD = 128  # pad the 21-way classifier output to a lane-dense 128 columns


def _cdiv(a, b):
    return -(-a // b)


def _round_up(x, m):
    return (x + m - 1) // m * m


def _classifier_kernel(obj_ref, sub_ref, uni_ref,
                       w_obj_ref, b_obj_ref,
                       w_sub_ref, b_sub_ref,
                       w_uni_ref, b_uni_ref,
                       w_cls_ref, b_cls_ref,
                       out_ref):
    # One [bt, 2048] batch tile per grid step; all weights VMEM-resident
    # (single-buffered, fetched once).
    def branch(x_ref, w_ref, b_ref):
        # In-kernel f32 -> bf16 cast of the activation tile (no-op if the
        # caller already provides bf16); bf16 x bf16 -> f32 MXU accumulate,
        # bias add + ReLU in f32, bf16 operand out for the classifier matmul.
        x = x_ref[...].astype(jnp.bfloat16)
        h = jnp.dot(x, w_ref[...], preferred_element_type=jnp.float32)
        h = jnp.maximum(h + b_ref[...], 0.0)
        return h.astype(jnp.bfloat16)

    h_obj = branch(obj_ref, w_obj_ref, b_obj_ref)
    h_sub = branch(sub_ref, w_sub_ref, b_sub_ref)
    h_uni = branch(uni_ref, w_uni_ref, b_uni_ref)

    # concat([h_obj, h_sub, h_uni], 1) @ W_cls  ==  sum of three row-block
    # matmuls against W_cls's 512-row slices (avoids a VMEM concat copy).
    logits = (
        jnp.dot(h_obj, w_cls_ref[pl.ds(0 * HID, HID), :],
                preferred_element_type=jnp.float32)
        + jnp.dot(h_sub, w_cls_ref[pl.ds(1 * HID, HID), :],
                  preferred_element_type=jnp.float32)
        + jnp.dot(h_uni, w_cls_ref[pl.ds(2 * HID, HID), :],
                  preferred_element_type=jnp.float32)
        + b_cls_ref[...]
    )
    out_ref[...] = logits  # f32, lane-dense (bt, 128)


def _choose_tile(B, block_b):
    """Near-equal tiles, >= 2 when B allows (v7x megacore), minimal padding."""
    n_tiles = max(_cdiv(B, block_b), 1)
    if n_tiles < 2 and B > 16:
        n_tiles = 2                      # both v7x TensorCores get work
    bt = _round_up(_cdiv(B, n_tiles), 16)  # 16-row multiple (bf16 sublane pack)
    Bp = bt * _cdiv(B, bt)
    return bt, Bp


def classifier_forward(obj, sub, union, params, *, block_b=512):
    """obj/sub/union: [B, 2048] (f32 or bf16).  Returns logits [B, 21] f32."""
    (w_obj, b_obj, w_sub, b_sub, w_uni, b_uni, w_cls_p, b_cls_p) = params
    B = obj.shape[0]

    bt, Bp = _choose_tile(B, block_b)

    def prep(x):
        # No dtype cast here: the kernel casts on the VPU, so activations are
        # read from HBM exactly once in their native dtype.
        if Bp != B:
            x = jnp.pad(x, ((0, Bp - B), (0, 0)))
        return x

    obj_p, sub_p, uni_p = prep(obj), prep(sub), prep(union)

    act_spec = pl.BlockSpec((bt, IN_DIM), lambda i: (i, 0))

    def resident(shape):
        # Grid-invariant block: single-buffer it (no point double-buffering a
        # block whose index_map never changes).
        return pl.BlockSpec(shape, lambda i: (0, 0),
                            pipeline_mode=pl.Buffered(1))

    w_spec = resident((IN_DIM, HID))
    b_spec = resident((1, HID))
    wcls_spec = resident((3 * HID, CLS_PAD))
    bcls_spec = resident((1, CLS_PAD))
    out_spec = pl.BlockSpec((bt, CLS_PAD), lambda i: (i, 0))

    out_padded = pl.pallas_call(
        _classifier_kernel,
        out_shape=jax.ShapeDtypeStruct((Bp, CLS_PAD), jnp.float32),
        grid=(Bp // bt,),
        in_specs=[act_spec, act_spec, act_spec,
                  w_spec, b_spec,
                  w_spec, b_spec,
                  w_spec, b_spec,
                  wcls_spec, bcls_spec],
        out_specs=out_spec,
        compiler_params=pltpu.CompilerParams(
            dimension_semantics=("parallel",),
            # ~6.4 MiB single-buffered weights + 2x double-buffered f32
            # activation tiles (24 MiB at bt=512) + output/scratch, with
            # headroom; stays under v7x's 64 MiB per-TC VMEM.
            vmem_limit_bytes=48 << 20,
        ),
    )(obj_p, sub_p, uni_p,
      w_obj, b_obj, w_sub, b_sub, w_uni, b_uni, w_cls_p, b_cls_p)

    return out_padded[:B, :NUM_CLASSES]


def _xavier_uniform(key, fan_in, fan_out):
    # matches nn.init.xavier_uniform_ (gain=1); stored as [in, out]
    bound = math.sqrt(6.0 / (fan_in + fan_out))
    return jax.random.uniform(key, (fan_in, fan_out), jnp.float32, -bound, bound)


def init_params(key):
    """Kernel-ready params: bf16 weights, f32 biases, classifier padded 21->128."""
    k1, k2, k3, k4 = jax.random.split(key, 4)
    w_obj = _xavier_uniform(k1, IN_DIM, HID).astype(jnp.bfloat16)
    w_sub = _xavier_uniform(k2, IN_DIM, HID).astype(jnp.bfloat16)
    w_uni = _xavier_uniform(k3, IN_DIM, HID).astype(jnp.bfloat16)
    w_cls = _xavier_uniform(k4, 3 * HID, NUM_CLASSES)

    b_obj = jnp.full((1, HID), 0.1, jnp.float32)
    b_sub = jnp.full((1, HID), 0.1, jnp.float32)
    b_uni = jnp.full((1, HID), 0.1, jnp.float32)

    # Pad classifier weight/bias once at init (zero columns -> zero logits,
    # sliced off in the wrapper), so no per-call padding op.
    w_cls_p = (jnp.zeros((3 * HID, CLS_PAD), jnp.float32)
               .at[:, :NUM_CLASSES].set(w_cls).astype(jnp.bfloat16))
    b_cls_p = (jnp.zeros((1, CLS_PAD), jnp.float32)
               .at[:, :NUM_CLASSES].set(0.1))

    return (w_obj, b_obj, w_sub, b_sub, w_uni, b_uni, w_cls_p, b_cls_p)


_HP = jax.lax.Precision.HIGHEST


def _reference_bf16(obj, sub, union, params):
    """Pure-JAX reference with the same bf16 operand rounding as the kernel."""
    (w_obj, b_obj, w_sub, b_sub, w_uni, b_uni, w_cls_p, b_cls_p) = params
    f32 = lambda x: x.astype(jnp.float32)
    bf = lambda x: x.astype(jnp.bfloat16).astype(jnp.float32)

    o, s, u = bf(obj), bf(sub), bf(union)
    h_o = jax.nn.relu(jnp.dot(o, f32(w_obj), precision=_HP) + b_obj)
    h_s = jax.nn.relu(jnp.dot(s, f32(w_sub), precision=_HP) + b_sub)
    h_u = jax.nn.relu(jnp.dot(u, f32(w_uni), precision=_HP) + b_uni)
    feat = bf(jnp.concatenate([h_o, h_s, h_u], axis=1))
    logits = jnp.dot(feat, f32(w_cls_p), precision=_HP) + b_cls_p
    return logits[:, :NUM_CLASSES]


def _reference_f32(obj, sub, union, params):
    """All-f32 reference (true PyTorch-style math on the bf16-stored weights)."""
    (w_obj, b_obj, w_sub, b_sub, w_uni, b_uni, w_cls_p, b_cls_p) = params
    f32 = lambda x: x.astype(jnp.float32)
    h_o = jax.nn.relu(jnp.dot(f32(obj), f32(w_obj), precision=_HP) + b_obj)
    h_s = jax.nn.relu(jnp.dot(f32(sub), f32(w_sub), precision=_HP) + b_sub)
    h_u = jax.nn.relu(jnp.dot(f32(union), f32(w_uni), precision=_HP) + b_uni)
    feat = jnp.concatenate([h_o, h_s, h_u], axis=1)
    logits = jnp.dot(feat, f32(w_cls_p), precision=_HP) + b_cls_p
    return logits[:, :NUM_CLASSES]


if __name__ == "__main__":
    key = jax.random.PRNGKey(0)
    kp, ko, ks, ku = jax.random.split(key, 4)

    params = init_params(kp)

    # Case 1: tiny batch (single tile, padded 8 -> 16 rows).
    B = 8
    obj = jax.random.normal(ko, (B, IN_DIM), jnp.float32)
    sub = jax.random.normal(ks, (B, IN_DIM), jnp.float32)
    union = jax.random.normal(ku, (B, IN_DIM), jnp.float32)

    logits = classifier_forward(obj, sub, union, params)
    jax.block_until_ready(logits)
    assert logits.shape == (B, NUM_CLASSES), logits.shape
    ref_bf = _reference_bf16(obj, sub, union, params)
    assert jnp.allclose(logits, ref_bf, atol=2e-3, rtol=2e-3), "mismatch vs bf16 reference"
    ref_f32 = _reference_f32(obj, sub, union, params)
    assert jnp.allclose(logits, ref_f32, atol=0.3, rtol=0.05), "mismatch vs f32 reference"

    # Case 2: ragged batch exercising the multi-tile (grid >= 2) path.
    B2 = 40
    ko2, ks2, ku2 = jax.random.split(jax.random.PRNGKey(1), 3)
    obj2 = jax.random.normal(ko2, (B2, IN_DIM), jnp.float32)
    sub2 = jax.random.normal(ks2, (B2, IN_DIM), jnp.float32)
    union2 = jax.random.normal(ku2, (B2, IN_DIM), jnp.float32)

    logits2 = classifier_forward(obj2, sub2, union2, params)
    jax.block_until_ready(logits2)
    assert logits2.shape == (B2, NUM_CLASSES), logits2.shape
    ref2 = _reference_bf16(obj2, sub2, union2, params)
    assert jnp.allclose(logits2, ref2, atol=2e-3, rtol=2e-3), "mismatch vs bf16 reference (B=40)"

    print("KERNEL_OK")
</pallas_src>

<mosaic_0001>
module attributes {stable_mosaic.version = 11 : i64} {
  func.func @_classifier_kernel(%arg0: i32, %arg1: memref<16x2048xf32, #tpu.memory_space<vmem>>, %arg2: memref<16x2048xf32, #tpu.memory_space<vmem>>, %arg3: memref<16x2048xf32, #tpu.memory_space<vmem>>, %arg4: memref<2048x512xbf16, #tpu.memory_space<vmem>>, %arg5: memref<1x512xf32, #tpu.memory_space<vmem>>, %arg6: memref<2048x512xbf16, #tpu.memory_space<vmem>>, %arg7: memref<1x512xf32, #tpu.memory_space<vmem>>, %arg8: memref<2048x512xbf16, #tpu.memory_space<vmem>>, %arg9: memref<1x512xf32, #tpu.memory_space<vmem>>, %arg10: memref<1536x128xbf16, #tpu.memory_space<vmem>>, %arg11: memref<1x128xf32, #tpu.memory_space<vmem>>, %arg12: memref<16x128xf32, #tpu.memory_space<vmem>>) attributes {dimension_semantics = [#tpu.dimension_semantics<parallel>], iteration_bounds = array<i64: 1>, scalar_prefetch = 0 : i64, scratch_operands = 0 : i64, tpu.core_type = #tpu.core_type<tc>, window_params = [{transform_indices = @transform_0, window_bounds = array<i64: 16, 2048>}, {transform_indices = @transform_1, window_bounds = array<i64: 16, 2048>}, {transform_indices = @transform_2, window_bounds = array<i64: 16, 2048>}, {pipeline_mode = #tpu.pipeline_mode<synchronous>, transform_indices = @transform_3, window_bounds = array<i64: 2048, 512>}, {pipeline_mode = #tpu.pipeline_mode<synchronous>, transform_indices = @transform_4, window_bounds = array<i64: 1, 512>}, {pipeline_mode = #tpu.pipeline_mode<synchronous>, transform_indices = @transform_5, window_bounds = array<i64: 2048, 512>}, {pipeline_mode = #tpu.pipeline_mode<synchronous>, transform_indices = @transform_6, window_bounds = array<i64: 1, 512>}, {pipeline_mode = #tpu.pipeline_mode<synchronous>, transform_indices = @transform_7, window_bounds = array<i64: 2048, 512>}, {pipeline_mode = #tpu.pipeline_mode<synchronous>, transform_indices = @transform_8, window_bounds = array<i64: 1, 512>}, {pipeline_mode = #tpu.pipeline_mode<synchronous>, transform_indices = @transform_9, window_bounds = array<i64: 1536, 128>}, {pipeline_mode = #tpu.pipeline_mode<synchronous>, transform_indices = @transform_10, window_bounds = array<i64: 1, 128>}, {transform_indices = @transform_11, window_bounds = array<i64: 16, 128>}]} {
    %c0 = arith.constant 0 : index
    %c0_0 = arith.constant 0 : index
    %0 = vector.load %arg1[%c0, %c0_0] : memref<16x2048xf32, #tpu.memory_space<vmem>>, vector<16x2048xf32>
    %1 = arith.truncf %0 : vector<16x2048xf32> to vector<16x2048xbf16>
    %c0_1 = arith.constant 0 : index
    %c0_2 = arith.constant 0 : index
    %2 = vector.load %arg4[%c0_1, %c0_2] : memref<2048x512xbf16, #tpu.memory_space<vmem>>, vector<2048x512xbf16>
    %cst = arith.constant dense<0.000000e+00> : vector<16x512xf32>
    %3 = tpu.matmul %1, %2, %cst {dimension_numbers = #tpu.dot_dimension_numbers<[1], [0], [0], [1], [0, 0, 1, 1], [], []>} : vector<16x2048xbf16>, vector<2048x512xbf16>, vector<16x512xf32> -> vector<16x512xf32>
    %c0_3 = arith.constant 0 : index
    %c0_4 = arith.constant 0 : index
    %4 = vector.load %arg5[%c0_3, %c0_4] : memref<1x512xf32, #tpu.memory_space<vmem>>, vector<1x512xf32>
    %5 = vector.broadcast %4 : vector<1x512xf32> to vector<16x512xf32>
    %6 = arith.addf %3, %5 : vector<16x512xf32>
    %cst_5 = arith.constant 0.000000e+00 : f32
    %7 = vector.broadcast %cst_5 : f32 to vector<16x512xf32>
    %8 = arith.maximumf %6, %7 : vector<16x512xf32>
    %9 = arith.truncf %8 : vector<16x512xf32> to vector<16x512xbf16>
    %c0_6 = arith.constant 0 : index
    %c0_7 = arith.constant 0 : index
    %10 = vector.load %arg2[%c0_6, %c0_7] : memref<16x2048xf32, #tpu.memory_space<vmem>>, vector<16x2048xf32>
    %11 = arith.truncf %10 : vector<16x2048xf32> to vector<16x2048xbf16>
    %c0_8 = arith.constant 0 : index
    %c0_9 = arith.constant 0 : index
    %12 = vector.load %arg6[%c0_8, %c0_9] : memref<2048x512xbf16, #tpu.memory_space<vmem>>, vector<2048x512xbf16>
    %cst_10 = arith.constant dense<0.000000e+00> : vector<16x512xf32>
    %13 = tpu.matmul %11, %12, %cst_10 {dimension_numbers = #tpu.dot_dimension_numbers<[1], [0], [0], [1], [0, 0, 1, 1], [], []>} : vector<16x2048xbf16>, vector<2048x512xbf16>, vector<16x512xf32> -> vector<16x512xf32>
    %c0_11 = arith.constant 0 : index
    %c0_12 = arith.constant 0 : index
    %14 = vector.load %arg7[%c0_11, %c0_12] : memref<1x512xf32, #tpu.memory_space<vmem>>, vector<1x512xf32>
    %15 = vector.broadcast %14 : vector<1x512xf32> to vector<16x512xf32>
    %16 = arith.addf %13, %15 : vector<16x512xf32>
    %cst_13 = arith.constant 0.000000e+00 : f32
    %17 = vector.broadcast %cst_13 : f32 to vector<16x512xf32>
    %18 = arith.maximumf %16, %17 : vector<16x512xf32>
    %19 = arith.truncf %18 : vector<16x512xf32> to vector<16x512xbf16>
    %c0_14 = arith.constant 0 : index
    %c0_15 = arith.constant 0 : index
    %20 = vector.load %arg3[%c0_14, %c0_15] : memref<16x2048xf32, #tpu.memory_space<vmem>>, vector<16x2048xf32>
    %21 = arith.truncf %20 : vector<16x2048xf32> to vector<16x2048xbf16>
    %c0_16 = arith.constant 0 : index
    %c0_17 = arith.constant 0 : index
    %22 = vector.load %arg8[%c0_16, %c0_17] : memref<2048x512xbf16, #tpu.memory_space<vmem>>, vector<2048x512xbf16>
    %cst_18 = arith.constant dense<0.000000e+00> : vector<16x512xf32>
    %23 = tpu.matmul %21, %22, %cst_18 {dimension_numbers = #tpu.dot_dimension_numbers<[1], [0], [0], [1], [0, 0, 1, 1], [], []>} : vector<16x2048xbf16>, vector<2048x512xbf16>, vector<16x512xf32> -> vector<16x512xf32>
    %c0_19 = arith.constant 0 : index
    %c0_20 = arith.constant 0 : index
    %24 = vector.load %arg9[%c0_19, %c0_20] : memref<1x512xf32, #tpu.memory_space<vmem>>, vector<1x512xf32>
    %25 = vector.broadcast %24 : vector<1x512xf32> to vector<16x512xf32>
    %26 = arith.addf %23, %25 : vector<16x512xf32>
    %cst_21 = arith.constant 0.000000e+00 : f32
    %27 = vector.broadcast %cst_21 : f32 to vector<16x512xf32>
    %28 = arith.maximumf %26, %27 : vector<16x512xf32>
    %29 = arith.truncf %28 : vector<16x512xf32> to vector<16x512xbf16>
    %c0_22 = arith.constant 0 : index
    %c0_23 = arith.constant 0 : index
    %30 = vector.load %arg10[%c0_22, %c0_23] : memref<1536x128xbf16, #tpu.memory_space<vmem>>, vector<512x128xbf16>
    %cst_24 = arith.constant dense<0.000000e+00> : vector<16x128xf32>
    %31 = tpu.matmul %9, %30, %cst_24 {dimension_numbers = #tpu.dot_dimension_numbers<[1], [0], [0], [1], [0, 0, 1, 1], [], []>} : vector<16x512xbf16>, vector<512x128xbf16>, vector<16x128xf32> -> vector<16x128xf32>
    %c512 = arith.constant 512 : index
    %c0_25 = arith.constant 0 : index
    %32 = vector.load %arg10[%c512, %c0_25] : memref<1536x128xbf16, #tpu.memory_space<vmem>>, vector<512x128xbf16>
    %cst_26 = arith.constant dense<0.000000e+00> : vector<16x128xf32>
    %33 = tpu.matmul %19, %32, %cst_26 {dimension_numbers = #tpu.dot_dimension_numbers<[1], [0], [0], [1], [0, 0, 1, 1], [], []>} : vector<16x512xbf16>, vector<512x128xbf16>, vector<16x128xf32> -> vector<16x128xf32>
    %34 = arith.addf %31, %33 : vector<16x128xf32>
    %c1024 = arith.constant 1024 : index
    %c0_27 = arith.constant 0 : index
    %35 = vector.load %arg10[%c1024, %c0_27] : memref<1536x128xbf16, #tpu.memory_space<vmem>>, vector<512x128xbf16>
    %cst_28 = arith.constant dense<0.000000e+00> : vector<16x128xf32>
    %36 = tpu.matmul %29, %35, %cst_28 {dimension_numbers = #tpu.dot_dimension_numbers<[1], [0], [0], [1], [0, 0, 1, 1], [], []>} : vector<16x512xbf16>, vector<512x128xbf16>, vector<16x128xf32> -> vector<16x128xf32>
    %37 = arith.addf %34, %36 : vector<16x128xf32>
    %c0_29 = arith.constant 0 : index
    %c0_30 = arith.constant 0 : index
    %38 = vector.load %arg11[%c0_29, %c0_30] : memref<1x128xf32, #tpu.memory_space<vmem>>, vector<1x128xf32>
    %39 = vector.broadcast %38 : vector<1x128xf32> to vector<16x128xf32>
    %40 = arith.addf %37, %39 : vector<16x128xf32>
    %c0_31 = arith.constant 0 : index
    %c0_32 = arith.constant 0 : index
    %41 = vector.load %arg12[%c0_31, %c0_32] : memref<16x128xf32, #tpu.memory_space<vmem>>, vector<16x128xf32>
    tpu.vector_store %arg12[%c0_31, %c0_32], %40 {strides = array<i32>} : memref<16x128xf32, #tpu.memory_space<vmem>>, vector<16x128xf32>,
    return
  }
  func.func @transform_0(%arg0: i32) -> (i32, i32) {
    %c0_i32 = arith.constant 0 : i32
    %c0_i32_0 = arith.constant 0 : i32
    return %arg0, %c0_i32 : i32, i32
  }
  func.func @transform_1(%arg0: i32) -> (i32, i32) {
    %c0_i32 = arith.constant 0 : i32
    %c0_i32_0 = arith.constant 0 : i32
    return %arg0, %c0_i32 : i32, i32
  }
  func.func @transform_2(%arg0: i32) -> (i32, i32) {
    %c0_i32 = arith.constant 0 : i32
    %c0_i32_0 = arith.constant 0 : i32
    return %arg0, %c0_i32 : i32, i32
  }
  func.func @transform_3(%arg0: i32) -> (i32, i32) {
    %c0_i32 = arith.constant 0 : i32
    %c0_i32_0 = arith.constant 0 : i32
    %c0_i32_1 = arith.constant 0 : i32
    return %c0_i32, %c0_i32_0 : i32, i32
  }
  func.func @transform_4(%arg0: i32) -> (i32, i32) {
    %c0_i32 = arith.constant 0 : i32
    %c0_i32_0 = arith.constant 0 : i32
    %c0_i32_1 = arith.constant 0 : i32
    return %c0_i32, %c0_i32_0 : i32, i32
  }
  func.func @transform_5(%arg0: i32) -> (i32, i32) {
    %c0_i32 = arith.constant 0 : i32
    %c0_i32_0 = arith.constant 0 : i32
    %c0_i32_1 = arith.constant 0 : i32
    return %c0_i32, %c0_i32_0 : i32, i32
  }
  func.func @transform_6(%arg0: i32) -> (i32, i32) {
    %c0_i32 = arith.constant 0 : i32
    %c0_i32_0 = arith.constant 0 : i32
    %c0_i32_1 = arith.constant 0 : i32
    return %c0_i32, %c0_i32_0 : i32, i32
  }
  func.func @transform_7(%arg0: i32) -> (i32, i32) {
    %c0_i32 = arith.constant 0 : i32
    %c0_i32_0 = arith.constant 0 : i32
    %c0_i32_1 = arith.constant 0 : i32
    return %c0_i32, %c0_i32_0 : i32, i32
  }
  func.func @transform_8(%arg0: i32) -> (i32, i32) {
    %c0_i32 = arith.constant 0 : i32
    %c0_i32_0 = arith.constant 0 : i32
    %c0_i32_1 = arith.constant 0 : i32
    return %c0_i32, %c0_i32_0 : i32, i32
  }
  func.func @transform_9(%arg0: i32) -> (i32, i32) {
    %c0_i32 = arith.constant 0 : i32
    %c0_i32_0 = arith.constant 0 : i32
    %c0_i32_1 = arith.constant 0 : i32
    return %c0_i32, %c0_i32_0 : i32, i32
  }
  func.func @transform_10(%arg0: i32) -> (i32, i32) {
    %c0_i32 = arith.constant 0 : i32
    %c0_i32_0 = arith.constant 0 : i32
    %c0_i32_1 = arith.constant 0 : i32
    return %c0_i32, %c0_i32_0 : i32, i32
  }
  func.func @transform_11(%arg0: i32) -> (i32, i32) {
    %c0_i32 = arith.constant 0 : i32
    %c0_i32_0 = arith.constant 0 : i32
    return %arg0, %c0_i32 : i32, i32
  }
}

</mosaic_0001>

<llo_original>
// kernel: tpu_custom_call.1
$region0: #{tpu_custom_call.1}
  #allocation0 [shape = 'u32[]', space=smem, size = 0x4, offset = 0x4, fixed_abs, tag = 'smem constant byte address 0x4 - core index']
  #allocation1 [shape = 'u32[144,128]{1,0:T(1,128)}', space=vmem, size = 0x12000, scoped, tag = 'internal scratch']
  %s0 = inlined_call_operand.hbm [shape: f32[16,2048], index: 0, kind: input, shape index: {}]
  %s1 = inlined_call_operand.hbm [shape: f32[16,2048], index: 1, kind: input, shape index: {}]
  %s2 = inlined_call_operand.hbm [shape: f32[16,2048], index: 2, kind: input, shape index: {}]
  %s3 = inlined_call_operand.hbm [shape: bf16[2048,512], index: 3, kind: input, shape index: {}]
  %s4 = inlined_call_operand.hbm [shape: f32[1,512], index: 4, kind: input, shape index: {}]
  %s5 = inlined_call_operand.hbm [shape: bf16[2048,512], index: 5, kind: input, shape index: {}]
  %s6 = inlined_call_operand.hbm [shape: f32[1,512], index: 6, kind: input, shape index: {}]
  %s7 = inlined_call_operand.hbm [shape: bf16[2048,512], index: 7, kind: input, shape index: {}]
  %s8 = inlined_call_operand.hbm [shape: f32[1,512], index: 8, kind: input, shape index: {}]
  %s9 = inlined_call_operand.hbm [shape: bf16[1536,128], index: 9, kind: input, shape index: {}]
  %s10 = inlined_call_operand.hbm [shape: f32[1,128], index: 10, kind: input, shape index: {}]
  %s11 = inlined_call_operand.hbm [shape: f32[16,128], index: 11, kind: output, shape index: {}]
  %s12 = sld [smem:[#allocation0]]
  $region98: #{tpu_custom_call.1} parent=0
    _
  %s14 = ssub.s32 1, %s12
  %s15 = scalar_select 0, %s14, %s12
  $region1: #{tpu_custom_call.1} parent=0
    #allocation2 [shape = 'u8[131072]{0}', space=vmem, size = 0x20000, scoped, tag = 'input window, operand 0, single buffered']
    #allocation3 [shape = 's32[1]{0}', space=sflag, size = 0x4, scoped, tag = 'scoped memory for tpu_custom_call.1']
    #allocation4 [shape = 's32[1]{0}', space=sflag, size = 0x4, scoped, tag = 'scoped memory for tpu_custom_call.1']
    #allocation5 [shape = 'u8[131072]{0}', space=vmem, size = 0x20000, scoped, tag = 'input window, operand 1, single buffered']
    #allocation6 [shape = 's32[1]{0}', space=sflag, size = 0x4, scoped, tag = 'scoped memory for tpu_custom_call.1']
    #allocation7 [shape = 'u8[131072]{0}', space=vmem, size = 0x20000, scoped, tag = 'input window, operand 2, single buffered']
    #allocation8 [shape = 'u8[2097152]{0}', space=vmem, size = 0x200000, scoped, tag = 'input window, operand 3, single buffered']
    #allocation9 [shape = 's32[1]{0}', space=sflag, size = 0x4, scoped, tag = 'scoped memory for tpu_custom_call.1']
    #allocation10 [shape = 'u8[2048]{0}', space=vmem, size = 0x800, scoped, tag = 'input window, operand 4, single buffered']
    #allocation11 [shape = 'u8[2097152]{0}', space=vmem, size = 0x200000, scoped, tag = 'input window, operand 5, single buffered']
    #allocation12 [shape = 's32[1]{0}', space=sflag, size = 0x4, scoped, tag = 'scoped memory for tpu_custom_call.1']
    #allocation13 [shape = 'u8[2048]{0}', space=vmem, size = 0x800, scoped, tag = 'input window, operand 6, single buffered']
    #allocation14 [shape = 'u8[2097152]{0}', space=vmem, size = 0x200000, scoped, tag = 'input window, operand 7, single buffered']
    #allocation15 [shape = 's32[1]{0}', space=sflag, size = 0x4, scoped, tag = 'scoped memory for tpu_custom_call.1']
    #allocation16 [shape = 'u8[2048]{0}', space=vmem, size = 0x800, scoped, tag = 'input window, operand 8, single buffered']
    #allocation17 [shape = 'u8[393216]{0}', space=vmem, size = 0x60000, scoped, tag = 'input window, operand 9, single buffered']
    #allocation18 [shape = 's32[1]{0}', space=sflag, size = 0x4, scoped, tag = 'scoped memory for tpu_custom_call.1']
    #allocation19 [shape = 'u8[512]{0}', space=vmem, size = 0x400, scoped, tag = 'input window, operand 10, single buffered']
    #allocation20 [shape = 'u8[8192]{0}', space=vmem, size = 0x2000, scoped, tag = 'output window, operand 0, single buffered']
    %16 = vsyncpa [#allocation3], 0
    %17 = vsyncpa [#allocation6], 0
    %18 = vsyncpa [#allocation9], 0
    %19 = vsyncpa [#allocation12], 0
    %20 = vsyncpa [#allocation15], 0
    %21 = vsyncpa [#allocation18], 0
    %22 = vsyncpa [#allocation4], 0
    // Predicated region
    $region2: #{tpu_custom_call.1} parent=1 // pred_check
      _
    $region3: #{tpu_custom_call.1} parent=1 // pred_check_branch
      %24 = sbr.rel (0) target = $region5
    $region4: #{tpu_custom_call.1} parent=1 // pred_region
      %s26 = ssub.s32 4096, 4096
      %27 = vsyncadd [#allocation3], %s26
      %s28 = sshll.u32 [#allocation2], 4
      %s29 = int_to_ptr.vmem [resolvable:$true] %s28
      %34 = dma.hbm_to_vmem [thread:$0]  %s0, 4096, %s29, [#allocation3], 2048, 2048, 128
    $region5: #{tpu_custom_call.1} parent=1 // pred_fallthru
      _
    // Predicated region
    $region6: #{tpu_custom_call.1} parent=1 // pred_check
      _
    $region7: #{tpu_custom_call.1} parent=1 // pred_check_branch
      %36 = sbr.rel (0) target = $region9
    $region8: #{tpu_custom_call.1} parent=1 // pred_region
      %s38 = ssub.s32 4096, 4096
      %39 = vsyncadd [#allocation6], %s38
      %s40 = sshll.u32 [#allocation5], 4
      %s41 = int_to_ptr.vmem [resolvable:$true] %s40
      %46 = dma.hbm_to_vmem [thread:$0]  %s1, 4096, %s41, [#allocation6], 2048, 2048, 128
    $region9: #{tpu_custom_call.1} parent=1 // pred_fallthru
      _
    // Predicated region
    $region10: #{tpu_custom_call.1} parent=1 // pred_check
      _
    $region11: #{tpu_custom_call.1} parent=1 // pred_check_branch
      %48 = sbr.rel (0) target = $region13
    $region12: #{tpu_custom_call.1} parent=1 // pred_region
      %s50 = ssub.s32 4096, 4096
      %51 = vsyncadd [#allocation6], %s50
      %s52 = sshll.u32 [#allocation7], 4
      %s53 = int_to_ptr.vmem [resolvable:$true] %s52
      %58 = dma.hbm_to_vmem [thread:$0]  %s2, 4096, %s53, [#allocation6], 2048, 2048, 128
    $region13: #{tpu_custom_call.1} parent=1 // pred_fallthru
      _
    // Predicated region
    $region14: #{tpu_custom_call.1} parent=1 // pred_check
      _
    $region15: #{tpu_custom_call.1} parent=1 // pred_check_branch
      %60 = sbr.rel (0) target = $region17
    $region16: #{tpu_custom_call.1} parent=1 // pred_region
      %s62 = ssub.s32 65536, 65536
      %63 = vsyncadd [#allocation9], %s62
      %s64 = sshll.u32 [#allocation8], 4
      %s65 = int_to_ptr.vmem [resolvable:$true] %s64
      %70 = dma.hbm_to_vmem [thread:$0]  %s3, 65536, %s65, [#allocation9], 256, 256, 16
    $region17: #{tpu_custom_call.1} parent=1 // pred_fallthru
      _
    // Predicated region
    $region18: #{tpu_custom_call.1} parent=1 // pred_check
      _
    $region19: #{tpu_custom_call.1} parent=1 // pred_check_branch
      %72 = sbr.rel (0) target = $region21
    $region20: #{tpu_custom_call.1} parent=1 // pred_region
      %s74 = ssub.s32 64, 64
      %75 = vsyncadd [#allocation9], %s74
      %s77 = sshll.u32 [#allocation10], 4
      %s78 = int_to_ptr.vmem [resolvable:$true] %s77
      %80 = dma.hbm_to_vmem [thread:$0]  %s4, 64, %s78, [#allocation9]
    $region21: #{tpu_custom_call.1} parent=1 // pred_fallthru
      _
    // Predicated region
    $region22: #{tpu_custom_call.1} parent=1 // pred_check
      _
    $region23: #{tpu_custom_call.1} parent=1 // pred_check_branch
      %82 = sbr.rel (0) target = $region25
    $region24: #{tpu_custom_call.1} parent=1 // pred_region
      %s84 = ssub.s32 65536, 65536
      %85 = vsyncadd [#allocation12], %s84
      %s86 = sshll.u32 [#allocation11], 4
      %s87 = int_to_ptr.vmem [resolvable:$true] %s86
      %92 = dma.hbm_to_vmem [thread:$0]  %s5, 65536, %s87, [#allocation12], 256, 256, 16
    $region25: #{tpu_custom_call.1} parent=1 // pred_fallthru
      _
    // Predicated region
    $region26: #{tpu_custom_call.1} parent=1 // pred_check
      _
    $region27: #{tpu_custom_call.1} parent=1 // pred_check_branch
      %94 = sbr.rel (0) target = $region29
    $region28: #{tpu_custom_call.1} parent=1 // pred_region
      %s96 = ssub.s32 64, 64
      %97 = vsyncadd [#allocation12], %s96
      %s99 = sshll.u32 [#allocation13], 4
      %s100 = int_to_ptr.vmem [resolvable:$true] %s99
      %102 = dma.hbm_to_vmem [thread:$0]  %s6, 64, %s100, [#allocation12]
    $region29: #{tpu_custom_call.1} parent=1 // pred_fallthru
      _
    // Predicated region
    $region30: #{tpu_custom_call.1} parent=1 // pred_check
      _
    $region31: #{tpu_custom_call.1} parent=1 // pred_check_branch
      %104 = sbr.rel (0) target = $region33
    $region32: #{tpu_custom_call.1} parent=1 // pred_region
      %s106 = ssub.s32 65536, 65536
      %107 = vsyncadd [#allocation15], %s106
      %s108 = sshll.u32 [#allocation14], 4
      %s109 = int_to_ptr.vmem [resolvable:$true] %s108
      %114 = dma.hbm_to_vmem [thread:$0]  %s7, 65536, %s109, [#allocation15], 256, 256, 16
    $region33: #{tpu_custom_call.1} parent=1 // pred_fallthru
      _
    // Predicated region
    $region34: #{tpu_custom_call.1} parent=1 // pred_check
      _
    $region35: #{tpu_custom_call.1} parent=1 // pred_check_branch
      %116 = sbr.rel (0) target = $region37
    $region36: #{tpu_custom_call.1} parent=1 // pred_region
      %s118 = ssub.s32 64, 64
      %119 = vsyncadd [#allocation15], %s118
      %s121 = sshll.u32 [#allocation16], 4
      %s122 = int_to_ptr.vmem [resolvable:$true] %s121
      %124 = dma.hbm_to_vmem [thread:$0]  %s8, 64, %s122, [#allocation15]
    $region37: #{tpu_custom_call.1} parent=1 // pred_fallthru
      _
    // Predicated region
    $region38: #{tpu_custom_call.1} parent=1 // pred_check
      _
    $region39: #{tpu_custom_call.1} parent=1 // pred_check_branch
      %126 = sbr.rel (0) target = $region41
    $region40: #{tpu_custom_call.1} parent=1 // pred_region
      %s128 = ssub.s32 12288, 12288
      %129 = vsyncadd [#allocation18], %s128
      %s130 = sshll.u32 [#allocation17], 4
      %s131 = int_to_ptr.vmem [resolvable:$true] %s130
      %136 = dma.hbm_to_vmem [thread:$0]  %s9, 12288, %s131, [#allocation18], 64, 64, 4
    $region41: #{tpu_custom_call.1} parent=1 // pred_fallthru
      _
    // Predicated region
    $region42: #{tpu_custom_call.1} parent=1 // pred_check
      _
    $region43: #{tpu_custom_call.1} parent=1 // pred_check_branch
      %138 = sbr.rel (0) target = $region45
    $region44: #{tpu_custom_call.1} parent=1 // pred_region
      %s140 = ssub.s32 16, 16
      %141 = vsyncadd [#allocation18], %s140
      %s143 = sshll.u32 [#allocation19], 4
      %s144 = int_to_ptr.vmem [resolvable:$true] %s143
      %146 = dma.hbm_to_vmem [thread:$0]  %s10, 16, %s144, [#allocation18]
    $region45: #{tpu_custom_call.1} parent=1 // pred_fallthru
      _
    // Predicated region
    $region46: #{tpu_custom_call.1} parent=1 // pred_check
      _
    $region47: #{tpu_custom_call.1} parent=1 // pred_check_branch
      %148 = sbr.rel (0) target = $region49
    $region48: #{tpu_custom_call.1} parent=1 // pred_region
      %149 = dma.done [#allocation3], 4096
    $region49: #{tpu_custom_call.1} parent=1 // pred_fallthru
      _
    // Predicated region
    $region50: #{tpu_custom_call.1} parent=1 // pred_check
      _
    $region51: #{tpu_custom_call.1} parent=1 // pred_check_branch
      %151 = sbr.rel (0) target = $region53
    $region52: #{tpu_custom_call.1} parent=1 // pred_region
      %152 = dma.done [#allocation6], 4096
    $region53: #{tpu_custom_call.1} parent=1 // pred_fallthru
      _
    // Predicated region
    $region54: #{tpu_custom_call.1} parent=1 // pred_check
      _
    $region55: #{tpu_custom_call.1} parent=1 // pred_check_branch
      %154 = sbr.rel (0) target = $region57
    $region56: #{tpu_custom_call.1} parent=1 // pred_region
      %155 = dma.done [#allocation6], 4096
    $region57: #{tpu_custom_call.1} parent=1 // pred_fallthru
      _
    // Predicated region
    $region58: #{tpu_custom_call.1} parent=1 // pred_check
      _
    $region59: #{tpu_custom_call.1} parent=1 // pred_check_branch
      %157 = sbr.rel (0) target = $region61
    $region60: #{tpu_custom_call.1} parent=1 // pred_region
      %158 = dma.done [#allocation9], 65536
    $region61: #{tpu_custom_call.1} parent=1 // pred_fallthru
      _
    // Predicated region
    $region62: #{tpu_custom_call.1} parent=1 // pred_check
      _
    $region63: #{tpu_custom_call.1} parent=1 // pred_check_branch
      %160 = sbr.rel (0) target = $region65
    $region64: #{tpu_custom_call.1} parent=1 // pred_region
      %161 = dma.done [#allocation9], 64
    $region65: #{tpu_custom_call.1} parent=1 // pred_fallthru
      _
    // Predicated region
    $region66: #{tpu_custom_call.1} parent=1 // pred_check
      _
    $region67: #{tpu_custom_call.1} parent=1 // pred_check_branch
      %163 = sbr.rel (0) target = $region69
    $region68: #{tpu_custom_call.1} parent=1 // pred_region
      %164 = dma.done [#allocation12], 65536
    $region69: #{tpu_custom_call.1} parent=1 // pred_fallthru
      _
    // Predicated region
    $region70: #{tpu_custom_call.1} parent=1 // pred_check
      _
    $region71: #{tpu_custom_call.1} parent=1 // pred_check_branch
      %166 = sbr.rel (0) target = $region73
    $region72: #{tpu_custom_call.1} parent=1 // pred_region
      %167 = dma.done [#allocation12], 64
    $region73: #{tpu_custom_call.1} parent=1 // pred_fallthru
      _
    // Predicated region
    $region74: #{tpu_custom_call.1} parent=1 // pred_check
      _
    $region75: #{tpu_custom_call.1} parent=1 // pred_check_branch
      %169 = sbr.rel (0) target = $region77
    $region76: #{tpu_custom_call.1} parent=1 // pred_region
      %170 = dma.done [#allocation15], 65536
    $region77: #{tpu_custom_call.1} parent=1 // pred_fallthru
      _
    // Predicated region
    $region78: #{tpu_custom_call.1} parent=1 // pred_check
      _
    $region79: #{tpu_custom_call.1} parent=1 // pred_check_branch
      %172 = sbr.rel (0) target = $region81
    $region80: #{tpu_custom_call.1} parent=1 // pred_region
      %173 = dma.done [#allocation15], 64
    $region81: #{tpu_custom_call.1} parent=1 // pred_fallthru
      _
    // Predicated region
    $region82: #{tpu_custom_call.1} parent=1 // pred_check
      _
    $region83: #{tpu_custom_call.1} parent=1 // pred_check_branch
      %175 = sbr.rel (0) target = $region85
    $region84: #{tpu_custom_call.1} parent=1 // pred_region
      %176 = dma.done [#allocation18], 12288
    $region85: #{tpu_custom_call.1} parent=1 // pred_fallthru
      _
    // Predicated region
    $region86: #{tpu_custom_call.1} parent=1 // pred_check
      _
    $region87: #{tpu_custom_call.1} parent=1 // pred_check_branch
      %178 = sbr.rel (0) target = $region89
    $region88: #{tpu_custom_call.1} parent=1 // pred_region
      %179 = dma.done [#allocation18], 16
    $region89: #{tpu_custom_call.1} parent=1 // pred_fallthru
      _
    %v181 = vld [vmem:[#allocation2] sm:$0xff]
    %v182 = vld [vmem:[#allocation2 + $0x8] sm:$0xff]
    %v183 = vld [vmem:[#allocation2 + $0x10] sm:$0xff]
    %v184 = vld [vmem:[#allocation2 + $0x18] sm:$0xff]
    %v185 = vld [vmem:[#allocation2 + $0x20] sm:$0xff]
    %v186 = vld [vmem:[#allocation2 + $0x28] sm:$0xff]
    %v187 = vld [vmem:[#allocation2 + $0x30] sm:$0xff]
    %v188 = vld [vmem:[#allocation2 + $0x38] sm:$0xff]
    %v189 = vld [vmem:[#allocation2 + $0x40] sm:$0xff]
    %v190 = vld [vmem:[#allocation2 + $0x48] sm:$0xff]
    %v191 = vld [vmem:[#allocation2 + $0x50] sm:$0xff]
    %v192 = vld [vmem:[#allocation2 + $0x58] sm:$0xff]
    %v193 = vld [vmem:[#allocation2 + $0x60] sm:$0xff]
    %v194 = vld [vmem:[#allocation2 + $0x68] sm:$0xff]
    %v195 = vld [vmem:[#allocation2 + $0x70] sm:$0xff]
    %v196 = vld [vmem:[#allocation2 + $0x78] sm:$0xff]
    %v197 = vld [vmem:[#allocation2 + $0x80] sm:$0xff]
    %v198 = vld [vmem:[#allocation2 + $0x88] sm:$0xff]
    %v199 = vld [vmem:[#allocation2 + $0x90] sm:$0xff]
    %v200 = vld [vmem:[#allocation2 + $0x98] sm:$0xff]
    %v201 = vld [vmem:[#allocation2 + $0xa0] sm:$0xff]
    %v202 = vld [vmem:[#allocation2 + $0xa8] sm:$0xff]
    %v203 = vld [vmem:[#allocation2 + $0xb0] sm:$0xff]
    %v204 = vld [vmem:[#allocation2 + $0xb8] sm:$0xff]
    %v205 = vld [vmem:[#allocation2 + $0xc0] sm:$0xff]
    %v206 = vld [vmem:[#allocation2 + $0xc8] sm:$0xff]
    %v207 = vld [vmem:[#allocation2 + $0xd0] sm:$0xff]
    %v208 = vld [vmem:[#allocation2 + $0xd8] sm:$0xff]
    %v209 = vld [vmem:[#allocation2 + $0xe0] sm:$0xff]
    %v210 = vld [vmem:[#allocation2 + $0xe8] sm:$0xff]
    %v211 = vld [vmem:[#allocation2 + $0xf0] sm:$0xff]
    %v212 = vld [vmem:[#allocation2 + $0xf8] sm:$0xff]
    %v213 = vpack.c.bf16 %v197, %v181
    %v214 = vpack.c.bf16 %v198, %v182
    %v215 = vpack.c.bf16 %v199, %v183
    %v216 = vpack.c.bf16 %v200, %v184
    %v217 = vpack.c.bf16 %v201, %v185
    %v218 = vpack.c.bf16 %v202, %v186
    %v219 = vpack.c.bf16 %v203, %v187
    %v220 = vpack.c.bf16 %v204, %v188
    %v221 = vpack.c.bf16 %v205, %v189
    %v222 = vpack.c.bf16 %v206, %v190
    %v223 = vpack.c.bf16 %v207, %v191
    %v224 = vpack.c.bf16 %v208, %v192
    %v225 = vpack.c.bf16 %v209, %v193
    %v226 = vpack.c.bf16 %v210, %v194
    %v227 = vpack.c.bf16 %v211, %v195
    %v228 = vpack.c.bf16 %v212, %v196
    %v229 = vld [vmem:[#allocation8] sm:$0xff]
    %v230 = vld [vmem:[#allocation8 + $0x8] sm:$0xff]
    %v231 = vld [vmem:[#allocation8 + $0x10] sm:$0xff]
    %v232 = vld [vmem:[#allocation8 + $0x18] sm:$0xff]
    %v233 = vld [vmem:[#allocation8 + $0x20] sm:$0xff]
    %v234 = vld [vmem:[#allocation8 + $0x28] sm:$0xff]
    %v235 = vld [vmem:[#allocation8 + $0x30] sm:$0xff]
    %v236 = vld [vmem:[#allocation8 + $0x38] sm:$0xff]
    %v237 = vld [vmem:[#allocation8 + $0x40] sm:$0xff]
    %v238 = vld [vmem:[#allocation8 + $0x48] sm:$0xff]
    %v239 = vld [vmem:[#allocation8 + $0x50] sm:$0xff]
    %v240 = vld [vmem:[#allocation8 + $0x58] sm:$0xff]
    %v241 = vld [vmem:[#allocation8 + $0x60] sm:$0xff]
    %v242 = vld [vmem:[#allocation8 + $0x68] sm:$0xff]
    %v243 = vld [vmem:[#allocation8 + $0x70] sm:$0xff]
    %v244 = vld [vmem:[#allocation8 + $0x78] sm:$0xff]
    %v245 = vld [vmem:[#allocation8 + $0x80] sm:$0xff]
    %v246 = vld [vmem:[#allocation8 + $0x88] sm:$0xff]
    %v247 = vld [vmem:[#allocation8 + $0x90] sm:$0xff]
    %v248 = vld [vmem:[#allocation8 + $0x98] sm:$0xff]
    %v249 = vld [vmem:[#allocation8 + $0xa0] sm:$0xff]
    %v250 = vld [vmem:[#allocation8 + $0xa8] sm:$0xff]
    %v251 = vld [vmem:[#allocation8 + $0xb0] sm:$0xff]
    %v252 = vld [vmem:[#allocation8 + $0xb8] sm:$0xff]
    %v253 = vld [vmem:[#allocation8 + $0xc0] sm:$0xff]
    %v254 = vld [vmem:[#allocation8 + $0xc8] sm:$0xff]
    %v255 = vld [vmem:[#allocation8 + $0xd0] sm:$0xff]
    %v256 = vld [vmem:[#allocation8 + $0xd8] sm:$0xff]
    %v257 = vld [vmem:[#allocation8 + $0xe0] sm:$0xff]
    %v258 = vld [vmem:[#allocation8 + $0xe8] sm:$0xff]
    %v259 = vld [vmem:[#allocation8 + $0xf0] sm:$0xff]
    %v260 = vld [vmem:[#allocation8 + $0xf8] sm:$0xff]
    %v261 = vld [vmem:[#allocation8 + $0x100] sm:$0xff]
    %v262 = vld [vmem:[#allocation8 + $0x108] sm:$0xff]
    %v263 = vld [vmem:[#allocation8 + $0x110] sm:$0xff]
    %v264 = vld [vmem:[#allocation8 + $0x118] sm:$0xff]
    %v265 = vld [vmem:[#allocation8 + $0x120] sm:$0xff]
    %v266 = vld [vmem:[#allocation8 + $0x128] sm:$0xff]
    %v267 = vld [vmem:[#allocation8 + $0x130] sm:$0xff]
    %v268 = vld [vmem:[#allocation8 + $0x138] sm:$0xff]
    %v269 = vld [vmem:[#allocation8 + $0x140] sm:$0xff]
    %v270 = vld [vmem:[#allocation8 + $0x148] sm:$0xff]
    %v271 = vld [vmem:[#allocation8 + $0x150] sm:$0xff]
    %v272 = vld [vmem:[#allocation8 + $0x158] sm:$0xff]
    %v273 = vld [vmem:[#allocation8 + $0x160] sm:$0xff]
    %v274 = vld [vmem:[#allocation8 + $0x168] sm:$0xff]
    %v275 = vld [vmem:[#allocation8 + $0x170] sm:$0xff]
    %v276 = vld [vmem:[#allocation8 + $0x178] sm:$0xff]
    %v277 = vld [vmem:[#allocation8 + $0x180] sm:$0xff]
    %v278 = vld [vmem:[#allocation8 + $0x188] sm:$0xff]
    %v279 = vld [vmem:[#allocation8 + $0x190] sm:$0xff]
    %v280 = vld [vmem:[#allocation8 + $0x198] sm:$0xff]
    %v281 = vld [vmem:[#allocation8 + $0x1a0] sm:$0xff]
    %v282 = vld [vmem:[#allocation8 + $0x1a8] sm:$0xff]
    %v283 = vld [vmem:[#allocation8 + $0x1b0] sm:$0xff]
    %v284 = vld [vmem:[#allocation8 + $0x1b8] sm:$0xff]
    %v285 = vld [vmem:[#allocation8 + $0x1c0] sm:$0xff]
    %v286 = vld [vmem:[#allocation8 + $0x1c8] sm:$0xff]
    %v287 = vld [vmem:[#allocation8 + $0x1d0] sm:$0xff]
    %v288 = vld [vmem:[#allocation8 + $0x1d8] sm:$0xff]
    %v289 = vld [vmem:[#allocation8 + $0x1e0] sm:$0xff]
    %v290 = vld [vmem:[#allocation8 + $0x1e8] sm:$0xff]
    %v291 = vld [vmem:[#allocation8 + $0x1f0] sm:$0xff]
    %v292 = vld [vmem:[#allocation8 + $0x1f8] sm:$0xff]
    %v293 = vld [vmem:[#allocation8 + $0x200] sm:$0xff]
    %v294 = vld [vmem:[#allocation8 + $0x208] sm:$0xff]
    %v295 = vld [vmem:[#allocation8 + $0x210] sm:$0xff]
    %v296 = vld [vmem:[#allocation8 + $0x218] sm:$0xff]
    %v297 = vld [vmem:[#allocation8 + $0x220] sm:$0xff]
    %v298 = vld [vmem:[#allocation8 + $0x228] sm:$0xff]
    %v299 = vld [vmem:[#allocation8 + $0x230] sm:$0xff]
    %v300 = vld [vmem:[#allocation8 + $0x238] sm:$0xff]
    %v301 = vld [vmem:[#allocation8 + $0x240] sm:$0xff]
    %v302 = vld [vmem:[#allocation8 + $0x248] sm:$0xff]
    %v303 = vld [vmem:[#allocation8 + $0x250] sm:$0xff]
    %v304 = vld [vmem:[#allocation8 + $0x258] sm:$0xff]
    %v305 = vld [vmem:[#allocation8 + $0x260] sm:$0xff]
    %v306 = vld [vmem:[#allocation8 + $0x268] sm:$0xff]
    %v307 = vld [vmem:[#allocation8 + $0x270] sm:$0xff]
    %v308 = vld [vmem:[#allocation8 + $0x278] sm:$0xff]
    %v309 = vld [vmem:[#allocation8 + $0x280] sm:$0xff]
    %v310 = vld [vmem:[#allocation8 + $0x288] sm:$0xff]
    %v311 = vld [vmem:[#allocation8 + $0x290] sm:$0xff]
    %v312 = vld [vmem:[#allocation8 + $0x298] sm:$0xff]
    %v313 = vld [vmem:[#allocation8 + $0x2a0] sm:$0xff]
    %v314 = vld [vmem:[#allocation8 + $0x2a8] sm:$0xff]
    %v315 = vld [vmem:[#allocation8 + $0x2b0] sm:$0xff]
    %v316 = vld [vmem:[#allocation8 + $0x2b8] sm:$0xff]
    %v317 = vld [vmem:[#allocation8 + $0x2c0] sm:$0xff]
    %v318 = vld [vmem:[#allocation8 + $0x2c8] sm:$0xff]
    %v319 = vld [vmem:[#allocation8 + $0x2d0] sm:$0xff]
    %v320 = vld [vmem:[#allocation8 + $0x2d8] sm:$0xff]
    %v321 = vld [vmem:[#allocation8 + $0x2e0] sm:$0xff]
    %v322 = vld [vmem:[#allocation8 + $0x2e8] sm:$0xff]
    %v323 = vld [vmem:[#allocation8 + $0x2f0] sm:$0xff]
    %v324 = vld [vmem:[#allocation8 + $0x2f8] sm:$0xff]
    %v325 = vld [vmem:[#allocation8 + $0x300] sm:$0xff]
    %v326 = vld [vmem:[#allocation8 + $0x308] sm:$0xff]
    %v327 = vld [vmem:[#allocation8 + $0x310] sm:$0xff]
    %v328 = vld [vmem:[#allocation8 + $0x318] sm:$0xff]
    %v329 = vld [vmem:[#allocation8 + $0x320] sm:$0xff]
    %v330 = vld [vmem:[#allocation8 + $0x328] sm:$0xff]
    %v331 = vld [vmem:[#allocation8 + $0x330] sm:$0xff]
    %v332 = vld [vmem:[#allocation8 + $0x338] sm:$0xff]
    %v333 = vld [vmem:[#allocation8 + $0x340] sm:$0xff]
    %v334 = vld [vmem:[#allocation8 + $0x348] sm:$0xff]
    %v335 = vld [vmem:[#allocation8 + $0x350] sm:$0xff]
    %v336 = vld [vmem:[#allocation8 + $0x358] sm:$0xff]
    %v337 = vld [vmem:[#allocation8 + $0x360] sm:$0xff]
    %v338 = vld [vmem:[#allocation8 + $0x368] sm:$0xff]
    %v339 = vld [vmem:[#allocation8 + $0x370] sm:$0xff]
    %v340 = vld [vmem:[#allocation8 + $0x378] sm:$0xff]
    %v341 = vld [vmem:[#allocation8 + $0x380] sm:$0xff]
    %v342 = vld [vmem:[#allocation8 + $0x388] sm:$0xff]
    %v343 = vld [vmem:[#allocation8 + $0x390] sm:$0xff]
    %v344 = vld [vmem:[#allocation8 + $0x398] sm:$0xff]
    %v345 = vld [vmem:[#allocation8 + $0x3a0] sm:$0xff]
    %v346 = vld [vmem:[#allocation8 + $0x3a8] sm:$0xff]
    %v347 = vld [vmem:[#allocation8 + $0x3b0] sm:$0xff]
    %v348 = vld [vmem:[#allocation8 + $0x3b8] sm:$0xff]
    %v349 = vld [vmem:[#allocation8 + $0x3c0] sm:$0xff]
    %v350 = vld [vmem:[#allocation8 + $0x3c8] sm:$0xff]
    %v351 = vld [vmem:[#allocation8 + $0x3d0] sm:$0xff]
    %v352 = vld [vmem:[#allocation8 + $0x3d8] sm:$0xff]
    %v353 = vld [vmem:[#allocation8 + $0x3e0] sm:$0xff]
    %v354 = vld [vmem:[#allocation8 + $0x3e8] sm:$0xff]
    %v355 = vld [vmem:[#allocation8 + $0x3f0] sm:$0xff]
    %v356 = vld [vmem:[#allocation8 + $0x3f8] sm:$0xff]
    %v357 = vld [vmem:[#allocation8 + $0x400] sm:$0xff]
    %v358 = vld [vmem:[#allocation8 + $0x408] sm:$0xff]
    %v359 = vld [vmem:[#allocation8 + $0x410] sm:$0xff]
    %v360 = vld [vmem:[#allocation8 + $0x418] sm:$0xff]
    %v361 = vld [vmem:[#allocation8 + $0x420] sm:$0xff]
    %v362 = vld [vmem:[#allocation8 + $0x428] sm:$0xff]
    %v363 = vld [vmem:[#allocation8 + $0x430] sm:$0xff]
    %v364 = vld [vmem:[#allocation8 + $0x438] sm:$0xff]
    %v365 = vld [vmem:[#allocation8 + $0x440] sm:$0xff]
    %v366 = vld [vmem:[#allocation8 + $0x448] sm:$0xff]
    %v367 = vld [vmem:[#allocation8 + $0x450] sm:$0xff]
    %v368 = vld [vmem:[#allocation8 + $0x458] sm:$0xff]
    %v369 = vld [vmem:[#allocation8 + $0x460] sm:$0xff]
    %v370 = vld [vmem:[#allocation8 + $0x468] sm:$0xff]
    %v371 = vld [vmem:[#allocation8 + $0x470] sm:$0xff]
    %v372 = vld [vmem:[#allocation8 + $0x478] sm:$0xff]
    %v373 = vld [vmem:[#allocation8 + $0x480] sm:$0xff]
    %v374 = vld [vmem:[#allocation8 + $0x488] sm:$0xff]
    %v375 = vld [vmem:[#allocation8 + $0x490] sm:$0xff]
    %v376 = vld [vmem:[#allocation8 + $0x498] sm:$0xff]
    %v377 = vld [vmem:[#allocation8 + $0x4a0] sm:$0xff]
    %v378 = vld [vmem:[#allocation8 + $0x4a8] sm:$0xff]
    %v379 = vld [vmem:[#allocation8 + $0x4b0] sm:$0xff]
    %v380 = vld [vmem:[#allocation8 + $0x4b8] sm:$0xff]
    %v381 = vld [vmem:[#allocation8 + $0x4c0] sm:$0xff]
    %v382 = vld [vmem:[#allocation8 + $0x4c8] sm:$0xff]
    %v383 = vld [vmem:[#allocation8 + $0x4d0] sm:$0xff]
    %v384 = vld [vmem:[#allocation8 + $0x4d8] sm:$0xff]
    %v385 = vld [vmem:[#allocation8 + $0x4e0] sm:$0xff]
    %v386 = vld [vmem:[#allocation8 + $0x4e8] sm:$0xff]
    %v387 = vld [vmem:[#allocation8 + $0x4f0] sm:$0xff]
    %v388 = vld [vmem:[#allocation8 + $0x4f8] sm:$0xff]
    %v389 = vld [vmem:[#allocation8 + $0x500] sm:$0xff]
    %v390 = vld [vmem:[#allocation8 + $0x508] sm:$0xff]
    %v391 = vld [vmem:[#allocation8 + $0x510] sm:$0xff]
    %v392 = vld [vmem:[#allocation8 + $0x518] sm:$0xff]
    %v393 = vld [vmem:[#allocation8 + $0x520] sm:$0xff]
    %v394 = vld [vmem:[#allocation8 + $0x528] sm:$0xff]
    %v395 = vld [vmem:[#allocation8 + $0x530] sm:$0xff]
    %v396 = vld [vmem:[#allocation8 + $0x538] sm:$0xff]
    %v397 = vld [vmem:[#allocation8 + $0x540] sm:$0xff]
    %v398 = vld [vmem:[#allocation8 + $0x548] sm:$0xff]
    %v399 = vld [vmem:[#allocation8 + $0x550] sm:$0xff]
    %v400 = vld [vmem:[#allocation8 + $0x558] sm:$0xff]
    %v401 = vld [vmem:[#allocation8 + $0x560] sm:$0xff]
    %v402 = vld [vmem:[#allocation8 + $0x568] sm:$0xff]
    %v403 = vld [vmem:[#allocation8 + $0x570] sm:$0xff]
    %v404 = vld [vmem:[#allocation8 + $0x578] sm:$0xff]
    %v405 = vld [vmem:[#allocation8 + $0x580] sm:$0xff]
    %v406 = vld [vmem:[#allocation8 + $0x588] sm:$0xff]
    %v407 = vld [vmem:[#allocation8 + $0x590] sm:$0xff]
    %v408 = vld [vmem:[#allocation8 + $0x598] sm:$0xff]
    %v409 = vld [vmem:[#allocation8 + $0x5a0] sm:$0xff]
    %v410 = vld [vmem:[#allocation8 + $0x5a8] sm:$0xff]
    %v411 = vld [vmem:[#allocation8 + $0x5b0] sm:$0xff]
    %v412 = vld [vmem:[#allocation8 + $0x5b8] sm:$0xff]
    %v413 = vld [vmem:[#allocation8 + $0x5c0] sm:$0xff]
    %v414 = vld [vmem:[#allocation8 + $0x5c8] sm:$0xff]
    %v415 = vld [vmem:[#allocation8 + $0x5d0] sm:$0xff]
    %v416 = vld [vmem:[#allocation8 + $0x5d8] sm:$0xff]
    %v417 = vld [vmem:[#allocation8 + $0x5e0] sm:$0xff]
    %v418 = vld [vmem:[#allocation8 + $0x5e8] sm:$0xff]
    %v419 = vld [vmem:[#allocation8 + $0x5f0] sm:$0xff]
    %v420 = vld [vmem:[#allocation8 + $0x5f8] sm:$0xff]
    %v421 = vld [vmem:[#allocation8 + $0x600] sm:$0xff]
    %v422 = vld [vmem:[#allocation8 + $0x608] sm:$0xff]
    %v423 = vld [vmem:[#allocation8 + $0x610] sm:$0xff]
    %v424 = vld [vmem:[#allocation8 + $0x618] sm:$0xff]
    %v425 = vld [vmem:[#allocation8 + $0x620] sm:$0xff]
    %v426 = vld [vmem:[#allocation8 + $0x628] sm:$0xff]
    %v427 = vld [vmem:[#allocation8 + $0x630] sm:$0xff]
    %v428 = vld [vmem:[#allocation8 + $0x638] sm:$0xff]
    %v429 = vld [vmem:[#allocation8 + $0x640] sm:$0xff]
    %v430 = vld [vmem:[#allocation8 + $0x648] sm:$0xff]
    %v431 = vld [vmem:[#allocation8 + $0x650] sm:$0xff]
    %v432 = vld [vmem:[#allocation8 + $0x658] sm:$0xff]
    %v433 = vld [vmem:[#allocation8 + $0x660] sm:$0xff]
    %v434 = vld [vmem:[#allocation8 + $0x668] sm:$0xff]
    %v435 = vld [vmem:[#allocation8 + $0x670] sm:$0xff]
    %v436 = vld [vmem:[#allocation8 + $0x678] sm:$0xff]
    %v437 = vld [vmem:[#allocation8 + $0x680] sm:$0xff]
    %v438 = vld [vmem:[#allocation8 + $0x688] sm:$0xff]
    %v439 = vld [vmem:[#allocation8 + $0x690] sm:$0xff]
    %v440 = vld [vmem:[#allocation8 + $0x698] sm:$0xff]
    %v441 = vld [vmem:[#allocation8 + $0x6a0] sm:$0xff]
    %v442 = vld [vmem:[#allocation8 + $0x6a8] sm:$0xff]
    %v443 = vld [vmem:[#allocation8 + $0x6b0] sm:$0xff]
    %v444 = vld [vmem:[#allocation8 + $0x6b8] sm:$0xff]
    %v445 = vld [vmem:[#allocation8 + $0x6c0] sm:$0xff]
    %v446 = vld [vmem:[#allocation8 + $0x6c8] sm:$0xff]
    %v447 = vld [vmem:[#allocation8 + $0x6d0] sm:$0xff]
    %v448 = vld [vmem:[#allocation8 + $0x6d8] sm:$0xff]
    %v449 = vld [vmem:[#allocation8 + $0x6e0] sm:$0xff]
    %v450 = vld [vmem:[#allocation8 + $0x6e8] sm:$0xff]
    %v451 = vld [vmem:[#allocation8 + $0x6f0] sm:$0xff]
    %v452 = vld [vmem:[#allocation8 + $0x6f8] sm:$0xff]
    %v453 = vld [vmem:[#allocation8 + $0x700] sm:$0xff]
    %v454 = vld [vmem:[#allocation8 + $0x708] sm:$0xff]
    %v455 = vld [vmem:[#allocation8 + $0x710] sm:$0xff]
    %v456 = vld [vmem:[#allocation8 + $0x718] sm:$0xff]
    %v457 = vld [vmem:[#allocation8 + $0x720] sm:$0xff]
    %v458 = vld [vmem:[#allocation8 + $0x728] sm:$0xff]
    %v459 = vld [vmem:[#allocation8 + $0x730] sm:$0xff]
    %v460 = vld [vmem:[#allocation8 + $0x738] sm:$0xff]
    %v461 = vld [vmem:[#allocation8 + $0x740] sm:$0xff]
    %v462 = vld [vmem:[#allocation8 + $0x748] sm:$0xff]
    %v463 = vld [vmem:[#allocation8 + $0x750] sm:$0xff]
    %v464 = vld [vmem:[#allocation8 + $0x758] sm:$0xff]
    %v465 = vld [vmem:[#allocation8 + $0x760] sm:$0xff]
    %v466 = vld [vmem:[#allocation8 + $0x768] sm:$0xff]
    %v467 = vld [vmem:[#allocation8 + $0x770] sm:$0xff]
    %v468 = vld [vmem:[#allocation8 + $0x778] sm:$0xff]
    %v469 = vld [vmem:[#allocation8 + $0x780] sm:$0xff]
    %v470 = vld [vmem:[#allocation8 + $0x788] sm:$0xff]
    %v471 = vld [vmem:[#allocation8 + $0x790] sm:$0xff]
    %v472 = vld [vmem:[#allocation8 + $0x798] sm:$0xff]
    %v473 = vld [vmem:[#allocation8 + $0x7a0] sm:$0xff]
    %v474 = vld [vmem:[#allocation8 + $0x7a8] sm:$0xff]
    %v475 = vld [vmem:[#allocation8 + $0x7b0] sm:$0xff]
    %v476 = vld [vmem:[#allocation8 + $0x7b8] sm:$0xff]
    %v477 = vld [vmem:[#allocation8 + $0x7c0] sm:$0xff]
    %v478 = vld [vmem:[#allocation8 + $0x7c8] sm:$0xff]
    %v479 = vld [vmem:[#allocation8 + $0x7d0] sm:$0xff]
    %v480 = vld [vmem:[#allocation8 + $0x7d8] sm:$0xff]
    %v481 = vld [vmem:[#allocation8 + $0x7e0] sm:$0xff]
    %v482 = vld [vmem:[#allocation8 + $0x7e8] sm:$0xff]
    %v483 = vld [vmem:[#allocation8 + $0x7f0] sm:$0xff]
    %v484 = vld [vmem:[#allocation8 + $0x7f8] sm:$0xff]
    %v485 = vld [vmem:[#allocation8 + $0x800] sm:$0xff]
    %v486 = vld [vmem:[#allocation8 + $0x808] sm:$0xff]
    %v487 = vld [vmem:[#allocation8 + $0x810] sm:$0xff]
    %v488 = vld [vmem:[#allocation8 + $0x818] sm:$0xff]
    %v489 = vld [vmem:[#allocation8 + $0x820] sm:$0xff]
    %v490 = vld [vmem:[#allocation8 + $0x828] sm:$0xff]
    %v491 = vld [vmem:[#allocation8 + $0x830] sm:$0xff]
    %v492 = vld [vmem:[#allocation8 + $0x838] sm:$0xff]
    %v493 = vld [vmem:[#allocation8 + $0x840] sm:$0xff]
    %v494 = vld [vmem:[#allocation8 + $0x848] sm:$0xff]
    %v495 = vld [vmem:[#allocation8 + $0x850] sm:$0xff]
    %v496 = vld [vmem:[#allocation8 + $0x858] sm:$0xff]
    %v497 = vld [vmem:[#allocation8 + $0x860] sm:$0xff]
    %v498 = vld [vmem:[#allocation8 + $0x868] sm:$0xff]
    %v499 = vld [vmem:[#allocation8 + $0x870] sm:$0xff]
    %v500 = vld [vmem:[#allocation8 + $0x878] sm:$0xff]
    %v501 = vld [vmem:[#allocation8 + $0x880] sm:$0xff]
    %v502 = vld [vmem:[#allocation8 + $0x888] sm:$0xff]
    %v503 = vld [vmem:[#allocation8 + $0x890] sm:$0xff]
    %v504 = vld [vmem:[#allocation8 + $0x898] sm:$0xff]
    %v505 = vld [vmem:[#allocation8 + $0x8a0] sm:$0xff]
    %v506 = vld [vmem:[#allocation8 + $0x8a8] sm:$0xff]
    %v507 = vld [vmem:[#allocation8 + $0x8b0] sm:$0xff]
    %v508 = vld [vmem:[#allocation8 + $0x8b8] sm:$0xff]
    %v509 = vld [vmem:[#allocation8 + $0x8c0] sm:$0xff]
    %v510 = vld [vmem:[#allocation8 + $0x8c8] sm:$0xff]
    %v511 = vld [vmem:[#allocation8 + $0x8d0] sm:$0xff]
    %v512 = vld [vmem:[#allocation8 + $0x8d8] sm:$0xff]
    %v513 = vld [vmem:[#allocation8 + $0x8e0] sm:$0xff]
    %v514 = vld [vmem:[#allocation8 + $0x8e8] sm:$0xff]
    %v515 = vld [vmem:[#allocation8 + $0x8f0] sm:$0xff]
    %v516 = vld [vmem:[#allocation8 + $0x8f8] sm:$0xff]
    %v517 = vld [vmem:[#allocation8 + $0x900] sm:$0xff]
    %v518 = vld [vmem:[#allocation8 + $0x908] sm:$0xff]
    %v519 = vld [vmem:[#allocation8 + $0x910] sm:$0xff]
    %v520 = vld [vmem:[#allocation8 + $0x918] sm:$0xff]
    %v521 = vld [vmem:[#allocation8 + $0x920] sm:$0xff]
    %v522 = vld [vmem:[#allocation8 + $0x928] sm:$0xff]
    %v523 = vld [vmem:[#allocation8 + $0x930] sm:$0xff]
    %v524 = vld [vmem:[#allocation8 + $0x938] sm:$0xff]
    %v525 = vld [vmem:[#allocation8 + $0x940] sm:$0xff]
    %v526 = vld [vmem:[#allocation8 + $0x948] sm:$0xff]
    %v527 = vld [vmem:[#allocation8 + $0x950] sm:$0xff]
    %v528 = vld [vmem:[#allocation8 + $0x958] sm:$0xff]
    %v529 = vld [vmem:[#allocation8 + $0x960] sm:$0xff]
    %v530 = vld [vmem:[#allocation8 + $0x968] sm:$0xff]
    %v531 = vld [vmem:[#allocation8 + $0x970] sm:$0xff]
    %v532 = vld [vmem:[#allocation8 + $0x978] sm:$0xff]
    %v533 = vld [vmem:[#allocation8 + $0x980] sm:$0xff]
    %v534 = vld [vmem:[#allocation8 + $0x988] sm:$0xff]
    %v535 = vld [vmem:[#allocation8 + $0x990] sm:$0xff]
    %v536 = vld [vmem:[#allocation8 + $0x998] sm:$0xff]
    %v537 = vld [vmem:[#allocation8 + $0x9a0] sm:$0xff]
    %v538 = vld [vmem:[#allocation8 + $0x9a8] sm:$0xff]
    %v539 = vld [vmem:[#allocation8 + $0x9b0] sm:$0xff]
    %v540 = vld [vmem:[#allocation8 + $0x9b8] sm:$0xff]
    %v541 = vld [vmem:[#allocation8 + $0x9c0] sm:$0xff]
    %v542 = vld [vmem:[#allocation8 + $0x9c8] sm:$0xff]
    %v543 = vld [vmem:[#allocation8 + $0x9d0] sm:$0xff]
    %v544 = vld [vmem:[#allocation8 + $0x9d8] sm:$0xff]
    %v545 = vld [vmem:[#allocation8 + $0x9e0] sm:$0xff]
    %v546 = vld [vmem:[#allocation8 + $0x9e8] sm:$0xff]
    %v547 = vld [vmem:[#allocation8 + $0x9f0] sm:$0xff]
    %v548 = vld [vmem:[#allocation8 + $0x9f8] sm:$0xff]
    %v549 = vld [vmem:[#allocation8 + $0xa00] sm:$0xff]
    %v550 = vld [vmem:[#allocation8 + $0xa08] sm:$0xff]
    %v551 = vld [vmem:[#allocation8 + $0xa10] sm:$0xff]
    %v552 = vld [vmem:[#allocation8 + $0xa18] sm:$0xff]
    %v553 = vld [vmem:[#allocation8 + $0xa20] sm:$0xff]
    %v554 = vld [vmem:[#allocation8 + $0xa28] sm:$0xff]
    %v555 = vld [vmem:[#allocation8 + $0xa30] sm:$0xff]
    %v556 = vld [vmem:[#allocation8 + $0xa38] sm:$0xff]
    %v557 = vld [vmem:[#allocation8 + $0xa40] sm:$0xff]
    %v558 = vld [vmem:[#allocation8 + $0xa48] sm:$0xff]
    %v559 = vld [vmem:[#allocation8 + $0xa50] sm:$0xff]
    %v560 = vld [vmem:[#allocation8 + $0xa58] sm:$0xff]
    %v561 = vld [vmem:[#allocation8 + $0xa60] sm:$0xff]
    %v562 = vld [vmem:[#allocation8 + $0xa68] sm:$0xff]
    %v563 = vld [vmem:[#allocation8 + $0xa70] sm:$0xff]
    %v564 = vld [vmem:[#allocation8 + $0xa78] sm:$0xff]
    %v565 = vld [vmem:[#allocation8 + $0xa80] sm:$0xff]
    %v566 = vld [vmem:[#allocation8 + $0xa88] sm:$0xff]
    %v567 = vld [vmem:[#allocation8 + $0xa90] sm:$0xff]
    %v568 = vld [vmem:[#allocation8 + $0xa98] sm:$0xff]
    %v569 = vld [vmem:[#allocation8 + $0xaa0] sm:$0xff]
    %v570 = vld [vmem:[#allocation8 + $0xaa8] sm:$0xff]
    %v571 = vld [vmem:[#allocation8 + $0xab0] sm:$0xff]
    %v572 = vld [vmem:[#allocation8 + $0xab8] sm:$0xff]
    %v573 = vld [vmem:[#allocation8 + $0xac0] sm:$0xff]
    %v574 = vld [vmem:[#allocation8 + $0xac8] sm:$0xff]
    %v575 = vld [vmem:[#allocation8 + $0xad0] sm:$0xff]
    %v576 = vld [vmem:[#allocation8 + $0xad8] sm:$0xff]
    %v577 = vld [vmem:[#allocation8 + $0xae0] sm:$0xff]
    %v578 = vld [vmem:[#allocation8 + $0xae8] sm:$0xff]
    %v579 = vld [vmem:[#allocation8 + $0xaf0] sm:$0xff]
    %v580 = vld [vmem:[#allocation8 + $0xaf8] sm:$0xff]
    %v581 = vld [vmem:[#allocation8 + $0xb00] sm:$0xff]
    %v582 = vld [vmem:[#allocation8 + $0xb08] sm:$0xff]
    %v583 = vld [vmem:[#allocation8 + $0xb10] sm:$0xff]
    %v584 = vld [vmem:[#allocation8 + $0xb18] sm:$0xff]
    %v585 = vld [vmem:[#allocation8 + $0xb20] sm:$0xff]
    %v586 = vld [vmem:[#allocation8 + $0xb28] sm:$0xff]
    %v587 = vld [vmem:[#allocation8 + $0xb30] sm:$0xff]
    %v588 = vld [vmem:[#allocation8 + $0xb38] sm:$0xff]
    %v589 = vld [vmem:[#allocation8 + $0xb40] sm:$0xff]
    %v590 = vld [vmem:[#allocation8 + $0xb48] sm:$0xff]
    %v591 = vld [vmem:[#allocation8 + $0xb50] sm:$0xff]
    %v592 = vld [vmem:[#allocation8 + $0xb58] sm:$0xff]
    %v593 = vld [vmem:[#allocation8 + $0xb60] sm:$0xff]
    %v594 = vld [vmem:[#allocation8 + $0xb68] sm:$0xff]
    %v595 = vld [vmem:[#allocation8 + $0xb70] sm:$0xff]
    %v596 = vld [vmem:[#allocation8 + $0xb78] sm:$0xff]
    %v597 = vld [vmem:[#allocation8 + $0xb80] sm:$0xff]
    %v598 = vld [vmem:[#allocation8 + $0xb88] sm:$0xff]
    %v599 = vld [vmem:[#allocation8 + $0xb90] sm:$0xff]
    %v600 = vld [vmem:[#allocation8 + $0xb98] sm:$0xff]
    %v601 = vld [vmem:[#allocation8 + $0xba0] sm:$0xff]
    %v602 = vld [vmem:[#allocation8 + $0xba8] sm:$0xff]
    %v603 = vld [vmem:[#allocation8 + $0xbb0] sm:$0xff]
    %v604 = vld [vmem:[#allocation8 + $0xbb8] sm:$0xff]
    %v605 = vld [vmem:[#allocation8 + $0xbc0] sm:$0xff]
    %v606 = vld [vmem:[#allocation8 + $0xbc8] sm:$0xff]
    %v607 = vld [vmem:[#allocation8 + $0xbd0] sm:$0xff]
    %v608 = vld [vmem:[#allocation8 + $0xbd8] sm:$0xff]
    %v609 = vld [vmem:[#allocation8 + $0xbe0] sm:$0xff]
    %v610 = vld [vmem:[#allocation8 + $0xbe8] sm:$0xff]
    %v611 = vld [vmem:[#allocation8 + $0xbf0] sm:$0xff]
    %v612 = vld [vmem:[#allocation8 + $0xbf8] sm:$0xff]
    %v613 = vld [vmem:[#allocation8 + $0xc00] sm:$0xff]
    %v614 = vld [vmem:[#allocation8 + $0xc08] sm:$0xff]
    %v615 = vld [vmem:[#allocation8 + $0xc10] sm:$0xff]
    %v616 = vld [vmem:[#allocation8 + $0xc18] sm:$0xff]
    %v617 = vld [vmem:[#allocation8 + $0xc20] sm:$0xff]
    %v618 = vld [vmem:[#allocation8 + $0xc28] sm:$0xff]
    %v619 = vld [vmem:[#allocation8 + $0xc30] sm:$0xff]
    %v620 = vld [vmem:[#allocation8 + $0xc38] sm:$0xff]
    %v621 = vld [vmem:[#allocation8 + $0xc40] sm:$0xff]
    %v622 = vld [vmem:[#allocation8 + $0xc48] sm:$0xff]
    %v623 = vld [vmem:[#allocation8 + $0xc50] sm:$0xff]
    %v624 = vld [vmem:[#allocation8 + $0xc58] sm:$0xff]
    %v625 = vld [vmem:[#allocation8 + $0xc60] sm:$0xff]
    %v626 = vld [vmem:[#allocation8 + $0xc68] sm:$0xff]
    %v627 = vld [vmem:[#allocation8 + $0xc70] sm:$0xff]
    %v628 = vld [vmem:[#allocation8 + $0xc78] sm:$0xff]
    %v629 = vld [vmem:[#allocation8 + $0xc80] sm:$0xff]
    %v630 = vld [vmem:[#allocation8 + $0xc88] sm:$0xff]
    %v631 = vld [vmem:[#allocation8 + $0xc90] sm:$0xff]
    %v632 = vld [vmem:[#allocation8 + $0xc98] sm:$0xff]
    %v633 = vld [vmem:[#allocation8 + $0xca0] sm:$0xff]
    %v634 = vld [vmem:[#allocation8 + $0xca8] sm:$0xff]
    %v635 = vld [vmem:[#allocation8 + $0xcb0] sm:$0xff]
    %v636 = vld [vmem:[#allocation8 + $0xcb8] sm:$0xff]
    %v637 = vld [vmem:[#allocation8 + $0xcc0] sm:$0xff]
    %v638 = vld [vmem:[#allocation8 + $0xcc8] sm:$0xff]
    %v639 = vld [vmem:[#allocation8 + $0xcd0] sm:$0xff]
    %v640 = vld [vmem:[#allocation8 + $0xcd8] sm:$0xff]
    %v641 = vld [vmem:[#allocation8 + $0xce0] sm:$0xff]
    %v642 = vld [vmem:[#allocation8 + $0xce8] sm:$0xff]
    %v643 = vld [vmem:[#allocation8 + $0xcf0] sm:$0xff]
    %v644 = vld [vmem:[#allocation8 + $0xcf8] sm:$0xff]
    %v645 = vld [vmem:[#allocation8 + $0xd00] sm:$0xff]
    %v646 = vld [vmem:[#allocation8 + $0xd08] sm:$0xff]
    %v647 = vld [vmem:[#allocation8 + $0xd10] sm:$0xff]
    %v648 = vld [vmem:[#allocation8 + $0xd18] sm:$0xff]
    %v649 = vld [vmem:[#allocation8 + $0xd20] sm:$0xff]
    %v650 = vld [vmem:[#allocation8 + $0xd28] sm:$0xff]
    %v651 = vld [vmem:[#allocation8 + $0xd30] sm:$0xff]
    %v652 = vld [vmem:[#allocation8 + $0xd38] sm:$0xff]
    %v653 = vld [vmem:[#allocation8 + $0xd40] sm:$0xff]
    %v654 = vld [vmem:[#allocation8 + $0xd48] sm:$0xff]
    %v655 = vld [vmem:[#allocation8 + $0xd50] sm:$0xff]
    %v656 = vld [vmem:[#allocation8 + $0xd58] sm:$0xff]
    %v657 = vld [vmem:[#allocation8 + $0xd60] sm:$0xff]
    %v658 = vld [vmem:[#allocation8 + $0xd68] sm:$0xff]
    %v659 = vld [vmem:[#allocation8 + $0xd70] sm:$0xff]
    %v660 = vld [vmem:[#allocation8 + $0xd78] sm:$0xff]
    %v661 = vld [vmem:[#allocation8 + $0xd80] sm:$0xff]
    %v662 = vld [vmem:[#allocation8 + $0xd88] sm:$0xff]
    %v663 = vld [vmem:[#allocation8 + $0xd90] sm:$0xff]
    %v664 = vld [vmem:[#allocation8 + $0xd98] sm:$0xff]
    %v665 = vld [vmem:[#allocation8 + $0xda0] sm:$0xff]
    %v666 = vld [vmem:[#allocation8 + $0xda8] sm:$0xff]
    %v667 = vld [vmem:[#allocation8 + $0xdb0] sm:$0xff]
    %v668 = vld [vmem:[#allocation8 + $0xdb8] sm:$0xff]
    %v669 = vld [vmem:[#allocation8 + $0xdc0] sm:$0xff]
    %v670 = vld [vmem:[#allocation8 + $0xdc8] sm:$0xff]
    %v671 = vld [vmem:[#allocation8 + $0xdd0] sm:$0xff]
    %v672 = vld [vmem:[#allocation8 + $0xdd8] sm:$0xff]
    %v673 = vld [vmem:[#allocation8 + $0xde0] sm:$0xff]
    %v674 = vld [vmem:[#allocation8 + $0xde8] sm:$0xff]
    %v675 = vld [vmem:[#allocation8 + $0xdf0] sm:$0xff]
    %v676 = vld [vmem:[#allocation8 + $0xdf8] sm:$0xff]
    %v677 = vld [vmem:[#allocation8 + $0xe00] sm:$0xff]
    %v678 = vld [vmem:[#allocation8 + $0xe08] sm:$0xff]
    %v679 = vld [vmem:[#allocation8 + $0xe10] sm:$0xff]
    %v680 = vld [vmem:[#allocation8 + $0xe18] sm:$0xff]
    %v681 = vld [vmem:[#allocation8 + $0xe20] sm:$0xff]
    %v682 = vld [vmem:[#allocation8 + $0xe28] sm:$0xff]
    %v683 = vld [vmem:[#allocation8 + $0xe30] sm:$0xff]
    %v684 = vld [vmem:[#allocation8 + $0xe38] sm:$0xff]
    %v685 = vld [vmem:[#allocation8 + $0xe40] sm:$0xff]
    %v686 = vld [vmem:[#allocation8 + $0xe48] sm:$0xff]
    %v687 = vld [vmem:[#allocation8 + $0xe50] sm:$0xff]
    %v688 = vld [vmem:[#allocation8 + $0xe58] sm:$0xff]
    %v689 = vld [vmem:[#allocation8 + $0xe60] sm:$0xff]
    %v690 = vld [vmem:[#allocation8 + $0xe68] sm:$0xff]
    %v691 = vld [vmem:[#allocation8 + $0xe70] sm:$0xff]
    %v692 = vld [vmem:[#allocation8 + $0xe78] sm:$0xff]
    %v693 = vld [vmem:[#allocation8 + $0xe80] sm:$0xff]
    %v694 = vld [vmem:[#allocation8 + $0xe88] sm:$0xff]
    %v695 = vld [vmem:[#allocation8 + $0xe90] sm:$0xff]
    %v696 = vld [vmem:[#allocation8 + $0xe98] sm:$0xff]
    %v697 = vld [vmem:[#allocation8 + $0xea0] sm:$0xff]
    %v698 = vld [vmem:[#allocation8 + $0xea8] sm:$0xff]
    %v699 = vld [vmem:[#allocation8 + $0xeb0] sm:$0xff]
    %v700 = vld [vmem:[#allocation8 + $0xeb8] sm:$0xff]
    %v701 = vld [vmem:[#allocation8 + $0xec0] sm:$0xff]
    %v702 = vld [vmem:[#allocation8 + $0xec8] sm:$0xff]
    %v703 = vld [vmem:[#allocation8 + $0xed0] sm:$0xff]
    %v704 = vld [vmem:[#allocation8 + $0xed8] sm:$0xff]
    %v705 = vld [vmem:[#allocation8 + $0xee0] sm:$0xff]
    %v706 = vld [vmem:[#allocation8 + $0xee8] sm:$0xff]
    %v707 = vld [vmem:[#allocation8 + $0xef0] sm:$0xff]
    %v708 = vld [vmem:[#allocation8 + $0xef8] sm:$0xff]
    %v709 = vld [vmem:[#allocation8 + $0xf00] sm:$0xff]
    %v710 = vld [vmem:[#allocation8 + $0xf08] sm:$0xff]
    %v711 = vld [vmem:[#allocation8 + $0xf10] sm:$0xff]
    %v712 = vld [vmem:[#allocation8 + $0xf18] sm:$0xff]
    %v713 = vld [vmem:[#allocation8 + $0xf20] sm:$0xff]
    %v714 = vld [vmem:[#allocation8 + $0xf28] sm:$0xff]
    %v715 = vld [vmem:[#allocation8 + $0xf30] sm:$0xff]
    %v716 = vld [vmem:[#allocation8 + $0xf38] sm:$0xff]
    %v717 = vld [vmem:[#allocation8 + $0xf40] sm:$0xff]
    %v718 = vld [vmem:[#allocation8 + $0xf48] sm:$0xff]
    %v719 = vld [vmem:[#allocation8 + $0xf50] sm:$0xff]
    %v720 = vld [vmem:[#allocation8 + $0xf58] sm:$0xff]
    %v721 = vld [vmem:[#allocation8 + $0xf60] sm:$0xff]
    %v722 = vld [vmem:[#allocation8 + $0xf68] sm:$0xff]
    %v723 = vld [vmem:[#allocation8 + $0xf70] sm:$0xff]
    %v724 = vld [vmem:[#allocation8 + $0xf78] sm:$0xff]
    %v725 = vld [vmem:[#allocation8 + $0xf80] sm:$0xff]
    %v726 = vld [vmem:[#allocation8 + $0xf88] sm:$0xff]
    %v727 = vld [vmem:[#allocation8 + $0xf90] sm:$0xff]
    %v728 = vld [vmem:[#allocation8 + $0xf98] sm:$0xff]
    %v729 = vld [vmem:[#allocation8 + $0xfa0] sm:$0xff]
    %v730 = vld [vmem:[#allocation8 + $0xfa8] sm:$0xff]
    %v731 = vld [vmem:[#allocation8 + $0xfb0] sm:$0xff]
    %v732 = vld [vmem:[#allocation8 + $0xfb8] sm:$0xff]
    %v733 = vld [vmem:[#allocation8 + $0xfc0] sm:$0xff]
    %v734 = vld [vmem:[#allocation8 + $0xfc8] sm:$0xff]
    %v735 = vld [vmem:[#allocation8 + $0xfd0] sm:$0xff]
    %v736 = vld [vmem:[#allocation8 + $0xfd8] sm:$0xff]
    %v737 = vld [vmem:[#allocation8 + $0xfe0] sm:$0xff]
    %v738 = vld [vmem:[#allocation8 + $0xfe8] sm:$0xff]
    %v739 = vld [vmem:[#allocation8 + $0xff0] sm:$0xff]
    %v740 = vld [vmem:[#allocation8 + $0xff8] sm:$0xff]
    %v741 = vld [vmem:[#allocation10] sm:$0xf]
    %v743 = vlaneseq
    %v744 = vshrl.u32 %v743, 7
    %v745 = vsub.s32 0, %v744
    %v746 = vrot.slane %v741, %v745
    %v747 = vlaneseq
    %v748 = vshrl.u32 %v747, 7
    %v749 = vsub.s32 1, %v748
    %v750 = vrot.slane %v741, %v749
    %v751 = vlaneseq
    %v752 = vshrl.u32 %v751, 7
    %v753 = vsub.s32 2, %v752
    %v754 = vrot.slane %v741, %v753
    %v755 = vlaneseq
    %v756 = vshrl.u32 %v755, 7
    %v757 = vsub.s32 3, %v756
    %v758 = vrot.slane %v741, %v757
    %v1275 = vunpack.c.l.b16 %v229
    %v1276 = vunpack.c.h.b16 %v229
    %v1277 = vunpack.c.l.b16 %v230
    %v1278 = vunpack.c.h.b16 %v230
    %v1279 = vunpack.c.l.b16 %v231
    %v1280 = vunpack.c.h.b16 %v231
    %v1281 = vunpack.c.l.b16 %v232
    %v1282 = vunpack.c.h.b16 %v232
    %v1283 = vunpack.c.l.b16 %v233
    %v1284 = vunpack.c.h.b16 %v233
    %v1285 = vunpack.c.l.b16 %v234
    %v1286 = vunpack.c.h.b16 %v234
    %v1287 = vunpack.c.l.b16 %v235
    %v1288 = vunpack.c.h.b16 %v235
    %v1289 = vunpack.c.l.b16 %v236
    %v1290 = vunpack.c.h.b16 %v236
    %v1291 = vunpack.c.l.b16 %v237
    %v1292 = vunpack.c.h.b16 %v237
    %v1293 = vunpack.c.l.b16 %v238
    %v1294 = vunpack.c.h.b16 %v238
    %v1295 = vunpack.c.l.b16 %v239
    %v1296 = vunpack.c.h.b16 %v239
    %v1297 = vunpack.c.l.b16 %v240
    %v1298 = vunpack.c.h.b16 %v240
    %v1299 = vunpack.c.l.b16 %v241
    %v1300 = vunpack.c.h.b16 %v241
    %v1301 = vunpack.c.l.b16 %v242
    %v1302 = vunpack.c.h.b16 %v242
    %v1303 = vunpack.c.l.b16 %v243
    %v1304 = vunpack.c.h.b16 %v243
    %v1305 = vunpack.c.l.b16 %v244
    %v1306 = vunpack.c.h.b16 %v244
    %v1307 = vunpack.c.l.b16 %v245
    %v1308 = vunpack.c.h.b16 %v245
    %v1309 = vunpack.c.l.b16 %v246
    %v1310 = vunpack.c.h.b16 %v246
    %v1311 = vunpack.c.l.b16 %v247
    %v1312 = vunpack.c.h.b16 %v247
    %v1313 = vunpack.c.l.b16 %v248
    %v1314 = vunpack.c.h.b16 %v248
    %v1315 = vunpack.c.l.b16 %v249
    %v1316 = vunpack.c.h.b16 %v249
    %v1317 = vunpack.c.l.b16 %v250
    %v1318 = vunpack.c.h.b16 %v250
    %v1319 = vunpack.c.l.b16 %v251
    %v1320 = vunpack.c.h.b16 %v251
    %v1321 = vunpack.c.l.b16 %v252
    %v1322 = vunpack.c.h.b16 %v252
    %v1323 = vunpack.c.l.b16 %v253
    %v1324 = vunpack.c.h.b16 %v253
    %v1325 = vunpack.c.l.b16 %v254
    %v1326 = vunpack.c.h.b16 %v254
    %v1327 = vunpack.c.l.b16 %v255
    %v1328 = vunpack.c.h.b16 %v255
    %v1329 = vunpack.c.l.b16 %v256
    %v1330 = vunpack.c.h.b16 %v256
    %v1331 = vunpack.c.l.b16 %v257
    %v1332 = vunpack.c.h.b16 %v257
    %v1333 = vunpack.c.l.b16 %v258
    %v1334 = vunpack.c.h.b16 %v258
    %v1335 = vunpack.c.l.b16 %v259
    %v1336 = vunpack.c.h.b16 %v259
    %v1337 = vunpack.c.l.b16 %v260
    %v1338 = vunpack.c.h.b16 %v260
    %v1339 = vunpack.c.l.b16 %v261
    %v1340 = vunpack.c.h.b16 %v261
    %v1341 = vunpack.c.l.b16 %v262
    %v1342 = vunpack.c.h.b16 %v262
    %v1343 = vunpack.c.l.b16 %v263
    %v1344 = vunpack.c.h.b16 %v263
    %v1345 = vunpack.c.l.b16 %v264
    %v1346 = vunpack.c.h.b16 %v264
    %v1347 = vunpack.c.l.b16 %v265
    %v1348 = vunpack.c.h.b16 %v265
    %v1349 = vunpack.c.l.b16 %v266
    %v1350 = vunpack.c.h.b16 %v266
    %v1351 = vunpack.c.l.b16 %v267
    %v1352 = vunpack.c.h.b16 %v267
    %v1353 = vunpack.c.l.b16 %v268
    %v1354 = vunpack.c.h.b16 %v268
    %v1355 = vunpack.c.l.b16 %v269
    %v1356 = vunpack.c.h.b16 %v269
    %v1357 = vunpack.c.l.b16 %v270
    %v1358 = vunpack.c.h.b16 %v270
    %v1359 = vunpack.c.l.b16 %v271
    %v1360 = vunpack.c.h.b16 %v271
    %v1361 = vunpack.c.l.b16 %v272
    %v1362 = vunpack.c.h.b16 %v272
    %v1363 = vunpack.c.l.b16 %v273
    %v1364 = vunpack.c.h.b16 %v273
    %v1365 = vunpack.c.l.b16 %v274
    %v1366 = vunpack.c.h.b16 %v274
    %v1367 = vunpack.c.l.b16 %v275
    %v1368 = vunpack.c.h.b16 %v275
    %v1369 = vunpack.c.l.b16 %v276
    %v1370 = vunpack.c.h.b16 %v276
    %v1371 = vunpack.c.l.b16 %v277
    %v1372 = vunpack.c.h.b16 %v277
    %v1373 = vunpack.c.l.b16 %v278
    %v1374 = vunpack.c.h.b16 %v278
    %v1375 = vunpack.c.l.b16 %v279
    %v1376 = vunpack.c.h.b16 %v279
    %v1377 = vunpack.c.l.b16 %v280
    %v1378 = vunpack.c.h.b16 %v280
    %v1379 = vunpack.c.l.b16 %v281
    %v1380 = vunpack.c.h.b16 %v281
    %v1381 = vunpack.c.l.b16 %v282
    %v1382 = vunpack.c.h.b16 %v282
    %v1383 = vunpack.c.l.b16 %v283
    %v1384 = vunpack.c.h.b16 %v283
    %v1385 = vunpack.c.l.b16 %v284
    %v1386 = vunpack.c.h.b16 %v284
    %v1387 = vunpack.c.l.b16 %v285
    %v1388 = vunpack.c.h.b16 %v285
    %v1389 = vunpack.c.l.b16 %v286
    %v1390 = vunpack.c.h.b16 %v286
    %v1391 = vunpack.c.l.b16 %v287
    %v1392 = vunpack.c.h.b16 %v287
    %v1393 = vunpack.c.l.b16 %v288
    %v1394 = vunpack.c.h.b16 %v288
    %v1395 = vunpack.c.l.b16 %v289
    %v1396 = vunpack.c.h.b16 %v289
    %v1397 = vunpack.c.l.b16 %v290
    %v1398 = vunpack.c.h.b16 %v290
    %v1399 = vunpack.c.l.b16 %v291
    %v1400 = vunpack.c.h.b16 %v291
    %v1401 = vunpack.c.l.b16 %v292
    %v1402 = vunpack.c.h.b16 %v292
    %v1403 = vunpack.c.l.b16 %v293
    %v1404 = vunpack.c.h.b16 %v293
    %v1405 = vunpack.c.l.b16 %v294
    %v1406 = vunpack.c.h.b16 %v294
    %v1407 = vunpack.c.l.b16 %v295
    %v1408 = vunpack.c.h.b16 %v295
    %v1409 = vunpack.c.l.b16 %v296
    %v1410 = vunpack.c.h.b16 %v296
    %v1411 = vunpack.c.l.b16 %v297
    %v1412 = vunpack.c.h.b16 %v297
    %v1413 = vunpack.c.l.b16 %v298
    %v1414 = vunpack.c.h.b16 %v298
    %v1415 = vunpack.c.l.b16 %v299
    %v1416 = vunpack.c.h.b16 %v299
    %v1417 = vunpack.c.l.b16 %v300
    %v1418 = vunpack.c.h.b16 %v300
    %v1419 = vunpack.c.l.b16 %v301
    %v1420 = vunpack.c.h.b16 %v301
    %v1421 = vunpack.c.l.b16 %v302
    %v1422 = vunpack.c.h.b16 %v302
    %v1423 = vunpack.c.l.b16 %v303
    %v1424 = vunpack.c.h.b16 %v303
    %v1425 = vunpack.c.l.b16 %v304
    %v1426 = vunpack.c.h.b16 %v304
    %v1427 = vunpack.c.l.b16 %v305
    %v1428 = vunpack.c.h.b16 %v305
    %v1429 = vunpack.c.l.b16 %v306
    %v1430 = vunpack.c.h.b16 %v306
    %v1431 = vunpack.c.l.b16 %v307
    %v1432 = vunpack.c.h.b16 %v307
    %v1433 = vunpack.c.l.b16 %v308
    %v1434 = vunpack.c.h.b16 %v308
    %v1435 = vunpack.c.l.b16 %v309
    %v1436 = vunpack.c.h.b16 %v309
    %v1437 = vunpack.c.l.b16 %v310
    %v1438 = vunpack.c.h.b16 %v310
    %v1439 = vunpack.c.l.b16 %v311
    %v1440 = vunpack.c.h.b16 %v311
    %v1441 = vunpack.c.l.b16 %v312
    %v1442 = vunpack.c.h.b16 %v312
    %v1443 = vunpack.c.l.b16 %v313
    %v1444 = vunpack.c.h.b16 %v313
    %v1445 = vunpack.c.l.b16 %v314
    %v1446 = vunpack.c.h.b16 %v314
    %v1447 = vunpack.c.l.b16 %v315
    %v1448 = vunpack.c.h.b16 %v315
    %v1449 = vunpack.c.l.b16 %v316
    %v1450 = vunpack.c.h.b16 %v316
    %v1451 = vunpack.c.l.b16 %v317
    %v1452 = vunpack.c.h.b16 %v317
    %v1453 = vunpack.c.l.b16 %v318
    %v1454 = vunpack.c.h.b16 %v318
    %v1455 = vunpack.c.l.b16 %v319
    %v1456 = vunpack.c.h.b16 %v319
    %v1457 = vunpack.c.l.b16 %v320
    %v1458 = vunpack.c.h.b16 %v320
    %v1459 = vunpack.c.l.b16 %v321
    %v1460 = vunpack.c.h.b16 %v321
    %v1461 = vunpack.c.l.b16 %v322
    %v1462 = vunpack.c.h.b16 %v322
    %v1463 = vunpack.c.l.b16 %v323
    %v1464 = vunpack.c.h.b16 %v323
    %v1465 = vunpack.c.l.b16 %v324
    %v1466 = vunpack.c.h.b16 %v324
    %v1467 = vunpack.c.l.b16 %v325
    %v1468 = vunpack.c.h.b16 %v325
    %v1469 = vunpack.c.l.b16 %v326
    %v1470 = vunpack.c.h.b16 %v326
    %v1471 = vunpack.c.l.b16 %v327
    %v1472 = vunpack.c.h.b16 %v327
    %v1473 = vunpack.c.l.b16 %v328
    %v1474 = vunpack.c.h.b16 %v328
    %v1475 = vunpack.c.l.b16 %v329
    %v1476 = vunpack.c.h.b16 %v329
    %v1477 = vunpack.c.l.b16 %v330
    %v1478 = vunpack.c.h.b16 %v330
    %v1479 = vunpack.c.l.b16 %v331
    %v1480 = vunpack.c.h.b16 %v331
    %v1481 = vunpack.c.l.b16 %v332
    %v1482 = vunpack.c.h.b16 %v332
    %v1483 = vunpack.c.l.b16 %v333
    %v1484 = vunpack.c.h.b16 %v333
    %v1485 = vunpack.c.l.b16 %v334
    %v1486 = vunpack.c.h.b16 %v334
    %v1487 = vunpack.c.l.b16 %v335
    %v1488 = vunpack.c.h.b16 %v335
    %v1489 = vunpack.c.l.b16 %v336
    %v1490 = vunpack.c.h.b16 %v336
    %v1491 = vunpack.c.l.b16 %v337
    %v1492 = vunpack.c.h.b16 %v337
    %v1493 = vunpack.c.l.b16 %v338
    %v1494 = vunpack.c.h.b16 %v338
    %v1495 = vunpack.c.l.b16 %v339
    %v1496 = vunpack.c.h.b16 %v339
    %v1497 = vunpack.c.l.b16 %v340
    %v1498 = vunpack.c.h.b16 %v340
    %v1499 = vunpack.c.l.b16 %v341
    %v1500 = vunpack.c.h.b16 %v341
    %v1501 = vunpack.c.l.b16 %v342
    %v1502 = vunpack.c.h.b16 %v342
    %v1503 = vunpack.c.l.b16 %v343
    %v1504 = vunpack.c.h.b16 %v343
    %v1505 = vunpack.c.l.b16 %v344
    %v1506 = vunpack.c.h.b16 %v344
    %v1507 = vunpack.c.l.b16 %v345
    %v1508 = vunpack.c.h.b16 %v345
    %v1509 = vunpack.c.l.b16 %v346
    %v1510 = vunpack.c.h.b16 %v346
    %v1511 = vunpack.c.l.b16 %v347
    %v1512 = vunpack.c.h.b16 %v347
    %v1513 = vunpack.c.l.b16 %v348
    %v1514 = vunpack.c.h.b16 %v348
    %v1515 = vunpack.c.l.b16 %v349
    %v1516 = vunpack.c.h.b16 %v349
    %v1517 = vunpack.c.l.b16 %v350
    %v1518 = vunpack.c.h.b16 %v350
    %v1519 = vunpack.c.l.b16 %v351
    %v1520 = vunpack.c.h.b16 %v351
    %v1521 = vunpack.c.l.b16 %v352
    %v1522 = vunpack.c.h.b16 %v352
    %v1523 = vunpack.c.l.b16 %v353
    %v1524 = vunpack.c.h.b16 %v353
    %v1525 = vunpack.c.l.b16 %v354
    %v1526 = vunpack.c.h.b16 %v354
    %v1527 = vunpack.c.l.b16 %v355
    %v1528 = vunpack.c.h.b16 %v355
    %v1529 = vunpack.c.l.b16 %v356
    %v1530 = vunpack.c.h.b16 %v356
    %v1531 = vunpack.c.l.b16 %v357
    %v1532 = vunpack.c.h.b16 %v357
    %v1533 = vunpack.c.l.b16 %v358
    %v1534 = vunpack.c.h.b16 %v358
    %v1535 = vunpack.c.l.b16 %v359
    %v1536 = vunpack.c.h.b16 %v359
    %v1537 = vunpack.c.l.b16 %v360
    %v1538 = vunpack.c.h.b16 %v360
    %v1539 = vunpack.c.l.b16 %v361
    %v1540 = vunpack.c.h.b16 %v361
    %v1541 = vunpack.c.l.b16 %v362
    %v1542 = vunpack.c.h.b16 %v362
    %v1543 = vunpack.c.l.b16 %v363
    %v1544 = vunpack.c.h.b16 %v363
    %v1545 = vunpack.c.l.b16 %v364
    %v1546 = vunpack.c.h.b16 %v364
    %v1547 = vunpack.c.l.b16 %v365
    %v1548 = vunpack.c.h.b16 %v365
    %v1549 = vunpack.c.l.b16 %v366
    %v1550 = vunpack.c.h.b16 %v366
    %v1551 = vunpack.c.l.b16 %v367
    %v1552 = vunpack.c.h.b16 %v367
    %v1553 = vunpack.c.l.b16 %v368
    %v1554 = vunpack.c.h.b16 %v368
    %v1555 = vunpack.c.l.b16 %v369
    %v1556 = vunpack.c.h.b16 %v369
    %v1557 = vunpack.c.l.b16 %v370
    %v1558 = vunpack.c.h.b16 %v370
    %v1559 = vunpack.c.l.b16 %v371
    %v1560 = vunpack.c.h.b16 %v371
    %v1561 = vunpack.c.l.b16 %v372
    %v1562 = vunpack.c.h.b16 %v372
    %v1563 = vunpack.c.l.b16 %v373
    %v1564 = vunpack.c.h.b16 %v373
    %v1565 = vunpack.c.l.b16 %v374
    %v1566 = vunpack.c.h.b16 %v374
    %v1567 = vunpack.c.l.b16 %v375
    %v1568 = vunpack.c.h.b16 %v375
    %v1569 = vunpack.c.l.b16 %v376
    %v1570 = vunpack.c.h.b16 %v376
    %v1571 = vunpack.c.l.b16 %v377
    %v1572 = vunpack.c.h.b16 %v377
    %v1573 = vunpack.c.l.b16 %v378
    %v1574 = vunpack.c.h.b16 %v378
    %v1575 = vunpack.c.l.b16 %v379
    %v1576 = vunpack.c.h.b16 %v379
    %v1577 = vunpack.c.l.b16 %v380
    %v1578 = vunpack.c.h.b16 %v380
    %v1579 = vunpack.c.l.b16 %v381
    %v1580 = vunpack.c.h.b16 %v381
    %v1581 = vunpack.c.l.b16 %v382
    %v1582 = vunpack.c.h.b16 %v382
    %v1583 = vunpack.c.l.b16 %v383
    %v1584 = vunpack.c.h.b16 %v383
    %v1585 = vunpack.c.l.b16 %v384
    %v1586 = vunpack.c.h.b16 %v384
    %v1587 = vunpack.c.l.b16 %v385
    %v1588 = vunpack.c.h.b16 %v385
    %v1589 = vunpack.c.l.b16 %v386
    %v1590 = vunpack.c.h.b16 %v386
    %v1591 = vunpack.c.l.b16 %v387
    %v1592 = vunpack.c.h.b16 %v387
    %v1593 = vunpack.c.l.b16 %v388
    %v1594 = vunpack.c.h.b16 %v388
    %v1595 = vunpack.c.l.b16 %v389
    %v1596 = vunpack.c.h.b16 %v389
    %v1597 = vunpack.c.l.b16 %v390
    %v1598 = vunpack.c.h.b16 %v390
    %v1599 = vunpack.c.l.b16 %v391
    %v1600 = vunpack.c.h.b16 %v391
    %v1601 = vunpack.c.l.b16 %v392
    %v1602 = vunpack.c.h.b16 %v392
    %v1603 = vunpack.c.l.b16 %v393
    %v1604 = vunpack.c.h.b16 %v393
    %v1605 = vunpack.c.l.b16 %v394
    %v1606 = vunpack.c.h.b16 %v394
    %v1607 = vunpack.c.l.b16 %v395
    %v1608 = vunpack.c.h.b16 %v395
    %v1609 = vunpack.c.l.b16 %v396
    %v1610 = vunpack.c.h.b16 %v396
    %v1611 = vunpack.c.l.b16 %v397
    %v1612 = vunpack.c.h.b16 %v397
    %v1613 = vunpack.c.l.b16 %v398
    %v1614 = vunpack.c.h.b16 %v398
    %v1615 = vunpack.c.l.b16 %v399
    %v1616 = vunpack.c.h.b16 %v399
    %v1617 = vunpack.c.l.b16 %v400
    %v1618 = vunpack.c.h.b16 %v400
    %v1619 = vunpack.c.l.b16 %v401
    %v1620 = vunpack.c.h.b16 %v401
    %v1621 = vunpack.c.l.b16 %v402
    %v1622 = vunpack.c.h.b16 %v402
    %v1623 = vunpack.c.l.b16 %v403
    %v1624 = vunpack.c.h.b16 %v403
    %v1625 = vunpack.c.l.b16 %v404
    %v1626 = vunpack.c.h.b16 %v404
    %v1627 = vunpack.c.l.b16 %v405
    %v1628 = vunpack.c.h.b16 %v405
    %v1629 = vunpack.c.l.b16 %v406
    %v1630 = vunpack.c.h.b16 %v406
    %v1631 = vunpack.c.l.b16 %v407
    %v1632 = vunpack.c.h.b16 %v407
    %v1633 = vunpack.c.l.b16 %v408
    %v1634 = vunpack.c.h.b16 %v408
    %v1635 = vunpack.c.l.b16 %v409
    %v1636 = vunpack.c.h.b16 %v409
    %v1637 = vunpack.c.l.b16 %v410
    %v1638 = vunpack.c.h.b16 %v410
    %v1639 = vunpack.c.l.b16 %v411
    %v1640 = vunpack.c.h.b16 %v411
    %v1641 = vunpack.c.l.b16 %v412
    %v1642 = vunpack.c.h.b16 %v412
    %v1643 = vunpack.c.l.b16 %v413
    %v1644 = vunpack.c.h.b16 %v413
    %v1645 = vunpack.c.l.b16 %v414
    %v1646 = vunpack.c.h.b16 %v414
    %v1647 = vunpack.c.l.b16 %v415
    %v1648 = vunpack.c.h.b16 %v415
    %v1649 = vunpack.c.l.b16 %v416
    %v1650 = vunpack.c.h.b16 %v416
    %v1651 = vunpack.c.l.b16 %v417
    %v1652 = vunpack.c.h.b16 %v417
    %v1653 = vunpack.c.l.b16 %v418
    %v1654 = vunpack.c.h.b16 %v418
    %v1655 = vunpack.c.l.b16 %v419
    %v1656 = vunpack.c.h.b16 %v419
    %v1657 = vunpack.c.l.b16 %v420
    %v1658 = vunpack.c.h.b16 %v420
    %v1659 = vunpack.c.l.b16 %v421
    %v1660 = vunpack.c.h.b16 %v421
    %v1661 = vunpack.c.l.b16 %v422
    %v1662 = vunpack.c.h.b16 %v422
    %v1663 = vunpack.c.l.b16 %v423
    %v1664 = vunpack.c.h.b16 %v423
    %v1665 = vunpack.c.l.b16 %v424
    %v1666 = vunpack.c.h.b16 %v424
    %v1667 = vunpack.c.l.b16 %v425
    %v1668 = vunpack.c.h.b16 %v425
    %v1669 = vunpack.c.l.b16 %v426
    %v1670 = vunpack.c.h.b16 %v426
    %v1671 = vunpack.c.l.b16 %v427
    %v1672 = vunpack.c.h.b16 %v427
    %v1673 = vunpack.c.l.b16 %v428
    %v1674 = vunpack.c.h.b16 %v428
    %v1675 = vunpack.c.l.b16 %v429
    %v1676 = vunpack.c.h.b16 %v429
    %v1677 = vunpack.c.l.b16 %v430
    %v1678 = vunpack.c.h.b16 %v430
    %v1679 = vunpack.c.l.b16 %v431
    %v1680 = vunpack.c.h.b16 %v431
    %v1681 = vunpack.c.l.b16 %v432
    %v1682 = vunpack.c.h.b16 %v432
    %v1683 = vunpack.c.l.b16 %v433
    %v1684 = vunpack.c.h.b16 %v433
    %v1685 = vunpack.c.l.b16 %v434
    %v1686 = vunpack.c.h.b16 %v434
    %v1687 = vunpack.c.l.b16 %v435
    %v1688 = vunpack.c.h.b16 %v435
    %v1689 = vunpack.c.l.b16 %v436
    %v1690 = vunpack.c.h.b16 %v436
    %v1691 = vunpack.c.l.b16 %v437
    %v1692 = vunpack.c.h.b16 %v437
    %v1693 = vunpack.c.l.b16 %v438
    %v1694 = vunpack.c.h.b16 %v438
    %v1695 = vunpack.c.l.b16 %v439
    %v1696 = vunpack.c.h.b16 %v439
    %v1697 = vunpack.c.l.b16 %v440
    %v1698 = vunpack.c.h.b16 %v440
    %v1699 = vunpack.c.l.b16 %v441
    %v1700 = vunpack.c.h.b16 %v441
    %v1701 = vunpack.c.l.b16 %v442
    %v1702 = vunpack.c.h.b16 %v442
    %v1703 = vunpack.c.l.b16 %v443
    %v1704 = vunpack.c.h.b16 %v443
    %v1705 = vunpack.c.l.b16 %v444
    %v1706 = vunpack.c.h.b16 %v444
    %v1707 = vunpack.c.l.b16 %v445
    %v1708 = vunpack.c.h.b16 %v445
    %v1709 = vunpack.c.l.b16 %v446
    %v1710 = vunpack.c.h.b16 %v446
    %v1711 = vunpack.c.l.b16 %v447
    %v1712 = vunpack.c.h.b16 %v447
    %v1713 = vunpack.c.l.b16 %v448
    %v1714 = vunpack.c.h.b16 %v448
    %v1715 = vunpack.c.l.b16 %v449
    %v1716 = vunpack.c.h.b16 %v449
    %v1717 = vunpack.c.l.b16 %v450
    %v1718 = vunpack.c.h.b16 %v450
    %v1719 = vunpack.c.l.b16 %v451
    %v1720 = vunpack.c.h.b16 %v451
    %v1721 = vunpack.c.l.b16 %v452
    %v1722 = vunpack.c.h.b16 %v452
    %v1723 = vunpack.c.l.b16 %v453
    %v1724 = vunpack.c.h.b16 %v453
    %v1725 = vunpack.c.l.b16 %v454
    %v1726 = vunpack.c.h.b16 %v454
    %v1727 = vunpack.c.l.b16 %v455
    %v1728 = vunpack.c.h.b16 %v455
    %v1729 = vunpack.c.l.b16 %v456
    %v1730 = vunpack.c.h.b16 %v456
    %v1731 = vunpack.c.l.b16 %v457
    %v1732 = vunpack.c.h.b16 %v457
    %v1733 = vunpack.c.l.b16 %v458
    %v1734 = vunpack.c.h.b16 %v458
    %v1735 = vunpack.c.l.b16 %v459
    %v1736 = vunpack.c.h.b16 %v459
    %v1737 = vunpack.c.l.b16 %v460
    %v1738 = vunpack.c.h.b16 %v460
    %v1739 = vunpack.c.l.b16 %v461
    %v1740 = vunpack.c.h.b16 %v461
    %v1741 = vunpack.c.l.b16 %v462
    %v1742 = vunpack.c.h.b16 %v462
    %v1743 = vunpack.c.l.b16 %v463
    %v1744 = vunpack.c.h.b16 %v463
    %v1745 = vunpack.c.l.b16 %v464
    %v1746 = vunpack.c.h.b16 %v464
    %v1747 = vunpack.c.l.b16 %v465
    %v1748 = vunpack.c.h.b16 %v465
    %v1749 = vunpack.c.l.b16 %v466
    %v1750 = vunpack.c.h.b16 %v466
    %v1751 = vunpack.c.l.b16 %v467
    %v1752 = vunpack.c.h.b16 %v467
    %v1753 = vunpack.c.l.b16 %v468
    %v1754 = vunpack.c.h.b16 %v468
    %v1755 = vunpack.c.l.b16 %v469
    %v1756 = vunpack.c.h.b16 %v469
    %v1757 = vunpack.c.l.b16 %v470
    %v1758 = vunpack.c.h.b16 %v470
    %v1759 = vunpack.c.l.b16 %v471
    %v1760 = vunpack.c.h.b16 %v471
    %v1761 = vunpack.c.l.b16 %v472
    %v1762 = vunpack.c.h.b16 %v472
    %v1763 = vunpack.c.l.b16 %v473
    %v1764 = vunpack.c.h.b16 %v473
    %v1765 = vunpack.c.l.b16 %v474
    %v1766 = vunpack.c.h.b16 %v474
    %v1767 = vunpack.c.l.b16 %v475
    %v1768 = vunpack.c.h.b16 %v475
    %v1769 = vunpack.c.l.b16 %v476
    %v1770 = vunpack.c.h.b16 %v476
    %v1771 = vunpack.c.l.b16 %v477
    %v1772 = vunpack.c.h.b16 %v477
    %v1773 = vunpack.c.l.b16 %v478
    %v1774 = vunpack.c.h.b16 %v478
    %v1775 = vunpack.c.l.b16 %v479
    %v1776 = vunpack.c.h.b16 %v479
    %v1777 = vunpack.c.l.b16 %v480
    %v1778 = vunpack.c.h.b16 %v480
    %v1779 = vunpack.c.l.b16 %v481
    %v1780 = vunpack.c.h.b16 %v481
    %v1781 = vunpack.c.l.b16 %v482
    %v1782 = vunpack.c.h.b16 %v482
    %v1783 = vunpack.c.l.b16 %v483
    %v1784 = vunpack.c.h.b16 %v483
    %v1785 = vunpack.c.l.b16 %v484
    %v1786 = vunpack.c.h.b16 %v484
    %v1787 = vunpack.c.l.b16 %v485
    %v1788 = vunpack.c.h.b16 %v485
    %v1789 = vunpack.c.l.b16 %v486
    %v1790 = vunpack.c.h.b16 %v486
    %v1791 = vunpack.c.l.b16 %v487
    %v1792 = vunpack.c.h.b16 %v487
    %v1793 = vunpack.c.l.b16 %v488
    %v1794 = vunpack.c.h.b16 %v488
    %v1795 = vunpack.c.l.b16 %v489
    %v1796 = vunpack.c.h.b16 %v489
    %v1797 = vunpack.c.l.b16 %v490
    %v1798 = vunpack.c.h.b16 %v490
    %v1799 = vunpack.c.l.b16 %v491
    %v1800 = vunpack.c.h.b16 %v491
    %v1801 = vunpack.c.l.b16 %v492
    %v1802 = vunpack.c.h.b16 %v492
    %v1803 = vunpack.c.l.b16 %v493
    %v1804 = vunpack.c.h.b16 %v493
    %v1805 = vunpack.c.l.b16 %v494
    %v1806 = vunpack.c.h.b16 %v494
    %v1807 = vunpack.c.l.b16 %v495
    %v1808 = vunpack.c.h.b16 %v495
    %v1809 = vunpack.c.l.b16 %v496
    %v1810 = vunpack.c.h.b16 %v496
    %v1811 = vunpack.c.l.b16 %v497
    %v1812 = vunpack.c.h.b16 %v497
    %v1813 = vunpack.c.l.b16 %v498
    %v1814 = vunpack.c.h.b16 %v498
    %v1815 = vunpack.c.l.b16 %v499
    %v1816 = vunpack.c.h.b16 %v499
    %v1817 = vunpack.c.l.b16 %v500
    %v1818 = vunpack.c.h.b16 %v500
    %v1819 = vunpack.c.l.b16 %v501
    %v1820 = vunpack.c.h.b16 %v501
    %v1821 = vunpack.c.l.b16 %v502
    %v1822 = vunpack.c.h.b16 %v502
    %v1823 = vunpack.c.l.b16 %v503
    %v1824 = vunpack.c.h.b16 %v503
    %v1825 = vunpack.c.l.b16 %v504
    %v1826 = vunpack.c.h.b16 %v504
    %v1827 = vunpack.c.l.b16 %v505
    %v1828 = vunpack.c.h.b16 %v505
    %v1829 = vunpack.c.l.b16 %v506
    %v1830 = vunpack.c.h.b16 %v506
    %v1831 = vunpack.c.l.b16 %v507
    %v1832 = vunpack.c.h.b16 %v507
    %v1833 = vunpack.c.l.b16 %v508
    %v1834 = vunpack.c.h.b16 %v508
    %v1835 = vunpack.c.l.b16 %v509
    %v1836 = vunpack.c.h.b16 %v509
    %v1837 = vunpack.c.l.b16 %v510
    %v1838 = vunpack.c.h.b16 %v510
    %v1839 = vunpack.c.l.b16 %v511
    %v1840 = vunpack.c.h.b16 %v511
    %v1841 = vunpack.c.l.b16 %v512
    %v1842 = vunpack.c.h.b16 %v512
    %v1843 = vunpack.c.l.b16 %v513
    %v1844 = vunpack.c.h.b16 %v513
    %v1845 = vunpack.c.l.b16 %v514
    %v1846 = vunpack.c.h.b16 %v514
    %v1847 = vunpack.c.l.b16 %v515
    %v1848 = vunpack.c.h.b16 %v515
    %v1849 = vunpack.c.l.b16 %v516
    %v1850 = vunpack.c.h.b16 %v516
    %v1851 = vunpack.c.l.b16 %v517
    %v1852 = vunpack.c.h.b16 %v517
    %v1853 = vunpack.c.l.b16 %v518
    %v1854 = vunpack.c.h.b16 %v518
    %v1855 = vunpack.c.l.b16 %v519
    %v1856 = vunpack.c.h.b16 %v519
    %v1857 = vunpack.c.l.b16 %v520
    %v1858 = vunpack.c.h.b16 %v520
    %v1859 = vunpack.c.l.b16 %v521
    %v1860 = vunpack.c.h.b16 %v521
    %v1861 = vunpack.c.l.b16 %v522
    %v1862 = vunpack.c.h.b16 %v522
    %v1863 = vunpack.c.l.b16 %v523
    %v1864 = vunpack.c.h.b16 %v523
    %v1865 = vunpack.c.l.b16 %v524
    %v1866 = vunpack.c.h.b16 %v524
    %v1867 = vunpack.c.l.b16 %v525
    %v1868 = vunpack.c.h.b16 %v525
    %v1869 = vunpack.c.l.b16 %v526
    %v1870 = vunpack.c.h.b16 %v526
    %v1871 = vunpack.c.l.b16 %v527
    %v1872 = vunpack.c.h.b16 %v527
    %v1873 = vunpack.c.l.b16 %v528
    %v1874 = vunpack.c.h.b16 %v528
    %v1875 = vunpack.c.l.b16 %v529
    %v1876 = vunpack.c.h.b16 %v529
    %v1877 = vunpack.c.l.b16 %v530
    %v1878 = vunpack.c.h.b16 %v530
    %v1879 = vunpack.c.l.b16 %v531
    %v1880 = vunpack.c.h.b16 %v531
    %v1881 = vunpack.c.l.b16 %v532
    %v1882 = vunpack.c.h.b16 %v532
    %v1883 = vunpack.c.l.b16 %v533
    %v1884 = vunpack.c.h.b16 %v533
    %v1885 = vunpack.c.l.b16 %v534
    %v1886 = vunpack.c.h.b16 %v534
    %v1887 = vunpack.c.l.b16 %v535
    %v1888 = vunpack.c.h.b16 %v535
    %v1889 = vunpack.c.l.b16 %v536
    %v1890 = vunpack.c.h.b16 %v536
    %v1891 = vunpack.c.l.b16 %v537
    %v1892 = vunpack.c.h.b16 %v537
    %v1893 = vunpack.c.l.b16 %v538
    %v1894 = vunpack.c.h.b16 %v538
    %v1895 = vunpack.c.l.b16 %v539
    %v1896 = vunpack.c.h.b16 %v539
    %v1897 = vunpack.c.l.b16 %v540
    %v1898 = vunpack.c.h.b16 %v540
    %v1899 = vunpack.c.l.b16 %v541
    %v1900 = vunpack.c.h.b16 %v541
    %v1901 = vunpack.c.l.b16 %v542
    %v1902 = vunpack.c.h.b16 %v542
    %v1903 = vunpack.c.l.b16 %v543
    %v1904 = vunpack.c.h.b16 %v543
    %v1905 = vunpack.c.l.b16 %v544
    %v1906 = vunpack.c.h.b16 %v544
    %v1907 = vunpack.c.l.b16 %v545
    %v1908 = vunpack.c.h.b16 %v545
    %v1909 = vunpack.c.l.b16 %v546
    %v1910 = vunpack.c.h.b16 %v546
    %v1911 = vunpack.c.l.b16 %v547
    %v1912 = vunpack.c.h.b16 %v547
    %v1913 = vunpack.c.l.b16 %v548
    %v1914 = vunpack.c.h.b16 %v548
    %v1915 = vunpack.c.l.b16 %v549
    %v1916 = vunpack.c.h.b16 %v549
    %v1917 = vunpack.c.l.b16 %v550
    %v1918 = vunpack.c.h.b16 %v550
    %v1919 = vunpack.c.l.b16 %v551
    %v1920 = vunpack.c.h.b16 %v551
    %v1921 = vunpack.c.l.b16 %v552
    %v1922 = vunpack.c.h.b16 %v552
    %v1923 = vunpack.c.l.b16 %v553
    %v1924 = vunpack.c.h.b16 %v553
    %v1925 = vunpack.c.l.b16 %v554
    %v1926 = vunpack.c.h.b16 %v554
    %v1927 = vunpack.c.l.b16 %v555
    %v1928 = vunpack.c.h.b16 %v555
    %v1929 = vunpack.c.l.b16 %v556
    %v1930 = vunpack.c.h.b16 %v556
    %v1931 = vunpack.c.l.b16 %v557
    %v1932 = vunpack.c.h.b16 %v557
    %v1933 = vunpack.c.l.b16 %v558
    %v1934 = vunpack.c.h.b16 %v558
    %v1935 = vunpack.c.l.b16 %v559
    %v1936 = vunpack.c.h.b16 %v559
    %v1937 = vunpack.c.l.b16 %v560
    %v1938 = vunpack.c.h.b16 %v560
    %v1939 = vunpack.c.l.b16 %v561
    %v1940 = vunpack.c.h.b16 %v561
    %v1941 = vunpack.c.l.b16 %v562
    %v1942 = vunpack.c.h.b16 %v562
    %v1943 = vunpack.c.l.b16 %v563
    %v1944 = vunpack.c.h.b16 %v563
    %v1945 = vunpack.c.l.b16 %v564
    %v1946 = vunpack.c.h.b16 %v564
    %v1947 = vunpack.c.l.b16 %v565
    %v1948 = vunpack.c.h.b16 %v565
    %v1949 = vunpack.c.l.b16 %v566
    %v1950 = vunpack.c.h.b16 %v566
    %v1951 = vunpack.c.l.b16 %v567
    %v1952 = vunpack.c.h.b16 %v567
    %v1953 = vunpack.c.l.b16 %v568
    %v1954 = vunpack.c.h.b16 %v568
    %v1955 = vunpack.c.l.b16 %v569
    %v1956 = vunpack.c.h.b16 %v569
    %v1957 = vunpack.c.l.b16 %v570
    %v1958 = vunpack.c.h.b16 %v570
    %v1959 = vunpack.c.l.b16 %v571
    %v1960 = vunpack.c.h.b16 %v571
    %v1961 = vunpack.c.l.b16 %v572
    %v1962 = vunpack.c.h.b16 %v572
    %v1963 = vunpack.c.l.b16 %v573
    %v1964 = vunpack.c.h.b16 %v573
    %v1965 = vunpack.c.l.b16 %v574
    %v1966 = vunpack.c.h.b16 %v574
    %v1967 = vunpack.c.l.b16 %v575
    %v1968 = vunpack.c.h.b16 %v575
    %v1969 = vunpack.c.l.b16 %v576
    %v1970 = vunpack.c.h.b16 %v576
    %v1971 = vunpack.c.l.b16 %v577
    %v1972 = vunpack.c.h.b16 %v577
    %v1973 = vunpack.c.l.b16 %v578
    %v1974 = vunpack.c.h.b16 %v578
    %v1975 = vunpack.c.l.b16 %v579
    %v1976 = vunpack.c.h.b16 %v579
    %v1977 = vunpack.c.l.b16 %v580
    %v1978 = vunpack.c.h.b16 %v580
    %v1979 = vunpack.c.l.b16 %v581
    %v1980 = vunpack.c.h.b16 %v581
    %v1981 = vunpack.c.l.b16 %v582
    %v1982 = vunpack.c.h.b16 %v582
    %v1983 = vunpack.c.l.b16 %v583
    %v1984 = vunpack.c.h.b16 %v583
    %v1985 = vunpack.c.l.b16 %v584
    %v1986 = vunpack.c.h.b16 %v584
    %v1987 = vunpack.c.l.b16 %v585
    %v1988 = vunpack.c.h.b16 %v585
    %v1989 = vunpack.c.l.b16 %v586
    %v1990 = vunpack.c.h.b16 %v586
    %v1991 = vunpack.c.l.b16 %v587
    %v1992 = vunpack.c.h.b16 %v587
    %v1993 = vunpack.c.l.b16 %v588
    %v1994 = vunpack.c.h.b16 %v588
    %v1995 = vunpack.c.l.b16 %v589
    %v1996 = vunpack.c.h.b16 %v589
    %v1997 = vunpack.c.l.b16 %v590
    %v1998 = vunpack.c.h.b16 %v590
    %v1999 = vunpack.c.l.b16 %v591
    %v2000 = vunpack.c.h.b16 %v591
    %v2001 = vunpack.c.l.b16 %v592
    %v2002 = vunpack.c.h.b16 %v592
    %v2003 = vunpack.c.l.b16 %v593
    %v2004 = vunpack.c.h.b16 %v593
    %v2005 = vunpack.c.l.b16 %v594
    %v2006 = vunpack.c.h.b16 %v594
    %v2007 = vunpack.c.l.b16 %v595
    %v2008 = vunpack.c.h.b16 %v595
    %v2009 = vunpack.c.l.b16 %v596
    %v2010 = vunpack.c.h.b16 %v596
    %v2011 = vunpack.c.l.b16 %v597
    %v2012 = vunpack.c.h.b16 %v597
    %v2013 = vunpack.c.l.b16 %v598
    %v2014 = vunpack.c.h.b16 %v598
    %v2015 = vunpack.c.l.b16 %v599
    %v2016 = vunpack.c.h.b16 %v599
    %v2017 = vunpack.c.l.b16 %v600
    %v2018 = vunpack.c.h.b16 %v600
    %v2019 = vunpack.c.l.b16 %v601
    %v2020 = vunpack.c.h.b16 %v601
    %v2021 = vunpack.c.l.b16 %v602
    %v2022 = vunpack.c.h.b16 %v602
    %v2023 = vunpack.c.l.b16 %v603
    %v2024 = vunpack.c.h.b16 %v603
    %v2025 = vunpack.c.l.b16 %v604
    %v2026 = vunpack.c.h.b16 %v604
    %v2027 = vunpack.c.l.b16 %v605
    %v2028 = vunpack.c.h.b16 %v605
    %v2029 = vunpack.c.l.b16 %v606
    %v2030 = vunpack.c.h.b16 %v606
    %v2031 = vunpack.c.l.b16 %v607
    %v2032 = vunpack.c.h.b16 %v607
    %v2033 = vunpack.c.l.b16 %v608
    %v2034 = vunpack.c.h.b16 %v608
    %v2035 = vunpack.c.l.b16 %v609
    %v2036 = vunpack.c.h.b16 %v609
    %v2037 = vunpack.c.l.b16 %v610
    %v2038 = vunpack.c.h.b16 %v610
    %v2039 = vunpack.c.l.b16 %v611
    %v2040 = vunpack.c.h.b16 %v611
    %v2041 = vunpack.c.l.b16 %v612
    %v2042 = vunpack.c.h.b16 %v612
    %v2043 = vunpack.c.l.b16 %v613
    %v2044 = vunpack.c.h.b16 %v613
    %v2045 = vunpack.c.l.b16 %v614
    %v2046 = vunpack.c.h.b16 %v614
    %v2047 = vunpack.c.l.b16 %v615
    %v2048 = vunpack.c.h.b16 %v615
    %v2049 = vunpack.c.l.b16 %v616
    %v2050 = vunpack.c.h.b16 %v616
    %v2051 = vunpack.c.l.b16 %v617
    %v2052 = vunpack.c.h.b16 %v617
    %v2053 = vunpack.c.l.b16 %v618
    %v2054 = vunpack.c.h.b16 %v618
    %v2055 = vunpack.c.l.b16 %v619
    %v2056 = vunpack.c.h.b16 %v619
    %v2057 = vunpack.c.l.b16 %v620
    %v2058 = vunpack.c.h.b16 %v620
    %v2059 = vunpack.c.l.b16 %v621
    %v2060 = vunpack.c.h.b16 %v621
    %v2061 = vunpack.c.l.b16 %v622
    %v2062 = vunpack.c.h.b16 %v622
    %v2063 = vunpack.c.l.b16 %v623
    %v2064 = vunpack.c.h.b16 %v623
    %v2065 = vunpack.c.l.b16 %v624
    %v2066 = vunpack.c.h.b16 %v624
    %v2067 = vunpack.c.l.b16 %v625
    %v2068 = vunpack.c.h.b16 %v625
    %v2069 = vunpack.c.l.b16 %v626
    %v2070 = vunpack.c.h.b16 %v626
    %v2071 = vunpack.c.l.b16 %v627
    %v2072 = vunpack.c.h.b16 %v627
    %v2073 = vunpack.c.l.b16 %v628
    %v2074 = vunpack.c.h.b16 %v628
    %v2075 = vunpack.c.l.b16 %v629
    %v2076 = vunpack.c.h.b16 %v629
    %v2077 = vunpack.c.l.b16 %v630
    %v2078 = vunpack.c.h.b16 %v630
    %v2079 = vunpack.c.l.b16 %v631
    %v2080 = vunpack.c.h.b16 %v631
    %v2081 = vunpack.c.l.b16 %v632
    %v2082 = vunpack.c.h.b16 %v632
    %v2083 = vunpack.c.l.b16 %v633
    %v2084 = vunpack.c.h.b16 %v633
    %v2085 = vunpack.c.l.b16 %v634
    %v2086 = vunpack.c.h.b16 %v634
    %v2087 = vunpack.c.l.b16 %v635
    %v2088 = vunpack.c.h.b16 %v635
    %v2089 = vunpack.c.l.b16 %v636
    %v2090 = vunpack.c.h.b16 %v636
    %v2091 = vunpack.c.l.b16 %v637
    %v2092 = vunpack.c.h.b16 %v637
    %v2093 = vunpack.c.l.b16 %v638
    %v2094 = vunpack.c.h.b16 %v638
    %v2095 = vunpack.c.l.b16 %v639
    %v2096 = vunpack.c.h.b16 %v639
    %v2097 = vunpack.c.l.b16 %v640
    %v2098 = vunpack.c.h.b16 %v640
    %v2099 = vunpack.c.l.b16 %v641
    %v2100 = vunpack.c.h.b16 %v641
    %v2101 = vunpack.c.l.b16 %v642
    %v2102 = vunpack.c.h.b16 %v642
    %v2103 = vunpack.c.l.b16 %v643
    %v2104 = vunpack.c.h.b16 %v643
    %v2105 = vunpack.c.l.b16 %v644
    %v2106 = vunpack.c.h.b16 %v644
    %v2107 = vunpack.c.l.b16 %v645
    %v2108 = vunpack.c.h.b16 %v645
    %v2109 = vunpack.c.l.b16 %v646
    %v2110 = vunpack.c.h.b16 %v646
    %v2111 = vunpack.c.l.b16 %v647
    %v2112 = vunpack.c.h.b16 %v647
    %v2113 = vunpack.c.l.b16 %v648
    %v2114 = vunpack.c.h.b16 %v648
    %v2115 = vunpack.c.l.b16 %v649
    %v2116 = vunpack.c.h.b16 %v649
    %v2117 = vunpack.c.l.b16 %v650
    %v2118 = vunpack.c.h.b16 %v650
    %v2119 = vunpack.c.l.b16 %v651
    %v2120 = vunpack.c.h.b16 %v651
    %v2121 = vunpack.c.l.b16 %v652
    %v2122 = vunpack.c.h.b16 %v652
    %v2123 = vunpack.c.l.b16 %v653
    %v2124 = vunpack.c.h.b16 %v653
    %v2125 = vunpack.c.l.b16 %v654
    %v2126 = vunpack.c.h.b16 %v654
    %v2127 = vunpack.c.l.b16 %v655
    %v2128 = vunpack.c.h.b16 %v655
    %v2129 = vunpack.c.l.b16 %v656
    %v2130 = vunpack.c.h.b16 %v656
    %v2131 = vunpack.c.l.b16 %v657
    %v2132 = vunpack.c.h.b16 %v657
    %v2133 = vunpack.c.l.b16 %v658
    %v2134 = vunpack.c.h.b16 %v658
    %v2135 = vunpack.c.l.b16 %v659
    %v2136 = vunpack.c.h.b16 %v659
    %v2137 = vunpack.c.l.b16 %v660
    %v2138 = vunpack.c.h.b16 %v660
    %v2139 = vunpack.c.l.b16 %v661
    %v2140 = vunpack.c.h.b16 %v661
    %v2141 = vunpack.c.l.b16 %v662
    %v2142 = vunpack.c.h.b16 %v662
    %v2143 = vunpack.c.l.b16 %v663
    %v2144 = vunpack.c.h.b16 %v663
    %v2145 = vunpack.c.l.b16 %v664
    %v2146 = vunpack.c.h.b16 %v664
    %v2147 = vunpack.c.l.b16 %v665
    %v2148 = vunpack.c.h.b16 %v665
    %v2149 = vunpack.c.l.b16 %v666
    %v2150 = vunpack.c.h.b16 %v666
    %v2151 = vunpack.c.l.b16 %v667
    %v2152 = vunpack.c.h.b16 %v667
    %v2153 = vunpack.c.l.b16 %v668
    %v2154 = vunpack.c.h.b16 %v668
    %v2155 = vunpack.c.l.b16 %v669
    %v2156 = vunpack.c.h.b16 %v669
    %v2157 = vunpack.c.l.b16 %v670
    %v2158 = vunpack.c.h.b16 %v670
    %v2159 = vunpack.c.l.b16 %v671
    %v2160 = vunpack.c.h.b16 %v671
    %v2161 = vunpack.c.l.b16 %v672
    %v2162 = vunpack.c.h.b16 %v672
    %v2163 = vunpack.c.l.b16 %v673
    %v2164 = vunpack.c.h.b16 %v673
    %v2165 = vunpack.c.l.b16 %v674
    %v2166 = vunpack.c.h.b16 %v674
    %v2167 = vunpack.c.l.b16 %v675
    %v2168 = vunpack.c.h.b16 %v675
    %v2169 = vunpack.c.l.b16 %v676
    %v2170 = vunpack.c.h.b16 %v676
    %v2171 = vunpack.c.l.b16 %v677
    %v2172 = vunpack.c.h.b16 %v677
    %v2173 = vunpack.c.l.b16 %v678
    %v2174 = vunpack.c.h.b16 %v678
    %v2175 = vunpack.c.l.b16 %v679
    %v2176 = vunpack.c.h.b16 %v679
    %v2177 = vunpack.c.l.b16 %v680
    %v2178 = vunpack.c.h.b16 %v680
    %v2179 = vunpack.c.l.b16 %v681
    %v2180 = vunpack.c.h.b16 %v681
    %v2181 = vunpack.c.l.b16 %v682
    %v2182 = vunpack.c.h.b16 %v682
    %v2183 = vunpack.c.l.b16 %v683
    %v2184 = vunpack.c.h.b16 %v683
    %v2185 = vunpack.c.l.b16 %v684
    %v2186 = vunpack.c.h.b16 %v684
    %v2187 = vunpack.c.l.b16 %v685
    %v2188 = vunpack.c.h.b16 %v685
    %v2189 = vunpack.c.l.b16 %v686
    %v2190 = vunpack.c.h.b16 %v686
    %v2191 = vunpack.c.l.b16 %v687
    %v2192 = vunpack.c.h.b16 %v687
    %v2193 = vunpack.c.l.b16 %v688
    %v2194 = vunpack.c.h.b16 %v688
    %v2195 = vunpack.c.l.b16 %v689
    %v2196 = vunpack.c.h.b16 %v689
    %v2197 = vunpack.c.l.b16 %v690
    %v2198 = vunpack.c.h.b16 %v690
    %v2199 = vunpack.c.l.b16 %v691
    %v2200 = vunpack.c.h.b16 %v691
    %v2201 = vunpack.c.l.b16 %v692
    %v2202 = vunpack.c.h.b16 %v692
    %v2203 = vunpack.c.l.b16 %v693
    %v2204 = vunpack.c.h.b16 %v693
    %v2205 = vunpack.c.l.b16 %v694
    %v2206 = vunpack.c.h.b16 %v694
    %v2207 = vunpack.c.l.b16 %v695
    %v2208 = vunpack.c.h.b16 %v695
    %v2209 = vunpack.c.l.b16 %v696
    %v2210 = vunpack.c.h.b16 %v696
    %v2211 = vunpack.c.l.b16 %v697
    %v2212 = vunpack.c.h.b16 %v697
    %v2213 = vunpack.c.l.b16 %v698
    %v2214 = vunpack.c.h.b16 %v698
    %v2215 = vunpack.c.l.b16 %v699
    %v2216 = vunpack.c.h.b16 %v699
    %v2217 = vunpack.c.l.b16 %v700
    %v2218 = vunpack.c.h.b16 %v700
    %v2219 = vunpack.c.l.b16 %v701
    %v2220 = vunpack.c.h.b16 %v701
    %v2221 = vunpack.c.l.b16 %v702
    %v2222 = vunpack.c.h.b16 %v702
    %v2223 = vunpack.c.l.b16 %v703
    %v2224 = vunpack.c.h.b16 %v703
    %v2225 = vunpack.c.l.b16 %v704
    %v2226 = vunpack.c.h.b16 %v704
    %v2227 = vunpack.c.l.b16 %v705
    %v2228 = vunpack.c.h.b16 %v705
    %v2229 = vunpack.c.l.b16 %v706
    %v2230 = vunpack.c.h.b16 %v706
    %v2231 = vunpack.c.l.b16 %v707
    %v2232 = vunpack.c.h.b16 %v707
    %v2233 = vunpack.c.l.b16 %v708
    %v2234 = vunpack.c.h.b16 %v708
    %v2235 = vunpack.c.l.b16 %v709
    %v2236 = vunpack.c.h.b16 %v709
    %v2237 = vunpack.c.l.b16 %v710
    %v2238 = vunpack.c.h.b16 %v710
    %v2239 = vunpack.c.l.b16 %v711
    %v2240 = vunpack.c.h.b16 %v711
    %v2241 = vunpack.c.l.b16 %v712
    %v2242 = vunpack.c.h.b16 %v712
    %v2243 = vunpack.c.l.b16 %v713
    %v2244 = vunpack.c.h.b16 %v713
    %v2245 = vunpack.c.l.b16 %v714
    %v2246 = vunpack.c.h.b16 %v714
    %v2247 = vunpack.c.l.b16 %v715
    %v2248 = vunpack.c.h.b16 %v715
    %v2249 = vunpack.c.l.b16 %v716
    %v2250 = vunpack.c.h.b16 %v716
    %v2251 = vunpack.c.l.b16 %v717
    %v2252 = vunpack.c.h.b16 %v717
    %v2253 = vunpack.c.l.b16 %v718
    %v2254 = vunpack.c.h.b16 %v718
    %v2255 = vunpack.c.l.b16 %v719
    %v2256 = vunpack.c.h.b16 %v719
    %v2257 = vunpack.c.l.b16 %v720
    %v2258 = vunpack.c.h.b16 %v720
    %v2259 = vunpack.c.l.b16 %v721
    %v2260 = vunpack.c.h.b16 %v721
    %v2261 = vunpack.c.l.b16 %v722
    %v2262 = vunpack.c.h.b16 %v722
    %v2263 = vunpack.c.l.b16 %v723
    %v2264 = vunpack.c.h.b16 %v723
    %v2265 = vunpack.c.l.b16 %v724
    %v2266 = vunpack.c.h.b16 %v724
    %v2267 = vunpack.c.l.b16 %v725
    %v2268 = vunpack.c.h.b16 %v725
    %v2269 = vunpack.c.l.b16 %v726
    %v2270 = vunpack.c.h.b16 %v726
    %v2271 = vunpack.c.l.b16 %v727
    %v2272 = vunpack.c.h.b16 %v727
    %v2273 = vunpack.c.l.b16 %v728
    %v2274 = vunpack.c.h.b16 %v728
    %v2275 = vunpack.c.l.b16 %v729
    %v2276 = vunpack.c.h.b16 %v729
    %v2277 = vunpack.c.l.b16 %v730
    %v2278 = vunpack.c.h.b16 %v730
    %v2279 = vunpack.c.l.b16 %v731
    %v2280 = vunpack.c.h.b16 %v731
    %v2281 = vunpack.c.l.b16 %v732
    %v2282 = vunpack.c.h.b16 %v732
    %v2283 = vunpack.c.l.b16 %v733
    %v2284 = vunpack.c.h.b16 %v733
    %v2285 = vunpack.c.l.b16 %v734
    %v2286 = vunpack.c.h.b16 %v734
    %v2287 = vunpack.c.l.b16 %v735
    %v2288 = vunpack.c.h.b16 %v735
    %v2289 = vunpack.c.l.b16 %v736
    %v2290 = vunpack.c.h.b16 %v736
    %v2291 = vunpack.c.l.b16 %v737
    %v2292 = vunpack.c.h.b16 %v737
    %v2293 = vunpack.c.l.b16 %v738
    %v2294 = vunpack.c.h.b16 %v738
    %v2295 = vunpack.c.l.b16 %v739
    %v2296 = vunpack.c.h.b16 %v739
    %v2297 = vunpack.c.l.b16 %v740
    %v2298 = vunpack.c.h.b16 %v740
    %v2299 = vpack.c.b16 %v1279, %v1275
    %v2300 = vpack.c.b16 %v1280, %v1276
    %v2301 = vpack.c.b16 %v1281, %v1277
    %v2302 = vpack.c.b16 %v1282, %v1278
    %v2303 = vpack.c.b16 %v1287, %v1283
    %v2304 = vpack.c.b16 %v1288, %v1284
    %v2305 = vpack.c.b16 %v1289, %v1285
    %v2306 = vpack.c.b16 %v1290, %v1286
    %v2307 = vpack.c.b16 %v1295, %v1291
    %v2308 = vpack.c.b16 %v1296, %v1292
    %v2309 = vpack.c.b16 %v1297, %v1293
    %v2310 = vpack.c.b16 %v1298, %v1294
    %v2311 = vpack.c.b16 %v1303, %v1299
    %v2312 = vpack.c.b16 %v1304, %v1300
    %v2313 = vpack.c.b16 %v1305, %v1301
    %v2314 = vpack.c.b16 %v1306, %v1302
    %v2315 = vpack.c.b16 %v1311, %v1307
    %v2316 = vpack.c.b16 %v1312, %v1308
    %v2317 = vpack.c.b16 %v1313, %v1309
    %v2318 = vpack.c.b16 %v1314, %v1310
    %v2319 = vpack.c.b16 %v1319, %v1315
    %v2320 = vpack.c.b16 %v1320, %v1316
    %v2321 = vpack.c.b16 %v1321, %v1317
    %v2322 = vpack.c.b16 %v1322, %v1318
    %v2323 = vpack.c.b16 %v1327, %v1323
    %v2324 = vpack.c.b16 %v1328, %v1324
    %v2325 = vpack.c.b16 %v1329, %v1325
    %v2326 = vpack.c.b16 %v1330, %v1326
    %v2327 = vpack.c.b16 %v1335, %v1331
    %v2328 = vpack.c.b16 %v1336, %v1332
    %v2329 = vpack.c.b16 %v1337, %v1333
    %v2330 = vpack.c.b16 %v1338, %v1334
    %v2331 = vpack.c.b16 %v1343, %v1339
    %v2332 = vpack.c.b16 %v1344, %v1340
    %v2333 = vpack.c.b16 %v1345, %v1341
    %v2334 = vpack.c.b16 %v1346, %v1342
    %v2335 = vpack.c.b16 %v1351, %v1347
    %v2336 = vpack.c.b16 %v1352, %v1348
    %v2337 = vpack.c.b16 %v1353, %v1349
    %v2338 = vpack.c.b16 %v1354, %v1350
    %v2339 = vpack.c.b16 %v1359, %v1355
    %v2340 = vpack.c.b16 %v1360, %v1356
    %v2341 = vpack.c.b16 %v1361, %v1357
    %v2342 = vpack.c.b16 %v1362, %v1358
    %v2343 = vpack.c.b16 %v1367, %v1363
    %v2344 = vpack.c.b16 %v1368, %v1364
    %v2345 = vpack.c.b16 %v1369, %v1365
    %v2346 = vpack.c.b16 %v1370, %v1366
    %v2347 = vpack.c.b16 %v1375, %v1371
    %v2348 = vpack.c.b16 %v1376, %v1372
    %v2349 = vpack.c.b16 %v1377, %v1373
    %v2350 = vpack.c.b16 %v1378, %v1374
    %v2351 = vpack.c.b16 %v1383, %v1379
    %v2352 = vpack.c.b16 %v1384, %v1380
    %v2353 = vpack.c.b16 %v1385, %v1381
    %v2354 = vpack.c.b16 %v1386, %v1382
    %v2355 = vpack.c.b16 %v1391, %v1387
    %v2356 = vpack.c.b16 %v1392, %v1388
    %v2357 = vpack.c.b16 %v1393, %v1389
    %v2358 = vpack.c.b16 %v1394, %v1390
    %v2359 = vpack.c.b16 %v1399, %v1395
    %v2360 = vpack.c.b16 %v1400, %v1396
    %v2361 = vpack.c.b16 %v1401, %v1397
    %v2362 = vpack.c.b16 %v1402, %v1398
    %v2363 = vpack.c.b16 %v1407, %v1403
    %v2364 = vpack.c.b16 %v1408, %v1404
    %v2365 = vpack.c.b16 %v1409, %v1405
    %v2366 = vpack.c.b16 %v1410, %v1406
    %v2367 = vpack.c.b16 %v1415, %v1411
    %v2368 = vpack.c.b16 %v1416, %v1412
    %v2369 = vpack.c.b16 %v1417, %v1413
    %v2370 = vpack.c.b16 %v1418, %v1414
    %v2371 = vpack.c.b16 %v1423, %v1419
    %v2372 = vpack.c.b16 %v1424, %v1420
    %v2373 = vpack.c.b16 %v1425, %v1421
    %v2374 = vpack.c.b16 %v1426, %v1422
    %v2375 = vpack.c.b16 %v1431, %v1427
    %v2376 = vpack.c.b16 %v1432, %v1428
    %v2377 = vpack.c.b16 %v1433, %v1429
    %v2378 = vpack.c.b16 %v1434, %v1430
    %v2379 = vpack.c.b16 %v1439, %v1435
    %v2380 = vpack.c.b16 %v1440, %v1436
    %v2381 = vpack.c.b16 %v1441, %v1437
    %v2382 = vpack.c.b16 %v1442, %v1438
    %v2383 = vpack.c.b16 %v1447, %v1443
    %v2384 = vpack.c.b16 %v1448, %v1444
    %v2385 = vpack.c.b16 %v1449, %v1445
    %v2386 = vpack.c.b16 %v1450, %v1446
    %v2387 = vpack.c.b16 %v1455, %v1451
    %v2388 = vpack.c.b16 %v1456, %v1452
    %v2389 = vpack.c.b16 %v1457, %v1453
    %v2390 = vpack.c.b16 %v1458, %v1454
    %v2391 = vpack.c.b16 %v1463, %v1459
    %v2392 = vpack.c.b16 %v1464, %v1460
    %v2393 = vpack.c.b16 %v1465, %v1461
    %v2394 = vpack.c.b16 %v1466, %v1462
    %v2395 = vpack.c.b16 %v1471, %v1467
    %v2396 = vpack.c.b16 %v1472, %v1468
    %v2397 = vpack.c.b16 %v1473, %v1469
    %v2398 = vpack.c.b16 %v1474, %v1470
    %v2399 = vpack.c.b16 %v1479, %v1475
    %v2400 = vpack.c.b16 %v1480, %v1476
    %v2401 = vpack.c.b16 %v1481, %v1477
    %v2402 = vpack.c.b16 %v1482, %v1478
    %v2403 = vpack.c.b16 %v1487, %v1483
    %v2404 = vpack.c.b16 %v1488, %v1484
    %v2405 = vpack.c.b16 %v1489, %v1485
    %v2406 = vpack.c.b16 %v1490, %v1486
    %v2407 = vpack.c.b16 %v1495, %v1491
    %v2408 = vpack.c.b16 %v1496, %v1492
    %v2409 = vpack.c.b16 %v1497, %v1493
    %v2410 = vpack.c.b16 %v1498, %v1494
    %v2411 = vpack.c.b16 %v1503, %v1499
    %v2412 = vpack.c.b16 %v1504, %v1500
    %v2413 = vpack.c.b16 %v1505, %v1501
    %v2414 = vpack.c.b16 %v1506, %v1502
    %v2415 = vpack.c.b16 %v1511, %v1507
    %v2416 = vpack.c.b16 %v1512, %v1508
    %v2417 = vpack.c.b16 %v1513, %v1509
    %v2418 = vpack.c.b16 %v1514, %v1510
    %v2419 = vpack.c.b16 %v1519, %v1515
    %v2420 = vpack.c.b16 %v1520, %v1516
    %v2421 = vpack.c.b16 %v1521, %v1517
    %v2422 = vpack.c.b16 %v1522, %v1518
    %v2423 = vpack.c.b16 %v1527, %v1523
    %v2424 = vpack.c.b16 %v1528, %v1524
    %v2425 = vpack.c.b16 %v1529, %v1525
    %v2426 = vpack.c.b16 %v1530, %v1526
    %v2427 = vpack.c.b16 %v1535, %v1531
    %v2428 = vpack.c.b16 %v1536, %v1532
    %v2429 = vpack.c.b16 %v1537, %v1533
    %v2430 = vpack.c.b16 %v1538, %v1534
    %v2431 = vpack.c.b16 %v1543, %v1539
    %v2432 = vpack.c.b16 %v1544, %v1540
    %v2433 = vpack.c.b16 %v1545, %v1541
    %v2434 = vpack.c.b16 %v1546, %v1542
    %v2435 = vpack.c.b16 %v1551, %v1547
    %v2436 = vpack.c.b16 %v1552, %v1548
    %v2437 = vpack.c.b16 %v1553, %v1549
    %v2438 = vpack.c.b16 %v1554, %v1550
    %v2439 = vpack.c.b16 %v1559, %v1555
    %v2440 = vpack.c.b16 %v1560, %v1556
    %v2441 = vpack.c.b16 %v1561, %v1557
    %v2442 = vpack.c.b16 %v1562, %v1558
    %v2443 = vpack.c.b16 %v1567, %v1563
    %v2444 = vpack.c.b16 %v1568, %v1564
    %v2445 = vpack.c.b16 %v1569, %v1565
    %v2446 = vpack.c.b16 %v1570, %v1566
    %v2447 = vpack.c.b16 %v1575, %v1571
    %v2448 = vpack.c.b16 %v1576, %v1572
    %v2449 = vpack.c.b16 %v1577, %v1573
    %v2450 = vpack.c.b16 %v1578, %v1574
    %v2451 = vpack.c.b16 %v1583, %v1579
    %v2452 = vpack.c.b16 %v1584, %v1580
    %v2453 = vpack.c.b16 %v1585, %v1581
    %v2454 = vpack.c.b16 %v1586, %v1582
    %v2455 = vpack.c.b16 %v1591, %v1587
    %v2456 = vpack.c.b16 %v1592, %v1588
    %v2457 = vpack.c.b16 %v1593, %v1589
    %v2458 = vpack.c.b16 %v1594, %v1590
    %v2459 = vpack.c.b16 %v1599, %v1595
    %v2460 = vpack.c.b16 %v1600, %v1596
    %v2461 = vpack.c.b16 %v1601, %v1597
    %v2462 = vpack.c.b16 %v1602, %v1598
    %v2463 = vpack.c.b16 %v1607, %v1603
    %v2464 = vpack.c.b16 %v1608, %v1604
    %v2465 = vpack.c.b16 %v1609, %v1605
    %v2466 = vpack.c.b16 %v1610, %v1606
    %v2467 = vpack.c.b16 %v1615, %v1611
    %v2468 = vpack.c.b16 %v1616, %v1612
    %v2469 = vpack.c.b16 %v1617, %v1613
    %v2470 = vpack.c.b16 %v1618, %v1614
    %v2471 = vpack.c.b16 %v1623, %v1619
    %v2472 = vpack.c.b16 %v1624, %v1620
    %v2473 = vpack.c.b16 %v1625, %v1621
    %v2474 = vpack.c.b16 %v1626, %v1622
    %v2475 = vpack.c.b16 %v1631, %v1627
    %v2476 = vpack.c.b16 %v1632, %v1628
    %v2477 = vpack.c.b16 %v1633, %v1629
    %v2478 = vpack.c.b16 %v1634, %v1630
    %v2479 = vpack.c.b16 %v1639, %v1635
    %v2480 = vpack.c.b16 %v1640, %v1636
    %v2481 = vpack.c.b16 %v1641, %v1637
    %v2482 = vpack.c.b16 %v1642, %v1638
    %v2483 = vpack.c.b16 %v1647, %v1643
    %v2484 = vpack.c.b16 %v1648, %v1644
    %v2485 = vpack.c.b16 %v1649, %v1645
    %v2486 = vpack.c.b16 %v1650, %v1646
    %v2487 = vpack.c.b16 %v1655, %v1651
    %v2488 = vpack.c.b16 %v1656, %v1652
    %v2489 = vpack.c.b16 %v1657, %v1653
    %v2490 = vpack.c.b16 %v1658, %v1654
    %v2491 = vpack.c.b16 %v1663, %v1659
    %v2492 = vpack.c.b16 %v1664, %v1660
    %v2493 = vpack.c.b16 %v1665, %v1661
    %v2494 = vpack.c.b16 %v1666, %v1662
    %v2495 = vpack.c.b16 %v1671, %v1667
    %v2496 = vpack.c.b16 %v1672, %v1668
    %v2497 = vpack.c.b16 %v1673, %v1669
    %v2498 = vpack.c.b16 %v1674, %v1670
    %v2499 = vpack.c.b16 %v1679, %v1675
    %v2500 = vpack.c.b16 %v1680, %v1676
    %v2501 = vpack.c.b16 %v1681, %v1677
    %v2502 = vpack.c.b16 %v1682, %v1678
    %v2503 = vpack.c.b16 %v1687, %v1683
    %v2504 = vpack.c.b16 %v1688, %v1684
    %v2505 = vpack.c.b16 %v1689, %v1685
    %v2506 = vpack.c.b16 %v1690, %v1686
    %v2507 = vpack.c.b16 %v1695, %v1691
    %v2508 = vpack.c.b16 %v1696, %v1692
    %v2509 = vpack.c.b16 %v1697, %v1693
    %v2510 = vpack.c.b16 %v1698, %v1694
    %v2511 = vpack.c.b16 %v1703, %v1699
    %v2512 = vpack.c.b16 %v1704, %v1700
    %v2513 = vpack.c.b16 %v1705, %v1701
    %v2514 = vpack.c.b16 %v1706, %v1702
    %v2515 = vpack.c.b16 %v1711, %v1707
    %v2516 = vpack.c.b16 %v1712, %v1708
    %v2517 = vpack.c.b16 %v1713, %v1709
    %v2518 = vpack.c.b16 %v1714, %v1710
    %v2519 = vpack.c.b16 %v1719, %v1715
    %v2520 = vpack.c.b16 %v1720, %v1716
    %v2521 = vpack.c.b16 %v1721, %v1717
    %v2522 = vpack.c.b16 %v1722, %v1718
    %v2523 = vpack.c.b16 %v1727, %v1723
    %v2524 = vpack.c.b16 %v1728, %v1724
    %v2525 = vpack.c.b16 %v1729, %v1725
    %v2526 = vpack.c.b16 %v1730, %v1726
    %v2527 = vpack.c.b16 %v1735, %v1731
    %v2528 = vpack.c.b16 %v1736, %v1732
    %v2529 = vpack.c.b16 %v1737, %v1733
    %v2530 = vpack.c.b16 %v1738, %v1734
    %v2531 = vpack.c.b16 %v1743, %v1739
    %v2532 = vpack.c.b16 %v1744, %v1740
    %v2533 = vpack.c.b16 %v1745, %v1741
    %v2534 = vpack.c.b16 %v1746, %v1742
    %v2535 = vpack.c.b16 %v1751, %v1747
    %v2536 = vpack.c.b16 %v1752, %v1748
    %v2537 = vpack.c.b16 %v1753, %v1749
    %v2538 = vpack.c.b16 %v1754, %v1750
    %v2539 = vpack.c.b16 %v1759, %v1755
    %v2540 = vpack.c.b16 %v1760, %v1756
    %v2541 = vpack.c.b16 %v1761, %v1757
    %v2542 = vpack.c.b16 %v1762, %v1758
    %v2543 = vpack.c.b16 %v1767, %v1763
    %v2544 = vpack.c.b16 %v1768, %v1764
    %v2545 = vpack.c.b16 %v1769, %v1765
    %v2546 = vpack.c.b16 %v1770, %v1766
    %v2547 = vpack.c.b16 %v1775, %v1771
    %v2548 = vpack.c.b16 %v1776, %v1772
    %v2549 = vpack.c.b16 %v1777, %v1773
    %v2550 = vpack.c.b16 %v1778, %v1774
    %v2551 = vpack.c.b16 %v1783, %v1779
    %v2552 = vpack.c.b16 %v1784, %v1780
    %v2553 = vpack.c.b16 %v1785, %v1781
    %v2554 = vpack.c.b16 %v1786, %v1782
    %v2555 = vpack.c.b16 %v1791, %v1787
    %v2556 = vpack.c.b16 %v1792, %v1788
    %v2557 = vpack.c.b16 %v1793, %v1789
    %v2558 = vpack.c.b16 %v1794, %v1790
    %v2559 = vpack.c.b16 %v1799, %v1795
    %v2560 = vpack.c.b16 %v1800, %v1796
    %v2561 = vpack.c.b16 %v1801, %v1797
    %v2562 = vpack.c.b16 %v1802, %v1798
    %v2563 = vpack.c.b16 %v1807, %v1803
    %v2564 = vpack.c.b16 %v1808, %v1804
    %v2565 = vpack.c.b16 %v1809, %v1805
    %v2566 = vpack.c.b16 %v1810, %v1806
    %v2567 = vpack.c.b16 %v1815, %v1811
    %v2568 = vpack.c.b16 %v1816, %v1812
    %v2569 = vpack.c.b16 %v1817, %v1813
    %v2570 = vpack.c.b16 %v1818, %v1814
    %v2571 = vpack.c.b16 %v1823, %v1819
    %v2572 = vpack.c.b16 %v1824, %v1820
    %v2573 = vpack.c.b16 %v1825, %v1821
    %v2574 = vpack.c.b16 %v1826, %v1822
    %v2575 = vpack.c.b16 %v1831, %v1827
    %v2576 = vpack.c.b16 %v1832, %v1828
    %v2577 = vpack.c.b16 %v1833, %v1829
    %v2578 = vpack.c.b16 %v1834, %v1830
    %v2579 = vpack.c.b16 %v1839, %v1835
    %v2580 = vpack.c.b16 %v1840, %v1836
    %v2581 = vpack.c.b16 %v1841, %v1837
    %v2582 = vpack.c.b16 %v1842, %v1838
    %v2583 = vpack.c.b16 %v1847, %v1843
    %v2584 = vpack.c.b16 %v1848, %v1844
    %v2585 = vpack.c.b16 %v1849, %v1845
    %v2586 = vpack.c.b16 %v1850, %v1846
    %v2587 = vpack.c.b16 %v1855, %v1851
    %v2588 = vpack.c.b16 %v1856, %v1852
    %v2589 = vpack.c.b16 %v1857, %v1853
    %v2590 = vpack.c.b16 %v1858, %v1854
    %v2591 = vpack.c.b16 %v1863, %v1859
    %v2592 = vpack.c.b16 %v1864, %v1860
    %v2593 = vpack.c.b16 %v1865, %v1861
    %v2594 = vpack.c.b16 %v1866, %v1862
    %v2595 = vpack.c.b16 %v1871, %v1867
    %v2596 = vpack.c.b16 %v1872, %v1868
    %v2597 = vpack.c.b16 %v1873, %v1869
    %v2598 = vpack.c.b16 %v1874, %v1870
    %v2599 = vpack.c.b16 %v1879, %v1875
    %v2600 = vpack.c.b16 %v1880, %v1876
    %v2601 = vpack.c.b16 %v1881, %v1877
    %v2602 = vpack.c.b16 %v1882, %v1878
    %v2603 = vpack.c.b16 %v1887, %v1883
    %v2604 = vpack.c.b16 %v1888, %v1884
    %v2605 = vpack.c.b16 %v1889, %v1885
    %v2606 = vpack.c.b16 %v1890, %v1886
    %v2607 = vpack.c.b16 %v1895, %v1891
    %v2608 = vpack.c.b16 %v1896, %v1892
    %v2609 = vpack.c.b16 %v1897, %v1893
    %v2610 = vpack.c.b16 %v1898, %v1894
    %v2611 = vpack.c.b16 %v1903, %v1899
    %v2612 = vpack.c.b16 %v1904, %v1900
    %v2613 = vpack.c.b16 %v1905, %v1901
    %v2614 = vpack.c.b16 %v1906, %v1902
    %v2615 = vpack.c.b16 %v1911, %v1907
    %v2616 = vpack.c.b16 %v1912, %v1908
    %v2617 = vpack.c.b16 %v1913, %v1909
    %v2618 = vpack.c.b16 %v1914, %v1910
    %v2619 = vpack.c.b16 %v1919, %v1915
    %v2620 = vpack.c.b16 %v1920, %v1916
    %v2621 = vpack.c.b16 %v1921, %v1917
    %v2622 = vpack.c.b16 %v1922, %v1918
    %v2623 = vpack.c.b16 %v1927, %v1923
    %v2624 = vpack.c.b16 %v1928, %v1924
    %v2625 = vpack.c.b16 %v1929, %v1925
    %v2626 = vpack.c.b16 %v1930, %v1926
    %v2627 = vpack.c.b16 %v1935, %v1931
    %v2628 = vpack.c.b16 %v1936, %v1932
    %v2629 = vpack.c.b16 %v1937, %v1933
    %v2630 = vpack.c.b16 %v1938, %v1934
    %v2631 = vpack.c.b16 %v1943, %v1939
    %v2632 = vpack.c.b16 %v1944, %v1940
    %v2633 = vpack.c.b16 %v1945, %v1941
    %v2634 = vpack.c.b16 %v1946, %v1942
    %v2635 = vpack.c.b16 %v1951, %v1947
    %v2636 = vpack.c.b16 %v1952, %v1948
    %v2637 = vpack.c.b16 %v1953, %v1949
    %v2638 = vpack.c.b16 %v1954, %v1950
    %v2639 = vpack.c.b16 %v1959, %v1955
    %v2640 = vpack.c.b16 %v1960, %v1956
    %v2641 = vpack.c.b16 %v1961, %v1957
    %v2642 = vpack.c.b16 %v1962, %v1958
    %v2643 = vpack.c.b16 %v1967, %v1963
    %v2644 = vpack.c.b16 %v1968, %v1964
    %v2645 = vpack.c.b16 %v1969, %v1965
    %v2646 = vpack.c.b16 %v1970, %v1966
    %v2647 = vpack.c.b16 %v1975, %v1971
    %v2648 = vpack.c.b16 %v1976, %v1972
    %v2649 = vpack.c.b16 %v1977, %v1973
    %v2650 = vpack.c.b16 %v1978, %v1974
    %v2651 = vpack.c.b16 %v1983, %v1979
    %v2652 = vpack.c.b16 %v1984, %v1980
    %v2653 = vpack.c.b16 %v1985, %v1981
    %v2654 = vpack.c.b16 %v1986, %v1982
    %v2655 = vpack.c.b16 %v1991, %v1987
    %v2656 = vpack.c.b16 %v1992, %v1988
    %v2657 = vpack.c.b16 %v1993, %v1989
    %v2658 = vpack.c.b16 %v1994, %v1990
    %v2659 = vpack.c.b16 %v1999, %v1995
    %v2660 = vpack.c.b16 %v2000, %v1996
    %v2661 = vpack.c.b16 %v2001, %v1997
    %v2662 = vpack.c.b16 %v2002, %v1998
    %v2663 = vpack.c.b16 %v2007, %v2003
    %v2664 = vpack.c.b16 %v2008, %v2004
    %v2665 = vpack.c.b16 %v2009, %v2005
    %v2666 = vpack.c.b16 %v2010, %v2006
    %v2667 = vpack.c.b16 %v2015, %v2011
    %v2668 = vpack.c.b16 %v2016, %v2012
    %v2669 = vpack.c.b16 %v2017, %v2013
    %v2670 = vpack.c.b16 %v2018, %v2014
    %v2671 = vpack.c.b16 %v2023, %v2019
    %v2672 = vpack.c.b16 %v2024, %v2020
    %v2673 = vpack.c.b16 %v2025, %v2021
    %v2674 = vpack.c.b16 %v2026, %v2022
    %v2675 = vpack.c.b16 %v2031, %v2027
    %v2676 = vpack.c.b16 %v2032, %v2028
    %v2677 = vpack.c.b16 %v2033, %v2029
    %v2678 = vpack.c.b16 %v2034, %v2030
    %v2679 = vpack.c.b16 %v2039, %v2035
    %v2680 = vpack.c.b16 %v2040, %v2036
    %v2681 = vpack.c.b16 %v2041, %v2037
    %v2682 = vpack.c.b16 %v2042, %v2038
    %v2683 = vpack.c.b16 %v2047, %v2043
    %v2684 = vpack.c.b16 %v2048, %v2044
    %v2685 = vpack.c.b16 %v2049, %v2045
    %v2686 = vpack.c.b16 %v2050, %v2046
    %v2687 = vpack.c.b16 %v2055, %v2051
    %v2688 = vpack.c.b16 %v2056, %v2052
    %v2689 = vpack.c.b16 %v2057, %v2053
    %v2690 = vpack.c.b16 %v2058, %v2054
    %v2691 = vpack.c.b16 %v2063, %v2059
    %v2692 = vpack.c.b16 %v2064, %v2060
    %v2693 = vpack.c.b16 %v2065, %v2061
    %v2694 = vpack.c.b16 %v2066, %v2062
    %v2695 = vpack.c.b16 %v2071, %v2067
    %v2696 = vpack.c.b16 %v2072, %v2068
    %v2697 = vpack.c.b16 %v2073, %v2069
    %v2698 = vpack.c.b16 %v2074, %v2070
    %v2699 = vpack.c.b16 %v2079, %v2075
    %v2700 = vpack.c.b16 %v2080, %v2076
    %v2701 = vpack.c.b16 %v2081, %v2077
    %v2702 = vpack.c.b16 %v2082, %v2078
    %v2703 = vpack.c.b16 %v2087, %v2083
    %v2704 = vpack.c.b16 %v2088, %v2084
    %v2705 = vpack.c.b16 %v2089, %v2085
    %v2706 = vpack.c.b16 %v2090, %v2086
    %v2707 = vpack.c.b16 %v2095, %v2091
    %v2708 = vpack.c.b16 %v2096, %v2092
    %v2709 = vpack.c.b16 %v2097, %v2093
    %v2710 = vpack.c.b16 %v2098, %v2094
    %v2711 = vpack.c.b16 %v2103, %v2099
    %v2712 = vpack.c.b16 %v2104, %v2100
    %v2713 = vpack.c.b16 %v2105, %v2101
    %v2714 = vpack.c.b16 %v2106, %v2102
    %v2715 = vpack.c.b16 %v2111, %v2107
    %v2716 = vpack.c.b16 %v2112, %v2108
    %v2717 = vpack.c.b16 %v2113, %v2109
    %v2718 = vpack.c.b16 %v2114, %v2110
    %v2719 = vpack.c.b16 %v2119, %v2115
    %v2720 = vpack.c.b16 %v2120, %v2116
    %v2721 = vpack.c.b16 %v2121, %v2117
    %v2722 = vpack.c.b16 %v2122, %v2118
    %v2723 = vpack.c.b16 %v2127, %v2123
    %v2724 = vpack.c.b16 %v2128, %v2124
    %v2725 = vpack.c.b16 %v2129, %v2125
    %v2726 = vpack.c.b16 %v2130, %v2126
    %v2727 = vpack.c.b16 %v2135, %v2131
    %v2728 = vpack.c.b16 %v2136, %v2132
    %v2729 = vpack.c.b16 %v2137, %v2133
    %v2730 = vpack.c.b16 %v2138, %v2134
    %v2731 = vpack.c.b16 %v2143, %v2139
    %v2732 = vpack.c.b16 %v2144, %v2140
    %v2733 = vpack.c.b16 %v2145, %v2141
    %v2734 = vpack.c.b16 %v2146, %v2142
    %v2735 = vpack.c.b16 %v2151, %v2147
    %v2736 = vpack.c.b16 %v2152, %v2148
    %v2737 = vpack.c.b16 %v2153, %v2149
    %v2738 = vpack.c.b16 %v2154, %v2150
    %v2739 = vpack.c.b16 %v2159, %v2155
    %v2740 = vpack.c.b16 %v2160, %v2156
    %v2741 = vpack.c.b16 %v2161, %v2157
    %v2742 = vpack.c.b16 %v2162, %v2158
    %v2743 = vpack.c.b16 %v2167, %v2163
    %v2744 = vpack.c.b16 %v2168, %v2164
    %v2745 = vpack.c.b16 %v2169, %v2165
    %v2746 = vpack.c.b16 %v2170, %v2166
    %v2747 = vpack.c.b16 %v2175, %v2171
    %v2748 = vpack.c.b16 %v2176, %v2172
    %v2749 = vpack.c.b16 %v2177, %v2173
    %v2750 = vpack.c.b16 %v2178, %v2174
    %v2751 = vpack.c.b16 %v2183, %v2179
    %v2752 = vpack.c.b16 %v2184, %v2180
    %v2753 = vpack.c.b16 %v2185, %v2181
    %v2754 = vpack.c.b16 %v2186, %v2182
    %v2755 = vpack.c.b16 %v2191, %v2187
    %v2756 = vpack.c.b16 %v2192, %v2188
    %v2757 = vpack.c.b16 %v2193, %v2189
    %v2758 = vpack.c.b16 %v2194, %v2190
    %v2759 = vpack.c.b16 %v2199, %v2195
    %v2760 = vpack.c.b16 %v2200, %v2196
    %v2761 = vpack.c.b16 %v2201, %v2197
    %v2762 = vpack.c.b16 %v2202, %v2198
    %v2763 = vpack.c.b16 %v2207, %v2203
    %v2764 = vpack.c.b16 %v2208, %v2204
    %v2765 = vpack.c.b16 %v2209, %v2205
    %v2766 = vpack.c.b16 %v2210, %v2206
    %v2767 = vpack.c.b16 %v2215, %v2211
    %v2768 = vpack.c.b16 %v2216, %v2212
    %v2769 = vpack.c.b16 %v2217, %v2213
    %v2770 = vpack.c.b16 %v2218, %v2214
    %v2771 = vpack.c.b16 %v2223, %v2219
    %v2772 = vpack.c.b16 %v2224, %v2220
    %v2773 = vpack.c.b16 %v2225, %v2221
    %v2774 = vpack.c.b16 %v2226, %v2222
    %v2775 = vpack.c.b16 %v2231, %v2227
    %v2776 = vpack.c.b16 %v2232, %v2228
    %v2777 = vpack.c.b16 %v2233, %v2229
    %v2778 = vpack.c.b16 %v2234, %v2230
    %v2779 = vpack.c.b16 %v2239, %v2235
    %v2780 = vpack.c.b16 %v2240, %v2236
    %v2781 = vpack.c.b16 %v2241, %v2237
    %v2782 = vpack.c.b16 %v2242, %v2238
    %v2783 = vpack.c.b16 %v2247, %v2243
    %v2784 = vpack.c.b16 %v2248, %v2244
    %v2785 = vpack.c.b16 %v2249, %v2245
    %v2786 = vpack.c.b16 %v2250, %v2246
    %v2787 = vpack.c.b16 %v2255, %v2251
    %v2788 = vpack.c.b16 %v2256, %v2252
    %v2789 = vpack.c.b16 %v2257, %v2253
    %v2790 = vpack.c.b16 %v2258, %v2254
    %v2791 = vpack.c.b16 %v2263, %v2259
    %v2792 = vpack.c.b16 %v2264, %v2260
    %v2793 = vpack.c.b16 %v2265, %v2261
    %v2794 = vpack.c.b16 %v2266, %v2262
    %v2795 = vpack.c.b16 %v2271, %v2267
    %v2796 = vpack.c.b16 %v2272, %v2268
    %v2797 = vpack.c.b16 %v2273, %v2269
    %v2798 = vpack.c.b16 %v2274, %v2270
    %v2799 = vpack.c.b16 %v2279, %v2275
    %v2800 = vpack.c.b16 %v2280, %v2276
    %v2801 = vpack.c.b16 %v2281, %v2277
    %v2802 = vpack.c.b16 %v2282, %v2278
    %v2803 = vpack.c.b16 %v2287, %v2283
    %v2804 = vpack.c.b16 %v2288, %v2284
    %v2805 = vpack.c.b16 %v2289, %v2285
    %v2806 = vpack.c.b16 %v2290, %v2286
    %v2807 = vpack.c.b16 %v2295, %v2291
    %v2808 = vpack.c.b16 %v2296, %v2292
    %v2809 = vpack.c.b16 %v2297, %v2293
    %v2810 = vpack.c.b16 %v2298, %v2294
    %3323 = vmatprep.subr.bf16.mxu0 %v2300
    %3324 = vmatpush1.bf16.msra.mxu0 %v2299
    %3325 = vmatprep.subr.bf16.mxu0 %v2304
    %3326 = vmatpush1.bf16.msra.mxu0 %v2303
    %3327 = vmatprep.subr.bf16.mxu0 %v2308
    %3328 = vmatpush1.bf16.msra.mxu0 %v2307
    %3329 = vmatprep.subr.bf16.mxu0 %v2312
    %3330 = vmatpush1.bf16.msra.mxu0 %v2311
    %3331 = vmatprep.subr.bf16.mxu0 %v2316
    %3332 = vmatpush1.bf16.msra.mxu0 %v2315
    %3333 = vmatprep.subr.bf16.mxu0 %v2320
    %3334 = vmatpush1.bf16.msra.mxu0 %v2319
    %3335 = vmatprep.subr.bf16.mxu0 %v2324
    %3336 = vmatpush1.bf16.msra.mxu0 %v2323
    %3337 = vmatprep.subr.bf16.mxu0 %v2328
    %3338 = vmatpush1.bf16.msra.mxu0 %v2327
    %3339 = vmatprep.subr.bf16.mxu0 %v2332
    %3340 = vmatpush1.bf16.msra.mxu0 %v2331
    %3341 = vmatprep.subr.bf16.mxu0 %v2336
    %3342 = vmatpush1.bf16.msra.mxu0 %v2335
    %3343 = vmatprep.subr.bf16.mxu0 %v2340
    %3344 = vmatpush1.bf16.msra.mxu0 %v2339
    %3345 = vmatprep.subr.bf16.mxu0 %v2344
    %3346 = vmatpush1.bf16.msra.mxu0 %v2343
    %3347 = vmatprep.subr.bf16.mxu0 %v2348
    %3348 = vmatpush1.bf16.msra.mxu0 %v2347
    %3349 = vmatprep.subr.bf16.mxu0 %v2352
    %3350 = vmatpush1.bf16.msra.mxu0 %v2351
    %3351 = vmatprep.subr.bf16.mxu0 %v2356
    %3352 = vmatpush1.bf16.msra.mxu0 %v2355
    %3353 = vmatprep.subr.bf16.mxu0 %v2360
    %3354 = vmatpush1.bf16.msra.mxu0 %v2359
    %3355 = vmatprep.mubr.bf16.mxu0 %v214
    %3356 = vmatmul.mubr.bf16.gmra.mrb[0].mxu0 %v213
    %v3357 = vpop.f32.mrb[0].mxu0
    %v3358 = vadd.f32 %v746, %v3357
    %v3359 = vpop.f32.mrb[0].mxu0
    %v3360 = vadd.f32 %v750, %v3359
    %v3361 = vpop.f32.mrb[0].mxu0
    %v3362 = vadd.f32 %v746, %v3361
    %v3363 = vpop.f32.mrb[0].mxu0
    %v3364 = vadd.f32 %v750, %v3363
    %3365 = vdwg.mxu0
    %3366 = vmatprep.subr.bf16.mxu0 %v2364
    %3367 = vmatpush1.bf16.msra.mxu0 %v2363
    %3368 = vmatprep.subr.bf16.mxu0 %v2368
    %3369 = vmatpush1.bf16.msra.mxu0 %v2367
    %3370 = vmatprep.subr.bf16.mxu0 %v2372
    %3371 = vmatpush1.bf16.msra.mxu0 %v2371
    %3372 = vmatprep.subr.bf16.mxu0 %v2376
    %3373 = vmatpush1.bf16.msra.mxu0 %v2375
    %3374 = vmatprep.subr.bf16.mxu0 %v2380
    %3375 = vmatpush1.bf16.msra.mxu0 %v2379
    %3376 = vmatprep.subr.bf16.mxu0 %v2384
    %3377 = vmatpush1.bf16.msra.mxu0 %v2383
    %3378 = vmatprep.subr.bf16.mxu0 %v2388
    %3379 = vmatpush1.bf16.msra.mxu0 %v2387
    %3380 = vmatprep.subr.bf16.mxu0 %v2392
    %3381 = vmatpush1.bf16.msra.mxu0 %v2391
    %3382 = vmatprep.subr.bf16.mxu0 %v2396
    %3383 = vmatpush1.bf16.msra.mxu0 %v2395
    %3384 = vmatprep.subr.bf16.mxu0 %v2400
    %3385 = vmatpush1.bf16.msra.mxu0 %v2399
    %3386 = vmatprep.subr.bf16.mxu0 %v2404
    %3387 = vmatpush1.bf16.msra.mxu0 %v2403
    %3388 = vmatprep.subr.bf16.mxu0 %v2408
    %3389 = vmatpush1.bf16.msra.mxu0 %v2407
    %3390 = vmatprep.subr.bf16.mxu0 %v2412
    %3391 = vmatpush1.bf16.msra.mxu0 %v2411
    %3392 = vmatprep.subr.bf16.mxu0 %v2416
    %3393 = vmatpush1.bf16.msra.mxu0 %v2415
    %3394 = vmatprep.subr.bf16.mxu0 %v2420
    %3395 = vmatpush1.bf16.msra.mxu0 %v2419
    %3396 = vmatprep.subr.bf16.mxu0 %v2424
    %3397 = vmatpush1.bf16.msra.mxu0 %v2423
    %3398 = vmatprep.mubr.bf16.mxu0 %v216
    %3399 = vmatmul.mubr.bf16.gmra.mrb[0].mxu0 %v215
    %v3400 = vpop.f32.mrb[0].mxu0
    %v3401 = vadd.f32 %v3358, %v3400
    %v3402 = vpop.f32.mrb[0].mxu0
    %v3403 = vadd.f32 %v3360, %v3402
    %v3404 = vpop.f32.mrb[0].mxu0
    %v3405 = vadd.f32 %v3362, %v3404
    %v3406 = vpop.f32.mrb[0].mxu0
    %v3407 = vadd.f32 %v3364, %v3406
    %3408 = vdwg.mxu0
    %3409 = vmatprep.subr.bf16.mxu0 %v2428
    %3410 = vmatpush1.bf16.msra.mxu0 %v2427
    %3411 = vmatprep.subr.bf16.mxu0 %v2432
    %3412 = vmatpush1.bf16.msra.mxu0 %v2431
    %3413 = vmatprep.subr.bf16.mxu0 %v2436
    %3414 = vmatpush1.bf16.msra.mxu0 %v2435
    %3415 = vmatprep.subr.bf16.mxu0 %v2440
    %3416 = vmatpush1.bf16.msra.mxu0 %v2439
    %3417 = vmatprep.subr.bf16.mxu0 %v2444
    %3418 = vmatpush1.bf16.msra.mxu0 %v2443
    %3419 = vmatprep.subr.bf16.mxu0 %v2448
    %3420 = vmatpush1.bf16.msra.mxu0 %v2447
    %3421 = vmatprep.subr.bf16.mxu0 %v2452
    %3422 = vmatpush1.bf16.msra.mxu0 %v2451
    %3423 = vmatprep.subr.bf16.mxu0 %v2456
    %3424 = vmatpush1.bf16.msra.mxu0 %v2455
    %3425 = vmatprep.subr.bf16.mxu0 %v2460
    %3426 = vmatpush1.bf16.msra.mxu0 %v2459
    %3427 = vmatprep.subr.bf16.mxu0 %v2464
    %3428 = vmatpush1.bf16.msra.mxu0 %v2463
    %3429 = vmatprep.subr.bf16.mxu0 %v2468
    %3430 = vmatpush1.bf16.msra.mxu0 %v2467
    %3431 = vmatprep.subr.bf16.mxu0 %v2472
    %3432 = vmatpush1.bf16.msra.mxu0 %v2471
    %3433 = vmatprep.subr.bf16.mxu0 %v2476
    %3434 = vmatpush1.bf16.msra.mxu0 %v2475
    %3435 = vmatprep.subr.bf16.mxu0 %v2480
    %3436 = vmatpush1.bf16.msra.mxu0 %v2479
    %3437 = vmatprep.subr.bf16.mxu0 %v2484
    %3438 = vmatpush1.bf16.msra.mxu0 %v2483
    %3439 = vmatprep.subr.bf16.mxu0 %v2488
    %3440 = vmatpush1.bf16.msra.mxu0 %v2487
    %3441 = vmatprep.mubr.bf16.mxu0 %v218
    %3442 = vmatmul.mubr.bf16.gmra.mrb[0].mxu0 %v217
    %v3443 = vpop.f32.mrb[0].mxu0
    %v3444 = vadd.f32 %v3401, %v3443
    %v3445 = vpop.f32.mrb[0].mxu0
    %v3446 = vadd.f32 %v3403, %v3445
    %v3447 = vpop.f32.mrb[0].mxu0
    %v3448 = vadd.f32 %v3405, %v3447
    %v3449 = vpop.f32.mrb[0].mxu0
    %v3450 = vadd.f32 %v3407, %v3449
    %3451 = vdwg.mxu0
    %3452 = vmatprep.subr.bf16.mxu0 %v2492
    %3453 = vmatpush1.bf16.msra.mxu0 %v2491
    %3454 = vmatprep.subr.bf16.mxu0 %v2496
    %3455 = vmatpush1.bf16.msra.mxu0 %v2495
    %3456 = vmatprep.subr.bf16.mxu0 %v2500
    %3457 = vmatpush1.bf16.msra.mxu0 %v2499
    %3458 = vmatprep.subr.bf16.mxu0 %v2504
    %3459 = vmatpush1.bf16.msra.mxu0 %v2503
    %3460 = vmatprep.subr.bf16.mxu0 %v2508
    %3461 = vmatpush1.bf16.msra.mxu0 %v2507
    %3462 = vmatprep.subr.bf16.mxu0 %v2512
    %3463 = vmatpush1.bf16.msra.mxu0 %v2511
    %3464 = vmatprep.subr.bf16.mxu0 %v2516
    %3465 = vmatpush1.bf16.msra.mxu0 %v2515
    %3466 = vmatprep.subr.bf16.mxu0 %v2520
    %3467 = vmatpush1.bf16.msra.mxu0 %v2519
    %3468 = vmatprep.subr.bf16.mxu0 %v2524
    %3469 = vmatpush1.bf16.msra.mxu0 %v2523
    %3470 = vmatprep.subr.bf16.mxu0 %v2528
    %3471 = vmatpush1.bf16.msra.mxu0 %v2527
    %3472 = vmatprep.subr.bf16.mxu0 %v2532
    %3473 = vmatpush1.bf16.msra.mxu0 %v2531
    %3474 = vmatprep.subr.bf16.mxu0 %v2536
    %3475 = vmatpush1.bf16.msra.mxu0 %v2535
    %3476 = vmatprep.subr.bf16.mxu0 %v2540
    %3477 = vmatpush1.bf16.msra.mxu0 %v2539
    %3478 = vmatprep.subr.bf16.mxu0 %v2544
    %3479 = vmatpush1.bf16.msra.mxu0 %v2543
    %3480 = vmatprep.subr.bf16.mxu0 %v2548
    %3481 = vmatpush1.bf16.msra.mxu0 %v2547
    %3482 = vmatprep.subr.bf16.mxu0 %v2552
    %3483 = vmatpush1.bf16.msra.mxu0 %v2551
    %3484 = vmatprep.mubr.bf16.mxu0 %v220
    %3485 = vmatmul.mubr.bf16.gmra.mrb[0].mxu0 %v219
    %v3486 = vpop.f32.mrb[0].mxu0
    %v3487 = vadd.f32 %v3444, %v3486
    %v3488 = vpop.f32.mrb[0].mxu0
    %v3489 = vadd.f32 %v3446, %v3488
    %v3490 = vpop.f32.mrb[0].mxu0
    %v3491 = vadd.f32 %v3448, %v3490
    %v3492 = vpop.f32.mrb[0].mxu0
    %v3493 = vadd.f32 %v3450, %v3492
    %3494 = vdwg.mxu0
    %3495 = vmatprep.subr.bf16.mxu0 %v2556
    %3496 = vmatpush1.bf16.msra.mxu0 %v2555
    %3497 = vmatprep.subr.bf16.mxu0 %v2560
    %3498 = vmatpush1.bf16.msra.mxu0 %v2559
    %3499 = vmatprep.subr.bf16.mxu0 %v2564
    %3500 = vmatpush1.bf16.msra.mxu0 %v2563
    %3501 = vmatprep.subr.bf16.mxu0 %v2568
    %3502 = vmatpush1.bf16.msra.mxu0 %v2567
    %3503 = vmatprep.subr.bf16.mxu0 %v2572
    %3504 = vmatpush1.bf16.msra.mxu0 %v2571
    %3505 = vmatprep.subr.bf16.mxu0 %v2576
    %3506 = vmatpush1.bf16.msra.mxu0 %v2575
    %3507 = vmatprep.subr.bf16.mxu0 %v2580
    %3508 = vmatpush1.bf16.msra.mxu0 %v2579
    %3509 = vmatprep.subr.bf16.mxu0 %v2584
    %3510 = vmatpush1.bf16.msra.mxu0 %v2583
    %3511 = vmatprep.subr.bf16.mxu0 %v2588
    %3512 = vmatpush1.bf16.msra.mxu0 %v2587
    %3513 = vmatprep.subr.bf16.mxu0 %v2592
    %3514 = vmatpush1.bf16.msra.mxu0 %v2591
    %3515 = vmatprep.subr.bf16.mxu0 %v2596
    %3516 = vmatpush1.bf16.msra.mxu0 %v2595
    %3517 = vmatprep.subr.bf16.mxu0 %v2600
    %3518 = vmatpush1.bf16.msra.mxu0 %v2599
    %3519 = vmatprep.subr.bf16.mxu0 %v2604
    %3520 = vmatpush1.bf16.msra.mxu0 %v2603
    %3521 = vmatprep.subr.bf16.mxu0 %v2608
    %3522 = vmatpush1.bf16.msra.mxu0 %v2607
    %3523 = vmatprep.subr.bf16.mxu0 %v2612
    %3524 = vmatpush1.bf16.msra.mxu0 %v2611
    %3525 = vmatprep.subr.bf16.mxu0 %v2616
    %3526 = vmatpush1.bf16.msra.mxu0 %v2615
    %3527 = vmatprep.mubr.bf16.mxu0 %v222
    %3528 = vmatmul.mubr.bf16.gmra.mrb[0].mxu0 %v221
    %v3529 = vpop.f32.mrb[0].mxu0
    %v3530 = vadd.f32 %v3487, %v3529
    %v3531 = vpop.f32.mrb[0].mxu0
    %v3532 = vadd.f32 %v3489, %v3531
    %v3533 = vpop.f32.mrb[0].mxu0
    %v3534 = vadd.f32 %v3491, %v3533
    %v3535 = vpop.f32.mrb[0].mxu0
    %v3536 = vadd.f32 %v3493, %v3535
    %3537 = vdwg.mxu0
    %3538 = vmatprep.subr.bf16.mxu0 %v2620
    %3539 = vmatpush1.bf16.msra.mxu0 %v2619
    %3540 = vmatprep.subr.bf16.mxu0 %v2624
    %3541 = vmatpush1.bf16.msra.mxu0 %v2623
    %3542 = vmatprep.subr.bf16.mxu0 %v2628
    %3543 = vmatpush1.bf16.msra.mxu0 %v2627
    %3544 = vmatprep.subr.bf16.mxu0 %v2632
    %3545 = vmatpush1.bf16.msra.mxu0 %v2631
    %3546 = vmatprep.subr.bf16.mxu0 %v2636
    %3547 = vmatpush1.bf16.msra.mxu0 %v2635
    %3548 = vmatprep.subr.bf16.mxu0 %v2640
    %3549 = vmatpush1.bf16.msra.mxu0 %v2639
    %3550 = vmatprep.subr.bf16.mxu0 %v2644
    %3551 = vmatpush1.bf16.msra.mxu0 %v2643
    %3552 = vmatprep.subr.bf16.mxu0 %v2648
    %3553 = vmatpush1.bf16.msra.mxu0 %v2647
    %3554 = vmatprep.subr.bf16.mxu0 %v2652
    %3555 = vmatpush1.bf16.msra.mxu0 %v2651
    %3556 = vmatprep.subr.bf16.mxu0 %v2656
    %3557 = vmatpush1.bf16.msra.mxu0 %v2655
    %3558 = vmatprep.subr.bf16.mxu0 %v2660
    %3559 = vmatpush1.bf16.msra.mxu0 %v2659
    %3560 = vmatprep.subr.bf16.mxu0 %v2664
    %3561 = vmatpush1.bf16.msra.mxu0 %v2663
    %3562 = vmatprep.subr.bf16.mxu0 %v2668
    %3563 = vmatpush1.bf16.msra.mxu0 %v2667
    %3564 = vmatprep.subr.bf16.mxu0 %v2672
    %3565 = vmatpush1.bf16.msra.mxu0 %v2671
    %3566 = vmatprep.subr.bf16.mxu0 %v2676
    %3567 = vmatpush1.bf16.msra.mxu0 %v2675
    %3568 = vmatprep.subr.bf16.mxu0 %v2680
    %3569 = vmatpush1.bf16.msra.mxu0 %v2679
    %3570 = vmatprep.mubr.bf16.mxu0 %v224
    %3571 = vmatmul.mubr.bf16.gmra.mrb[0].mxu0 %v223
    %v3572 = vpop.f32.mrb[0].mxu0
    %v3573 = vadd.f32 %v3530, %v3572
    %v3574 = vpop.f32.mrb[0].mxu0
    %v3575 = vadd.f32 %v3532, %v3574
    %v3576 = vpop.f32.mrb[0].mxu0
    %v3577 = vadd.f32 %v3534, %v3576
    %v3578 = vpop.f32.mrb[0].mxu0
    %v3579 = vadd.f32 %v3536, %v3578
    %3580 = vdwg.mxu0
    %3581 = vmatprep.subr.bf16.mxu0 %v2684
    %3582 = vmatpush1.bf16.msra.mxu0 %v2683
    %3583 = vmatprep.subr.bf16.mxu0 %v2688
    %3584 = vmatpush1.bf16.msra.mxu0 %v2687
    %3585 = vmatprep.subr.bf16.mxu0 %v2692
    %3586 = vmatpush1.bf16.msra.mxu0 %v2691
    %3587 = vmatprep.subr.bf16.mxu0 %v2696
    %3588 = vmatpush1.bf16.msra.mxu0 %v2695
    %3589 = vmatprep.subr.bf16.mxu0 %v2700
    %3590 = vmatpush1.bf16.msra.mxu0 %v2699
    %3591 = vmatprep.subr.bf16.mxu0 %v2704
    %3592 = vmatpush1.bf16.msra.mxu0 %v2703
    %3593 = vmatprep.subr.bf16.mxu0 %v2708
    %3594 = vmatpush1.bf16.msra.mxu0 %v2707
    %3595 = vmatprep.subr.bf16.mxu0 %v2712
    %3596 = vmatpush1.bf16.msra.mxu0 %v2711
    %3597 = vmatprep.subr.bf16.mxu0 %v2716
    %3598 = vmatpush1.bf16.msra.mxu0 %v2715
    %3599 = vmatprep.subr.bf16.mxu0 %v2720
    %3600 = vmatpush1.bf16.msra.mxu0 %v2719
    %3601 = vmatprep.subr.bf16.mxu0 %v2724
    %3602 = vmatpush1.bf16.msra.mxu0 %v2723
    %3603 = vmatprep.subr.bf16.mxu0 %v2728
    %3604 = vmatpush1.bf16.msra.mxu0 %v2727
    %3605 = vmatprep.subr.bf16.mxu0 %v2732
    %3606 = vmatpush1.bf16.msra.mxu0 %v2731
    %3607 = vmatprep.subr.bf16.mxu0 %v2736
    %3608 = vmatpush1.bf16.msra.mxu0 %v2735
    %3609 = vmatprep.subr.bf16.mxu0 %v2740
    %3610 = vmatpush1.bf16.msra.mxu0 %v2739
    %3611 = vmatprep.subr.bf16.mxu0 %v2744
    %3612 = vmatpush1.bf16.msra.mxu0 %v2743
    %3613 = vmatprep.mubr.bf16.mxu0 %v226
    %3614 = vmatmul.mubr.bf16.gmra.mrb[0].mxu0 %v225
    %v3615 = vpop.f32.mrb[0].mxu0
    %v3616 = vadd.f32 %v3573, %v3615
    %v3617 = vpop.f32.mrb[0].mxu0
    %v3618 = vadd.f32 %v3575, %v3617
    %v3619 = vpop.f32.mrb[0].mxu0
    %v3620 = vadd.f32 %v3577, %v3619
    %v3621 = vpop.f32.mrb[0].mxu0
    %v3622 = vadd.f32 %v3579, %v3621
    %3623 = vdwg.mxu0
    %3624 = vmatprep.subr.bf16.mxu0 %v2748
    %3625 = vmatpush1.bf16.msra.mxu0 %v2747
    %3626 = vmatprep.subr.bf16.mxu0 %v2752
    %3627 = vmatpush1.bf16.msra.mxu0 %v2751
    %3628 = vmatprep.subr.bf16.mxu0 %v2756
    %3629 = vmatpush1.bf16.msra.mxu0 %v2755
    %3630 = vmatprep.subr.bf16.mxu0 %v2760
    %3631 = vmatpush1.bf16.msra.mxu0 %v2759
    %3632 = vmatprep.subr.bf16.mxu0 %v2764
    %3633 = vmatpush1.bf16.msra.mxu0 %v2763
    %3634 = vmatprep.subr.bf16.mxu0 %v2768
    %3635 = vmatpush1.bf16.msra.mxu0 %v2767
    %3636 = vmatprep.subr.bf16.mxu0 %v2772
    %3637 = vmatpush1.bf16.msra.mxu0 %v2771
    %3638 = vmatprep.subr.bf16.mxu0 %v2776
    %3639 = vmatpush1.bf16.msra.mxu0 %v2775
    %3640 = vmatprep.subr.bf16.mxu0 %v2780
    %3641 = vmatpush1.bf16.msra.mxu0 %v2779
    %3642 = vmatprep.subr.bf16.mxu0 %v2784
    %3643 = vmatpush1.bf16.msra.mxu0 %v2783
    %3644 = vmatprep.subr.bf16.mxu0 %v2788
    %3645 = vmatpush1.bf16.msra.mxu0 %v2787
    %3646 = vmatprep.subr.bf16.mxu0 %v2792
    %3647 = vmatpush1.bf16.msra.mxu0 %v2791
    %3648 = vmatprep.subr.bf16.mxu0 %v2796
    %3649 = vmatpush1.bf16.msra.mxu0 %v2795
    %3650 = vmatprep.subr.bf16.mxu0 %v2800
    %3651 = vmatpush1.bf16.msra.mxu0 %v2799
    %3652 = vmatprep.subr.bf16.mxu0 %v2804
    %3653 = vmatpush1.bf16.msra.mxu0 %v2803
    %3654 = vmatprep.subr.bf16.mxu0 %v2808
    %3655 = vmatpush1.bf16.msra.mxu0 %v2807
    %3656 = vmatprep.mubr.bf16.mxu0 %v228
    %3657 = vmatmul.mubr.bf16.gmra.mrb[0].mxu0 %v227
    %v3658 = vpop.f32.mrb[0].mxu0
    %v3659 = vadd.f32 %v3616, %v3658
    %v3660 = vpop.f32.mrb[0].mxu0
    %v3661 = vadd.f32 %v3618, %v3660
    %v3662 = vpop.f32.mrb[0].mxu0
    %v3663 = vadd.f32 %v3620, %v3662
    %v3664 = vpop.f32.mrb[0].mxu0
    %v3665 = vadd.f32 %v3622, %v3664
    %3666 = vdwg.mxu0
    %3667 = vmatprep.subr.bf16.mxu0 %v2302
    %3668 = vmatpush1.bf16.msra.mxu0 %v2301
    %3669 = vmatprep.subr.bf16.mxu0 %v2306
    %3670 = vmatpush1.bf16.msra.mxu0 %v2305
    %3671 = vmatprep.subr.bf16.mxu0 %v2310
    %3672 = vmatpush1.bf16.msra.mxu0 %v2309
    %3673 = vmatprep.subr.bf16.mxu0 %v2314
    %3674 = vmatpush1.bf16.msra.mxu0 %v2313
    %3675 = vmatprep.subr.bf16.mxu0 %v2318
    %3676 = vmatpush1.bf16.msra.mxu0 %v2317
    %3677 = vmatprep.subr.bf16.mxu0 %v2322
    %3678 = vmatpush1.bf16.msra.mxu0 %v2321
    %3679 = vmatprep.subr.bf16.mxu0 %v2326
    %3680 = vmatpush1.bf16.msra.mxu0 %v2325
    %3681 = vmatprep.subr.bf16.mxu0 %v2330
    %3682 = vmatpush1.bf16.msra.mxu0 %v2329
    %3683 = vmatprep.subr.bf16.mxu0 %v2334
    %3684 = vmatpush1.bf16.msra.mxu0 %v2333
    %3685 = vmatprep.subr.bf16.mxu0 %v2338
    %3686 = vmatpush1.bf16.msra.mxu0 %v2337
    %3687 = vmatprep.subr.bf16.mxu0 %v2342
    %3688 = vmatpush1.bf16.msra.mxu0 %v2341
    %3689 = vmatprep.subr.bf16.mxu0 %v2346
    %3690 = vmatpush1.bf16.msra.mxu0 %v2345
    %3691 = vmatprep.subr.bf16.mxu0 %v2350
    %3692 = vmatpush1.bf16.msra.mxu0 %v2349
    %3693 = vmatprep.subr.bf16.mxu0 %v2354
    %3694 = vmatpush1.bf16.msra.mxu0 %v2353
    %3695 = vmatprep.subr.bf16.mxu0 %v2358
    %3696 = vmatpush1.bf16.msra.mxu0 %v2357
    %3697 = vmatprep.subr.bf16.mxu0 %v2362
    %3698 = vmatpush1.bf16.msra.mxu0 %v2361
    %3699 = vmatprep.mubr.bf16.mxu0 %v214
    %3700 = vmatmul.mubr.bf16.gmra.mrb[0].mxu0 %v213
    %v3701 = vpop.f32.mrb[0].mxu0
    %v3702 = vadd.f32 %v754, %v3701
    %v3703 = vpop.f32.mrb[0].mxu0
    %v3704 = vadd.f32 %v758, %v3703
    %v3705 = vpop.f32.mrb[0].mxu0
    %v3706 = vadd.f32 %v754, %v3705
    %v3707 = vpop.f32.mrb[0].mxu0
    %v3708 = vadd.f32 %v758, %v3707
    %3709 = vdwg.mxu0
    %3710 = vmatprep.subr.bf16.mxu0 %v2366
    %3711 = vmatpush1.bf16.msra.mxu0 %v2365
    %3712 = vmatprep.subr.bf16.mxu0 %v2370
    %3713 = vmatpush1.bf16.msra.mxu0 %v2369
    %3714 = vmatprep.subr.bf16.mxu0 %v2374
    %3715 = vmatpush1.bf16.msra.mxu0 %v2373
    %3716 = vmatprep.subr.bf16.mxu0 %v2378
    %3717 = vmatpush1.bf16.msra.mxu0 %v2377
    %3718 = vmatprep.subr.bf16.mxu0 %v2382
    %3719 = vmatpush1.bf16.msra.mxu0 %v2381
    %3720 = vmatprep.subr.bf16.mxu0 %v2386
    %3721 = vmatpush1.bf16.msra.mxu0 %v2385
    %3722 = vmatprep.subr.bf16.mxu0 %v2390
    %3723 = vmatpush1.bf16.msra.mxu0 %v2389
    %3724 = vmatprep.subr.bf16.mxu0 %v2394
    %3725 = vmatpush1.bf16.msra.mxu0 %v2393
    %3726 = vmatprep.subr.bf16.mxu0 %v2398
    %3727 = vmatpush1.bf16.msra.mxu0 %v2397
    %3728 = vmatprep.subr.bf16.mxu0 %v2402
    %3729 = vmatpush1.bf16.msra.mxu0 %v2401
    %3730 = vmatprep.subr.bf16.mxu0 %v2406
    %3731 = vmatpush1.bf16.msra.mxu0 %v2405
    %3732 = vmatprep.subr.bf16.mxu0 %v2410
    %3733 = vmatpush1.bf16.msra.mxu0 %v2409
    %3734 = vmatprep.subr.bf16.mxu0 %v2414
    %3735 = vmatpush1.bf16.msra.mxu0 %v2413
    %3736 = vmatprep.subr.bf16.mxu0 %v2418
    %3737 = vmatpush1.bf16.msra.mxu0 %v2417
    %3738 = vmatprep.subr.bf16.mxu0 %v2422
    %3739 = vmatpush1.bf16.msra.mxu0 %v2421
    %3740 = vmatprep.subr.bf16.mxu0 %v2426
    %3741 = vmatpush1.bf16.msra.mxu0 %v2425
    %3742 = vmatprep.mubr.bf16.mxu0 %v216
    %3743 = vmatmul.mubr.bf16.gmra.mrb[0].mxu0 %v215
    %v3744 = vpop.f32.mrb[0].mxu0
    %v3745 = vadd.f32 %v3702, %v3744
    %v3746 = vpop.f32.mrb[0].mxu0
    %v3747 = vadd.f32 %v3704, %v3746
    %v3748 = vpop.f32.mrb[0].mxu0
    %v3749 = vadd.f32 %v3706, %v3748
    %v3750 = vpop.f32.mrb[0].mxu0
    %v3751 = vadd.f32 %v3708, %v3750
    %3752 = vdwg.mxu0
    %3753 = vmatprep.subr.bf16.mxu0 %v2430
    %3754 = vmatpush1.bf16.msra.mxu0 %v2429
    %3755 = vmatprep.subr.bf16.mxu0 %v2434
    %3756 = vmatpush1.bf16.msra.mxu0 %v2433
    %3757 = vmatprep.subr.bf16.mxu0 %v2438
    %3758 = vmatpush1.bf16.msra.mxu0 %v2437
    %3759 = vmatprep.subr.bf16.mxu0 %v2442
    %3760 = vmatpush1.bf16.msra.mxu0 %v2441
    %3761 = vmatprep.subr.bf16.mxu0 %v2446
    %3762 = vmatpush1.bf16.msra.mxu0 %v2445
    %3763 = vmatprep.subr.bf16.mxu0 %v2450
    %3764 = vmatpush1.bf16.msra.mxu0 %v2449
    %3765 = vmatprep.subr.bf16.mxu0 %v2454
    %3766 = vmatpush1.bf16.msra.mxu0 %v2453
    %3767 = vmatprep.subr.bf16.mxu0 %v2458
    %3768 = vmatpush1.bf16.msra.mxu0 %v2457
    %3769 = vmatprep.subr.bf16.mxu0 %v2462
    %3770 = vmatpush1.bf16.msra.mxu0 %v2461
    %3771 = vmatprep.subr.bf16.mxu0 %v2466
    %3772 = vmatpush1.bf16.msra.mxu0 %v2465
    %3773 = vmatprep.subr.bf16.mxu0 %v2470
    %3774 = vmatpush1.bf16.msra.mxu0 %v2469
    %3775 = vmatprep.subr.bf16.mxu0 %v2474
    %3776 = vmatpush1.bf16.msra.mxu0 %v2473
    %3777 = vmatprep.subr.bf16.mxu0 %v2478
    %3778 = vmatpush1.bf16.msra.mxu0 %v2477
    %3779 = vmatprep.subr.bf16.mxu0 %v2482
    %3780 = vmatpush1.bf16.msra.mxu0 %v2481
    %3781 = vmatprep.subr.bf16.mxu0 %v2486
    %3782 = vmatpush1.bf16.msra.mxu0 %v2485
    %3783 = vmatprep.subr.bf16.mxu0 %v2490
    %3784 = vmatpush1.bf16.msra.mxu0 %v2489
    %3785 = vmatprep.mubr.bf16.mxu0 %v218
    %3786 = vmatmul.mubr.bf16.gmra.mrb[0].mxu0 %v217
    %v3787 = vpop.f32.mrb[0].mxu0
    %v3788 = vadd.f32 %v3745, %v3787
    %v3789 = vpop.f32.mrb[0].mxu0
    %v3790 = vadd.f32 %v3747, %v3789
    %v3791 = vpop.f32.mrb[0].mxu0
    %v3792 = vadd.f32 %v3749, %v3791
    %v3793 = vpop.f32.mrb[0].mxu0
    %v3794 = vadd.f32 %v3751, %v3793
    %3795 = vdwg.mxu0
    %3796 = vmatprep.subr.bf16.mxu0 %v2494
    %3797 = vmatpush1.bf16.msra.mxu0 %v2493
    %3798 = vmatprep.subr.bf16.mxu0 %v2498
    %3799 = vmatpush1.bf16.msra.mxu0 %v2497
    %3800 = vmatprep.subr.bf16.mxu0 %v2502
    %3801 = vmatpush1.bf16.msra.mxu0 %v2501
    %3802 = vmatprep.subr.bf16.mxu0 %v2506
    %3803 = vmatpush1.bf16.msra.mxu0 %v2505
    %3804 = vmatprep.subr.bf16.mxu0 %v2510
    %3805 = vmatpush1.bf16.msra.mxu0 %v2509
    %3806 = vmatprep.subr.bf16.mxu0 %v2514
    %3807 = vmatpush1.bf16.msra.mxu0 %v2513
    %3808 = vmatprep.subr.bf16.mxu0 %v2518
    %3809 = vmatpush1.bf16.msra.mxu0 %v2517
    %3810 = vmatprep.subr.bf16.mxu0 %v2522
    %3811 = vmatpush1.bf16.msra.mxu0 %v2521
    %3812 = vmatprep.subr.bf16.mxu0 %v2526
    %3813 = vmatpush1.bf16.msra.mxu0 %v2525
    %3814 = vmatprep.subr.bf16.mxu0 %v2530
    %3815 = vmatpush1.bf16.msra.mxu0 %v2529
    %3816 = vmatprep.subr.bf16.mxu0 %v2534
    %3817 = vmatpush1.bf16.msra.mxu0 %v2533
    %3818 = vmatprep.subr.bf16.mxu0 %v2538
    %3819 = vmatpush1.bf16.msra.mxu0 %v2537
    %3820 = vmatprep.subr.bf16.mxu0 %v2542
    %3821 = vmatpush1.bf16.msra.mxu0 %v2541
    %3822 = vmatprep.subr.bf16.mxu0 %v2546
    %3823 = vmatpush1.bf16.msra.mxu0 %v2545
    %3824 = vmatprep.subr.bf16.mxu0 %v2550
    %3825 = vmatpush1.bf16.msra.mxu0 %v2549
    %3826 = vmatprep.subr.bf16.mxu0 %v2554
    %3827 = vmatpush1.bf16.msra.mxu0 %v2553
    %3828 = vmatprep.mubr.bf16.mxu0 %v220
    %3829 = vmatmul.mubr.bf16.gmra.mrb[0].mxu0 %v219
    %v3830 = vpop.f32.mrb[0].mxu0
    %v3831 = vadd.f32 %v3788, %v3830
    %v3832 = vpop.f32.mrb[0].mxu0
    %v3833 = vadd.f32 %v3790, %v3832
    %v3834 = vpop.f32.mrb[0].mxu0
    %v3835 = vadd.f32 %v3792, %v3834
    %v3836 = vpop.f32.mrb[0].mxu0
    %v3837 = vadd.f32 %v3794, %v3836
    %3838 = vdwg.mxu0
    %3839 = vmatprep.subr.bf16.mxu0 %v2558
    %3840 = vmatpush1.bf16.msra.mxu0 %v2557
    %3841 = vmatprep.subr.bf16.mxu0 %v2562
    %3842 = vmatpush1.bf16.msra.mxu0 %v2561
    %3843 = vmatprep.subr.bf16.mxu0 %v2566
    %3844 = vmatpush1.bf16.msra.mxu0 %v2565
    %3845 = vmatprep.subr.bf16.mxu0 %v2570
    %3846 = vmatpush1.bf16.msra.mxu0 %v2569
    %3847 = vmatprep.subr.bf16.mxu0 %v2574
    %3848 = vmatpush1.bf16.msra.mxu0 %v2573
    %3849 = vmatprep.subr.bf16.mxu0 %v2578
    %3850 = vmatpush1.bf16.msra.mxu0 %v2577
    %3851 = vmatprep.subr.bf16.mxu0 %v2582
    %3852 = vmatpush1.bf16.msra.mxu0 %v2581
    %3853 = vmatprep.subr.bf16.mxu0 %v2586
    %3854 = vmatpush1.bf16.msra.mxu0 %v2585
    %3855 = vmatprep.subr.bf16.mxu0 %v2590
    %3856 = vmatpush1.bf16.msra.mxu0 %v2589
    %3857 = vmatprep.subr.bf16.mxu0 %v2594
    %3858 = vmatpush1.bf16.msra.mxu0 %v2593
    %3859 = vmatprep.subr.bf16.mxu0 %v2598
    %3860 = vmatpush1.bf16.msra.mxu0 %v2597
    %3861 = vmatprep.subr.bf16.mxu0 %v2602
    %3862 = vmatpush1.bf16.msra.mxu0 %v2601
    %3863 = vmatprep.subr.bf16.mxu0 %v2606
    %3864 = vmatpush1.bf16.msra.mxu0 %v2605
    %3865 = vmatprep.subr.bf16.mxu0 %v2610
    %3866 = vmatpush1.bf16.msra.mxu0 %v2609
    %3867 = vmatprep.subr.bf16.mxu0 %v2614
    %3868 = vmatpush1.bf16.msra.mxu0 %v2613
    %3869 = vmatprep.subr.bf16.mxu0 %v2618
    %3870 = vmatpush1.bf16.msra.mxu0 %v2617
    %3871 = vmatprep.mubr.bf16.mxu0 %v222
    %3872 = vmatmul.mubr.bf16.gmra.mrb[0].mxu0 %v221
    %v3873 = vpop.f32.mrb[0].mxu0
    %v3874 = vadd.f32 %v3831, %v3873
    %v3875 = vpop.f32.mrb[0].mxu0
    %v3876 = vadd.f32 %v3833, %v3875
    %v3877 = vpop.f32.mrb[0].mxu0
    %v3878 = vadd.f32 %v3835, %v3877
    %v3879 = vpop.f32.mrb[0].mxu0
    %v3880 = vadd.f32 %v3837, %v3879
    %3881 = vdwg.mxu0
    %3882 = vmatprep.subr.bf16.mxu0 %v2622
    %3883 = vmatpush1.bf16.msra.mxu0 %v2621
    %3884 = vmatprep.subr.bf16.mxu0 %v2626
    %3885 = vmatpush1.bf16.msra.mxu0 %v2625
    %3886 = vmatprep.subr.bf16.mxu0 %v2630
    %3887 = vmatpush1.bf16.msra.mxu0 %v2629
    %3888 = vmatprep.subr.bf16.mxu0 %v2634
    %3889 = vmatpush1.bf16.msra.mxu0 %v2633
    %3890 = vmatprep.subr.bf16.mxu0 %v2638
    %3891 = vmatpush1.bf16.msra.mxu0 %v2637
    %3892 = vmatprep.subr.bf16.mxu0 %v2642
    %3893 = vmatpush1.bf16.msra.mxu0 %v2641
    %3894 = vmatprep.subr.bf16.mxu0 %v2646
    %3895 = vmatpush1.bf16.msra.mxu0 %v2645
    %3896 = vmatprep.subr.bf16.mxu0 %v2650
    %3897 = vmatpush1.bf16.msra.mxu0 %v2649
    %3898 = vmatprep.subr.bf16.mxu0 %v2654
    %3899 = vmatpush1.bf16.msra.mxu0 %v2653
    %3900 = vmatprep.subr.bf16.mxu0 %v2658
    %3901 = vmatpush1.bf16.msra.mxu0 %v2657
    %3902 = vmatprep.subr.bf16.mxu0 %v2662
    %3903 = vmatpush1.bf16.msra.mxu0 %v2661
    %3904 = vmatprep.subr.bf16.mxu0 %v2666
    %3905 = vmatpush1.bf16.msra.mxu0 %v2665
    %3906 = vmatprep.subr.bf16.mxu0 %v2670
    %3907 = vmatpush1.bf16.msra.mxu0 %v2669
    %3908 = vmatprep.subr.bf16.mxu0 %v2674
    %3909 = vmatpush1.bf16.msra.mxu0 %v2673
    %3910 = vmatprep.subr.bf16.mxu0 %v2678
    %3911 = vmatpush1.bf16.msra.mxu0 %v2677
    %3912 = vmatprep.subr.bf16.mxu0 %v2682
    %3913 = vmatpush1.bf16.msra.mxu0 %v2681
    %3914 = vmatprep.mubr.bf16.mxu0 %v224
    %3915 = vmatmul.mubr.bf16.gmra.mrb[0].mxu0 %v223
    %v3916 = vpop.f32.mrb[0].mxu0
    %v3917 = vadd.f32 %v3874, %v3916
    %v3918 = vpop.f32.mrb[0].mxu0
    %v3919 = vadd.f32 %v3876, %v3918
    %v3920 = vpop.f32.mrb[0].mxu0
    %v3921 = vadd.f32 %v3878, %v3920
    %v3922 = vpop.f32.mrb[0].mxu0
    %v3923 = vadd.f32 %v3880, %v3922
    %3924 = vdwg.mxu0
    %3925 = vmatprep.subr.bf16.mxu0 %v2686
    %3926 = vmatpush1.bf16.msra.mxu0 %v2685
    %3927 = vmatprep.subr.bf16.mxu0 %v2690
    %3928 = vmatpush1.bf16.msra.mxu0 %v2689
    %3929 = vmatprep.subr.bf16.mxu0 %v2694
    %3930 = vmatpush1.bf16.msra.mxu0 %v2693
    %3931 = vmatprep.subr.bf16.mxu0 %v2698
    %3932 = vmatpush1.bf16.msra.mxu0 %v2697
    %3933 = vmatprep.subr.bf16.mxu0 %v2702
    %3934 = vmatpush1.bf16.msra.mxu0 %v2701
    %3935 = vmatprep.subr.bf16.mxu0 %v2706
    %3936 = vmatpush1.bf16.msra.mxu0 %v2705
    %3937 = vmatprep.subr.bf16.mxu0 %v2710
    %3938 = vmatpush1.bf16.msra.mxu0 %v2709
    %3939 = vmatprep.subr.bf16.mxu0 %v2714
    %3940 = vmatpush1.bf16.msra.mxu0 %v2713
    %3941 = vmatprep.subr.bf16.mxu0 %v2718
    %3942 = vmatpush1.bf16.msra.mxu0 %v2717
    %3943 = vmatprep.subr.bf16.mxu0 %v2722
    %3944 = vmatpush1.bf16.msra.mxu0 %v2721
    %3945 = vmatprep.subr.bf16.mxu0 %v2726
    %3946 = vmatpush1.bf16.msra.mxu0 %v2725
    %3947 = vmatprep.subr.bf16.mxu0 %v2730
    %3948 = vmatpush1.bf16.msra.mxu0 %v2729
    %3949 = vmatprep.subr.bf16.mxu0 %v2734
    %3950 = vmatpush1.bf16.msra.mxu0 %v2733
    %3951 = vmatprep.subr.bf16.mxu0 %v2738
    %3952 = vmatpush1.bf16.msra.mxu0 %v2737
    %3953 = vmatprep.subr.bf16.mxu0 %v2742
    %3954 = vmatpush1.bf16.msra.mxu0 %v2741
    %3955 = vmatprep.subr.bf16.mxu0 %v2746
    %3956 = vmatpush1.bf16.msra.mxu0 %v2745
    %3957 = vmatprep.mubr.bf16.mxu0 %v226
    %3958 = vmatmul.mubr.bf16.gmra.mrb[0].mxu0 %v225
    %v3959 = vpop.f32.mrb[0].mxu0
    %v3960 = vadd.f32 %v3917, %v3959
    %v3961 = vpop.f32.mrb[0].mxu0
    %v3962 = vadd.f32 %v3919, %v3961
    %v3963 = vpop.f32.mrb[0].mxu0
    %v3964 = vadd.f32 %v3921, %v3963
    %v3965 = vpop.f32.mrb[0].mxu0
    %v3966 = vadd.f32 %v3923, %v3965
    %3967 = vdwg.mxu0
    %3968 = vmatprep.subr.bf16.mxu0 %v2750
    %3969 = vmatpush1.bf16.msra.mxu0 %v2749
    %3970 = vmatprep.subr.bf16.mxu0 %v2754
    %3971 = vmatpush1.bf16.msra.mxu0 %v2753
    %3972 = vmatprep.subr.bf16.mxu0 %v2758
    %3973 = vmatpush1.bf16.msra.mxu0 %v2757
    %3974 = vmatprep.subr.bf16.mxu0 %v2762
    %3975 = vmatpush1.bf16.msra.mxu0 %v2761
    %3976 = vmatprep.subr.bf16.mxu0 %v2766
    %3977 = vmatpush1.bf16.msra.mxu0 %v2765
    %3978 = vmatprep.subr.bf16.mxu0 %v2770
    %3979 = vmatpush1.bf16.msra.mxu0 %v2769
    %3980 = vmatprep.subr.bf16.mxu0 %v2774
    %3981 = vmatpush1.bf16.msra.mxu0 %v2773
    %3982 = vmatprep.subr.bf16.mxu0 %v2778
    %3983 = vmatpush1.bf16.msra.mxu0 %v2777
    %3984 = vmatprep.subr.bf16.mxu0 %v2782
    %3985 = vmatpush1.bf16.msra.mxu0 %v2781
    %3986 = vmatprep.subr.bf16.mxu0 %v2786
    %3987 = vmatpush1.bf16.msra.mxu0 %v2785
    %3988 = vmatprep.subr.bf16.mxu0 %v2790
    %3989 = vmatpush1.bf16.msra.mxu0 %v2789
    %3990 = vmatprep.subr.bf16.mxu0 %v2794
    %3991 = vmatpush1.bf16.msra.mxu0 %v2793
    %3992 = vmatprep.subr.bf16.mxu0 %v2798
    %3993 = vmatpush1.bf16.msra.mxu0 %v2797
    %3994 = vmatprep.subr.bf16.mxu0 %v2802
    %3995 = vmatpush1.bf16.msra.mxu0 %v2801
    %3996 = vmatprep.subr.bf16.mxu0 %v2806
    %3997 = vmatpush1.bf16.msra.mxu0 %v2805
    %3998 = vmatprep.subr.bf16.mxu0 %v2810
    %3999 = vmatpush1.bf16.msra.mxu0 %v2809
    %4000 = vmatprep.mubr.bf16.mxu0 %v228
    %4001 = vmatmul.mubr.bf16.gmra.mrb[0].mxu0 %v227
    %v4002 = vpop.f32.mrb[0].mxu0
    %v4003 = vadd.f32 %v3960, %v4002
    %v4004 = vpop.f32.mrb[0].mxu0
    %v4005 = vadd.f32 %v3962, %v4004
    %v4006 = vpop.f32.mrb[0].mxu0
    %v4007 = vadd.f32 %v3964, %v4006
    %v4008 = vpop.f32.mrb[0].mxu0
    %v4009 = vadd.f32 %v3966, %v4008
    %4010 = vdwg.mxu0
    %v4011 = vmax.f32 %v3659, 0.0
    %v4012 = vmax.f32 %v3661, 0.0
    %v4013 = vmax.f32 %v4003, 0.0
    %v4014 = vmax.f32 %v4005, 0.0
    %v4015 = vmax.f32 %v3663, 0.0
    %v4016 = vmax.f32 %v3665, 0.0
    %v4017 = vmax.f32 %v4007, 0.0
    %v4018 = vmax.f32 %v4009, 0.0
    %v4019 = vpack.c.bf16 %v4015, %v4011
    %v4020 = vpack.c.bf16 %v4016, %v4012
    %v4021 = vpack.c.bf16 %v4017, %v4013
    %v4022 = vpack.c.bf16 %v4018, %v4014
    %v4023 = vld [vmem:[#allocation5] sm:$0xff]
    %v4024 = vld [vmem:[#allocation5 + $0x8] sm:$0xff]
    %v4025 = vld [vmem:[#allocation5 + $0x10] sm:$0xff]
    %v4026 = vld [vmem:[#allocation5 + $0x18] sm:$0xff]
    %v4027 = vld [vmem:[#allocation5 + $0x20] sm:$0xff]
    %v4028 = vld [vmem:[#allocation5 + $0x28] sm:$0xff]
    %v4029 = vld [vmem:[#allocation5 + $0x30] sm:$0xff]
    %v4030 = vld [vmem:[#allocation5 + $0x38] sm:$0xff]
    %v4031 = vld [vmem:[#allocation5 + $0x40] sm:$0xff]
    %v4032 = vld [vmem:[#allocation5 + $0x48] sm:$0xff]
    %v4033 = vld [vmem:[#allocation5 + $0x50] sm:$0xff]
    %v4034 = vld [vmem:[#allocation5 + $0x58] sm:$0xff]
    %v4035 = vld [vmem:[#allocation5 + $0x60] sm:$0xff]
    %v4036 = vld [vmem:[#allocation5 + $0x68] sm:$0xff]
    %v4037 = vld [vmem:[#allocation5 + $0x70] sm:$0xff]
    %v4038 = vld [vmem:[#allocation5 + $0x78] sm:$0xff]
    %v4039 = vld [vmem:[#allocation5 + $0x80] sm:$0xff]
    %v4040 = vld [vmem:[#allocation5 + $0x88] sm:$0xff]
    %v4041 = vld [vmem:[#allocation5 + $0x90] sm:$0xff]
    %v4042 = vld [vmem:[#allocation5 + $0x98] sm:$0xff]
    %v4043 = vld [vmem:[#allocation5 + $0xa0] sm:$0xff]
    %v4044 = vld [vmem:[#allocation5 + $0xa8] sm:$0xff]
    %v4045 = vld [vmem:[#allocation5 + $0xb0] sm:$0xff]
    %v4046 = vld [vmem:[#allocation5 + $0xb8] sm:$0xff]
    %v4047 = vld [vmem:[#allocation5 + $0xc0] sm:$0xff]
    %v4048 = vld [vmem:[#allocation5 + $0xc8] sm:$0xff]
    %v4049 = vld [vmem:[#allocation5 + $0xd0] sm:$0xff]
    %v4050 = vld [vmem:[#allocation5 + $0xd8] sm:$0xff]
    %v4051 = vld [vmem:[#allocation5 + $0xe0] sm:$0xff]
    %v4052 = vld [vmem:[#allocation5 + $0xe8] sm:$0xff]
    %v4053 = vld [vmem:[#allocation5 + $0xf0] sm:$0xff]
    %v4054 = vld [vmem:[#allocation5 + $0xf8] sm:$0xff]
    %v4055 = vpack.c.bf16 %v4039, %v4023
    %v4056 = vpack.c.bf16 %v4040, %v4024
    %v4057 = vpack.c.bf16 %v4041, %v4025
    %v4058 = vpack.c.bf16 %v4042, %v4026
    %v4059 = vpack.c.bf16 %v4043, %v4027
    %v4060 = vpack.c.bf16 %v4044, %v4028
    %v4061 = vpack.c.bf16 %v4045, %v4029
    %v4062 = vpack.c.bf16 %v4046, %v4030
    %v4063 = vpack.c.bf16 %v4047, %v4031
    %v4064 = vpack.c.bf16 %v4048, %v4032
    %v4065 = vpack.c.bf16 %v4049, %v4033
    %v4066 = vpack.c.bf16 %v4050, %v4034
    %v4067 = vpack.c.bf16 %v4051, %v4035
    %v4068 = vpack.c.bf16 %v4052, %v4036
    %v4069 = vpack.c.bf16 %v4053, %v4037
    %v4070 = vpack.c.bf16 %v4054, %v4038
    %v4071 = vld [vmem:[#allocation11] sm:$0xff]
    %v4072 = vld [vmem:[#allocation11 + $0x8] sm:$0xff]
    %v4073 = vld [vmem:[#allocation11 + $0x10] sm:$0xff]
    %v4074 = vld [vmem:[#allocation11 + $0x18] sm:$0xff]
    %v4075 = vld [vmem:[#allocation11 + $0x20] sm:$0xff]
    %v4076 = vld [vmem:[#allocation11 + $0x28] sm:$0xff]
    %v4077 = vld [vmem:[#allocation11 + $0x30] sm:$0xff]
    %v4078 = vld [vmem:[#allocation11 + $0x38] sm:$0xff]
    %v4079 = vld [vmem:[#allocation11 + $0x40] sm:$0xff]
    %v4080 = vld [vmem:[#allocation11 + $0x48] sm:$0xff]
    %v4081 = vld [vmem:[#allocation11 + $0x50] sm:$0xff]
    %v4082 = vld [vmem:[#allocation11 + $0x58] sm:$0xff]
    %v4083 = vld [vmem:[#allocation11 + $0x60] sm:$0xff]
    %v4084 = vld [vmem:[#allocation11 + $0x68] sm:$0xff]
    %v4085 = vld [vmem:[#allocation11 + $0x70] sm:$0xff]
    %v4086 = vld [vmem:[#allocation11 + $0x78] sm:$0xff]
    %v4087 = vld [vmem:[#allocation11 + $0x80] sm:$0xff]
    %v4088 = vld [vmem:[#allocation11 + $0x88] sm:$0xff]
    %v4089 = vld [vmem:[#allocation11 + $0x90] sm:$0xff]
    %v4090 = vld [vmem:[#allocation11 + $0x98] sm:$0xff]
    %v4091 = vld [vmem:[#allocation11 + $0xa0] sm:$0xff]
    %v4092 = vld [vmem:[#allocation11 + $0xa8] sm:$0xff]
    %v4093 = vld [vmem:[#allocation11 + $0xb0] sm:$0xff]
    %v4094 = vld [vmem:[#allocation11 + $0xb8] sm:$0xff]
    %v4095 = vld [vmem:[#allocation11 + $0xc0] sm:$0xff]
    %v4096 = vld [vmem:[#allocation11 + $0xc8] sm:$0xff]
    %v4097 = vld [vmem:[#allocation11 + $0xd0] sm:$0xff]
    %v4098 = vld [vmem:[#allocation11 + $0xd8] sm:$0xff]
    %v4099 = vld [vmem:[#allocation11 + $0xe0] sm:$0xff]
    %v4100 = vld [vmem:[#allocation11 + $0xe8] sm:$0xff]
    %v4101 = vld [vmem:[#allocation11 + $0xf0] sm:$0xff]
    %v4102 = vld [vmem:[#allocation11 + $0xf8] sm:$0xff]
    %v4103 = vld [vmem:[#allocation11 + $0x100] sm:$0xff]
    %v4104 = vld [vmem:[#allocation11 + $0x108] sm:$0xff]
    %v4105 = vld [vmem:[#allocation11 + $0x110] sm:$0xff]
    %v4106 = vld [vmem:[#allocation11 + $0x118] sm:$0xff]
    %v4107 = vld [vmem:[#allocation11 + $0x120] sm:$0xff]
    %v4108 = vld [vmem:[#allocation11 + $0x128] sm:$0xff]
    %v4109 = vld [vmem:[#allocation11 + $0x130] sm:$0xff]
    %v4110 = vld [vmem:[#allocation11 + $0x138] sm:$0xff]
    %v4111 = vld [vmem:[#allocation11 + $0x140] sm:$0xff]
    %v4112 = vld [vmem:[#allocation11 + $0x148] sm:$0xff]
    %v4113 = vld [vmem:[#allocation11 + $0x150] sm:$0xff]
    %v4114 = vld [vmem:[#allocation11 + $0x158] sm:$0xff]
    %v4115 = vld [vmem:[#allocation11 + $0x160] sm:$0xff]
    %v4116 = vld [vmem:[#allocation11 + $0x168] sm:$0xff]
    %v4117 = vld [vmem:[#allocation11 + $0x170] sm:$0xff]
    %v4118 = vld [vmem:[#allocation11 + $0x178] sm:$0xff]
    %v4119 = vld [vmem:[#allocation11 + $0x180] sm:$0xff]
    %v4120 = vld [vmem:[#allocation11 + $0x188] sm:$0xff]
    %v4121 = vld [vmem:[#allocation11 + $0x190] sm:$0xff]
    %v4122 = vld [vmem:[#allocation11 + $0x198] sm:$0xff]
    %v4123 = vld [vmem:[#allocation11 + $0x1a0] sm:$0xff]
    %v4124 = vld [vmem:[#allocation11 + $0x1a8] sm:$0xff]
    %v4125 = vld [vmem:[#allocation11 + $0x1b0] sm:$0xff]
    %v4126 = vld [vmem:[#allocation11 + $0x1b8] sm:$0xff]
    %v4127 = vld [vmem:[#allocation11 + $0x1c0] sm:$0xff]
    %v4128 = vld [vmem:[#allocation11 + $0x1c8] sm:$0xff]
    %v4129 = vld [vmem:[#allocation11 + $0x1d0] sm:$0xff]
    %v4130 = vld [vmem:[#allocation11 + $0x1d8] sm:$0xff]
    %v4131 = vld [vmem:[#allocation11 + $0x1e0] sm:$0xff]
    %v4132 = vld [vmem:[#allocation11 + $0x1e8] sm:$0xff]
    %v4133 = vld [vmem:[#allocation11 + $0x1f0] sm:$0xff]
    %v4134 = vld [vmem:[#allocation11 + $0x1f8] sm:$0xff]
    %v4135 = vld [vmem:[#allocation11 + $0x200] sm:$0xff]
    %v4136 = vld [vmem:[#allocation11 + $0x208] sm:$0xff]
    %v4137 = vld [vmem:[#allocation11 + $0x210] sm:$0xff]
    %v4138 = vld [vmem:[#allocation11 + $0x218] sm:$0xff]
    %v4139 = vld [vmem:[#allocation11 + $0x220] sm:$0xff]
    %v4140 = vld [vmem:[#allocation11 + $0x228] sm:$0xff]
    %v4141 = vld [vmem:[#allocation11 + $0x230] sm:$0xff]
    %v4142 = vld [vmem:[#allocation11 + $0x238] sm:$0xff]
    %v4143 = vld [vmem:[#allocation11 + $0x240] sm:$0xff]
    %v4144 = vld [vmem:[#allocation11 + $0x248] sm:$0xff]
    %v4145 = vld [vmem:[#allocation11 + $0x250] sm:$0xff]
    %v4146 = vld [vmem:[#allocation11 + $0x258] sm:$0xff]
    %v4147 = vld [vmem:[#allocation11 + $0x260] sm:$0xff]
    %v4148 = vld [vmem:[#allocation11 + $0x268] sm:$0xff]
    %v4149 = vld [vmem:[#allocation11 + $0x270] sm:$0xff]
    %v4150 = vld [vmem:[#allocation11 + $0x278] sm:$0xff]
    %v4151 = vld [vmem:[#allocation11 + $0x280] sm:$0xff]
    %v4152 = vld [vmem:[#allocation11 + $0x288] sm:$0xff]
    %v4153 = vld [vmem:[#allocation11 + $0x290] sm:$0xff]
    %v4154 = vld [vmem:[#allocation11 + $0x298] sm:$0xff]
    %v4155 = vld [vmem:[#allocation11 + $0x2a0] sm:$0xff]
    %v4156 = vld [vmem:[#allocation11 + $0x2a8] sm:$0xff]
    %v4157 = vld [vmem:[#allocation11 + $0x2b0] sm:$0xff]
    %v4158 = vld [vmem:[#allocation11 + $0x2b8] sm:$0xff]
    %v4159 = vld [vmem:[#allocation11 + $0x2c0] sm:$0xff]
    %v4160 = vld [vmem:[#allocation11 + $0x2c8] sm:$0xff]
    %v4161 = vld [vmem:[#allocation11 + $0x2d0] sm:$0xff]
    %v4162 = vld [vmem:[#allocation11 + $0x2d8] sm:$0xff]
    %v4163 = vld [vmem:[#allocation11 + $0x2e0] sm:$0xff]
    %v4164 = vld [vmem:[#allocation11 + $0x2e8] sm:$0xff]
    %v4165 = vld [vmem:[#allocation11 + $0x2f0] sm:$0xff]
    %v4166 = vld [vmem:[#allocation11 + $0x2f8] sm:$0xff]
    %v4167 = vld [vmem:[#allocation11 + $0x300] sm:$0xff]
    %v4168 = vld [vmem:[#allocation11 + $0x308] sm:$0xff]
    %v4169 = vld [vmem:[#allocation11 + $0x310] sm:$0xff]
    %v4170 = vld [vmem:[#allocation11 + $0x318] sm:$0xff]
    %v4171 = vld [vmem:[#allocation11 + $0x320] sm:$0xff]
    %v4172 = vld [vmem:[#allocation11 + $0x328] sm:$0xff]
    %v4173 = vld [vmem:[#allocation11 + $0x330] sm:$0xff]
    %v4174 = vld [vmem:[#allocation11 + $0x338] sm:$0xff]
    %v4175 = vld [vmem:[#allocation11 + $0x340] sm:$0xff]
    %v4176 = vld [vmem:[#allocation11 + $0x348] sm:$0xff]
    %v4177 = vld [vmem:[#allocation11 + $0x350] sm:$0xff]
    %v4178 = vld [vmem:[#allocation11 + $0x358] sm:$0xff]
    %v4179 = vld [vmem:[#allocation11 + $0x360] sm:$0xff]
    %v4180 = vld [vmem:[#allocation11 + $0x368] sm:$0xff]
    %v4181 = vld [vmem:[#allocation11 + $0x370] sm:$0xff]
    %v4182 = vld [vmem:[#allocation11 + $0x378] sm:$0xff]
    %v4183 = vld [vmem:[#allocation11 + $0x380] sm:$0xff]
    %v4184 = vld [vmem:[#allocation11 + $0x388] sm:$0xff]
    %v4185 = vld [vmem:[#allocation11 + $0x390] sm:$0xff]
    %v4186 = vld [vmem:[#allocation11 + $0x398] sm:$0xff]
    %v4187 = vld [vmem:[#allocation11 + $0x3a0] sm:$0xff]
    %v4188 = vld [vmem:[#allocation11 + $0x3a8] sm:$0xff]
    %v4189 = vld [vmem:[#allocation11 + $0x3b0] sm:$0xff]
    %v4190 = vld [vmem:[#allocation11 + $0x3b8] sm:$0xff]
    %v4191 = vld [vmem:[#allocation11 + $0x3c0] sm:$0xff]
    %v4192 = vld [vmem:[#allocation11 + $0x3c8] sm:$0xff]
    %v4193 = vld [vmem:[#allocation11 + $0x3d0] sm:$0xff]
    %v4194 = vld [vmem:[#allocation11 + $0x3d8] sm:$0xff]
    %v4195 = vld [vmem:[#allocation11 + $0x3e0] sm:$0xff]
    %v4196 = vld [vmem:[#allocation11 + $0x3e8] sm:$0xff]
    %v4197 = vld [vmem:[#allocation11 + $0x3f0] sm:$0xff]
    %v4198 = vld [vmem:[#allocation11 + $0x3f8] sm:$0xff]
    %v4199 = vld [vmem:[#allocation11 + $0x400] sm:$0xff]
    %v4200 = vld [vmem:[#allocation11 + $0x408] sm:$0xff]
    %v4201 = vld [vmem:[#allocation11 + $0x410] sm:$0xff]
    %v4202 = vld [vmem:[#allocation11 + $0x418] sm:$0xff]
    %v4203 = vld [vmem:[#allocation11 + $0x420] sm:$0xff]
    %v4204 = vld [vmem:[#allocation11 + $0x428] sm:$0xff]
    %v4205 = vld [vmem:[#allocation11 + $0x430] sm:$0xff]
    %v4206 = vld [vmem:[#allocation11 + $0x438] sm:$0xff]
    %v4207 = vld [vmem:[#allocation11 + $0x440] sm:$0xff]
    %v4208 = vld [vmem:[#allocation11 + $0x448] sm:$0xff]
    %v4209 = vld [vmem:[#allocation11 + $0x450] sm:$0xff]
    %v4210 = vld [vmem:[#allocation11 + $0x458] sm:$0xff]
    %v4211 = vld [vmem:[#allocation11 + $0x460] sm:$0xff]
    %v4212 = vld [vmem:[#allocation11 + $0x468] sm:$0xff]
    %v4213 = vld [vmem:[#allocation11 + $0x470] sm:$0xff]
    %v4214 = vld [vmem:[#allocation11 + $0x478] sm:$0xff]
    %v4215 = vld [vmem:[#allocation11 + $0x480] sm:$0xff]
    %v4216 = vld [vmem:[#allocation11 + $0x488] sm:$0xff]
    %v4217 = vld [vmem:[#allocation11 + $0x490] sm:$0xff]
    %v4218 = vld [vmem:[#allocation11 + $0x498] sm:$0xff]
    %v4219 = vld [vmem:[#allocation11 + $0x4a0] sm:$0xff]
    %v4220 = vld [vmem:[#allocation11 + $0x4a8] sm:$0xff]
    %v4221 = vld [vmem:[#allocation11 + $0x4b0] sm:$0xff]
    %v4222 = vld [vmem:[#allocation11 + $0x4b8] sm:$0xff]
    %v4223 = vld [vmem:[#allocation11 + $0x4c0] sm:$0xff]
    %v4224 = vld [vmem:[#allocation11 + $0x4c8] sm:$0xff]
    %v4225 = vld [vmem:[#allocation11 + $0x4d0] sm:$0xff]
    %v4226 = vld [vmem:[#allocation11 + $0x4d8] sm:$0xff]
    %v4227 = vld [vmem:[#allocation11 + $0x4e0] sm:$0xff]
    %v4228 = vld [vmem:[#allocation11 + $0x4e8] sm:$0xff]
    %v4229 = vld [vmem:[#allocation11 + $0x4f0] sm:$0xff]
    %v4230 = vld [vmem:[#allocation11 + $0x4f8] sm:$0xff]
    %v4231 = vld [vmem:[#allocation11 + $0x500] sm:$0xff]
    %v4232 = vld [vmem:[#allocation11 + $0x508] sm:$0xff]
    %v4233 = vld [vmem:[#allocation11 + $0x510] sm:$0xff]
    %v4234 = vld [vmem:[#allocation11 + $0x518] sm:$0xff]
    %v4235 = vld [vmem:[#allocation11 + $0x520] sm:$0xff]
    %v4236 = vld [vmem:[#allocation11 + $0x528] sm:$0xff]
    %v4237 = vld [vmem:[#allocation11 + $0x530] sm:$0xff]
    %v4238 = vld [vmem:[#allocation11 + $0x538] sm:$0xff]
    %v4239 = vld [vmem:[#allocation11 + $0x540] sm:$0xff]
    %v4240 = vld [vmem:[#allocation11 + $0x548] sm:$0xff]
    %v4241 = vld [vmem:[#allocation11 + $0x550] sm:$0xff]
    %v4242 = vld [vmem:[#allocation11 + $0x558] sm:$0xff]
    %v4243 = vld [vmem:[#allocation11 + $0x560] sm:$0xff]
    %v4244 = vld [vmem:[#allocation11 + $0x568] sm:$0xff]
    %v4245 = vld [vmem:[#allocation11 + $0x570] sm:$0xff]
    %v4246 = vld [vmem:[#allocation11 + $0x578] sm:$0xff]
    %v4247 = vld [vmem:[#allocation11 + $0x580] sm:$0xff]
    %v4248 = vld [vmem:[#allocation11 + $0x588] sm:$0xff]
    %v4249 = vld [vmem:[#allocation11 + $0x590] sm:$0xff]
    %v4250 = vld [vmem:[#allocation11 + $0x598] sm:$0xff]
    %v4251 = vld [vmem:[#allocation11 + $0x5a0] sm:$0xff]
    %v4252 = vld [vmem:[#allocation11 + $0x5a8] sm:$0xff]
    %v4253 = vld [vmem:[#allocation11 + $0x5b0] sm:$0xff]
    %v4254 = vld [vmem:[#allocation11 + $0x5b8] sm:$0xff]
    %v4255 = vld [vmem:[#allocation11 + $0x5c0] sm:$0xff]
    %v4256 = vld [vmem:[#allocation11 + $0x5c8] sm:$0xff]
    %v4257 = vld [vmem:[#allocation11 + $0x5d0] sm:$0xff]
    %v4258 = vld [vmem:[#allocation11 + $0x5d8] sm:$0xff]
    %v4259 = vld [vmem:[#allocation11 + $0x5e0] sm:$0xff]
    %v4260 = vld [vmem:[#allocation11 + $0x5e8] sm:$0xff]
    %v4261 = vld [vmem:[#allocation11 + $0x5f0] sm:$0xff]
    %v4262 = vld [vmem:[#allocation11 + $0x5f8] sm:$0xff]
    %v4263 = vld [vmem:[#allocation11 + $0x600] sm:$0xff]
    %v4264 = vld [vmem:[#allocation11 + $0x608] sm:$0xff]
    %v4265 = vld [vmem:[#allocation11 + $0x610] sm:$0xff]
    %v4266 = vld [vmem:[#allocation11 + $0x618] sm:$0xff]
    %v4267 = vld [vmem:[#allocation11 + $0x620] sm:$0xff]
    %v4268 = vld [vmem:[#allocation11 + $0x628] sm:$0xff]
    %v4269 = vld [vmem:[#allocation11 + $0x630] sm:$0xff]
    %v4270 = vld [vmem:[#allocation11 + $0x638] sm:$0xff]
    %v4271 = vld [vmem:[#allocation11 + $0x640] sm:$0xff]
    %v4272 = vld [vmem:[#allocation11 + $0x648] sm:$0xff]
    %v4273 = vld [vmem:[#allocation11 + $0x650] sm:$0xff]
    %v4274 = vld [vmem:[#allocation11 + $0x658] sm:$0xff]
    %v4275 = vld [vmem:[#allocation11 + $0x660] sm:$0xff]
    %v4276 = vld [vmem:[#allocation11 + $0x668] sm:$0xff]
    %v4277 = vld [vmem:[#allocation11 + $0x670] sm:$0xff]
    %v4278 = vld [vmem:[#allocation11 + $0x678] sm:$0xff]
    %v4279 = vld [vmem:[#allocation11 + $0x680] sm:$0xff]
    %v4280 = vld [vmem:[#allocation11 + $0x688] sm:$0xff]
    %v4281 = vld [vmem:[#allocation11 + $0x690] sm:$0xff]
    %v4282 = vld [vmem:[#allocation11 + $0x698] sm:$0xff]
    %v4283 = vld [vmem:[#allocation11 + $0x6a0] sm:$0xff]
    %v4284 = vld [vmem:[#allocation11 + $0x6a8] sm:$0xff]
    %v4285 = vld [vmem:[#allocation11 + $0x6b0] sm:$0xff]
    %v4286 = vld [vmem:[#allocation11 + $0x6b8] sm:$0xff]
    %v4287 = vld [vmem:[#allocation11 + $0x6c0] sm:$0xff]
    %v4288 = vld [vmem:[#allocation11 + $0x6c8] sm:$0xff]
    %v4289 = vld [vmem:[#allocation11 + $0x6d0] sm:$0xff]
    %v4290 = vld [vmem:[#allocation11 + $0x6d8] sm:$0xff]
    %v4291 = vld [vmem:[#allocation11 + $0x6e0] sm:$0xff]
    %v4292 = vld [vmem:[#allocation11 + $0x6e8] sm:$0xff]
    %v4293 = vld [vmem:[#allocation11 + $0x6f0] sm:$0xff]
    %v4294 = vld [vmem:[#allocation11 + $0x6f8] sm:$0xff]
    %v4295 = vld [vmem:[#allocation11 + $0x700] sm:$0xff]
    %v4296 = vld [vmem:[#allocation11 + $0x708] sm:$0xff]
    %v4297 = vld [vmem:[#allocation11 + $0x710] sm:$0xff]
    %v4298 = vld [vmem:[#allocation11 + $0x718] sm:$0xff]
    %v4299 = vld [vmem:[#allocation11 + $0x720] sm:$0xff]
    %v4300 = vld [vmem:[#allocation11 + $0x728] sm:$0xff]
    %v4301 = vld [vmem:[#allocation11 + $0x730] sm:$0xff]
    %v4302 = vld [vmem:[#allocation11 + $0x738] sm:$0xff]
    %v4303 = vld [vmem:[#allocation11 + $0x740] sm:$0xff]
    %v4304 = vld [vmem:[#allocation11 + $0x748] sm:$0xff]
    %v4305 = vld [vmem:[#allocation11 + $0x750] sm:$0xff]
    %v4306 = vld [vmem:[#allocation11 + $0x758] sm:$0xff]
    %v4307 = vld [vmem:[#allocation11 + $0x760] sm:$0xff]
    %v4308 = vld [vmem:[#allocation11 + $0x768] sm:$0xff]
    %v4309 = vld [vmem:[#allocation11 + $0x770] sm:$0xff]
    %v4310 = vld [vmem:[#allocation11 + $0x778] sm:$0xff]
    %v4311 = vld [vmem:[#allocation11 + $0x780] sm:$0xff]
    %v4312 = vld [vmem:[#allocation11 + $0x788] sm:$0xff]
    %v4313 = vld [vmem:[#allocation11 + $0x790] sm:$0xff]
    %v4314 = vld [vmem:[#allocation11 + $0x798] sm:$0xff]
    %v4315 = vld [vmem:[#allocation11 + $0x7a0] sm:$0xff]
    %v4316 = vld [vmem:[#allocation11 + $0x7a8] sm:$0xff]
    %v4317 = vld [vmem:[#allocation11 + $0x7b0] sm:$0xff]
    %v4318 = vld [vmem:[#allocation11 + $0x7b8] sm:$0xff]
    %v4319 = vld [vmem:[#allocation11 + $0x7c0] sm:$0xff]
    %v4320 = vld [vmem:[#allocation11 + $0x7c8] sm:$0xff]
    %v4321 = vld [vmem:[#allocation11 + $0x7d0] sm:$0xff]
    %v4322 = vld [vmem:[#allocation11 + $0x7d8] sm:$0xff]
    %v4323 = vld [vmem:[#allocation11 + $0x7e0] sm:$0xff]
    %v4324 = vld [vmem:[#allocation11 + $0x7e8] sm:$0xff]
    %v4325 = vld [vmem:[#allocation11 + $0x7f0] sm:$0xff]
    %v4326 = vld [vmem:[#allocation11 + $0x7f8] sm:$0xff]
    %v4327 = vld [vmem:[#allocation11 + $0x800] sm:$0xff]
    %v4328 = vld [vmem:[#allocation11 + $0x808] sm:$0xff]
    %v4329 = vld [vmem:[#allocation11 + $0x810] sm:$0xff]
    %v4330 = vld [vmem:[#allocation11 + $0x818] sm:$0xff]
    %v4331 = vld [vmem:[#allocation11 + $0x820] sm:$0xff]
    %v4332 = vld [vmem:[#allocation11 + $0x828] sm:$0xff]
    %v4333 = vld [vmem:[#allocation11 + $0x830] sm:$0xff]
    %v4334 = vld [vmem:[#allocation11 + $0x838] sm:$0xff]
    %v4335 = vld [vmem:[#allocation11 + $0x840] sm:$0xff]
    %v4336 = vld [vmem:[#allocation11 + $0x848] sm:$0xff]
    %v4337 = vld [vmem:[#allocation11 + $0x850] sm:$0xff]
    %v4338 = vld [vmem:[#allocation11 + $0x858] sm:$0xff]
    %v4339 = vld [vmem:[#allocation11 + $0x860] sm:$0xff]
    %v4340 = vld [vmem:[#allocation11 + $0x868] sm:$0xff]
    %v4341 = vld [vmem:[#allocation11 + $0x870] sm:$0xff]
    %v4342 = vld [vmem:[#allocation11 + $0x878] sm:$0xff]
    %v4343 = vld [vmem:[#allocation11 + $0x880] sm:$0xff]
    %v4344 = vld [vmem:[#allocation11 + $0x888] sm:$0xff]
    %v4345 = vld [vmem:[#allocation11 + $0x890] sm:$0xff]
    %v4346 = vld [vmem:[#allocation11 + $0x898] sm:$0xff]
    %v4347 = vld [vmem:[#allocation11 + $0x8a0] sm:$0xff]
    %v4348 = vld [vmem:[#allocation11 + $0x8a8] sm:$0xff]
    %v4349 = vld [vmem:[#allocation11 + $0x8b0] sm:$0xff]
    %v4350 = vld [vmem:[#allocation11 + $0x8b8] sm:$0xff]
    %v4351 = vld [vmem:[#allocation11 + $0x8c0] sm:$0xff]
    %v4352 = vld [vmem:[#allocation11 + $0x8c8] sm:$0xff]
    %v4353 = vld [vmem:[#allocation11 + $0x8d0] sm:$0xff]
    %v4354 = vld [vmem:[#allocation11 + $0x8d8] sm:$0xff]
    %v4355 = vld [vmem:[#allocation11 + $0x8e0] sm:$0xff]
    %v4356 = vld [vmem:[#allocation11 + $0x8e8] sm:$0xff]
    %v4357 = vld [vmem:[#allocation11 + $0x8f0] sm:$0xff]
    %v4358 = vld [vmem:[#allocation11 + $0x8f8] sm:$0xff]
    %v4359 = vld [vmem:[#allocation11 + $0x900] sm:$0xff]
    %v4360 = vld [vmem:[#allocation11 + $0x908] sm:$0xff]
    %v4361 = vld [vmem:[#allocation11 + $0x910] sm:$0xff]
    %v4362 = vld [vmem:[#allocation11 + $0x918] sm:$0xff]
    %v4363 = vld [vmem:[#allocation11 + $0x920] sm:$0xff]
    %v4364 = vld [vmem:[#allocation11 + $0x928] sm:$0xff]
    %v4365 = vld [vmem:[#allocation11 + $0x930] sm:$0xff]
    %v4366 = vld [vmem:[#allocation11 + $0x938] sm:$0xff]
    %v4367 = vld [vmem:[#allocation11 + $0x940] sm:$0xff]
    %v4368 = vld [vmem:[#allocation11 + $0x948] sm:$0xff]
    %v4369 = vld [vmem:[#allocation11 + $0x950] sm:$0xff]
    %v4370 = vld [vmem:[#allocation11 + $0x958] sm:$0xff]
    %v4371 = vld [vmem:[#allocation11 + $0x960] sm:$0xff]
    %v4372 = vld [vmem:[#allocation11 + $0x968] sm:$0xff]
    %v4373 = vld [vmem:[#allocation11 + $0x970] sm:$0xff]
    %v4374 = vld [vmem:[#allocation11 + $0x978] sm:$0xff]
    %v4375 = vld [vmem:[#allocation11 + $0x980] sm:$0xff]
    %v4376 = vld [vmem:[#allocation11 + $0x988] sm:$0xff]
    %v4377 = vld [vmem:[#allocation11 + $0x990] sm:$0xff]
    %v4378 = vld [vmem:[#allocation11 + $0x998] sm:$0xff]
    %v4379 = vld [vmem:[#allocation11 + $0x9a0] sm:$0xff]
    %v4380 = vld [vmem:[#allocation11 + $0x9a8] sm:$0xff]
    %v4381 = vld [vmem:[#allocation11 + $0x9b0] sm:$0xff]
    %v4382 = vld [vmem:[#allocation11 + $0x9b8] sm:$0xff]
    %v4383 = vld [vmem:[#allocation11 + $0x9c0] sm:$0xff]
    %v4384 = vld [vmem:[#allocation11 + $0x9c8] sm:$0xff]
    %v4385 = vld [vmem:[#allocation11 + $0x9d0] sm:$0xff]
    %v4386 = vld [vmem:[#allocation11 + $0x9d8] sm:$0xff]
    %v4387 = vld [vmem:[#allocation11 + $0x9e0] sm:$0xff]
    %v4388 = vld [vmem:[#allocation11 + $0x9e8] sm:$0xff]
    %v4389 = vld [vmem:[#allocation11 + $0x9f0] sm:$0xff]
    %v4390 = vld [vmem:[#allocation11 + $0x9f8] sm:$0xff]
    %v4391 = vld [vmem:[#allocation11 + $0xa00] sm:$0xff]
    %v4392 = vld [vmem:[#allocation11 + $0xa08] sm:$0xff]
    %v4393 = vld [vmem:[#allocation11 + $0xa10] sm:$0xff]
    %v4394 = vld [vmem:[#allocation11 + $0xa18] sm:$0xff]
    %v4395 = vld [vmem:[#allocation11 + $0xa20] sm:$0xff]
    %v4396 = vld [vmem:[#allocation11 + $0xa28] sm:$0xff]
    %v4397 = vld [vmem:[#allocation11 + $0xa30] sm:$0xff]
    %v4398 = vld [vmem:[#allocation11 + $0xa38] sm:$0xff]
    %v4399 = vld [vmem:[#allocation11 + $0xa40] sm:$0xff]
    %v4400 = vld [vmem:[#allocation11 + $0xa48] sm:$0xff]
    %v4401 = vld [vmem:[#allocation11 + $0xa50] sm:$0xff]
    %v4402 = vld [vmem:[#allocation11 + $0xa58] sm:$0xff]
    %v4403 = vld [vmem:[#allocation11 + $0xa60] sm:$0xff]
    %v4404 = vld [vmem:[#allocation11 + $0xa68] sm:$0xff]
    %v4405 = vld [vmem:[#allocation11 + $0xa70] sm:$0xff]
    %v4406 = vld [vmem:[#allocation11 + $0xa78] sm:$0xff]
    %v4407 = vld [vmem:[#allocation11 + $0xa80] sm:$0xff]
    %v4408 = vld [vmem:[#allocation11 + $0xa88] sm:$0xff]
    %v4409 = vld [vmem:[#allocation11 + $0xa90] sm:$0xff]
    %v4410 = vld [vmem:[#allocation11 + $0xa98] sm:$0xff]
    %v4411 = vld [vmem:[#allocation11 + $0xaa0] sm:$0xff]
    %v4412 = vld [vmem:[#allocation11 + $0xaa8] sm:$0xff]
    %v4413 = vld [vmem:[#allocation11 + $0xab0] sm:$0xff]
    %v4414 = vld [vmem:[#allocation11 + $0xab8] sm:$0xff]
    %v4415 = vld [vmem:[#allocation11 + $0xac0] sm:$0xff]
    %v4416 = vld [vmem:[#allocation11 + $0xac8] sm:$0xff]
    %v4417 = vld [vmem:[#allocation11 + $0xad0] sm:$0xff]
    %v4418 = vld [vmem:[#allocation11 + $0xad8] sm:$0xff]
    %v4419 = vld [vmem:[#allocation11 + $0xae0] sm:$0xff]
    %v4420 = vld [vmem:[#allocation11 + $0xae8] sm:$0xff]
    %v4421 = vld [vmem:[#allocation11 + $0xaf0] sm:$0xff]
    %v4422 = vld [vmem:[#allocation11 + $0xaf8] sm:$0xff]
    %v4423 = vld [vmem:[#allocation11 + $0xb00] sm:$0xff]
    %v4424 = vld [vmem:[#allocation11 + $0xb08] sm:$0xff]
    %v4425 = vld [vmem:[#allocation11 + $0xb10] sm:$0xff]
    %v4426 = vld [vmem:[#allocation11 + $0xb18] sm:$0xff]
    %v4427 = vld [vmem:[#allocation11 + $0xb20] sm:$0xff]
    %v4428 = vld [vmem:[#allocation11 + $0xb28] sm:$0xff]
    %v4429 = vld [vmem:[#allocation11 + $0xb30] sm:$0xff]
    %v4430 = vld [vmem:[#allocation11 + $0xb38] sm:$0xff]
    %v4431 = vld [vmem:[#allocation11 + $0xb40] sm:$0xff]
    %v4432 = vld [vmem:[#allocation11 + $0xb48] sm:$0xff]
    %v4433 = vld [vmem:[#allocation11 + $0xb50] sm:$0xff]
    %v4434 = vld [vmem:[#allocation11 + $0xb58] sm:$0xff]
    %v4435 = vld [vmem:[#allocation11 + $0xb60] sm:$0xff]
    %v4436 = vld [vmem:[#allocation11 + $0xb68] sm:$0xff]
    %v4437 = vld [vmem:[#allocation11 + $0xb70] sm:$0xff]
    %v4438 = vld [vmem:[#allocation11 + $0xb78] sm:$0xff]
    %v4439 = vld [vmem:[#allocation11 + $0xb80] sm:$0xff]
    %v4440 = vld [vmem:[#allocation11 + $0xb88] sm:$0xff]
    %v4441 = vld [vmem:[#allocation11 + $0xb90] sm:$0xff]
    %v4442 = vld [vmem:[#allocation11 + $0xb98] sm:$0xff]
    %v4443 = vld [vmem:[#allocation11 + $0xba0] sm:$0xff]
    %v4444 = vld [vmem:[#allocation11 + $0xba8] sm:$0xff]
    %v4445 = vld [vmem:[#allocation11 + $0xbb0] sm:$0xff]
    %v4446 = vld [vmem:[#allocation11 + $0xbb8] sm:$0xff]
    %v4447 = vld [vmem:[#allocation11 + $0xbc0] sm:$0xff]
    %v4448 = vld [vmem:[#allocation11 + $0xbc8] sm:$0xff]
    %v4449 = vld [vmem:[#allocation11 + $0xbd0] sm:$0xff]
    %v4450 = vld [vmem:[#allocation11 + $0xbd8] sm:$0xff]
    %v4451 = vld [vmem:[#allocation11 + $0xbe0] sm:$0xff]
    %v4452 = vld [vmem:[#allocation11 + $0xbe8] sm:$0xff]
    %v4453 = vld [vmem:[#allocation11 + $0xbf0] sm:$0xff]
    %v4454 = vld [vmem:[#allocation11 + $0xbf8] sm:$0xff]
    %v4455 = vld [vmem:[#allocation11 + $0xc00] sm:$0xff]
    %v4456 = vld [vmem:[#allocation11 + $0xc08] sm:$0xff]
    %v4457 = vld [vmem:[#allocation11 + $0xc10] sm:$0xff]
    %v4458 = vld [vmem:[#allocation11 + $0xc18] sm:$0xff]
    %v4459 = vld [vmem:[#allocation11 + $0xc20] sm:$0xff]
    %v4460 = vld [vmem:[#allocation11 + $0xc28] sm:$0xff]
    %v4461 = vld [vmem:[#allocation11 + $0xc30] sm:$0xff]
    %v4462 = vld [vmem:[#allocation11 + $0xc38] sm:$0xff]
    %v4463 = vld [vmem:[#allocation11 + $0xc40] sm:$0xff]
    %v4464 = vld [vmem:[#allocation11 + $0xc48] sm:$0xff]
    %v4465 = vld [vmem:[#allocation11 + $0xc50] sm:$0xff]
    %v4466 = vld [vmem:[#allocation11 + $0xc58] sm:$0xff]
    %v4467 = vld [vmem:[#allocation11 + $0xc60] sm:$0xff]
    %v4468 = vld [vmem:[#allocation11 + $0xc68] sm:$0xff]
    %v4469 = vld [vmem:[#allocation11 + $0xc70] sm:$0xff]
    %v4470 = vld [vmem:[#allocation11 + $0xc78] sm:$0xff]
    %v4471 = vld [vmem:[#allocation11 + $0xc80] sm:$0xff]
    %v4472 = vld [vmem:[#allocation11 + $0xc88] sm:$0xff]
    %v4473 = vld [vmem:[#allocation11 + $0xc90] sm:$0xff]
    %v4474 = vld [vmem:[#allocation11 + $0xc98] sm:$0xff]
    %v4475 = vld [vmem:[#allocation11 + $0xca0] sm:$0xff]
    %v4476 = vld [vmem:[#allocation11 + $0xca8] sm:$0xff]
    %v4477 = vld [vmem:[#allocation11 + $0xcb0] sm:$0xff]
    %v4478 = vld [vmem:[#allocation11 + $0xcb8] sm:$0xff]
    %v4479 = vld [vmem:[#allocation11 + $0xcc0] sm:$0xff]
    %v4480 = vld [vmem:[#allocation11 + $0xcc8] sm:$0xff]
    %v4481 = vld [vmem:[#allocation11 + $0xcd0] sm:$0xff]
    %v4482 = vld [vmem:[#allocation11 + $0xcd8] sm:$0xff]
    %v4483 = vld [vmem:[#allocation11 + $0xce0] sm:$0xff]
    %v4484 = vld [vmem:[#allocation11 + $0xce8] sm:$0xff]
    %v4485 = vld [vmem:[#allocation11 + $0xcf0] sm:$0xff]
    %v4486 = vld [vmem:[#allocation11 + $0xcf8] sm:$0xff]
    %v4487 = vld [vmem:[#allocation11 + $0xd00] sm:$0xff]
    %v4488 = vld [vmem:[#allocation11 + $0xd08] sm:$0xff]
    %v4489 = vld [vmem:[#allocation11 + $0xd10] sm:$0xff]
    %v4490 = vld [vmem:[#allocation11 + $0xd18] sm:$0xff]
    %v4491 = vld [vmem:[#allocation11 + $0xd20] sm:$0xff]
    %v4492 = vld [vmem:[#allocation11 + $0xd28] sm:$0xff]
    %v4493 = vld [vmem:[#allocation11 + $0xd30] sm:$0xff]
    %v4494 = vld [vmem:[#allocation11 + $0xd38] sm:$0xff]
    %v4495 = vld [vmem:[#allocation11 + $0xd40] sm:$0xff]
    %v4496 = vld [vmem:[#allocation11 + $0xd48] sm:$0xff]
    %v4497 = vld [vmem:[#allocation11 + $0xd50] sm:$0xff]
    %v4498 = vld [vmem:[#allocation11 + $0xd58] sm:$0xff]
    %v4499 = vld [vmem:[#allocation11 + $0xd60] sm:$0xff]
    %v4500 = vld [vmem:[#allocation11 + $0xd68] sm:$0xff]
    %v4501 = vld [vmem:[#allocation11 + $0xd70] sm:$0xff]
    %v4502 = vld [vmem:[#allocation11 + $0xd78] sm:$0xff]
    %v4503 = vld [vmem:[#allocation11 + $0xd80] sm:$0xff]
    %v4504 = vld [vmem:[#allocation11 + $0xd88] sm:$0xff]
    %v4505 = vld [vmem:[#allocation11 + $0xd90] sm:$0xff]
    %v4506 = vld [vmem:[#allocation11 + $0xd98] sm:$0xff]
    %v4507 = vld [vmem:[#allocation11 + $0xda0] sm:$0xff]
    %v4508 = vld [vmem:[#allocation11 + $0xda8] sm:$0xff]
    %v4509 = vld [vmem:[#allocation11 + $0xdb0] sm:$0xff]
    %v4510 = vld [vmem:[#allocation11 + $0xdb8] sm:$0xff]
    %v4511 = vld [vmem:[#allocation11 + $0xdc0] sm:$0xff]
    %v4512 = vld [vmem:[#allocation11 + $0xdc8] sm:$0xff]
    %v4513 = vld [vmem:[#allocation11 + $0xdd0] sm:$0xff]
    %v4514 = vld [vmem:[#allocation11 + $0xdd8] sm:$0xff]
    %v4515 = vld [vmem:[#allocation11 + $0xde0] sm:$0xff]
    %v4516 = vld [vmem:[#allocation11 + $0xde8] sm:$0xff]
    %v4517 = vld [vmem:[#allocation11 + $0xdf0] sm:$0xff]
    %v4518 = vld [vmem:[#allocation11 + $0xdf8] sm:$0xff]
    %v4519 = vld [vmem:[#allocation11 + $0xe00] sm:$0xff]
    %v4520 = vld [vmem:[#allocation11 + $0xe08] sm:$0xff]
    %v4521 = vld [vmem:[#allocation11 + $0xe10] sm:$0xff]
    %v4522 = vld [vmem:[#allocation11 + $0xe18] sm:$0xff]
    %v4523 = vld [vmem:[#allocation11 + $0xe20] sm:$0xff]
    %v4524 = vld [vmem:[#allocation11 + $0xe28] sm:$0xff]
    %v4525 = vld [vmem:[#allocation11 + $0xe30] sm:$0xff]
    %v4526 = vld [vmem:[#allocation11 + $0xe38] sm:$0xff]
    %v4527 = vld [vmem:[#allocation11 + $0xe40] sm:$0xff]
    %v4528 = vld [vmem:[#allocation11 + $0xe48] sm:$0xff]
    %v4529 = vld [vmem:[#allocation11 + $0xe50] sm:$0xff]
    %v4530 = vld [vmem:[#allocation11 + $0xe58] sm:$0xff]
    %v4531 = vld [vmem:[#allocation11 + $0xe60] sm:$0xff]
    %v4532 = vld [vmem:[#allocation11 + $0xe68] sm:$0xff]
    %v4533 = vld [vmem:[#allocation11 + $0xe70] sm:$0xff]
    %v4534 = vld [vmem:[#allocation11 + $0xe78] sm:$0xff]
    %v4535 = vld [vmem:[#allocation11 + $0xe80] sm:$0xff]
    %v4536 = vld [vmem:[#allocation11 + $0xe88] sm:$0xff]
    %v4537 = vld [vmem:[#allocation11 + $0xe90] sm:$0xff]
    %v4538 = vld [vmem:[#allocation11 + $0xe98] sm:$0xff]
    %v4539 = vld [vmem:[#allocation11 + $0xea0] sm:$0xff]
    %v4540 = vld [vmem:[#allocation11 + $0xea8] sm:$0xff]
    %v4541 = vld [vmem:[#allocation11 + $0xeb0] sm:$0xff]
    %v4542 = vld [vmem:[#allocation11 + $0xeb8] sm:$0xff]
    %v4543 = vld [vmem:[#allocation11 + $0xec0] sm:$0xff]
    %v4544 = vld [vmem:[#allocation11 + $0xec8] sm:$0xff]
    %v4545 = vld [vmem:[#allocation11 + $0xed0] sm:$0xff]
    %v4546 = vld [vmem:[#allocation11 + $0xed8] sm:$0xff]
    %v4547 = vld [vmem:[#allocation11 + $0xee0] sm:$0xff]
    %v4548 = vld [vmem:[#allocation11 + $0xee8] sm:$0xff]
    %v4549 = vld [vmem:[#allocation11 + $0xef0] sm:$0xff]
    %v4550 = vld [vmem:[#allocation11 + $0xef8] sm:$0xff]
    %v4551 = vld [vmem:[#allocation11 + $0xf00] sm:$0xff]
    %v4552 = vld [vmem:[#allocation11 + $0xf08] sm:$0xff]
    %v4553 = vld [vmem:[#allocation11 + $0xf10] sm:$0xff]
    %v4554 = vld [vmem:[#allocation11 + $0xf18] sm:$0xff]
    %v4555 = vld [vmem:[#allocation11 + $0xf20] sm:$0xff]
    %v4556 = vld [vmem:[#allocation11 + $0xf28] sm:$0xff]
    %v4557 = vld [vmem:[#allocation11 + $0xf30] sm:$0xff]
    %v4558 = vld [vmem:[#allocation11 + $0xf38] sm:$0xff]
    %v4559 = vld [vmem:[#allocation11 + $0xf40] sm:$0xff]
    %v4560 = vld [vmem:[#allocation11 + $0xf48] sm:$0xff]
    %v4561 = vld [vmem:[#allocation11 + $0xf50] sm:$0xff]
    %v4562 = vld [vmem:[#allocation11 + $0xf58] sm:$0xff]
    %v4563 = vld [vmem:[#allocation11 + $0xf60] sm:$0xff]
    %v4564 = vld [vmem:[#allocation11 + $0xf68] sm:$0xff]
    %v4565 = vld [vmem:[#allocation11 + $0xf70] sm:$0xff]
    %v4566 = vld [vmem:[#allocation11 + $0xf78] sm:$0xff]
    %v4567 = vld [vmem:[#allocation11 + $0xf80] sm:$0xff]
    %v4568 = vld [vmem:[#allocation11 + $0xf88] sm:$0xff]
    %v4569 = vld [vmem:[#allocation11 + $0xf90] sm:$0xff]
    %v4570 = vld [vmem:[#allocation11 + $0xf98] sm:$0xff]
    %v4571 = vld [vmem:[#allocation11 + $0xfa0] sm:$0xff]
    %v4572 = vld [vmem:[#allocation11 + $0xfa8] sm:$0xff]
    %v4573 = vld [vmem:[#allocation11 + $0xfb0] sm:$0xff]
    %v4574 = vld [vmem:[#allocation11 + $0xfb8] sm:$0xff]
    %v4575 = vld [vmem:[#allocation11 + $0xfc0] sm:$0xff]
    %v4576 = vld [vmem:[#allocation11 + $0xfc8] sm:$0xff]
    %v4577 = vld [vmem:[#allocation11 + $0xfd0] sm:$0xff]
    %v4578 = vld [vmem:[#allocation11 + $0xfd8] sm:$0xff]
    %v4579 = vld [vmem:[#allocation11 + $0xfe0] sm:$0xff]
    %v4580 = vld [vmem:[#allocation11 + $0xfe8] sm:$0xff]
    %v4581 = vld [vmem:[#allocation11 + $0xff0] sm:$0xff]
    %v4582 = vld [vmem:[#allocation11 + $0xff8] sm:$0xff]
    %v4583 = vld [vmem:[#allocation13] sm:$0xf]
    %v4585 = vlaneseq
    %v4586 = vshrl.u32 %v4585, 7
    %v4587 = vsub.s32 0, %v4586
    %v4588 = vrot.slane %v4583, %v4587
    %v4589 = vlaneseq
    %v4590 = vshrl.u32 %v4589, 7
    %v4591 = vsub.s32 1, %v4590
    %v4592 = vrot.slane %v4583, %v4591
    %v4593 = vlaneseq
    %v4594 = vshrl.u32 %v4593, 7
    %v4595 = vsub.s32 2, %v4594
    %v4596 = vrot.slane %v4583, %v4595
    %v4597 = vlaneseq
    %v4598 = vshrl.u32 %v4597, 7
    %v4599 = vsub.s32 3, %v4598
    %v4600 = vrot.slane %v4583, %v4599
    %v5117 = vunpack.c.l.b16 %v4071
    %v5118 = vunpack.c.h.b16 %v4071
    %v5119 = vunpack.c.l.b16 %v4072
    %v5120 = vunpack.c.h.b16 %v4072
    %v5121 = vunpack.c.l.b16 %v4073
    %v5122 = vunpack.c.h.b16 %v4073
    %v5123 = vunpack.c.l.b16 %v4074
    %v5124 = vunpack.c.h.b16 %v4074
    %v5125 = vunpack.c.l.b16 %v4075
    %v5126 = vunpack.c.h.b16 %v4075
    %v5127 = vunpack.c.l.b16 %v4076
    %v5128 = vunpack.c.h.b16 %v4076
    %v5129 = vunpack.c.l.b16 %v4077
    %v5130 = vunpack.c.h.b16 %v4077
    %v5131 = vunpack.c.l.b16 %v4078
    %v5132 = vunpack.c.h.b16 %v4078
    %v5133 = vunpack.c.l.b16 %v4079
    %v5134 = vunpack.c.h.b16 %v4079
    %v5135 = vunpack.c.l.b16 %v4080
    %v5136 = vunpack.c.h.b16 %v4080
    %v5137 = vunpack.c.l.b16 %v4081
    %v5138 = vunpack.c.h.b16 %v4081
    %v5139 = vunpack.c.l.b16 %v4082
    %v5140 = vunpack.c.h.b16 %v4082
    %v5141 = vunpack.c.l.b16 %v4083
    %v5142 = vunpack.c.h.b16 %v4083
    %v5143 = vunpack.c.l.b16 %v4084
    %v5144 = vunpack.c.h.b16 %v4084
    %v5145 = vunpack.c.l.b16 %v4085
    %v5146 = vunpack.c.h.b16 %v4085
    %v5147 = vunpack.c.l.b16 %v4086
    %v5148 = vunpack.c.h.b16 %v4086
    %v5149 = vunpack.c.l.b16 %v4087
    %v5150 = vunpack.c.h.b16 %v4087
    %v5151 = vunpack.c.l.b16 %v4088
    %v5152 = vunpack.c.h.b16 %v4088
    %v5153 = vunpack.c.l.b16 %v4089
    %v5154 = vunpack.c.h.b16 %v4089
    %v5155 = vunpack.c.l.b16 %v4090
    %v5156 = vunpack.c.h.b16 %v4090
    %v5157 = vunpack.c.l.b16 %v4091
    %v5158 = vunpack.c.h.b16 %v4091
    %v5159 = vunpack.c.l.b16 %v4092
    %v5160 = vunpack.c.h.b16 %v4092
    %v5161 = vunpack.c.l.b16 %v4093
    %v5162 = vunpack.c.h.b16 %v4093
    %v5163 = vunpack.c.l.b16 %v4094
    %v5164 = vunpack.c.h.b16 %v4094
    %v5165 = vunpack.c.l.b16 %v4095
    %v5166 = vunpack.c.h.b16 %v4095
    %v5167 = vunpack.c.l.b16 %v4096
    %v5168 = vunpack.c.h.b16 %v4096
    %v5169 = vunpack.c.l.b16 %v4097
    %v5170 = vunpack.c.h.b16 %v4097
    %v5171 = vunpack.c.l.b16 %v4098
    %v5172 = vunpack.c.h.b16 %v4098
    %v5173 = vunpack.c.l.b16 %v4099
    %v5174 = vunpack.c.h.b16 %v4099
    %v5175 = vunpack.c.l.b16 %v4100
    %v5176 = vunpack.c.h.b16 %v4100
    %v5177 = vunpack.c.l.b16 %v4101
    %v5178 = vunpack.c.h.b16 %v4101
    %v5179 = vunpack.c.l.b16 %v4102
    %v5180 = vunpack.c.h.b16 %v4102
    %v5181 = vunpack.c.l.b16 %v4103
    %v5182 = vunpack.c.h.b16 %v4103
    %v5183 = vunpack.c.l.b16 %v4104
    %v5184 = vunpack.c.h.b16 %v4104
    %v5185 = vunpack.c.l.b16 %v4105
    %v5186 = vunpack.c.h.b16 %v4105
    %v5187 = vunpack.c.l.b16 %v4106
    %v5188 = vunpack.c.h.b16 %v4106
    %v5189 = vunpack.c.l.b16 %v4107
    %v5190 = vunpack.c.h.b16 %v4107
    %v5191 = vunpack.c.l.b16 %v4108
    %v5192 = vunpack.c.h.b16 %v4108
    %v5193 = vunpack.c.l.b16 %v4109
    %v5194 = vunpack.c.h.b16 %v4109
    %v5195 = vunpack.c.l.b16 %v4110
    %v5196 = vunpack.c.h.b16 %v4110
    %v5197 = vunpack.c.l.b16 %v4111
    %v5198 = vunpack.c.h.b16 %v4111
    %v5199 = vunpack.c.l.b16 %v4112
    %v5200 = vunpack.c.h.b16 %v4112
    %v5201 = vunpack.c.l.b16 %v4113
    %v5202 = vunpack.c.h.b16 %v4113
    %v5203 = vunpack.c.l.b16 %v4114
    %v5204 = vunpack.c.h.b16 %v4114
    %v5205 = vunpack.c.l.b16 %v4115
    %v5206 = vunpack.c.h.b16 %v4115
    %v5207 = vunpack.c.l.b16 %v4116
    %v5208 = vunpack.c.h.b16 %v4116
    %v5209 = vunpack.c.l.b16 %v4117
    %v5210 = vunpack.c.h.b16 %v4117
    %v5211 = vunpack.c.l.b16 %v4118
    %v5212 = vunpack.c.h.b16 %v4118
    %v5213 = vunpack.c.l.b16 %v4119
    %v5214 = vunpack.c.h.b16 %v4119
    %v5215 = vunpack.c.l.b16 %v4120
    %v5216 = vunpack.c.h.b16 %v4120
    %v5217 = vunpack.c.l.b16 %v4121
    %v5218 = vunpack.c.h.b16 %v4121
    %v5219 = vunpack.c.l.b16 %v4122
    %v5220 = vunpack.c.h.b16 %v4122
    %v5221 = vunpack.c.l.b16 %v4123
    %v5222 = vunpack.c.h.b16 %v4123
    %v5223 = vunpack.c.l.b16 %v4124
    %v5224 = vunpack.c.h.b16 %v4124
    %v5225 = vunpack.c.l.b16 %v4125
    %v5226 = vunpack.c.h.b16 %v4125
    %v5227 = vunpack.c.l.b16 %v4126
    %v5228 = vunpack.c.h.b16 %v4126
    %v5229 = vunpack.c.l.b16 %v4127
    %v5230 = vunpack.c.h.b16 %v4127
    %v5231 = vunpack.c.l.b16 %v4128
    %v5232 = vunpack.c.h.b16 %v4128
    %v5233 = vunpack.c.l.b16 %v4129
    %v5234 = vunpack.c.h.b16 %v4129
    %v5235 = vunpack.c.l.b16 %v4130
    %v5236 = vunpack.c.h.b16 %v4130
    %v5237 = vunpack.c.l.b16 %v4131
    %v5238 = vunpack.c.h.b16 %v4131
    %v5239 = vunpack.c.l.b16 %v4132
    %v5240 = vunpack.c.h.b16 %v4132
    %v5241 = vunpack.c.l.b16 %v4133
    %v5242 = vunpack.c.h.b16 %v4133
    %v5243 = vunpack.c.l.b16 %v4134
    %v5244 = vunpack.c.h.b16 %v4134
    %v5245 = vunpack.c.l.b16 %v4135
    %v5246 = vunpack.c.h.b16 %v4135
    %v5247 = vunpack.c.l.b16 %v4136
    %v5248 = vunpack.c.h.b16 %v4136
    %v5249 = vunpack.c.l.b16 %v4137
    %v5250 = vunpack.c.h.b16 %v4137
    %v5251 = vunpack.c.l.b16 %v4138
    %v5252 = vunpack.c.h.b16 %v4138
    %v5253 = vunpack.c.l.b16 %v4139
    %v5254 = vunpack.c.h.b16 %v4139
    %v5255 = vunpack.c.l.b16 %v4140
    %v5256 = vunpack.c.h.b16 %v4140
    %v5257 = vunpack.c.l.b16 %v4141
    %v5258 = vunpack.c.h.b16 %v4141
    %v5259 = vunpack.c.l.b16 %v4142
    %v5260 = vunpack.c.h.b16 %v4142
    %v5261 = vunpack.c.l.b16 %v4143
    %v5262 = vunpack.c.h.b16 %v4143
    %v5263 = vunpack.c.l.b16 %v4144
    %v5264 = vunpack.c.h.b16 %v4144
    %v5265 = vunpack.c.l.b16 %v4145
    %v5266 = vunpack.c.h.b16 %v4145
    %v5267 = vunpack.c.l.b16 %v4146
    %v5268 = vunpack.c.h.b16 %v4146
    %v5269 = vunpack.c.l.b16 %v4147
    %v5270 = vunpack.c.h.b16 %v4147
    %v5271 = vunpack.c.l.b16 %v4148
    %v5272 = vunpack.c.h.b16 %v4148
    %v5273 = vunpack.c.l.b16 %v4149
    %v5274 = vunpack.c.h.b16 %v4149
    %v5275 = vunpack.c.l.b16 %v4150
    %v5276 = vunpack.c.h.b16 %v4150
    %v5277 = vunpack.c.l.b16 %v4151
    %v5278 = vunpack.c.h.b16 %v4151
    %v5279 = vunpack.c.l.b16 %v4152
    %v5280 = vunpack.c.h.b16 %v4152
    %v5281 = vunpack.c.l.b16 %v4153
    %v5282 = vunpack.c.h.b16 %v4153
    %v5283 = vunpack.c.l.b16 %v4154
    %v5284 = vunpack.c.h.b16 %v4154
    %v5285 = vunpack.c.l.b16 %v4155
    %v5286 = vunpack.c.h.b16 %v4155
    %v5287 = vunpack.c.l.b16 %v4156
    %v5288 = vunpack.c.h.b16 %v4156
    %v5289 = vunpack.c.l.b16 %v4157
    %v5290 = vunpack.c.h.b16 %v4157
    %v5291 = vunpack.c.l.b16 %v4158
    %v5292 = vunpack.c.h.b16 %v4158
    %v5293 = vunpack.c.l.b16 %v4159
    %v5294 = vunpack.c.h.b16 %v4159
    %v5295 = vunpack.c.l.b16 %v4160
    %v5296 = vunpack.c.h.b16 %v4160
    %v5297 = vunpack.c.l.b16 %v4161
    %v5298 = vunpack.c.h.b16 %v4161
    %v5299 = vunpack.c.l.b16 %v4162
    %v5300 = vunpack.c.h.b16 %v4162
    %v5301 = vunpack.c.l.b16 %v4163
    %v5302 = vunpack.c.h.b16 %v4163
    %v5303 = vunpack.c.l.b16 %v4164
    %v5304 = vunpack.c.h.b16 %v4164
    %v5305 = vunpack.c.l.b16 %v4165
    %v5306 = vunpack.c.h.b16 %v4165
    %v5307 = vunpack.c.l.b16 %v4166
    %v5308 = vunpack.c.h.b16 %v4166
    %v5309 = vunpack.c.l.b16 %v4167
    %v5310 = vunpack.c.h.b16 %v4167
    %v5311 = vunpack.c.l.b16 %v4168
    %v5312 = vunpack.c.h.b16 %v4168
    %v5313 = vunpack.c.l.b16 %v4169
    %v5314 = vunpack.c.h.b16 %v4169
    %v5315 = vunpack.c.l.b16 %v4170
    %v5316 = vunpack.c.h.b16 %v4170
    %v5317 = vunpack.c.l.b16 %v4171
    %v5318 = vunpack.c.h.b16 %v4171
    %v5319 = vunpack.c.l.b16 %v4172
    %v5320 = vunpack.c.h.b16 %v4172
    %v5321 = vunpack.c.l.b16 %v4173
    %v5322 = vunpack.c.h.b16 %v4173
    %v5323 = vunpack.c.l.b16 %v4174
    %v5324 = vunpack.c.h.b16 %v4174
    %v5325 = vunpack.c.l.b16 %v4175
    %v5326 = vunpack.c.h.b16 %v4175
    %v5327 = vunpack.c.l.b16 %v4176
    %v5328 = vunpack.c.h.b16 %v4176
    %v5329 = vunpack.c.l.b16 %v4177
    %v5330 = vunpack.c.h.b16 %v4177
    %v5331 = vunpack.c.l.b16 %v4178
    %v5332 = vunpack.c.h.b16 %v4178
    %v5333 = vunpack.c.l.b16 %v4179
    %v5334 = vunpack.c.h.b16 %v4179
    %v5335 = vunpack.c.l.b16 %v4180
    %v5336 = vunpack.c.h.b16 %v4180
    %v5337 = vunpack.c.l.b16 %v4181
    %v5338 = vunpack.c.h.b16 %v4181
    %v5339 = vunpack.c.l.b16 %v4182
    %v5340 = vunpack.c.h.b16 %v4182
    %v5341 = vunpack.c.l.b16 %v4183
    %v5342 = vunpack.c.h.b16 %v4183
    %v5343 = vunpack.c.l.b16 %v4184
    %v5344 = vunpack.c.h.b16 %v4184
    %v5345 = vunpack.c.l.b16 %v4185
    %v5346 = vunpack.c.h.b16 %v4185
    %v5347 = vunpack.c.l.b16 %v4186
    %v5348 = vunpack.c.h.b16 %v4186
    %v5349 = vunpack.c.l.b16 %v4187
    %v5350 = vunpack.c.h.b16 %v4187
    %v5351 = vunpack.c.l.b16 %v4188
    %v5352 = vunpack.c.h.b16 %v4188
    %v5353 = vunpack.c.l.b16 %v4189
    %v5354 = vunpack.c.h.b16 %v4189
    %v5355 = vunpack.c.l.b16 %v4190
    %v5356 = vunpack.c.h.b16 %v4190
    %v5357 = vunpack.c.l.b16 %v4191
    %v5358 = vunpack.c.h.b16 %v4191
    %v5359 = vunpack.c.l.b16 %v4192
    %v5360 = vunpack.c.h.b16 %v4192
    %v5361 = vunpack.c.l.b16 %v4193
    %v5362 = vunpack.c.h.b16 %v4193
    %v5363 = vunpack.c.l.b16 %v4194
    %v5364 = vunpack.c.h.b16 %v4194
    %v5365 = vunpack.c.l.b16 %v4195
    %v5366 = vunpack.c.h.b16 %v4195
    %v5367 = vunpack.c.l.b16 %v4196
    %v5368 = vunpack.c.h.b16 %v4196
    %v5369 = vunpack.c.l.b16 %v4197
    %v5370 = vunpack.c.h.b16 %v4197
    %v5371 = vunpack.c.l.b16 %v4198
    %v5372 = vunpack.c.h.b16 %v4198
    %v5373 = vunpack.c.l.b16 %v4199
    %v5374 = vunpack.c.h.b16 %v4199
    %v5375 = vunpack.c.l.b16 %v4200
    %v5376 = vunpack.c.h.b16 %v4200
    %v5377 = vunpack.c.l.b16 %v4201
    %v5378 = vunpack.c.h.b16 %v4201
    %v5379 = vunpack.c.l.b16 %v4202
    %v5380 = vunpack.c.h.b16 %v4202
    %v5381 = vunpack.c.l.b16 %v4203
    %v5382 = vunpack.c.h.b16 %v4203
    %v5383 = vunpack.c.l.b16 %v4204
    %v5384 = vunpack.c.h.b16 %v4204
    %v5385 = vunpack.c.l.b16 %v4205
    %v5386 = vunpack.c.h.b16 %v4205
    %v5387 = vunpack.c.l.b16 %v4206
    %v5388 = vunpack.c.h.b16 %v4206
    %v5389 = vunpack.c.l.b16 %v4207
    %v5390 = vunpack.c.h.b16 %v4207
    %v5391 = vunpack.c.l.b16 %v4208
    %v5392 = vunpack.c.h.b16 %v4208
    %v5393 = vunpack.c.l.b16 %v4209
    %v5394 = vunpack.c.h.b16 %v4209
    %v5395 = vunpack.c.l.b16 %v4210
    %v5396 = vunpack.c.h.b16 %v4210
    %v5397 = vunpack.c.l.b16 %v4211
    %v5398 = vunpack.c.h.b16 %v4211
    %v5399 = vunpack.c.l.b16 %v4212
    %v5400 = vunpack.c.h.b16 %v4212
    %v5401 = vunpack.c.l.b16 %v4213
    %v5402 = vunpack.c.h.b16 %v4213
    %v5403 = vunpack.c.l.b16 %v4214
    %v5404 = vunpack.c.h.b16 %v4214
    %v5405 = vunpack.c.l.b16 %v4215
    %v5406 = vunpack.c.h.b16 %v4215
    %v5407 = vunpack.c.l.b16 %v4216
    %v5408 = vunpack.c.h.b16 %v4216
    %v5409 = vunpack.c.l.b16 %v4217
    %v5410 = vunpack.c.h.b16 %v4217
    %v5411 = vunpack.c.l.b16 %v4218
    %v5412 = vunpack.c.h.b16 %v4218
    %v5413 = vunpack.c.l.b16 %v4219
    %v5414 = vunpack.c.h.b16 %v4219
    %v5415 = vunpack.c.l.b16 %v4220
    %v5416 = vunpack.c.h.b16 %v4220
    %v5417 = vunpack.c.l.b16 %v4221
    %v5418 = vunpack.c.h.b16 %v4221
    %v5419 = vunpack.c.l.b16 %v4222
    %v5420 = vunpack.c.h.b16 %v4222
    %v5421 = vunpack.c.l.b16 %v4223
    %v5422 = vunpack.c.h.b16 %v4223
    %v5423 = vunpack.c.l.b16 %v4224
    %v5424 = vunpack.c.h.b16 %v4224
    %v5425 = vunpack.c.l.b16 %v4225
    %v5426 = vunpack.c.h.b16 %v4225
    %v5427 = vunpack.c.l.b16 %v4226
    %v5428 = vunpack.c.h.b16 %v4226
    %v5429 = vunpack.c.l.b16 %v4227
    %v5430 = vunpack.c.h.b16 %v4227
    %v5431 = vunpack.c.l.b16 %v4228
    %v5432 = vunpack.c.h.b16 %v4228
    %v5433 = vunpack.c.l.b16 %v4229
    %v5434 = vunpack.c.h.b16 %v4229
    %v5435 = vunpack.c.l.b16 %v4230
    %v5436 = vunpack.c.h.b16 %v4230
    %v5437 = vunpack.c.l.b16 %v4231
    %v5438 = vunpack.c.h.b16 %v4231
    %v5439 = vunpack.c.l.b16 %v4232
    %v5440 = vunpack.c.h.b16 %v4232
    %v5441 = vunpack.c.l.b16 %v4233
    %v5442 = vunpack.c.h.b16 %v4233
    %v5443 = vunpack.c.l.b16 %v4234
    %v5444 = vunpack.c.h.b16 %v4234
    %v5445 = vunpack.c.l.b16 %v4235
    %v5446 = vunpack.c.h.b16 %v4235
    %v5447 = vunpack.c.l.b16 %v4236
    %v5448 = vunpack.c.h.b16 %v4236
    %v5449 = vunpack.c.l.b16 %v4237
    %v5450 = vunpack.c.h.b16 %v4237
    %v5451 = vunpack.c.l.b16 %v4238
    %v5452 = vunpack.c.h.b16 %v4238
    %v5453 = vunpack.c.l.b16 %v4239
    %v5454 = vunpack.c.h.b16 %v4239
    %v5455 = vunpack.c.l.b16 %v4240
    %v5456 = vunpack.c.h.b16 %v4240
    %v5457 = vunpack.c.l.b16 %v4241
    %v5458 = vunpack.c.h.b16 %v4241
    %v5459 = vunpack.c.l.b16 %v4242
    %v5460 = vunpack.c.h.b16 %v4242
    %v5461 = vunpack.c.l.b16 %v4243
    %v5462 = vunpack.c.h.b16 %v4243
    %v5463 = vunpack.c.l.b16 %v4244
    %v5464 = vunpack.c.h.b16 %v4244
    %v5465 = vunpack.c.l.b16 %v4245
    %v5466 = vunpack.c.h.b16 %v4245
    %v5467 = vunpack.c.l.b16 %v4246
    %v5468 = vunpack.c.h.b16 %v4246
    %v5469 = vunpack.c.l.b16 %v4247
    %v5470 = vunpack.c.h.b16 %v4247
    %v5471 = vunpack.c.l.b16 %v4248
    %v5472 = vunpack.c.h.b16 %v4248
    %v5473 = vunpack.c.l.b16 %v4249
    %v5474 = vunpack.c.h.b16 %v4249
    %v5475 = vunpack.c.l.b16 %v4250
    %v5476 = vunpack.c.h.b16 %v4250
    %v5477 = vunpack.c.l.b16 %v4251
    %v5478 = vunpack.c.h.b16 %v4251
    %v5479 = vunpack.c.l.b16 %v4252
    %v5480 = vunpack.c.h.b16 %v4252
    %v5481 = vunpack.c.l.b16 %v4253
    %v5482 = vunpack.c.h.b16 %v4253
    %v5483 = vunpack.c.l.b16 %v4254
    %v5484 = vunpack.c.h.b16 %v4254
    %v5485 = vunpack.c.l.b16 %v4255
    %v5486 = vunpack.c.h.b16 %v4255
    %v5487 = vunpack.c.l.b16 %v4256
    %v5488 = vunpack.c.h.b16 %v4256
    %v5489 = vunpack.c.l.b16 %v4257
    %v5490 = vunpack.c.h.b16 %v4257
    %v5491 = vunpack.c.l.b16 %v4258
    %v5492 = vunpack.c.h.b16 %v4258
    %v5493 = vunpack.c.l.b16 %v4259
    %v5494 = vunpack.c.h.b16 %v4259
    %v5495 = vunpack.c.l.b16 %v4260
    %v5496 = vunpack.c.h.b16 %v4260
    %v5497 = vunpack.c.l.b16 %v4261
    %v5498 = vunpack.c.h.b16 %v4261
    %v5499 = vunpack.c.l.b16 %v4262
    %v5500 = vunpack.c.h.b16 %v4262
    %v5501 = vunpack.c.l.b16 %v4263
    %v5502 = vunpack.c.h.b16 %v4263
    %v5503 = vunpack.c.l.b16 %v4264
    %v5504 = vunpack.c.h.b16 %v4264
    %v5505 = vunpack.c.l.b16 %v4265
    %v5506 = vunpack.c.h.b16 %v4265
    %v5507 = vunpack.c.l.b16 %v4266
    %v5508 = vunpack.c.h.b16 %v4266
    %v5509 = vunpack.c.l.b16 %v4267
    %v5510 = vunpack.c.h.b16 %v4267
    %v5511 = vunpack.c.l.b16 %v4268
    %v5512 = vunpack.c.h.b16 %v4268
    %v5513 = vunpack.c.l.b16 %v4269
    %v5514 = vunpack.c.h.b16 %v4269
    %v5515 = vunpack.c.l.b16 %v4270
    %v5516 = vunpack.c.h.b16 %v4270
    %v5517 = vunpack.c.l.b16 %v4271
    %v5518 = vunpack.c.h.b16 %v4271
    %v5519 = vunpack.c.l.b16 %v4272
    %v5520 = vunpack.c.h.b16 %v4272
    %v5521 = vunpack.c.l.b16 %v4273
    %v5522 = vunpack.c.h.b16 %v4273
    %v5523 = vunpack.c.l.b16 %v4274
    %v5524 = vunpack.c.h.b16 %v4274
    %v5525 = vunpack.c.l.b16 %v4275
    %v5526 = vunpack.c.h.b16 %v4275
    %v5527 = vunpack.c.l.b16 %v4276
    %v5528 = vunpack.c.h.b16 %v4276
    %v5529 = vunpack.c.l.b16 %v4277
    %v5530 = vunpack.c.h.b16 %v4277
    %v5531 = vunpack.c.l.b16 %v4278
    %v5532 = vunpack.c.h.b16 %v4278
    %v5533 = vunpack.c.l.b16 %v4279
    %v5534 = vunpack.c.h.b16 %v4279
    %v5535 = vunpack.c.l.b16 %v4280
    %v5536 = vunpack.c.h.b16 %v4280
    %v5537 = vunpack.c.l.b16 %v4281
    %v5538 = vunpack.c.h.b16 %v4281
    %v5539 = vunpack.c.l.b16 %v4282
    %v5540 = vunpack.c.h.b16 %v4282
    %v5541 = vunpack.c.l.b16 %v4283
    %v5542 = vunpack.c.h.b16 %v4283
    %v5543 = vunpack.c.l.b16 %v4284
    %v5544 = vunpack.c.h.b16 %v4284
    %v5545 = vunpack.c.l.b16 %v4285
    %v5546 = vunpack.c.h.b16 %v4285
    %v5547 = vunpack.c.l.b16 %v4286
    %v5548 = vunpack.c.h.b16 %v4286
    %v5549 = vunpack.c.l.b16 %v4287
    %v5550 = vunpack.c.h.b16 %v4287
    %v5551 = vunpack.c.l.b16 %v4288
    %v5552 = vunpack.c.h.b16 %v4288
    %v5553 = vunpack.c.l.b16 %v4289
    %v5554 = vunpack.c.h.b16 %v4289
    %v5555 = vunpack.c.l.b16 %v4290
    %v5556 = vunpack.c.h.b16 %v4290
    %v5557 = vunpack.c.l.b16 %v4291
    %v5558 = vunpack.c.h.b16 %v4291
    %v5559 = vunpack.c.l.b16 %v4292
    %v5560 = vunpack.c.h.b16 %v4292
    %v5561 = vunpack.c.l.b16 %v4293
    %v5562 = vunpack.c.h.b16 %v4293
    %v5563 = vunpack.c.l.b16 %v4294
    %v5564 = vunpack.c.h.b16 %v4294
    %v5565 = vunpack.c.l.b16 %v4295
    %v5566 = vunpack.c.h.b16 %v4295
    %v5567 = vunpack.c.l.b16 %v4296
    %v5568 = vunpack.c.h.b16 %v4296
    %v5569 = vunpack.c.l.b16 %v4297
    %v5570 = vunpack.c.h.b16 %v4297
    %v5571 = vunpack.c.l.b16 %v4298
    %v5572 = vunpack.c.h.b16 %v4298
    %v5573 = vunpack.c.l.b16 %v4299
    %v5574 = vunpack.c.h.b16 %v4299
    %v5575 = vunpack.c.l.b16 %v4300
    %v5576 = vunpack.c.h.b16 %v4300
    %v5577 = vunpack.c.l.b16 %v4301
    %v5578 = vunpack.c.h.b16 %v4301
    %v5579 = vunpack.c.l.b16 %v4302
    %v5580 = vunpack.c.h.b16 %v4302
    %v5581 = vunpack.c.l.b16 %v4303
    %v5582 = vunpack.c.h.b16 %v4303
    %v5583 = vunpack.c.l.b16 %v4304
    %v5584 = vunpack.c.h.b16 %v4304
    %v5585 = vunpack.c.l.b16 %v4305
    %v5586 = vunpack.c.h.b16 %v4305
    %v5587 = vunpack.c.l.b16 %v4306
    %v5588 = vunpack.c.h.b16 %v4306
    %v5589 = vunpack.c.l.b16 %v4307
    %v5590 = vunpack.c.h.b16 %v4307
    %v5591 = vunpack.c.l.b16 %v4308
    %v5592 = vunpack.c.h.b16 %v4308
    %v5593 = vunpack.c.l.b16 %v4309
    %v5594 = vunpack.c.h.b16 %v4309
    %v5595 = vunpack.c.l.b16 %v4310
    %v5596 = vunpack.c.h.b16 %v4310
    %v5597 = vunpack.c.l.b16 %v4311
    %v5598 = vunpack.c.h.b16 %v4311
    %v5599 = vunpack.c.l.b16 %v4312
    %v5600 = vunpack.c.h.b16 %v4312
    %v5601 = vunpack.c.l.b16 %v4313
    %v5602 = vunpack.c.h.b16 %v4313
    %v5603 = vunpack.c.l.b16 %v4314
    %v5604 = vunpack.c.h.b16 %v4314
    %v5605 = vunpack.c.l.b16 %v4315
    %v5606 = vunpack.c.h.b16 %v4315
    %v5607 = vunpack.c.l.b16 %v4316
    %v5608 = vunpack.c.h.b16 %v4316
    %v5609 = vunpack.c.l.b16 %v4317
    %v5610 = vunpack.c.h.b16 %v4317
    %v5611 = vunpack.c.l.b16 %v4318
    %v5612 = vunpack.c.h.b16 %v4318
    %v5613 = vunpack.c.l.b16 %v4319
    %v5614 = vunpack.c.h.b16 %v4319
    %v5615 = vunpack.c.l.b16 %v4320
    %v5616 = vunpack.c.h.b16 %v4320
    %v5617 = vunpack.c.l.b16 %v4321
    %v5618 = vunpack.c.h.b16 %v4321
    %v5619 = vunpack.c.l.b16 %v4322
    %v5620 = vunpack.c.h.b16 %v4322
    %v5621 = vunpack.c.l.b16 %v4323
    %v5622 = vunpack.c.h.b16 %v4323
    %v5623 = vunpack.c.l.b16 %v4324
    %v5624 = vunpack.c.h.b16 %v4324
    %v5625 = vunpack.c.l.b16 %v4325
    %v5626 = vunpack.c.h.b16 %v4325
    %v5627 = vunpack.c.l.b16 %v4326
    %v5628 = vunpack.c.h.b16 %v4326
    %v5629 = vunpack.c.l.b16 %v4327
    %v5630 = vunpack.c.h.b16 %v4327
    %v5631 = vunpack.c.l.b16 %v4328
    %v5632 = vunpack.c.h.b16 %v4328
    %v5633 = vunpack.c.l.b16 %v4329
    %v5634 = vunpack.c.h.b16 %v4329
    %v5635 = vunpack.c.l.b16 %v4330
    %v5636 = vunpack.c.h.b16 %v4330
    %v5637 = vunpack.c.l.b16 %v4331
    %v5638 = vunpack.c.h.b16 %v4331
    %v5639 = vunpack.c.l.b16 %v4332
    %v5640 = vunpack.c.h.b16 %v4332
    %v5641 = vunpack.c.l.b16 %v4333
    %v5642 = vunpack.c.h.b16 %v4333
    %v5643 = vunpack.c.l.b16 %v4334
    %v5644 = vunpack.c.h.b16 %v4334
    %v5645 = vunpack.c.l.b16 %v4335
    %v5646 = vunpack.c.h.b16 %v4335
    %v5647 = vunpack.c.l.b16 %v4336
    %v5648 = vunpack.c.h.b16 %v4336
    %v5649 = vunpack.c.l.b16 %v4337
    %v5650 = vunpack.c.h.b16 %v4337
    %v5651 = vunpack.c.l.b16 %v4338
    %v5652 = vunpack.c.h.b16 %v4338
    %v5653 = vunpack.c.l.b16 %v4339
    %v5654 = vunpack.c.h.b16 %v4339
    %v5655 = vunpack.c.l.b16 %v4340
    %v5656 = vunpack.c.h.b16 %v4340
    %v5657 = vunpack.c.l.b16 %v4341
    %v5658 = vunpack.c.h.b16 %v4341
    %v5659 = vunpack.c.l.b16 %v4342
    %v5660 = vunpack.c.h.b16 %v4342
    %v5661 = vunpack.c.l.b16 %v4343
    %v5662 = vunpack.c.h.b16 %v4343
    %v5663 = vunpack.c.l.b16 %v4344
    %v5664 = vunpack.c.h.b16 %v4344
    %v5665 = vunpack.c.l.b16 %v4345
    %v5666 = vunpack.c.h.b16 %v4345
    %v5667 = vunpack.c.l.b16 %v4346
    %v5668 = vunpack.c.h.b16 %v4346
    %v5669 = vunpack.c.l.b16 %v4347
    %v5670 = vunpack.c.h.b16 %v4347
    %v5671 = vunpack.c.l.b16 %v4348
    %v5672 = vunpack.c.h.b16 %v4348
    %v5673 = vunpack.c.l.b16 %v4349
    %v5674 = vunpack.c.h.b16 %v4349
    %v5675 = vunpack.c.l.b16 %v4350
    %v5676 = vunpack.c.h.b16 %v4350
    %v5677 = vunpack.c.l.b16 %v4351
    %v5678 = vunpack.c.h.b16 %v4351
    %v5679 = vunpack.c.l.b16 %v4352
    %v5680 = vunpack.c.h.b16 %v4352
    %v5681 = vunpack.c.l.b16 %v4353
    %v5682 = vunpack.c.h.b16 %v4353
    %v5683 = vunpack.c.l.b16 %v4354
    %v5684 = vunpack.c.h.b16 %v4354
    %v5685 = vunpack.c.l.b16 %v4355
    %v5686 = vunpack.c.h.b16 %v4355
    %v5687 = vunpack.c.l.b16 %v4356
    %v5688 = vunpack.c.h.b16 %v4356
    %v5689 = vunpack.c.l.b16 %v4357
    %v5690 = vunpack.c.h.b16 %v4357
    %v5691 = vunpack.c.l.b16 %v4358
    %v5692 = vunpack.c.h.b16 %v4358
    %v5693 = vunpack.c.l.b16 %v4359
    %v5694 = vunpack.c.h.b16 %v4359
    %v5695 = vunpack.c.l.b16 %v4360
    %v5696 = vunpack.c.h.b16 %v4360
    %v5697 = vunpack.c.l.b16 %v4361
    %v5698 = vunpack.c.h.b16 %v4361
    %v5699 = vunpack.c.l.b16 %v4362
    %v5700 = vunpack.c.h.b16 %v4362
    %v5701 = vunpack.c.l.b16 %v4363
    %v5702 = vunpack.c.h.b16 %v4363
    %v5703 = vunpack.c.l.b16 %v4364
    %v5704 = vunpack.c.h.b16 %v4364
    %v5705 = vunpack.c.l.b16 %v4365
    %v5706 = vunpack.c.h.b16 %v4365
    %v5707 = vunpack.c.l.b16 %v4366
    %v5708 = vunpack.c.h.b16 %v4366
    %v5709 = vunpack.c.l.b16 %v4367
    %v5710 = vunpack.c.h.b16 %v4367
    %v5711 = vunpack.c.l.b16 %v4368
    %v5712 = vunpack.c.h.b16 %v4368
    %v5713 = vunpack.c.l.b16 %v4369
    %v5714 = vunpack.c.h.b16 %v4369
    %v5715 = vunpack.c.l.b16 %v4370
    %v5716 = vunpack.c.h.b16 %v4370
    %v5717 = vunpack.c.l.b16 %v4371
    %v5718 = vunpack.c.h.b16 %v4371
    %v5719 = vunpack.c.l.b16 %v4372
    %v5720 = vunpack.c.h.b16 %v4372
    %v5721 = vunpack.c.l.b16 %v4373
    %v5722 = vunpack.c.h.b16 %v4373
    %v5723 = vunpack.c.l.b16 %v4374
    %v5724 = vunpack.c.h.b16 %v4374
    %v5725 = vunpack.c.l.b16 %v4375
    %v5726 = vunpack.c.h.b16 %v4375
    %v5727 = vunpack.c.l.b16 %v4376
    %v5728 = vunpack.c.h.b16 %v4376
    %v5729 = vunpack.c.l.b16 %v4377
    %v5730 = vunpack.c.h.b16 %v4377
    %v5731 = vunpack.c.l.b16 %v4378
    %v5732 = vunpack.c.h.b16 %v4378
    %v5733 = vunpack.c.l.b16 %v4379
    %v5734 = vunpack.c.h.b16 %v4379
    %v5735 = vunpack.c.l.b16 %v4380
    %v5736 = vunpack.c.h.b16 %v4380
    %v5737 = vunpack.c.l.b16 %v4381
    %v5738 = vunpack.c.h.b16 %v4381
    %v5739 = vunpack.c.l.b16 %v4382
    %v5740 = vunpack.c.h.b16 %v4382
    %v5741 = vunpack.c.l.b16 %v4383
    %v5742 = vunpack.c.h.b16 %v4383
    %v5743 = vunpack.c.l.b16 %v4384
    %v5744 = vunpack.c.h.b16 %v4384
    %v5745 = vunpack.c.l.b16 %v4385
    %v5746 = vunpack.c.h.b16 %v4385
    %v5747 = vunpack.c.l.b16 %v4386
    %v5748 = vunpack.c.h.b16 %v4386
    %v5749 = vunpack.c.l.b16 %v4387
    %v5750 = vunpack.c.h.b16 %v4387
    %v5751 = vunpack.c.l.b16 %v4388
    %v5752 = vunpack.c.h.b16 %v4388
    %v5753 = vunpack.c.l.b16 %v4389
    %v5754 = vunpack.c.h.b16 %v4389
    %v5755 = vunpack.c.l.b16 %v4390
    %v5756 = vunpack.c.h.b16 %v4390
    %v5757 = vunpack.c.l.b16 %v4391
    %v5758 = vunpack.c.h.b16 %v4391
    %v5759 = vunpack.c.l.b16 %v4392
    %v5760 = vunpack.c.h.b16 %v4392
    %v5761 = vunpack.c.l.b16 %v4393
    %v5762 = vunpack.c.h.b16 %v4393
    %v5763 = vunpack.c.l.b16 %v4394
    %v5764 = vunpack.c.h.b16 %v4394
    %v5765 = vunpack.c.l.b16 %v4395
    %v5766 = vunpack.c.h.b16 %v4395
    %v5767 = vunpack.c.l.b16 %v4396
    %v5768 = vunpack.c.h.b16 %v4396
    %v5769 = vunpack.c.l.b16 %v4397
    %v5770 = vunpack.c.h.b16 %v4397
    %v5771 = vunpack.c.l.b16 %v4398
    %v5772 = vunpack.c.h.b16 %v4398
    %v5773 = vunpack.c.l.b16 %v4399
    %v5774 = vunpack.c.h.b16 %v4399
    %v5775 = vunpack.c.l.b16 %v4400
    %v5776 = vunpack.c.h.b16 %v4400
    %v5777 = vunpack.c.l.b16 %v4401
    %v5778 = vunpack.c.h.b16 %v4401
    %v5779 = vunpack.c.l.b16 %v4402
    %v5780 = vunpack.c.h.b16 %v4402
    %v5781 = vunpack.c.l.b16 %v4403
    %v5782 = vunpack.c.h.b16 %v4403
    %v5783 = vunpack.c.l.b16 %v4404
    %v5784 = vunpack.c.h.b16 %v4404
    %v5785 = vunpack.c.l.b16 %v4405
    %v5786 = vunpack.c.h.b16 %v4405
    %v5787 = vunpack.c.l.b16 %v4406
    %v5788 = vunpack.c.h.b16 %v4406
    %v5789 = vunpack.c.l.b16 %v4407
    %v5790 = vunpack.c.h.b16 %v4407
    %v5791 = vunpack.c.l.b16 %v4408
    %v5792 = vunpack.c.h.b16 %v4408
    %v5793 = vunpack.c.l.b16 %v4409
    %v5794 = vunpack.c.h.b16 %v4409
    %v5795 = vunpack.c.l.b16 %v4410
    %v5796 = vunpack.c.h.b16 %v4410
    %v5797 = vunpack.c.l.b16 %v4411
    %v5798 = vunpack.c.h.b16 %v4411
    %v5799 = vunpack.c.l.b16 %v4412
    %v5800 = vunpack.c.h.b16 %v4412
    %v5801 = vunpack.c.l.b16 %v4413
    %v5802 = vunpack.c.h.b16 %v4413
    %v5803 = vunpack.c.l.b16 %v4414
    %v5804 = vunpack.c.h.b16 %v4414
    %v5805 = vunpack.c.l.b16 %v4415
    %v5806 = vunpack.c.h.b16 %v4415
    %v5807 = vunpack.c.l.b16 %v4416
    %v5808 = vunpack.c.h.b16 %v4416
    %v5809 = vunpack.c.l.b16 %v4417
    %v5810 = vunpack.c.h.b16 %v4417
    %v5811 = vunpack.c.l.b16 %v4418
    %v5812 = vunpack.c.h.b16 %v4418
    %v5813 = vunpack.c.l.b16 %v4419
    %v5814 = vunpack.c.h.b16 %v4419
    %v5815 = vunpack.c.l.b16 %v4420
    %v5816 = vunpack.c.h.b16 %v4420
    %v5817 = vunpack.c.l.b16 %v4421
    %v5818 = vunpack.c.h.b16 %v4421
    %v5819 = vunpack.c.l.b16 %v4422
    %v5820 = vunpack.c.h.b16 %v4422
    %v5821 = vunpack.c.l.b16 %v4423
    %v5822 = vunpack.c.h.b16 %v4423
    %v5823 = vunpack.c.l.b16 %v4424
    %v5824 = vunpack.c.h.b16 %v4424
    %v5825 = vunpack.c.l.b16 %v4425
    %v5826 = vunpack.c.h.b16 %v4425
    %v5827 = vunpack.c.l.b16 %v4426
    %v5828 = vunpack.c.h.b16 %v4426
    %v5829 = vunpack.c.l.b16 %v4427
    %v5830 = vunpack.c.h.b16 %v4427
    %v5831 = vunpack.c.l.b16 %v4428
    %v5832 = vunpack.c.h.b16 %v4428
    %v5833 = vunpack.c.l.b16 %v4429
    %v5834 = vunpack.c.h.b16 %v4429
    %v5835 = vunpack.c.l.b16 %v4430
    %v5836 = vunpack.c.h.b16 %v4430
    %v5837 = vunpack.c.l.b16 %v4431
    %v5838 = vunpack.c.h.b16 %v4431
    %v5839 = vunpack.c.l.b16 %v4432
    %v5840 = vunpack.c.h.b16 %v4432
    %v5841 = vunpack.c.l.b16 %v4433
    %v5842 = vunpack.c.h.b16 %v4433
    %v5843 = vunpack.c.l.b16 %v4434
    %v5844 = vunpack.c.h.b16 %v4434
    %v5845 = vunpack.c.l.b16 %v4435
    %v5846 = vunpack.c.h.b16 %v4435
    %v5847 = vunpack.c.l.b16 %v4436
    %v5848 = vunpack.c.h.b16 %v4436
    %v5849 = vunpack.c.l.b16 %v4437
    %v5850 = vunpack.c.h.b16 %v4437
    %v5851 = vunpack.c.l.b16 %v4438
    %v5852 = vunpack.c.h.b16 %v4438
    %v5853 = vunpack.c.l.b16 %v4439
    %v5854 = vunpack.c.h.b16 %v4439
    %v5855 = vunpack.c.l.b16 %v4440
    %v5856 = vunpack.c.h.b16 %v4440
    %v5857 = vunpack.c.l.b16 %v4441
    %v5858 = vunpack.c.h.b16 %v4441
    %v5859 = vunpack.c.l.b16 %v4442
    %v5860 = vunpack.c.h.b16 %v4442
    %v5861 = vunpack.c.l.b16 %v4443
    %v5862 = vunpack.c.h.b16 %v4443
    %v5863 = vunpack.c.l.b16 %v4444
    %v5864 = vunpack.c.h.b16 %v4444
    %v5865 = vunpack.c.l.b16 %v4445
    %v5866 = vunpack.c.h.b16 %v4445
    %v5867 = vunpack.c.l.b16 %v4446
    %v5868 = vunpack.c.h.b16 %v4446
    %v5869 = vunpack.c.l.b16 %v4447
    %v5870 = vunpack.c.h.b16 %v4447
    %v5871 = vunpack.c.l.b16 %v4448
    %v5872 = vunpack.c.h.b16 %v4448
    %v5873 = vunpack.c.l.b16 %v4449
    %v5874 = vunpack.c.h.b16 %v4449
    %v5875 = vunpack.c.l.b16 %v4450
    %v5876 = vunpack.c.h.b16 %v4450
    %v5877 = vunpack.c.l.b16 %v4451
    %v5878 = vunpack.c.h.b16 %v4451
    %v5879 = vunpack.c.l.b16 %v4452
    %v5880 = vunpack.c.h.b16 %v4452
    %v5881 = vunpack.c.l.b16 %v4453
    %v5882 = vunpack.c.h.b16 %v4453
    %v5883 = vunpack.c.l.b16 %v4454
    %v5884 = vunpack.c.h.b16 %v4454
    %v5885 = vunpack.c.l.b16 %v4455
    %v5886 = vunpack.c.h.b16 %v4455
    %v5887 = vunpack.c.l.b16 %v4456
    %v5888 = vunpack.c.h.b16 %v4456
    %v5889 = vunpack.c.l.b16 %v4457
    %v5890 = vunpack.c.h.b16 %v4457
    %v5891 = vunpack.c.l.b16 %v4458
    %v5892 = vunpack.c.h.b16 %v4458
    %v5893 = vunpack.c.l.b16 %v4459
    %v5894 = vunpack.c.h.b16 %v4459
    %v5895 = vunpack.c.l.b16 %v4460
    %v5896 = vunpack.c.h.b16 %v4460
    %v5897 = vunpack.c.l.b16 %v4461
    %v5898 = vunpack.c.h.b16 %v4461
    %v5899 = vunpack.c.l.b16 %v4462
    %v5900 = vunpack.c.h.b16 %v4462
    %v5901 = vunpack.c.l.b16 %v4463
    %v5902 = vunpack.c.h.b16 %v4463
    %v5903 = vunpack.c.l.b16 %v4464
    %v5904 = vunpack.c.h.b16 %v4464
    %v5905 = vunpack.c.l.b16 %v4465
    %v5906 = vunpack.c.h.b16 %v4465
    %v5907 = vunpack.c.l.b16 %v4466
    %v5908 = vunpack.c.h.b16 %v4466
    %v5909 = vunpack.c.l.b16 %v4467
    %v5910 = vunpack.c.h.b16 %v4467
    %v5911 = vunpack.c.l.b16 %v4468
    %v5912 = vunpack.c.h.b16 %v4468
    %v5913 = vunpack.c.l.b16 %v4469
    %v5914 = vunpack.c.h.b16 %v4469
    %v5915 = vunpack.c.l.b16 %v4470
    %v5916 = vunpack.c.h.b16 %v4470
    %v5917 = vunpack.c.l.b16 %v4471
    %v5918 = vunpack.c.h.b16 %v4471
    %v5919 = vunpack.c.l.b16 %v4472
    %v5920 = vunpack.c.h.b16 %v4472
    %v5921 = vunpack.c.l.b16 %v4473
    %v5922 = vunpack.c.h.b16 %v4473
    %v5923 = vunpack.c.l.b16 %v4474
    %v5924 = vunpack.c.h.b16 %v4474
    %v5925 = vunpack.c.l.b16 %v4475
    %v5926 = vunpack.c.h.b16 %v4475
    %v5927 = vunpack.c.l.b16 %v4476
    %v5928 = vunpack.c.h.b16 %v4476
    %v5929 = vunpack.c.l.b16 %v4477
    %v5930 = vunpack.c.h.b16 %v4477
    %v5931 = vunpack.c.l.b16 %v4478
    %v5932 = vunpack.c.h.b16 %v4478
    %v5933 = vunpack.c.l.b16 %v4479
    %v5934 = vunpack.c.h.b16 %v4479
    %v5935 = vunpack.c.l.b16 %v4480
    %v5936 = vunpack.c.h.b16 %v4480
    %v5937 = vunpack.c.l.b16 %v4481
    %v5938 = vunpack.c.h.b16 %v4481
    %v5939 = vunpack.c.l.b16 %v4482
    %v5940 = vunpack.c.h.b16 %v4482
    %v5941 = vunpack.c.l.b16 %v4483
    %v5942 = vunpack.c.h.b16 %v4483
    %v5943 = vunpack.c.l.b16 %v4484
    %v5944 = vunpack.c.h.b16 %v4484
    %v5945 = vunpack.c.l.b16 %v4485
    %v5946 = vunpack.c.h.b16 %v4485
    %v5947 = vunpack.c.l.b16 %v4486
    %v5948 = vunpack.c.h.b16 %v4486
    %v5949 = vunpack.c.l.b16 %v4487
    %v5950 = vunpack.c.h.b16 %v4487
    %v5951 = vunpack.c.l.b16 %v4488
    %v5952 = vunpack.c.h.b16 %v4488
    %v5953 = vunpack.c.l.b16 %v4489
    %v5954 = vunpack.c.h.b16 %v4489
    %v5955 = vunpack.c.l.b16 %v4490
    %v5956 = vunpack.c.h.b16 %v4490
    %v5957 = vunpack.c.l.b16 %v4491
    %v5958 = vunpack.c.h.b16 %v4491
    %v5959 = vunpack.c.l.b16 %v4492
    %v5960 = vunpack.c.h.b16 %v4492
    %v5961 = vunpack.c.l.b16 %v4493
    %v5962 = vunpack.c.h.b16 %v4493
    %v5963 = vunpack.c.l.b16 %v4494
    %v5964 = vunpack.c.h.b16 %v4494
    %v5965 = vunpack.c.l.b16 %v4495
    %v5966 = vunpack.c.h.b16 %v4495
    %v5967 = vunpack.c.l.b16 %v4496
    %v5968 = vunpack.c.h.b16 %v4496
    %v5969 = vunpack.c.l.b16 %v4497
    %v5970 = vunpack.c.h.b16 %v4497
    %v5971 = vunpack.c.l.b16 %v4498
    %v5972 = vunpack.c.h.b16 %v4498
    %v5973 = vunpack.c.l.b16 %v4499
    %v5974 = vunpack.c.h.b16 %v4499
    %v5975 = vunpack.c.l.b16 %v4500
    %v5976 = vunpack.c.h.b16 %v4500
    %v5977 = vunpack.c.l.b16 %v4501
    %v5978 = vunpack.c.h.b16 %v4501
    %v5979 = vunpack.c.l.b16 %v4502
    %v5980 = vunpack.c.h.b16 %v4502
    %v5981 = vunpack.c.l.b16 %v4503
    %v5982 = vunpack.c.h.b16 %v4503
    %v5983 = vunpack.c.l.b16 %v4504
    %v5984 = vunpack.c.h.b16 %v4504
    %v5985 = vunpack.c.l.b16 %v4505
    %v5986 = vunpack.c.h.b16 %v4505
    %v5987 = vunpack.c.l.b16 %v4506
    %v5988 = vunpack.c.h.b16 %v4506
    %v5989 = vunpack.c.l.b16 %v4507
    %v5990 = vunpack.c.h.b16 %v4507
    %v5991 = vunpack.c.l.b16 %v4508
    %v5992 = vunpack.c.h.b16 %v4508
    %v5993 = vunpack.c.l.b16 %v4509
    %v5994 = vunpack.c.h.b16 %v4509
    %v5995 = vunpack.c.l.b16 %v4510
    %v5996 = vunpack.c.h.b16 %v4510
    %v5997 = vunpack.c.l.b16 %v4511
    %v5998 = vunpack.c.h.b16 %v4511
    %v5999 = vunpack.c.l.b16 %v4512
    %v6000 = vunpack.c.h.b16 %v4512
    %v6001 = vunpack.c.l.b16 %v4513
    %v6002 = vunpack.c.h.b16 %v4513
    %v6003 = vunpack.c.l.b16 %v4514
    %v6004 = vunpack.c.h.b16 %v4514
    %v6005 = vunpack.c.l.b16 %v4515
    %v6006 = vunpack.c.h.b16 %v4515
    %v6007 = vunpack.c.l.b16 %v4516
    %v6008 = vunpack.c.h.b16 %v4516
    %v6009 = vunpack.c.l.b16 %v4517
    %v6010 = vunpack.c.h.b16 %v4517
    %v6011 = vunpack.c.l.b16 %v4518
    %v6012 = vunpack.c.h.b16 %v4518
    %v6013 = vunpack.c.l.b16 %v4519
    %v6014 = vunpack.c.h.b16 %v4519
    %v6015 = vunpack.c.l.b16 %v4520
    %v6016 = vunpack.c.h.b16 %v4520
    %v6017 = vunpack.c.l.b16 %v4521
    %v6018 = vunpack.c.h.b16 %v4521
    %v6019 = vunpack.c.l.b16 %v4522
    %v6020 = vunpack.c.h.b16 %v4522
    %v6021 = vunpack.c.l.b16 %v4523
    %v6022 = vunpack.c.h.b16 %v4523
    %v6023 = vunpack.c.l.b16 %v4524
    %v6024 = vunpack.c.h.b16 %v4524
    %v6025 = vunpack.c.l.b16 %v4525
    %v6026 = vunpack.c.h.b16 %v4525
    %v6027 = vunpack.c.l.b16 %v4526
    %v6028 = vunpack.c.h.b16 %v4526
    %v6029 = vunpack.c.l.b16 %v4527
    %v6030 = vunpack.c.h.b16 %v4527
    %v6031 = vunpack.c.l.b16 %v4528
    %v6032 = vunpack.c.h.b16 %v4528
    %v6033 = vunpack.c.l.b16 %v4529
    %v6034 = vunpack.c.h.b16 %v4529
    %v6035 = vunpack.c.l.b16 %v4530
    %v6036 = vunpack.c.h.b16 %v4530
    %v6037 = vunpack.c.l.b16 %v4531
    %v6038 = vunpack.c.h.b16 %v4531
    %v6039 = vunpack.c.l.b16 %v4532
    %v6040 = vunpack.c.h.b16 %v4532
    %v6041 = vunpack.c.l.b16 %v4533
    %v6042 = vunpack.c.h.b16 %v4533
    %v6043 = vunpack.c.l.b16 %v4534
    %v6044 = vunpack.c.h.b16 %v4534
    %v6045 = vunpack.c.l.b16 %v4535
    %v6046 = vunpack.c.h.b16 %v4535
    %v6047 = vunpack.c.l.b16 %v4536
    %v6048 = vunpack.c.h.b16 %v4536
    %v6049 = vunpack.c.l.b16 %v4537
    %v6050 = vunpack.c.h.b16 %v4537
    %v6051 = vunpack.c.l.b16 %v4538
    %v6052 = vunpack.c.h.b16 %v4538
    %v6053 = vunpack.c.l.b16 %v4539
    %v6054 = vunpack.c.h.b16 %v4539
    %v6055 = vunpack.c.l.b16 %v4540
    %v6056 = vunpack.c.h.b16 %v4540
    %v6057 = vunpack.c.l.b16 %v4541
    %v6058 = vunpack.c.h.b16 %v4541
    %v6059 = vunpack.c.l.b16 %v4542
    %v6060 = vunpack.c.h.b16 %v4542
    %v6061 = vunpack.c.l.b16 %v4543
    %v6062 = vunpack.c.h.b16 %v4543
    %v6063 = vunpack.c.l.b16 %v4544
    %v6064 = vunpack.c.h.b16 %v4544
    %v6065 = vunpack.c.l.b16 %v4545
    %v6066 = vunpack.c.h.b16 %v4545
    %v6067 = vunpack.c.l.b16 %v4546
    %v6068 = vunpack.c.h.b16 %v4546
    %v6069 = vunpack.c.l.b16 %v4547
    %v6070 = vunpack.c.h.b16 %v4547
    %v6071 = vunpack.c.l.b16 %v4548
    %v6072 = vunpack.c.h.b16 %v4548
    %v6073 = vunpack.c.l.b16 %v4549
    %v6074 = vunpack.c.h.b16 %v4549
    %v6075 = vunpack.c.l.b16 %v4550
    %v6076 = vunpack.c.h.b16 %v4550
    %v6077 = vunpack.c.l.b16 %v4551
    %v6078 = vunpack.c.h.b16 %v4551
    %v6079 = vunpack.c.l.b16 %v4552
    %v6080 = vunpack.c.h.b16 %v4552
    %v6081 = vunpack.c.l.b16 %v4553
    %v6082 = vunpack.c.h.b16 %v4553
    %v6083 = vunpack.c.l.b16 %v4554
    %v6084 = vunpack.c.h.b16 %v4554
    %v6085 = vunpack.c.l.b16 %v4555
    %v6086 = vunpack.c.h.b16 %v4555
    %v6087 = vunpack.c.l.b16 %v4556
    %v6088 = vunpack.c.h.b16 %v4556
    %v6089 = vunpack.c.l.b16 %v4557
    %v6090 = vunpack.c.h.b16 %v4557
    %v6091 = vunpack.c.l.b16 %v4558
    %v6092 = vunpack.c.h.b16 %v4558
    %v6093 = vunpack.c.l.b16 %v4559
    %v6094 = vunpack.c.h.b16 %v4559
    %v6095 = vunpack.c.l.b16 %v4560
    %v6096 = vunpack.c.h.b16 %v4560
    %v6097 = vunpack.c.l.b16 %v4561
    %v6098 = vunpack.c.h.b16 %v4561
    %v6099 = vunpack.c.l.b16 %v4562
    %v6100 = vunpack.c.h.b16 %v4562
    %v6101 = vunpack.c.l.b16 %v4563
    %v6102 = vunpack.c.h.b16 %v4563
    %v6103 = vunpack.c.l.b16 %v4564
    %v6104 = vunpack.c.h.b16 %v4564
    %v6105 = vunpack.c.l.b16 %v4565
    %v6106 = vunpack.c.h.b16 %v4565
    %v6107 = vunpack.c.l.b16 %v4566
    %v6108 = vunpack.c.h.b16 %v4566
    %v6109 = vunpack.c.l.b16 %v4567
    %v6110 = vunpack.c.h.b16 %v4567
    %v6111 = vunpack.c.l.b16 %v4568
    %v6112 = vunpack.c.h.b16 %v4568
    %v6113 = vunpack.c.l.b16 %v4569
    %v6114 = vunpack.c.h.b16 %v4569
    %v6115 = vunpack.c.l.b16 %v4570
    %v6116 = vunpack.c.h.b16 %v4570
    %v6117 = vunpack.c.l.b16 %v4571
    %v6118 = vunpack.c.h.b16 %v4571
    %v6119 = vunpack.c.l.b16 %v4572
    %v6120 = vunpack.c.h.b16 %v4572
    %v6121 = vunpack.c.l.b16 %v4573
    %v6122 = vunpack.c.h.b16 %v4573
    %v6123 = vunpack.c.l.b16 %v4574
    %v6124 = vunpack.c.h.b16 %v4574
    %v6125 = vunpack.c.l.b16 %v4575
    %v6126 = vunpack.c.h.b16 %v4575
    %v6127 = vunpack.c.l.b16 %v4576
    %v6128 = vunpack.c.h.b16 %v4576
    %v6129 = vunpack.c.l.b16 %v4577
    %v6130 = vunpack.c.h.b16 %v4577
    %v6131 = vunpack.c.l.b16 %v4578
    %v6132 = vunpack.c.h.b16 %v4578
    %v6133 = vunpack.c.l.b16 %v4579
    %v6134 = vunpack.c.h.b16 %v4579
    %v6135 = vunpack.c.l.b16 %v4580
    %v6136 = vunpack.c.h.b16 %v4580
    %v6137 = vunpack.c.l.b16 %v4581
    %v6138 = vunpack.c.h.b16 %v4581
    %v6139 = vunpack.c.l.b16 %v4582
    %v6140 = vunpack.c.h.b16 %v4582
    %v6141 = vpack.c.b16 %v5121, %v5117
    %v6142 = vpack.c.b16 %v5122, %v5118
    %v6143 = vpack.c.b16 %v5123, %v5119
    %v6144 = vpack.c.b16 %v5124, %v5120
    %v6145 = vpack.c.b16 %v5129, %v5125
    %v6146 = vpack.c.b16 %v5130, %v5126
    %v6147 = vpack.c.b16 %v5131, %v5127
    %v6148 = vpack.c.b16 %v5132, %v5128
    %v6149 = vpack.c.b16 %v5137, %v5133
    %v6150 = vpack.c.b16 %v5138, %v5134
    %v6151 = vpack.c.b16 %v5139, %v5135
    %v6152 = vpack.c.b16 %v5140, %v5136
    %v6153 = vpack.c.b16 %v5145, %v5141
    %v6154 = vpack.c.b16 %v5146, %v5142
    %v6155 = vpack.c.b16 %v5147, %v5143
    %v6156 = vpack.c.b16 %v5148, %v5144
    %v6157 = vpack.c.b16 %v5153, %v5149
    %v6158 = vpack.c.b16 %v5154, %v5150
    %v6159 = vpack.c.b16 %v5155, %v5151
    %v6160 = vpack.c.b16 %v5156, %v5152
    %v6161 = vpack.c.b16 %v5161, %v5157
    %v6162 = vpack.c.b16 %v5162, %v5158
    %v6163 = vpack.c.b16 %v5163, %v5159
    %v6164 = vpack.c.b16 %v5164, %v5160
    %v6165 = vpack.c.b16 %v5169, %v5165
    %v6166 = vpack.c.b16 %v5170, %v5166
    %v6167 = vpack.c.b16 %v5171, %v5167
    %v6168 = vpack.c.b16 %v5172, %v5168
    %v6169 = vpack.c.b16 %v5177, %v5173
    %v6170 = vpack.c.b16 %v5178, %v5174
    %v6171 = vpack.c.b16 %v5179, %v5175
    %v6172 = vpack.c.b16 %v5180, %v5176
    %v6173 = vpack.c.b16 %v5185, %v5181
    %v6174 = vpack.c.b16 %v5186, %v5182
    %v6175 = vpack.c.b16 %v5187, %v5183
    %v6176 = vpack.c.b16 %v5188, %v5184
    %v6177 = vpack.c.b16 %v5193, %v5189
    %v6178 = vpack.c.b16 %v5194, %v5190
    %v6179 = vpack.c.b16 %v5195, %v5191
    %v6180 = vpack.c.b16 %v5196, %v5192
    %v6181 = vpack.c.b16 %v5201, %v5197
    %v6182 = vpack.c.b16 %v5202, %v5198
    %v6183 = vpack.c.b16 %v5203, %v5199
    %v6184 = vpack.c.b16 %v5204, %v5200
    %v6185 = vpack.c.b16 %v5209, %v5205
    %v6186 = vpack.c.b16 %v5210, %v5206
    %v6187 = vpack.c.b16 %v5211, %v5207
    %v6188 = vpack.c.b16 %v5212, %v5208
    %v6189 = vpack.c.b16 %v5217, %v5213
    %v6190 = vpack.c.b16 %v5218, %v5214
    %v6191 = vpack.c.b16 %v5219, %v5215
    %v6192 = vpack.c.b16 %v5220, %v5216
    %v6193 = vpack.c.b16 %v5225, %v5221
    %v6194 = vpack.c.b16 %v5226, %v5222
    %v6195 = vpack.c.b16 %v5227, %v5223
    %v6196 = vpack.c.b16 %v5228, %v5224
    %v6197 = vpack.c.b16 %v5233, %v5229
    %v6198 = vpack.c.b16 %v5234, %v5230
    %v6199 = vpack.c.b16 %v5235, %v5231
    %v6200 = vpack.c.b16 %v5236, %v5232
    %v6201 = vpack.c.b16 %v5241, %v5237
    %v6202 = vpack.c.b16 %v5242, %v5238
    %v6203 = vpack.c.b16 %v5243, %v5239
    %v6204 = vpack.c.b16 %v5244, %v5240
    %v6205 = vpack.c.b16 %v5249, %v5245
    %v6206 = vpack.c.b16 %v5250, %v5246
    %v6207 = vpack.c.b16 %v5251, %v5247
    %v6208 = vpack.c.b16 %v5252, %v5248
    %v6209 = vpack.c.b16 %v5257, %v5253
    %v6210 = vpack.c.b16 %v5258, %v5254
    %v6211 = vpack.c.b16 %v5259, %v5255
    %v6212 = vpack.c.b16 %v5260, %v5256
    %v6213 = vpack.c.b16 %v5265, %v5261
    %v6214 = vpack.c.b16 %v5266, %v5262
    %v6215 = vpack.c.b16 %v5267, %v5263
    %v6216 = vpack.c.b16 %v5268, %v5264
    %v6217 = vpack.c.b16 %v5273, %v5269
    %v6218 = vpack.c.b16 %v5274, %v5270
    %v6219 = vpack.c.b16 %v5275, %v5271
    %v6220 = vpack.c.b16 %v5276, %v5272
    %v6221 = vpack.c.b16 %v5281, %v5277
    %v6222 = vpack.c.b16 %v5282, %v5278
    %v6223 = vpack.c.b16 %v5283, %v5279
    %v6224 = vpack.c.b16 %v5284, %v5280
    %v6225 = vpack.c.b16 %v5289, %v5285
    %v6226 = vpack.c.b16 %v5290, %v5286
    %v6227 = vpack.c.b16 %v5291, %v5287
    %v6228 = vpack.c.b16 %v5292, %v5288
    %v6229 = vpack.c.b16 %v5297, %v5293
    %v6230 = vpack.c.b16 %v5298, %v5294
    %v6231 = vpack.c.b16 %v5299, %v5295
    %v6232 = vpack.c.b16 %v5300, %v5296
    %v6233 = vpack.c.b16 %v5305, %v5301
    %v6234 = vpack.c.b16 %v5306, %v5302
    %v6235 = vpack.c.b16 %v5307, %v5303
    %v6236 = vpack.c.b16 %v5308, %v5304
    %v6237 = vpack.c.b16 %v5313, %v5309
    %v6238 = vpack.c.b16 %v5314, %v5310
    %v6239 = vpack.c.b16 %v5315, %v5311
    %v6240 = vpack.c.b16 %v5316, %v5312
    %v6241 = vpack.c.b16 %v5321, %v5317
    %v6242 = vpack.c.b16 %v5322, %v5318
    %v6243 = vpack.c.b16 %v5323, %v5319
    %v6244 = vpack.c.b16 %v5324, %v5320
    %v6245 = vpack.c.b16 %v5329, %v5325
    %v6246 = vpack.c.b16 %v5330, %v5326
    %v6247 = vpack.c.b16 %v5331, %v5327
    %v6248 = vpack.c.b16 %v5332, %v5328
    %v6249 = vpack.c.b16 %v5337, %v5333
    %v6250 = vpack.c.b16 %v5338, %v5334
    %v6251 = vpack.c.b16 %v5339, %v5335
    %v6252 = vpack.c.b16 %v5340, %v5336
    %v6253 = vpack.c.b16 %v5345, %v5341
    %v6254 = vpack.c.b16 %v5346, %v5342
    %v6255 = vpack.c.b16 %v5347, %v5343
    %v6256 = vpack.c.b16 %v5348, %v5344
    %v6257 = vpack.c.b16 %v5353, %v5349
    %v6258 = vpack.c.b16 %v5354, %v5350
    %v6259 = vpack.c.b16 %v5355, %v5351
    %v6260 = vpack.c.b16 %v5356, %v5352
    %v6261 = vpack.c.b16 %v5361, %v5357
    %v6262 = vpack.c.b16 %v5362, %v5358
    %v6263 = vpack.c.b16 %v5363, %v5359
    %v6264 = vpack.c.b16 %v5364, %v5360
    %v6265 = vpack.c.b16 %v5369, %v5365
    %v6266 = vpack.c.b16 %v5370, %v5366
    %v6267 = vpack.c.b16 %v5371, %v5367
    %v6268 = vpack.c.b16 %v5372, %v5368
    %v6269 = vpack.c.b16 %v5377, %v5373
    %v6270 = vpack.c.b16 %v5378, %v5374
    %v6271 = vpack.c.b16 %v5379, %v5375
    %v6272 = vpack.c.b16 %v5380, %v5376
    %v6273 = vpack.c.b16 %v5385, %v5381
    %v6274 = vpack.c.b16 %v5386, %v5382
    %v6275 = vpack.c.b16 %v5387, %v5383
    %v6276 = vpack.c.b16 %v5388, %v5384
    %v6277 = vpack.c.b16 %v5393, %v5389
    %v6278 = vpack.c.b16 %v5394, %v5390
    %v6279 = vpack.c.b16 %v5395, %v5391
    %v6280 = vpack.c.b16 %v5396, %v5392
    %v6281 = vpack.c.b16 %v5401, %v5397
    %v6282 = vpack.c.b16 %v5402, %v5398
    %v6283 = vpack.c.b16 %v5403, %v5399
    %v6284 = vpack.c.b16 %v5404, %v5400
    %v6285 = vpack.c.b16 %v5409, %v5405
    %v6286 = vpack.c.b16 %v5410, %v5406
    %v6287 = vpack.c.b16 %v5411, %v5407
    %v6288 = vpack.c.b16 %v5412, %v5408
    %v6289 = vpack.c.b16 %v5417, %v5413
    %v6290 = vpack.c.b16 %v5418, %v5414
    %v6291 = vpack.c.b16 %v5419, %v5415
    %v6292 = vpack.c.b16 %v5420, %v5416
    %v6293 = vpack.c.b16 %v5425, %v5421
    %v6294 = vpack.c.b16 %v5426, %v5422
    %v6295 = vpack.c.b16 %v5427, %v5423
    %v6296 = vpack.c.b16 %v5428, %v5424
    %v6297 = vpack.c.b16 %v5433, %v5429
    %v6298 = vpack.c.b16 %v5434, %v5430
    %v6299 = vpack.c.b16 %v5435, %v5431
    %v6300 = vpack.c.b16 %v5436, %v5432
    %v6301 = vpack.c.b16 %v5441, %v5437
    %v6302 = vpack.c.b16 %v5442, %v5438
    %v6303 = vpack.c.b16 %v5443, %v5439
    %v6304 = vpack.c.b16 %v5444, %v5440
    %v6305 = vpack.c.b16 %v5449, %v5445
    %v6306 = vpack.c.b16 %v5450, %v5446
    %v6307 = vpack.c.b16 %v5451, %v5447
    %v6308 = vpack.c.b16 %v5452, %v5448
    %v6309 = vpack.c.b16 %v5457, %v5453
    %v6310 = vpack.c.b16 %v5458, %v5454
    %v6311 = vpack.c.b16 %v5459, %v5455
    %v6312 = vpack.c.b16 %v5460, %v5456
    %v6313 = vpack.c.b16 %v5465, %v5461
    %v6314 = vpack.c.b16 %v5466, %v5462
    %v6315 = vpack.c.b16 %v5467, %v5463
    %v6316 = vpack.c.b16 %v5468, %v5464
    %v6317 = vpack.c.b16 %v5473, %v5469
    %v6318 = vpack.c.b16 %v5474, %v5470
    %v6319 = vpack.c.b16 %v5475, %v5471
    %v6320 = vpack.c.b16 %v5476, %v5472
    %v6321 = vpack.c.b16 %v5481, %v5477
    %v6322 = vpack.c.b16 %v5482, %v5478
    %v6323 = vpack.c.b16 %v5483, %v5479
    %v6324 = vpack.c.b16 %v5484, %v5480
    %v6325 = vpack.c.b16 %v5489, %v5485
    %v6326 = vpack.c.b16 %v5490, %v5486
    %v6327 = vpack.c.b16 %v5491, %v5487
    %v6328 = vpack.c.b16 %v5492, %v5488
    %v6329 = vpack.c.b16 %v5497, %v5493
    %v6330 = vpack.c.b16 %v5498, %v5494
    %v6331 = vpack.c.b16 %v5499, %v5495
    %v6332 = vpack.c.b16 %v5500, %v5496
    %v6333 = vpack.c.b16 %v5505, %v5501
    %v6334 = vpack.c.b16 %v5506, %v5502
    %v6335 = vpack.c.b16 %v5507, %v5503
    %v6336 = vpack.c.b16 %v5508, %v5504
    %v6337 = vpack.c.b16 %v5513, %v5509
    %v6338 = vpack.c.b16 %v5514, %v5510
    %v6339 = vpack.c.b16 %v5515, %v5511
    %v6340 = vpack.c.b16 %v5516, %v5512
    %v6341 = vpack.c.b16 %v5521, %v5517
    %v6342 = vpack.c.b16 %v5522, %v5518
    %v6343 = vpack.c.b16 %v5523, %v5519
    %v6344 = vpack.c.b16 %v5524, %v5520
    %v6345 = vpack.c.b16 %v5529, %v5525
    %v6346 = vpack.c.b16 %v5530, %v5526
    %v6347 = vpack.c.b16 %v5531, %v5527
    %v6348 = vpack.c.b16 %v5532, %v5528
    %v6349 = vpack.c.b16 %v5537, %v5533
    %v6350 = vpack.c.b16 %v5538, %v5534
    %v6351 = vpack.c.b16 %v5539, %v5535
    %v6352 = vpack.c.b16 %v5540, %v5536
    %v6353 = vpack.c.b16 %v5545, %v5541
    %v6354 = vpack.c.b16 %v5546, %v5542
    %v6355 = vpack.c.b16 %v5547, %v5543
    %v6356 = vpack.c.b16 %v5548, %v5544
    %v6357 = vpack.c.b16 %v5553, %v5549
    %v6358 = vpack.c.b16 %v5554, %v5550
    %v6359 = vpack.c.b16 %v5555, %v5551
    %v6360 = vpack.c.b16 %v5556, %v5552
    %v6361 = vpack.c.b16 %v5561, %v5557
    %v6362 = vpack.c.b16 %v5562, %v5558
    %v6363 = vpack.c.b16 %v5563, %v5559
    %v6364 = vpack.c.b16 %v5564, %v5560
    %v6365 = vpack.c.b16 %v5569, %v5565
    %v6366 = vpack.c.b16 %v5570, %v5566
    %v6367 = vpack.c.b16 %v5571, %v5567
    %v6368 = vpack.c.b16 %v5572, %v5568
    %v6369 = vpack.c.b16 %v5577, %v5573
    %v6370 = vpack.c.b16 %v5578, %v5574
    %v6371 = vpack.c.b16 %v5579, %v5575
    %v6372 = vpack.c.b16 %v5580, %v5576
    %v6373 = vpack.c.b16 %v5585, %v5581
    %v6374 = vpack.c.b16 %v5586, %v5582
    %v6375 = vpack.c.b16 %v5587, %v5583
    %v6376 = vpack.c.b16 %v5588, %v5584
    %v6377 = vpack.c.b16 %v5593, %v5589
    %v6378 = vpack.c.b16 %v5594, %v5590
    %v6379 = vpack.c.b16 %v5595, %v5591
    %v6380 = vpack.c.b16 %v5596, %v5592
    %v6381 = vpack.c.b16 %v5601, %v5597
    %v6382 = vpack.c.b16 %v5602, %v5598
    %v6383 = vpack.c.b16 %v5603, %v5599
    %v6384 = vpack.c.b16 %v5604, %v5600
    %v6385 = vpack.c.b16 %v5609, %v5605
    %v6386 = vpack.c.b16 %v5610, %v5606
    %v6387 = vpack.c.b16 %v5611, %v5607
    %v6388 = vpack.c.b16 %v5612, %v5608
    %v6389 = vpack.c.b16 %v5617, %v5613
    %v6390 = vpack.c.b16 %v5618, %v5614
    %v6391 = vpack.c.b16 %v5619, %v5615
    %v6392 = vpack.c.b16 %v5620, %v5616
    %v6393 = vpack.c.b16 %v5625, %v5621
    %v6394 = vpack.c.b16 %v5626, %v5622
    %v6395 = vpack.c.b16 %v5627, %v5623
    %v6396 = vpack.c.b16 %v5628, %v5624
    %v6397 = vpack.c.b16 %v5633, %v5629
    %v6398 = vpack.c.b16 %v5634, %v5630
    %v6399 = vpack.c.b16 %v5635, %v5631
    %v6400 = vpack.c.b16 %v5636, %v5632
    %v6401 = vpack.c.b16 %v5641, %v5637
    %v6402 = vpack.c.b16 %v5642, %v5638
    %v6403 = vpack.c.b16 %v5643, %v5639
    %v6404 = vpack.c.b16 %v5644, %v5640
    %v6405 = vpack.c.b16 %v5649, %v5645
    %v6406 = vpack.c.b16 %v5650, %v5646
    %v6407 = vpack.c.b16 %v5651, %v5647
    %v6408 = vpack.c.b16 %v5652, %v5648
    %v6409 = vpack.c.b16 %v5657, %v5653
    %v6410 = vpack.c.b16 %v5658, %v5654
    %v6411 = vpack.c.b16 %v5659, %v5655
    %v6412 = vpack.c.b16 %v5660, %v5656
    %v6413 = vpack.c.b16 %v5665, %v5661
    %v6414 = vpack.c.b16 %v5666, %v5662
    %v6415 = vpack.c.b16 %v5667, %v5663
    %v6416 = vpack.c.b16 %v5668, %v5664
    %v6417 = vpack.c.b16 %v5673, %v5669
    %v6418 = vpack.c.b16 %v5674, %v5670
    %v6419 = vpack.c.b16 %v5675, %v5671
    %v6420 = vpack.c.b16 %v5676, %v5672
    %v6421 = vpack.c.b16 %v5681, %v5677
    %v6422 = vpack.c.b16 %v5682, %v5678
    %v6423 = vpack.c.b16 %v5683, %v5679
    %v6424 = vpack.c.b16 %v5684, %v5680
    %v6425 = vpack.c.b16 %v5689, %v5685
    %v6426 = vpack.c.b16 %v5690, %v5686
    %v6427 = vpack.c.b16 %v5691, %v5687
    %v6428 = vpack.c.b16 %v5692, %v5688
    %v6429 = vpack.c.b16 %v5697, %v5693
    %v6430 = vpack.c.b16 %v5698, %v5694
    %v6431 = vpack.c.b16 %v5699, %v5695
    %v6432 = vpack.c.b16 %v5700, %v5696
    %v6433 = vpack.c.b16 %v5705, %v5701
    %v6434 = vpack.c.b16 %v5706, %v5702
    %v6435 = vpack.c.b16 %v5707, %v5703
    %v6436 = vpack.c.b16 %v5708, %v5704
    %v6437 = vpack.c.b16 %v5713, %v5709
    %v6438 = vpack.c.b16 %v5714, %v5710
    %v6439 = vpack.c.b16 %v5715, %v5711
    %v6440 = vpack.c.b16 %v5716, %v5712
    %v6441 = vpack.c.b16 %v5721, %v5717
    %v6442 = vpack.c.b16 %v5722, %v5718
    %v6443 = vpack.c.b16 %v5723, %v5719
    %v6444 = vpack.c.b16 %v5724, %v5720
    %v6445 = vpack.c.b16 %v5729, %v5725
    %v6446 = vpack.c.b16 %v5730, %v5726
    %v6447 = vpack.c.b16 %v5731, %v5727
    %v6448 = vpack.c.b16 %v5732, %v5728
    %v6449 = vpack.c.b16 %v5737, %v5733
    %v6450 = vpack.c.b16 %v5738, %v5734
    %v6451 = vpack.c.b16 %v5739, %v5735
    %v6452 = vpack.c.b16 %v5740, %v5736
    %v6453 = vpack.c.b16 %v5745, %v5741
    %v6454 = vpack.c.b16 %v5746, %v5742
    %v6455 = vpack.c.b16 %v5747, %v5743
    %v6456 = vpack.c.b16 %v5748, %v5744
    %v6457 = vpack.c.b16 %v5753, %v5749
    %v6458 = vpack.c.b16 %v5754, %v5750
    %v6459 = vpack.c.b16 %v5755, %v5751
    %v6460 = vpack.c.b16 %v5756, %v5752
    %v6461 = vpack.c.b16 %v5761, %v5757
    %v6462 = vpack.c.b16 %v5762, %v5758
    %v6463 = vpack.c.b16 %v5763, %v5759
    %v6464 = vpack.c.b16 %v5764, %v5760
    %v6465 = vpack.c.b16 %v5769, %v5765
    %v6466 = vpack.c.b16 %v5770, %v5766
    %v6467 = vpack.c.b16 %v5771, %v5767
    %v6468 = vpack.c.b16 %v5772, %v5768
    %v6469 = vpack.c.b16 %v5777, %v5773
    %v6470 = vpack.c.b16 %v5778, %v5774
    %v6471 = vpack.c.b16 %v5779, %v5775
    %v6472 = vpack.c.b16 %v5780, %v5776
    %v6473 = vpack.c.b16 %v5785, %v5781
    %v6474 = vpack.c.b16 %v5786, %v5782
    %v6475 = vpack.c.b16 %v5787, %v5783
    %v6476 = vpack.c.b16 %v5788, %v5784
    %v6477 = vpack.c.b16 %v5793, %v5789
    %v6478 = vpack.c.b16 %v5794, %v5790
    %v6479 = vpack.c.b16 %v5795, %v5791
    %v6480 = vpack.c.b16 %v5796, %v5792
    %v6481 = vpack.c.b16 %v5801, %v5797
    %v6482 = vpack.c.b16 %v5802, %v5798
    %v6483 = vpack.c.b16 %v5803, %v5799
    %v6484 = vpack.c.b16 %v5804, %v5800
    %v6485 = vpack.c.b16 %v5809, %v5805
    %v6486 = vpack.c.b16 %v5810, %v5806
    %v6487 = vpack.c.b16 %v5811, %v5807
    %v6488 = vpack.c.b16 %v5812, %v5808
    %v6489 = vpack.c.b16 %v5817, %v5813
    %v6490 = vpack.c.b16 %v5818, %v5814
    %v6491 = vpack.c.b16 %v5819, %v5815
    %v6492 = vpack.c.b16 %v5820, %v5816
    %v6493 = vpack.c.b16 %v5825, %v5821
    %v6494 = vpack.c.b16 %v5826, %v5822
    %v6495 = vpack.c.b16 %v5827, %v5823
    %v6496 = vpack.c.b16 %v5828, %v5824
    %v6497 = vpack.c.b16 %v5833, %v5829
    %v6498 = vpack.c.b16 %v5834, %v5830
    %v6499 = vpack.c.b16 %v5835, %v5831
    %v6500 = vpack.c.b16 %v5836, %v5832
    %v6501 = vpack.c.b16 %v5841, %v5837
    %v6502 = vpack.c.b16 %v5842, %v5838
    %v6503 = vpack.c.b16 %v5843, %v5839
    %v6504 = vpack.c.b16 %v5844, %v5840
    %v6505 = vpack.c.b16 %v5849, %v5845
    %v6506 = vpack.c.b16 %v5850, %v5846
    %v6507 = vpack.c.b16 %v5851, %v5847
    %v6508 = vpack.c.b16 %v5852, %v5848
    %v6509 = vpack.c.b16 %v5857, %v5853
    %v6510 = vpack.c.b16 %v5858, %v5854
    %v6511 = vpack.c.b16 %v5859, %v5855
    %v6512 = vpack.c.b16 %v5860, %v5856
    %v6513 = vpack.c.b16 %v5865, %v5861
    %v6514 = vpack.c.b16 %v5866, %v5862
    %v6515 = vpack.c.b16 %v5867, %v5863
    %v6516 = vpack.c.b16 %v5868, %v5864
    %v6517 = vpack.c.b16 %v5873, %v5869
    %v6518 = vpack.c.b16 %v5874, %v5870
    %v6519 = vpack.c.b16 %v5875, %v5871
    %v6520 = vpack.c.b16 %v5876, %v5872
    %v6521 = vpack.c.b16 %v5881, %v5877
    %v6522 = vpack.c.b16 %v5882, %v5878
    %v6523 = vpack.c.b16 %v5883, %v5879
    %v6524 = vpack.c.b16 %v5884, %v5880
    %v6525 = vpack.c.b16 %v5889, %v5885
    %v6526 = vpack.c.b16 %v5890, %v5886
    %v6527 = vpack.c.b16 %v5891, %v5887
    %v6528 = vpack.c.b16 %v5892, %v5888
    %v6529 = vpack.c.b16 %v5897, %v5893
    %v6530 = vpack.c.b16 %v5898, %v5894
    %v6531 = vpack.c.b16 %v5899, %v5895
    %v6532 = vpack.c.b16 %v5900, %v5896
    %v6533 = vpack.c.b16 %v5905, %v5901
    %v6534 = vpack.c.b16 %v5906, %v5902
    %v6535 = vpack.c.b16 %v5907, %v5903
    %v6536 = vpack.c.b16 %v5908, %v5904
    %v6537 = vpack.c.b16 %v5913, %v5909
    %v6538 = vpack.c.b16 %v5914, %v5910
    %v6539 = vpack.c.b16 %v5915, %v5911
    %v6540 = vpack.c.b16 %v5916, %v5912
    %v6541 = vpack.c.b16 %v5921, %v5917
    %v6542 = vpack.c.b16 %v5922, %v5918
    %v6543 = vpack.c.b16 %v5923, %v5919
    %v6544 = vpack.c.b16 %v5924, %v5920
    %v6545 = vpack.c.b16 %v5929, %v5925
    %v6546 = vpack.c.b16 %v5930, %v5926
    %v6547 = vpack.c.b16 %v5931, %v5927
    %v6548 = vpack.c.b16 %v5932, %v5928
    %v6549 = vpack.c.b16 %v5937, %v5933
    %v6550 = vpack.c.b16 %v5938, %v5934
    %v6551 = vpack.c.b16 %v5939, %v5935
    %v6552 = vpack.c.b16 %v5940, %v5936
    %v6553 = vpack.c.b16 %v5945, %v5941
    %v6554 = vpack.c.b16 %v5946, %v5942
    %v6555 = vpack.c.b16 %v5947, %v5943
    %v6556 = vpack.c.b16 %v5948, %v5944
    %v6557 = vpack.c.b16 %v5953, %v5949
    %v6558 = vpack.c.b16 %v5954, %v5950
    %v6559 = vpack.c.b16 %v5955, %v5951
    %v6560 = vpack.c.b16 %v5956, %v5952
    %v6561 = vpack.c.b16 %v5961, %v5957
    %v6562 = vpack.c.b16 %v5962, %v5958
    %v6563 = vpack.c.b16 %v5963, %v5959
    %v6564 = vpack.c.b16 %v5964, %v5960
    %v6565 = vpack.c.b16 %v5969, %v5965
    %v6566 = vpack.c.b16 %v5970, %v5966
    %v6567 = vpack.c.b16 %v5971, %v5967
    %v6568 = vpack.c.b16 %v5972, %v5968
    %v6569 = vpack.c.b16 %v5977, %v5973
    %v6570 = vpack.c.b16 %v5978, %v5974
    %v6571 = vpack.c.b16 %v5979, %v5975
    %v6572 = vpack.c.b16 %v5980, %v5976
    %v6573 = vpack.c.b16 %v5985, %v5981
    %v6574 = vpack.c.b16 %v5986, %v5982
    %v6575 = vpack.c.b16 %v5987, %v5983
    %v6576 = vpack.c.b16 %v5988, %v5984
    %v6577 = vpack.c.b16 %v5993, %v5989
    %v6578 = vpack.c.b16 %v5994, %v5990
    %v6579 = vpack.c.b16 %v5995, %v5991
    %v6580 = vpack.c.b16 %v5996, %v5992
    %v6581 = vpack.c.b16 %v6001, %v5997
    %v6582 = vpack.c.b16 %v6002, %v5998
    %v6583 = vpack.c.b16 %v6003, %v5999
    %v6584 = vpack.c.b16 %v6004, %v6000
    %v6585 = vpack.c.b16 %v6009, %v6005
    %v6586 = vpack.c.b16 %v6010, %v6006
    %v6587 = vpack.c.b16 %v6011, %v6007
    %v6588 = vpack.c.b16 %v6012, %v6008
    %v6589 = vpack.c.b16 %v6017, %v6013
    %v6590 = vpack.c.b16 %v6018, %v6014
    %v6591 = vpack.c.b16 %v6019, %v6015
    %v6592 = vpack.c.b16 %v6020, %v6016
    %v6593 = vpack.c.b16 %v6025, %v6021
    %v6594 = vpack.c.b16 %v6026, %v6022
    %v6595 = vpack.c.b16 %v6027, %v6023
    %v6596 = vpack.c.b16 %v6028, %v6024
    %v6597 = vpack.c.b16 %v6033, %v6029
    %v6598 = vpack.c.b16 %v6034, %v6030
    %v6599 = vpack.c.b16 %v6035, %v6031
    %v6600 = vpack.c.b16 %v6036, %v6032
    %v6601 = vpack.c.b16 %v6041, %v6037
    %v6602 = vpack.c.b16 %v6042, %v6038
    %v6603 = vpack.c.b16 %v6043, %v6039
    %v6604 = vpack.c.b16 %v6044, %v6040
    %v6605 = vpack.c.b16 %v6049, %v6045
    %v6606 = vpack.c.b16 %v6050, %v6046
    %v6607 = vpack.c.b16 %v6051, %v6047
    %v6608 = vpack.c.b16 %v6052, %v6048
    %v6609 = vpack.c.b16 %v6057, %v6053
    %v6610 = vpack.c.b16 %v6058, %v6054
    %v6611 = vpack.c.b16 %v6059, %v6055
    %v6612 = vpack.c.b16 %v6060, %v6056
    %v6613 = vpack.c.b16 %v6065, %v6061
    %v6614 = vpack.c.b16 %v6066, %v6062
    %v6615 = vpack.c.b16 %v6067, %v6063
    %v6616 = vpack.c.b16 %v6068, %v6064
    %v6617 = vpack.c.b16 %v6073, %v6069
    %v6618 = vpack.c.b16 %v6074, %v6070
    %v6619 = vpack.c.b16 %v6075, %v6071
    %v6620 = vpack.c.b16 %v6076, %v6072
    %v6621 = vpack.c.b16 %v6081, %v6077
    %v6622 = vpack.c.b16 %v6082, %v6078
    %v6623 = vpack.c.b16 %v6083, %v6079
    %v6624 = vpack.c.b16 %v6084, %v6080
    %v6625 = vpack.c.b16 %v6089, %v6085
    %v6626 = vpack.c.b16 %v6090, %v6086
    %v6627 = vpack.c.b16 %v6091, %v6087
    %v6628 = vpack.c.b16 %v6092, %v6088
    %v6629 = vpack.c.b16 %v6097, %v6093
    %v6630 = vpack.c.b16 %v6098, %v6094
    %v6631 = vpack.c.b16 %v6099, %v6095
    %v6632 = vpack.c.b16 %v6100, %v6096
    %v6633 = vpack.c.b16 %v6105, %v6101
    %v6634 = vpack.c.b16 %v6106, %v6102
    %v6635 = vpack.c.b16 %v6107, %v6103
    %v6636 = vpack.c.b16 %v6108, %v6104
    %v6637 = vpack.c.b16 %v6113, %v6109
    %v6638 = vpack.c.b16 %v6114, %v6110
    %v6639 = vpack.c.b16 %v6115, %v6111
    %v6640 = vpack.c.b16 %v6116, %v6112
    %v6641 = vpack.c.b16 %v6121, %v6117
    %v6642 = vpack.c.b16 %v6122, %v6118
    %v6643 = vpack.c.b16 %v6123, %v6119
    %v6644 = vpack.c.b16 %v6124, %v6120
    %v6645 = vpack.c.b16 %v6129, %v6125
    %v6646 = vpack.c.b16 %v6130, %v6126
    %v6647 = vpack.c.b16 %v6131, %v6127
    %v6648 = vpack.c.b16 %v6132, %v6128
    %v6649 = vpack.c.b16 %v6137, %v6133
    %v6650 = vpack.c.b16 %v6138, %v6134
    %v6651 = vpack.c.b16 %v6139, %v6135
    %v6652 = vpack.c.b16 %v6140, %v6136
    %7165 = vmatprep.subr.bf16.mxu0 %v6142
    %7166 = vmatpush1.bf16.msra.mxu0 %v6141
    %7167 = vmatprep.subr.bf16.mxu0 %v6146
    %7168 = vmatpush1.bf16.msra.mxu0 %v6145
    %7169 = vmatprep.subr.bf16.mxu0 %v6150
    %7170 = vmatpush1.bf16.msra.mxu0 %v6149
    %7171 = vmatprep.subr.bf16.mxu0 %v6154
    %7172 = vmatpush1.bf16.msra.mxu0 %v6153
    %7173 = vmatprep.subr.bf16.mxu0 %v6158
    %7174 = vmatpush1.bf16.msra.mxu0 %v6157
    %7175 = vmatprep.subr.bf16.mxu0 %v6162
    %7176 = vmatpush1.bf16.msra.mxu0 %v6161
    %7177 = vmatprep.subr.bf16.mxu0 %v6166
    %7178 = vmatpush1.bf16.msra.mxu0 %v6165
    %7179 = vmatprep.subr.bf16.mxu0 %v6170
    %7180 = vmatpush1.bf16.msra.mxu0 %v6169
    %7181 = vmatprep.subr.bf16.mxu0 %v6174
    %7182 = vmatpush1.bf16.msra.mxu0 %v6173
    %7183 = vmatprep.subr.bf16.mxu0 %v6178
    %7184 = vmatpush1.bf16.msra.mxu0 %v6177
    %7185 = vmatprep.subr.bf16.mxu0 %v6182
    %7186 = vmatpush1.bf16.msra.mxu0 %v6181
    %7187 = vmatprep.subr.bf16.mxu0 %v6186
    %7188 = vmatpush1.bf16.msra.mxu0 %v6185
    %7189 = vmatprep.subr.bf16.mxu0 %v6190
    %7190 = vmatpush1.bf16.msra.mxu0 %v6189
    %7191 = vmatprep.subr.bf16.mxu0 %v6194
    %7192 = vmatpush1.bf16.msra.mxu0 %v6193
    %7193 = vmatprep.subr.bf16.mxu0 %v6198
    %7194 = vmatpush1.bf16.msra.mxu0 %v6197
    %7195 = vmatprep.subr.bf16.mxu0 %v6202
    %7196 = vmatpush1.bf16.msra.mxu0 %v6201
    %7197 = vmatprep.mubr.bf16.mxu0 %v4056
    %7198 = vmatmul.mubr.bf16.gmra.mrb[0].mxu0 %v4055
    %v7199 = vpop.f32.mrb[0].mxu0
    %v7200 = vadd.f32 %v4588, %v7199
    %v7201 = vpop.f32.mrb[0].mxu0
    %v7202 = vadd.f32 %v4592, %v7201
    %v7203 = vpop.f32.mrb[0].mxu0
    %v7204 = vadd.f32 %v4588, %v7203
    %v7205 = vpop.f32.mrb[0].mxu0
    %v7206 = vadd.f32 %v4592, %v7205
    %7207 = vdwg.mxu0
    %7208 = vmatprep.subr.bf16.mxu0 %v6206
    %7209 = vmatpush1.bf16.msra.mxu0 %v6205
    %7210 = vmatprep.subr.bf16.mxu0 %v6210
    %7211 = vmatpush1.bf16.msra.mxu0 %v6209
    %7212 = vmatprep.subr.bf16.mxu0 %v6214
    %7213 = vmatpush1.bf16.msra.mxu0 %v6213
    %7214 = vmatprep.subr.bf16.mxu0 %v6218
    %7215 = vmatpush1.bf16.msra.mxu0 %v6217
    %7216 = vmatprep.subr.bf16.mxu0 %v6222
    %7217 = vmatpush1.bf16.msra.mxu0 %v6221
    %7218 = vmatprep.subr.bf16.mxu0 %v6226
    %7219 = vmatpush1.bf16.msra.mxu0 %v6225
    %7220 = vmatprep.subr.bf16.mxu0 %v6230
    %7221 = vmatpush1.bf16.msra.mxu0 %v6229
    %7222 = vmatprep.subr.bf16.mxu0 %v6234
    %7223 = vmatpush1.bf16.msra.mxu0 %v6233
    %7224 = vmatprep.subr.bf16.mxu0 %v6238
    %7225 = vmatpush1.bf16.msra.mxu0 %v6237
    %7226 = vmatprep.subr.bf16.mxu0 %v6242
    %7227 = vmatpush1.bf16.msra.mxu0 %v6241
    %7228 = vmatprep.subr.bf16.mxu0 %v6246
    %7229 = vmatpush1.bf16.msra.mxu0 %v6245
    %7230 = vmatprep.subr.bf16.mxu0 %v6250
    %7231 = vmatpush1.bf16.msra.mxu0 %v6249
    %7232 = vmatprep.subr.bf16.mxu0 %v6254
    %7233 = vmatpush1.bf16.msra.mxu0 %v6253
    %7234 = vmatprep.subr.bf16.mxu0 %v6258
    %7235 = vmatpush1.bf16.msra.mxu0 %v6257
    %7236 = vmatprep.subr.bf16.mxu0 %v6262
    %7237 = vmatpush1.bf16.msra.mxu0 %v6261
    %7238 = vmatprep.subr.bf16.mxu0 %v6266
    %7239 = vmatpush1.bf16.msra.mxu0 %v6265
    %7240 = vmatprep.mubr.bf16.mxu0 %v4058
    %7241 = vmatmul.mubr.bf16.gmra.mrb[0].mxu0 %v4057
    %v7242 = vpop.f32.mrb[0].mxu0
    %v7243 = vadd.f32 %v7200, %v7242
    %v7244 = vpop.f32.mrb[0].mxu0
    %v7245 = vadd.f32 %v7202, %v7244
    %v7246 = vpop.f32.mrb[0].mxu0
    %v7247 = vadd.f32 %v7204, %v7246
    %v7248 = vpop.f32.mrb[0].mxu0
    %v7249 = vadd.f32 %v7206, %v7248
    %7250 = vdwg.mxu0
    %7251 = vmatprep.subr.bf16.mxu0 %v6270
    %7252 = vmatpush1.bf16.msra.mxu0 %v6269
    %7253 = vmatprep.subr.bf16.mxu0 %v6274
    %7254 = vmatpush1.bf16.msra.mxu0 %v6273
    %7255 = vmatprep.subr.bf16.mxu0 %v6278
    %7256 = vmatpush1.bf16.msra.mxu0 %v6277
    %7257 = vmatprep.subr.bf16.mxu0 %v6282
    %7258 = vmatpush1.bf16.msra.mxu0 %v6281
    %7259 = vmatprep.subr.bf16.mxu0 %v6286
    %7260 = vmatpush1.bf16.msra.mxu0 %v6285
    %7261 = vmatprep.subr.bf16.mxu0 %v6290
    %7262 = vmatpush1.bf16.msra.mxu0 %v6289
    %7263 = vmatprep.subr.bf16.mxu0 %v6294
    %7264 = vmatpush1.bf16.msra.mxu0 %v6293
    %7265 = vmatprep.subr.bf16.mxu0 %v6298
    %7266 = vmatpush1.bf16.msra.mxu0 %v6297
    %7267 = vmatprep.subr.bf16.mxu0 %v6302
    %7268 = vmatpush1.bf16.msra.mxu0 %v6301
    %7269 = vmatprep.subr.bf16.mxu0 %v6306
    %7270 = vmatpush1.bf16.msra.mxu0 %v6305
    %7271 = vmatprep.subr.bf16.mxu0 %v6310
    %7272 = vmatpush1.bf16.msra.mxu0 %v6309
    %7273 = vmatprep.subr.bf16.mxu0 %v6314
    %7274 = vmatpush1.bf16.msra.mxu0 %v6313
    %7275 = vmatprep.subr.bf16.mxu0 %v6318
    %7276 = vmatpush1.bf16.msra.mxu0 %v6317
    %7277 = vmatprep.subr.bf16.mxu0 %v6322
    %7278 = vmatpush1.bf16.msra.mxu0 %v6321
    %7279 = vmatprep.subr.bf16.mxu0 %v6326
    %7280 = vmatpush1.bf16.msra.mxu0 %v6325
    %7281 = vmatprep.subr.bf16.mxu0 %v6330
    %7282 = vmatpush1.bf16.msra.mxu0 %v6329
    %7283 = vmatprep.mubr.bf16.mxu0 %v4060
    %7284 = vmatmul.mubr.bf16.gmra.mrb[0].mxu0 %v4059
    %v7285 = vpop.f32.mrb[0].mxu0
    %v7286 = vadd.f32 %v7243, %v7285
    %v7287 = vpop.f32.mrb[0].mxu0
    %v7288 = vadd.f32 %v7245, %v7287
    %v7289 = vpop.f32.mrb[0].mxu0
    %v7290 = vadd.f32 %v7247, %v7289
    %v7291 = vpop.f32.mrb[0].mxu0
    %v7292 = vadd.f32 %v7249, %v7291
    %7293 = vdwg.mxu0
    %7294 = vmatprep.subr.bf16.mxu0 %v6334
    %7295 = vmatpush1.bf16.msra.mxu0 %v6333
    %7296 = vmatprep.subr.bf16.mxu0 %v6338
    %7297 = vmatpush1.bf16.msra.mxu0 %v6337
    %7298 = vmatprep.subr.bf16.mxu0 %v6342
    %7299 = vmatpush1.bf16.msra.mxu0 %v6341
    %7300 = vmatprep.subr.bf16.mxu0 %v6346
    %7301 = vmatpush1.bf16.msra.mxu0 %v6345
    %7302 = vmatprep.subr.bf16.mxu0 %v6350
    %7303 = vmatpush1.bf16.msra.mxu0 %v6349
    %7304 = vmatprep.subr.bf16.mxu0 %v6354
    %7305 = vmatpush1.bf16.msra.mxu0 %v6353
    %7306 = vmatprep.subr.bf16.mxu0 %v6358
    %7307 = vmatpush1.bf16.msra.mxu0 %v6357
    %7308 = vmatprep.subr.bf16.mxu0 %v6362
    %7309 = vmatpush1.bf16.msra.mxu0 %v6361
    %7310 = vmatprep.subr.bf16.mxu0 %v6366
    %7311 = vmatpush1.bf16.msra.mxu0 %v6365
    %7312 = vmatprep.subr.bf16.mxu0 %v6370
    %7313 = vmatpush1.bf16.msra.mxu0 %v6369
    %7314 = vmatprep.subr.bf16.mxu0 %v6374
    %7315 = vmatpush1.bf16.msra.mxu0 %v6373
    %7316 = vmatprep.subr.bf16.mxu0 %v6378
    %7317 = vmatpush1.bf16.msra.mxu0 %v6377
    %7318 = vmatprep.subr.bf16.mxu0 %v6382
    %7319 = vmatpush1.bf16.msra.mxu0 %v6381
    %7320 = vmatprep.subr.bf16.mxu0 %v6386
    %7321 = vmatpush1.bf16.msra.mxu0 %v6385
    %7322 = vmatprep.subr.bf16.mxu0 %v6390
    %7323 = vmatpush1.bf16.msra.mxu0 %v6389
    %7324 = vmatprep.subr.bf16.mxu0 %v6394
    %7325 = vmatpush1.bf16.msra.mxu0 %v6393
    %7326 = vmatprep.mubr.bf16.mxu0 %v4062
    %7327 = vmatmul.mubr.bf16.gmra.mrb[0].mxu0 %v4061
    %v7328 = vpop.f32.mrb[0].mxu0
    %v7329 = vadd.f32 %v7286, %v7328
    %v7330 = vpop.f32.mrb[0].mxu0
    %v7331 = vadd.f32 %v7288, %v7330
    %v7332 = vpop.f32.mrb[0].mxu0
    %v7333 = vadd.f32 %v7290, %v7332
    %v7334 = vpop.f32.mrb[0].mxu0
    %v7335 = vadd.f32 %v7292, %v7334
    %7336 = vdwg.mxu0
    %7337 = vmatprep.subr.bf16.mxu0 %v6398
    %7338 = vmatpush1.bf16.msra.mxu0 %v6397
    %7339 = vmatprep.subr.bf16.mxu0 %v6402
    %7340 = vmatpush1.bf16.msra.mxu0 %v6401
    %7341 = vmatprep.subr.bf16.mxu0 %v6406
    %7342 = vmatpush1.bf16.msra.mxu0 %v6405
    %7343 = vmatprep.subr.bf16.mxu0 %v6410
    %7344 = vmatpush1.bf16.msra.mxu0 %v6409
    %7345 = vmatprep.subr.bf16.mxu0 %v6414
    %7346 = vmatpush1.bf16.msra.mxu0 %v6413
    %7347 = vmatprep.subr.bf16.mxu0 %v6418
    %7348 = vmatpush1.bf16.msra.mxu0 %v6417
    %7349 = vmatprep.subr.bf16.mxu0 %v6422
    %7350 = vmatpush1.bf16.msra.mxu0 %v6421
    %7351 = vmatprep.subr.bf16.mxu0 %v6426
    %7352 = vmatpush1.bf16.msra.mxu0 %v6425
    %7353 = vmatprep.subr.bf16.mxu0 %v6430
    %7354 = vmatpush1.bf16.msra.mxu0 %v6429
    %7355 = vmatprep.subr.bf16.mxu0 %v6434
    %7356 = vmatpush1.bf16.msra.mxu0 %v6433
    %7357 = vmatprep.subr.bf16.mxu0 %v6438
    %7358 = vmatpush1.bf16.msra.mxu0 %v6437
    %7359 = vmatprep.subr.bf16.mxu0 %v6442
    %7360 = vmatpush1.bf16.msra.mxu0 %v6441
    %7361 = vmatprep.subr.bf16.mxu0 %v6446
    %7362 = vmatpush1.bf16.msra.mxu0 %v6445
    %7363 = vmatprep.subr.bf16.mxu0 %v6450
    %7364 = vmatpush1.bf16.msra.mxu0 %v6449
    %7365 = vmatprep.subr.bf16.mxu0 %v6454
    %7366 = vmatpush1.bf16.msra.mxu0 %v6453
    %7367 = vmatprep.subr.bf16.mxu0 %v6458
    %7368 = vmatpush1.bf16.msra.mxu0 %v6457
    %7369 = vmatprep.mubr.bf16.mxu0 %v4064
    %7370 = vmatmul.mubr.bf16.gmra.mrb[0].mxu0 %v4063
    %v7371 = vpop.f32.mrb[0].mxu0
    %v7372 = vadd.f32 %v7329, %v7371
    %v7373 = vpop.f32.mrb[0].mxu0
    %v7374 = vadd.f32 %v7331, %v7373
    %v7375 = vpop.f32.mrb[0].mxu0
    %v7376 = vadd.f32 %v7333, %v7375
    %v7377 = vpop.f32.mrb[0].mxu0
    %v7378 = vadd.f32 %v7335, %v7377
    %7379 = vdwg.mxu0
    %7380 = vmatprep.subr.bf16.mxu0 %v6462
    %7381 = vmatpush1.bf16.msra.mxu0 %v6461
    %7382 = vmatprep.subr.bf16.mxu0 %v6466
    %7383 = vmatpush1.bf16.msra.mxu0 %v6465
    %7384 = vmatprep.subr.bf16.mxu0 %v6470
    %7385 = vmatpush1.bf16.msra.mxu0 %v6469
    %7386 = vmatprep.subr.bf16.mxu0 %v6474
    %7387 = vmatpush1.bf16.msra.mxu0 %v6473
    %7388 = vmatprep.subr.bf16.mxu0 %v6478
    %7389 = vmatpush1.bf16.msra.mxu0 %v6477
    %7390 = vmatprep.subr.bf16.mxu0 %v6482
    %7391 = vmatpush1.bf16.msra.mxu0 %v6481
    %7392 = vmatprep.subr.bf16.mxu0 %v6486
    %7393 = vmatpush1.bf16.msra.mxu0 %v6485
    %7394 = vmatprep.subr.bf16.mxu0 %v6490
    %7395 = vmatpush1.bf16.msra.mxu0 %v6489
    %7396 = vmatprep.subr.bf16.mxu0 %v6494
    %7397 = vmatpush1.bf16.msra.mxu0 %v6493
    %7398 = vmatprep.subr.bf16.mxu0 %v6498
    %7399 = vmatpush1.bf16.msra.mxu0 %v6497
    %7400 = vmatprep.subr.bf16.mxu0 %v6502
    %7401 = vmatpush1.bf16.msra.mxu0 %v6501
    %7402 = vmatprep.subr.bf16.mxu0 %v6506
    %7403 = vmatpush1.bf16.msra.mxu0 %v6505
    %7404 = vmatprep.subr.bf16.mxu0 %v6510
    %7405 = vmatpush1.bf16.msra.mxu0 %v6509
    %7406 = vmatprep.subr.bf16.mxu0 %v6514
    %7407 = vmatpush1.bf16.msra.mxu0 %v6513
    %7408 = vmatprep.subr.bf16.mxu0 %v6518
    %7409 = vmatpush1.bf16.msra.mxu0 %v6517
    %7410 = vmatprep.subr.bf16.mxu0 %v6522
    %7411 = vmatpush1.bf16.msra.mxu0 %v6521
    %7412 = vmatprep.mubr.bf16.mxu0 %v4066
    %7413 = vmatmul.mubr.bf16.gmra.mrb[0].mxu0 %v4065
    %v7414 = vpop.f32.mrb[0].mxu0
    %v7415 = vadd.f32 %v7372, %v7414
    %v7416 = vpop.f32.mrb[0].mxu0
    %v7417 = vadd.f32 %v7374, %v7416
    %v7418 = vpop.f32.mrb[0].mxu0
    %v7419 = vadd.f32 %v7376, %v7418
    %v7420 = vpop.f32.mrb[0].mxu0
    %v7421 = vadd.f32 %v7378, %v7420
    %7422 = vdwg.mxu0
    %7423 = vmatprep.subr.bf16.mxu0 %v6526
    %7424 = vmatpush1.bf16.msra.mxu0 %v6525
    %7425 = vmatprep.subr.bf16.mxu0 %v6530
    %7426 = vmatpush1.bf16.msra.mxu0 %v6529
    %7427 = vmatprep.subr.bf16.mxu0 %v6534
    %7428 = vmatpush1.bf16.msra.mxu0 %v6533
    %7429 = vmatprep.subr.bf16.mxu0 %v6538
    %7430 = vmatpush1.bf16.msra.mxu0 %v6537
    %7431 = vmatprep.subr.bf16.mxu0 %v6542
    %7432 = vmatpush1.bf16.msra.mxu0 %v6541
    %7433 = vmatprep.subr.bf16.mxu0 %v6546
    %7434 = vmatpush1.bf16.msra.mxu0 %v6545
    %7435 = vmatprep.subr.bf16.mxu0 %v6550
    %7436 = vmatpush1.bf16.msra.mxu0 %v6549
    %7437 = vmatprep.subr.bf16.mxu0 %v6554
    %7438 = vmatpush1.bf16.msra.mxu0 %v6553
    %7439 = vmatprep.subr.bf16.mxu0 %v6558
    %7440 = vmatpush1.bf16.msra.mxu0 %v6557
    %7441 = vmatprep.subr.bf16.mxu0 %v6562
    %7442 = vmatpush1.bf16.msra.mxu0 %v6561
    %7443 = vmatprep.subr.bf16.mxu0 %v6566
    %7444 = vmatpush1.bf16.msra.mxu0 %v6565
    %7445 = vmatprep.subr.bf16.mxu0 %v6570
    %7446 = vmatpush1.bf16.msra.mxu0 %v6569
    %7447 = vmatprep.subr.bf16.mxu0 %v6574
    %7448 = vmatpush1.bf16.msra.mxu0 %v6573
    %7449 = vmatprep.subr.bf16.mxu0 %v6578
    %7450 = vmatpush1.bf16.msra.mxu0 %v6577
    %7451 = vmatprep.subr.bf16.mxu0 %v6582
    %7452 = vmatpush1.bf16.msra.mxu0 %v6581
    %7453 = vmatprep.subr.bf16.mxu0 %v6586
    %7454 = vmatpush1.bf16.msra.mxu0 %v6585
    %7455 = vmatprep.mubr.bf16.mxu0 %v4068
    %7456 = vmatmul.mubr.bf16.gmra.mrb[0].mxu0 %v4067
    %v7457 = vpop.f32.mrb[0].mxu0
    %v7458 = vadd.f32 %v7415, %v7457
    %v7459 = vpop.f32.mrb[0].mxu0
    %v7460 = vadd.f32 %v7417, %v7459
    %v7461 = vpop.f32.mrb[0].mxu0
    %v7462 = vadd.f32 %v7419, %v7461
    %v7463 = vpop.f32.mrb[0].mxu0
    %v7464 = vadd.f32 %v7421, %v7463
    %7465 = vdwg.mxu0
    %7466 = vmatprep.subr.bf16.mxu0 %v6590
    %7467 = vmatpush1.bf16.msra.mxu0 %v6589
    %7468 = vmatprep.subr.bf16.mxu0 %v6594
    %7469 = vmatpush1.bf16.msra.mxu0 %v6593
    %7470 = vmatprep.subr.bf16.mxu0 %v6598
    %7471 = vmatpush1.bf16.msra.mxu0 %v6597
    %7472 = vmatprep.subr.bf16.mxu0 %v6602
    %7473 = vmatpush1.bf16.msra.mxu0 %v6601
    %7474 = vmatprep.subr.bf16.mxu0 %v6606
    %7475 = vmatpush1.bf16.msra.mxu0 %v6605
    %7476 = vmatprep.subr.bf16.mxu0 %v6610
    %7477 = vmatpush1.bf16.msra.mxu0 %v6609
    %7478 = vmatprep.subr.bf16.mxu0 %v6614
    %7479 = vmatpush1.bf16.msra.mxu0 %v6613
    %7480 = vmatprep.subr.bf16.mxu0 %v6618
    %7481 = vmatpush1.bf16.msra.mxu0 %v6617
    %7482 = vmatprep.subr.bf16.mxu0 %v6622
    %7483 = vmatpush1.bf16.msra.mxu0 %v6621
    %7484 = vmatprep.subr.bf16.mxu0 %v6626
    %7485 = vmatpush1.bf16.msra.mxu0 %v6625
    %7486 = vmatprep.subr.bf16.mxu0 %v6630
    %7487 = vmatpush1.bf16.msra.mxu0 %v6629
    %7488 = vmatprep.subr.bf16.mxu0 %v6634
    %7489 = vmatpush1.bf16.msra.mxu0 %v6633
    %7490 = vmatprep.subr.bf16.mxu0 %v6638
    %7491 = vmatpush1.bf16.msra.mxu0 %v6637
    %7492 = vmatprep.subr.bf16.mxu0 %v6642
    %7493 = vmatpush1.bf16.msra.mxu0 %v6641
    %7494 = vmatprep.subr.bf16.mxu0 %v6646
    %7495 = vmatpush1.bf16.msra.mxu0 %v6645
    %7496 = vmatprep.subr.bf16.mxu0 %v6650
    %7497 = vmatpush1.bf16.msra.mxu0 %v6649
    %7498 = vmatprep.mubr.bf16.mxu0 %v4070
    %7499 = vmatmul.mubr.bf16.gmra.mrb[0].mxu0 %v4069
    %v7500 = vpop.f32.mrb[0].mxu0
    %v7501 = vadd.f32 %v7458, %v7500
    %v7502 = vpop.f32.mrb[0].mxu0
    %v7503 = vadd.f32 %v7460, %v7502
    %v7504 = vpop.f32.mrb[0].mxu0
    %v7505 = vadd.f32 %v7462, %v7504
    %v7506 = vpop.f32.mrb[0].mxu0
    %v7507 = vadd.f32 %v7464, %v7506
    %7508 = vdwg.mxu0
    %7509 = vmatprep.subr.bf16.mxu0 %v6144
    %7510 = vmatpush1.bf16.msra.mxu0 %v6143
    %7511 = vmatprep.subr.bf16.mxu0 %v6148
    %7512 = vmatpush1.bf16.msra.mxu0 %v6147
    %7513 = vmatprep.subr.bf16.mxu0 %v6152
    %7514 = vmatpush1.bf16.msra.mxu0 %v6151
    %7515 = vmatprep.subr.bf16.mxu0 %v6156
    %7516 = vmatpush1.bf16.msra.mxu0 %v6155
    %7517 = vmatprep.subr.bf16.mxu0 %v6160
    %7518 = vmatpush1.bf16.msra.mxu0 %v6159
    %7519 = vmatprep.subr.bf16.mxu0 %v6164
    %7520 = vmatpush1.bf16.msra.mxu0 %v6163
    %7521 = vmatprep.subr.bf16.mxu0 %v6168
    %7522 = vmatpush1.bf16.msra.mxu0 %v6167
    %7523 = vmatprep.subr.bf16.mxu0 %v6172
    %7524 = vmatpush1.bf16.msra.mxu0 %v6171
    %7525 = vmatprep.subr.bf16.mxu0 %v6176
    %7526 = vmatpush1.bf16.msra.mxu0 %v6175
    %7527 = vmatprep.subr.bf16.mxu0 %v6180
    %7528 = vmatpush1.bf16.msra.mxu0 %v6179
    %7529 = vmatprep.subr.bf16.mxu0 %v6184
    %7530 = vmatpush1.bf16.msra.mxu0 %v6183
    %7531 = vmatprep.subr.bf16.mxu0 %v6188
    %7532 = vmatpush1.bf16.msra.mxu0 %v6187
    %7533 = vmatprep.subr.bf16.mxu0 %v6192
    %7534 = vmatpush1.bf16.msra.mxu0 %v6191
    %7535 = vmatprep.subr.bf16.mxu0 %v6196
    %7536 = vmatpush1.bf16.msra.mxu0 %v6195
    %7537 = vmatprep.subr.bf16.mxu0 %v6200
    %7538 = vmatpush1.bf16.msra.mxu0 %v6199
    %7539 = vmatprep.subr.bf16.mxu0 %v6204
    %7540 = vmatpush1.bf16.msra.mxu0 %v6203
    %7541 = vmatprep.mubr.bf16.mxu0 %v4056
    %7542 = vmatmul.mubr.bf16.gmra.mrb[0].mxu0 %v4055
    %v7543 = vpop.f32.mrb[0].mxu0
    %v7544 = vadd.f32 %v4596, %v7543
    %v7545 = vpop.f32.mrb[0].mxu0
    %v7546 = vadd.f32 %v4600, %v7545
    %v7547 = vpop.f32.mrb[0].mxu0
    %v7548 = vadd.f32 %v4596, %v7547
    %v7549 = vpop.f32.mrb[0].mxu0
    %v7550 = vadd.f32 %v4600, %v7549
    %7551 = vdwg.mxu0
    %7552 = vmatprep.subr.bf16.mxu0 %v6208
    %7553 = vmatpush1.bf16.msra.mxu0 %v6207
    %7554 = vmatprep.subr.bf16.mxu0 %v6212
    %7555 = vmatpush1.bf16.msra.mxu0 %v6211
    %7556 = vmatprep.subr.bf16.mxu0 %v6216
    %7557 = vmatpush1.bf16.msra.mxu0 %v6215
    %7558 = vmatprep.subr.bf16.mxu0 %v6220
    %7559 = vmatpush1.bf16.msra.mxu0 %v6219
    %7560 = vmatprep.subr.bf16.mxu0 %v6224
    %7561 = vmatpush1.bf16.msra.mxu0 %v6223
    %7562 = vmatprep.subr.bf16.mxu0 %v6228
    %7563 = vmatpush1.bf16.msra.mxu0 %v6227
    %7564 = vmatprep.subr.bf16.mxu0 %v6232
    %7565 = vmatpush1.bf16.msra.mxu0 %v6231
    %7566 = vmatprep.subr.bf16.mxu0 %v6236
    %7567 = vmatpush1.bf16.msra.mxu0 %v6235
    %7568 = vmatprep.subr.bf16.mxu0 %v6240
    %7569 = vmatpush1.bf16.msra.mxu0 %v6239
    %7570 = vmatprep.subr.bf16.mxu0 %v6244
    %7571 = vmatpush1.bf16.msra.mxu0 %v6243
    %7572 = vmatprep.subr.bf16.mxu0 %v6248
    %7573 = vmatpush1.bf16.msra.mxu0 %v6247
    %7574 = vmatprep.subr.bf16.mxu0 %v6252
    %7575 = vmatpush1.bf16.msra.mxu0 %v6251
    %7576 = vmatprep.subr.bf16.mxu0 %v6256
    %7577 = vmatpush1.bf16.msra.mxu0 %v6255
    %7578 = vmatprep.subr.bf16.mxu0 %v6260
    %7579 = vmatpush1.bf16.msra.mxu0 %v6259
    %7580 = vmatprep.subr.bf16.mxu0 %v6264
    %7581 = vmatpush1.bf16.msra.mxu0 %v6263
    %7582 = vmatprep.subr.bf16.mxu0 %v6268
    %7583 = vmatpush1.bf16.msra.mxu0 %v6267
    %7584 = vmatprep.mubr.bf16.mxu0 %v4058
    %7585 = vmatmul.mubr.bf16.gmra.mrb[0].mxu0 %v4057
    %v7586 = vpop.f32.mrb[0].mxu0
    %v7587 = vadd.f32 %v7544, %v7586
    %v7588 = vpop.f32.mrb[0].mxu0
    %v7589 = vadd.f32 %v7546, %v7588
    %v7590 = vpop.f32.mrb[0].mxu0
    %v7591 = vadd.f32 %v7548, %v7590
    %v7592 = vpop.f32.mrb[0].mxu0
    %v7593 = vadd.f32 %v7550, %v7592
    %7594 = vdwg.mxu0
    %7595 = vmatprep.subr.bf16.mxu0 %v6272
    %7596 = vmatpush1.bf16.msra.mxu0 %v6271
    %7597 = vmatprep.subr.bf16.mxu0 %v6276
    %7598 = vmatpush1.bf16.msra.mxu0 %v6275
    %7599 = vmatprep.subr.bf16.mxu0 %v6280
    %7600 = vmatpush1.bf16.msra.mxu0 %v6279
    %7601 = vmatprep.subr.bf16.mxu0 %v6284
    %7602 = vmatpush1.bf16.msra.mxu0 %v6283
    %7603 = vmatprep.subr.bf16.mxu0 %v6288
    %7604 = vmatpush1.bf16.msra.mxu0 %v6287
    %7605 = vmatprep.subr.bf16.mxu0 %v6292
    %7606 = vmatpush1.bf16.msra.mxu0 %v6291
    %7607 = vmatprep.subr.bf16.mxu0 %v6296
    %7608 = vmatpush1.bf16.msra.mxu0 %v6295
    %7609 = vmatprep.subr.bf16.mxu0 %v6300
    %7610 = vmatpush1.bf16.msra.mxu0 %v6299
    %7611 = vmatprep.subr.bf16.mxu0 %v6304
    %7612 = vmatpush1.bf16.msra.mxu0 %v6303
    %7613 = vmatprep.subr.bf16.mxu0 %v6308
    %7614 = vmatpush1.bf16.msra.mxu0 %v6307
    %7615 = vmatprep.subr.bf16.mxu0 %v6312
    %7616 = vmatpush1.bf16.msra.mxu0 %v6311
    %7617 = vmatprep.subr.bf16.mxu0 %v6316
    %7618 = vmatpush1.bf16.msra.mxu0 %v6315
    %7619 = vmatprep.subr.bf16.mxu0 %v6320
    %7620 = vmatpush1.bf16.msra.mxu0 %v6319
    %7621 = vmatprep.subr.bf16.mxu0 %v6324
    %7622 = vmatpush1.bf16.msra.mxu0 %v6323
    %7623 = vmatprep.subr.bf16.mxu0 %v6328
    %7624 = vmatpush1.bf16.msra.mxu0 %v6327
    %7625 = vmatprep.subr.bf16.mxu0 %v6332
    %7626 = vmatpush1.bf16.msra.mxu0 %v6331
    %7627 = vmatprep.mubr.bf16.mxu0 %v4060
    %7628 = vmatmul.mubr.bf16.gmra.mrb[0].mxu0 %v4059
    %v7629 = vpop.f32.mrb[0].mxu0
    %v7630 = vadd.f32 %v7587, %v7629
    %v7631 = vpop.f32.mrb[0].mxu0
    %v7632 = vadd.f32 %v7589, %v7631
    %v7633 = vpop.f32.mrb[0].mxu0
    %v7634 = vadd.f32 %v7591, %v7633
    %v7635 = vpop.f32.mrb[0].mxu0
    %v7636 = vadd.f32 %v7593, %v7635
    %7637 = vdwg.mxu0
    %7638 = vmatprep.subr.bf16.mxu0 %v6336
    %7639 = vmatpush1.bf16.msra.mxu0 %v6335
    %7640 = vmatprep.subr.bf16.mxu0 %v6340
    %7641 = vmatpush1.bf16.msra.mxu0 %v6339
    %7642 = vmatprep.subr.bf16.mxu0 %v6344
    %7643 = vmatpush1.bf16.msra.mxu0 %v6343
    %7644 = vmatprep.subr.bf16.mxu0 %v6348
    %7645 = vmatpush1.bf16.msra.mxu0 %v6347
    %7646 = vmatprep.subr.bf16.mxu0 %v6352
    %7647 = vmatpush1.bf16.msra.mxu0 %v6351
    %7648 = vmatprep.subr.bf16.mxu0 %v6356
    %7649 = vmatpush1.bf16.msra.mxu0 %v6355
    %7650 = vmatprep.subr.bf16.mxu0 %v6360
    %7651 = vmatpush1.bf16.msra.mxu0 %v6359
    %7652 = vmatprep.subr.bf16.mxu0 %v6364
    %7653 = vmatpush1.bf16.msra.mxu0 %v6363
    %7654 = vmatprep.subr.bf16.mxu0 %v6368
    %7655 = vmatpush1.bf16.msra.mxu0 %v6367
    %7656 = vmatprep.subr.bf16.mxu0 %v6372
    %7657 = vmatpush1.bf16.msra.mxu0 %v6371
    %7658 = vmatprep.subr.bf16.mxu0 %v6376
    %7659 = vmatpush1.bf16.msra.mxu0 %v6375
    %7660 = vmatprep.subr.bf16.mxu0 %v6380
    %7661 = vmatpush1.bf16.msra.mxu0 %v6379
    %7662 = vmatprep.subr.bf16.mxu0 %v6384
    %7663 = vmatpush1.bf16.msra.mxu0 %v6383
    %7664 = vmatprep.subr.bf16.mxu0 %v6388
    %7665 = vmatpush1.bf16.msra.mxu0 %v6387
    %7666 = vmatprep.subr.bf16.mxu0 %v6392
    %7667 = vmatpush1.bf16.msra.mxu0 %v6391
    %7668 = vmatprep.subr.bf16.mxu0 %v6396
    %7669 = vmatpush1.bf16.msra.mxu0 %v6395
    %7670 = vmatprep.mubr.bf16.mxu0 %v4062
    %7671 = vmatmul.mubr.bf16.gmra.mrb[0].mxu0 %v4061
    %v7672 = vpop.f32.mrb[0].mxu0
    %v7673 = vadd.f32 %v7630, %v7672
    %v7674 = vpop.f32.mrb[0].mxu0
    %v7675 = vadd.f32 %v7632, %v7674
    %v7676 = vpop.f32.mrb[0].mxu0
    %v7677 = vadd.f32 %v7634, %v7676
    %v7678 = vpop.f32.mrb[0].mxu0
    %v7679 = vadd.f32 %v7636, %v7678
    %7680 = vdwg.mxu0
    %7681 = vmatprep.subr.bf16.mxu0 %v6400
    %7682 = vmatpush1.bf16.msra.mxu0 %v6399
    %7683 = vmatprep.subr.bf16.mxu0 %v6404
    %7684 = vmatpush1.bf16.msra.mxu0 %v6403
    %7685 = vmatprep.subr.bf16.mxu0 %v6408
    %7686 = vmatpush1.bf16.msra.mxu0 %v6407
    %7687 = vmatprep.subr.bf16.mxu0 %v6412
    %7688 = vmatpush1.bf16.msra.mxu0 %v6411
    %7689 = vmatprep.subr.bf16.mxu0 %v6416
    %7690 = vmatpush1.bf16.msra.mxu0 %v6415
    %7691 = vmatprep.subr.bf16.mxu0 %v6420
    %7692 = vmatpush1.bf16.msra.mxu0 %v6419
    %7693 = vmatprep.subr.bf16.mxu0 %v6424
    %7694 = vmatpush1.bf16.msra.mxu0 %v6423
    %7695 = vmatprep.subr.bf16.mxu0 %v6428
    %7696 = vmatpush1.bf16.msra.mxu0 %v6427
    %7697 = vmatprep.subr.bf16.mxu0 %v6432
    %7698 = vmatpush1.bf16.msra.mxu0 %v6431
    %7699 = vmatprep.subr.bf16.mxu0 %v6436
    %7700 = vmatpush1.bf16.msra.mxu0 %v6435
    %7701 = vmatprep.subr.bf16.mxu0 %v6440
    %7702 = vmatpush1.bf16.msra.mxu0 %v6439
    %7703 = vmatprep.subr.bf16.mxu0 %v6444
    %7704 = vmatpush1.bf16.msra.mxu0 %v6443
    %7705 = vmatprep.subr.bf16.mxu0 %v6448
    %7706 = vmatpush1.bf16.msra.mxu0 %v6447
    %7707 = vmatprep.subr.bf16.mxu0 %v6452
    %7708 = vmatpush1.bf16.msra.mxu0 %v6451
    %7709 = vmatprep.subr.bf16.mxu0 %v6456
    %7710 = vmatpush1.bf16.msra.mxu0 %v6455
    %7711 = vmatprep.subr.bf16.mxu0 %v6460
    %7712 = vmatpush1.bf16.msra.mxu0 %v6459
    %7713 = vmatprep.mubr.bf16.mxu0 %v4064
    %7714 = vmatmul.mubr.bf16.gmra.mrb[0].mxu0 %v4063
    %v7715 = vpop.f32.mrb[0].mxu0
    %v7716 = vadd.f32 %v7673, %v7715
    %v7717 = vpop.f32.mrb[0].mxu0
    %v7718 = vadd.f32 %v7675, %v7717
    %v7719 = vpop.f32.mrb[0].mxu0
    %v7720 = vadd.f32 %v7677, %v7719
    %v7721 = vpop.f32.mrb[0].mxu0
    %v7722 = vadd.f32 %v7679, %v7721
    %7723 = vdwg.mxu0
    %7724 = vmatprep.subr.bf16.mxu0 %v6464
    %7725 = vmatpush1.bf16.msra.mxu0 %v6463
    %7726 = vmatprep.subr.bf16.mxu0 %v6468
    %7727 = vmatpush1.bf16.msra.mxu0 %v6467
    %7728 = vmatprep.subr.bf16.mxu0 %v6472
    %7729 = vmatpush1.bf16.msra.mxu0 %v6471
    %7730 = vmatprep.subr.bf16.mxu0 %v6476
    %7731 = vmatpush1.bf16.msra.mxu0 %v6475
    %7732 = vmatprep.subr.bf16.mxu0 %v6480
    %7733 = vmatpush1.bf16.msra.mxu0 %v6479
    %7734 = vmatprep.subr.bf16.mxu0 %v6484
    %7735 = vmatpush1.bf16.msra.mxu0 %v6483
    %7736 = vmatprep.subr.bf16.mxu0 %v6488
    %7737 = vmatpush1.bf16.msra.mxu0 %v6487
    %7738 = vmatprep.subr.bf16.mxu0 %v6492
    %7739 = vmatpush1.bf16.msra.mxu0 %v6491
    %7740 = vmatprep.subr.bf16.mxu0 %v6496
    %7741 = vmatpush1.bf16.msra.mxu0 %v6495
    %7742 = vmatprep.subr.bf16.mxu0 %v6500
    %7743 = vmatpush1.bf16.msra.mxu0 %v6499
    %7744 = vmatprep.subr.bf16.mxu0 %v6504
    %7745 = vmatpush1.bf16.msra.mxu0 %v6503
    %7746 = vmatprep.subr.bf16.mxu0 %v6508
    %7747 = vmatpush1.bf16.msra.mxu0 %v6507
    %7748 = vmatprep.subr.bf16.mxu0 %v6512
    %7749 = vmatpush1.bf16.msra.mxu0 %v6511
    %7750 = vmatprep.subr.bf16.mxu0 %v6516
    %7751 = vmatpush1.bf16.msra.mxu0 %v6515
    %7752 = vmatprep.subr.bf16.mxu0 %v6520
    %7753 = vmatpush1.bf16.msra.mxu0 %v6519
    %7754 = vmatprep.subr.bf16.mxu0 %v6524
    %7755 = vmatpush1.bf16.msra.mxu0 %v6523
    %7756 = vmatprep.mubr.bf16.mxu0 %v4066
    %7757 = vmatmul.mubr.bf16.gmra.mrb[0].mxu0 %v4065
    %v7758 = vpop.f32.mrb[0].mxu0
    %v7759 = vadd.f32 %v7716, %v7758
    %v7760 = vpop.f32.mrb[0].mxu0
    %v7761 = vadd.f32 %v7718, %v7760
    %v7762 = vpop.f32.mrb[0].mxu0
    %v7763 = vadd.f32 %v7720, %v7762
    %v7764 = vpop.f32.mrb[0].mxu0
    %v7765 = vadd.f32 %v7722, %v7764
    %7766 = vdwg.mxu0
    %7767 = vmatprep.subr.bf16.mxu0 %v6528
    %7768 = vmatpush1.bf16.msra.mxu0 %v6527
    %7769 = vmatprep.subr.bf16.mxu0 %v6532
    %7770 = vmatpush1.bf16.msra.mxu0 %v6531
    %7771 = vmatprep.subr.bf16.mxu0 %v6536
    %7772 = vmatpush1.bf16.msra.mxu0 %v6535
    %7773 = vmatprep.subr.bf16.mxu0 %v6540
    %7774 = vmatpush1.bf16.msra.mxu0 %v6539
    %7775 = vmatprep.subr.bf16.mxu0 %v6544
    %7776 = vmatpush1.bf16.msra.mxu0 %v6543
    %7777 = vmatprep.subr.bf16.mxu0 %v6548
    %7778 = vmatpush1.bf16.msra.mxu0 %v6547
    %7779 = vmatprep.subr.bf16.mxu0 %v6552
    %7780 = vmatpush1.bf16.msra.mxu0 %v6551
    %7781 = vmatprep.subr.bf16.mxu0 %v6556
    %7782 = vmatpush1.bf16.msra.mxu0 %v6555
    %7783 = vmatprep.subr.bf16.mxu0 %v6560
    %7784 = vmatpush1.bf16.msra.mxu0 %v6559
    %7785 = vmatprep.subr.bf16.mxu0 %v6564
    %7786 = vmatpush1.bf16.msra.mxu0 %v6563
    %7787 = vmatprep.subr.bf16.mxu0 %v6568
    %7788 = vmatpush1.bf16.msra.mxu0 %v6567
    %7789 = vmatprep.subr.bf16.mxu0 %v6572
    %7790 = vmatpush1.bf16.msra.mxu0 %v6571
    %7791 = vmatprep.subr.bf16.mxu0 %v6576
    %7792 = vmatpush1.bf16.msra.mxu0 %v6575
    %7793 = vmatprep.subr.bf16.mxu0 %v6580
    %7794 = vmatpush1.bf16.msra.mxu0 %v6579
    %7795 = vmatprep.subr.bf16.mxu0 %v6584
    %7796 = vmatpush1.bf16.msra.mxu0 %v6583
    %7797 = vmatprep.subr.bf16.mxu0 %v6588
    %7798 = vmatpush1.bf16.msra.mxu0 %v6587
    %7799 = vmatprep.mubr.bf16.mxu0 %v4068
    %7800 = vmatmul.mubr.bf16.gmra.mrb[0].mxu0 %v4067
    %v7801 = vpop.f32.mrb[0].mxu0
    %v7802 = vadd.f32 %v7759, %v7801
    %v7803 = vpop.f32.mrb[0].mxu0
    %v7804 = vadd.f32 %v7761, %v7803
    %v7805 = vpop.f32.mrb[0].mxu0
    %v7806 = vadd.f32 %v7763, %v7805
    %v7807 = vpop.f32.mrb[0].mxu0
    %v7808 = vadd.f32 %v7765, %v7807
    %7809 = vdwg.mxu0
    %7810 = vmatprep.subr.bf16.mxu0 %v6592
    %7811 = vmatpush1.bf16.msra.mxu0 %v6591
    %7812 = vmatprep.subr.bf16.mxu0 %v6596
    %7813 = vmatpush1.bf16.msra.mxu0 %v6595
    %7814 = vmatprep.subr.bf16.mxu0 %v6600
    %7815 = vmatpush1.bf16.msra.mxu0 %v6599
    %7816 = vmatprep.subr.bf16.mxu0 %v6604
    %7817 = vmatpush1.bf16.msra.mxu0 %v6603
    %7818 = vmatprep.subr.bf16.mxu0 %v6608
    %7819 = vmatpush1.bf16.msra.mxu0 %v6607
    %7820 = vmatprep.subr.bf16.mxu0 %v6612
    %7821 = vmatpush1.bf16.msra.mxu0 %v6611
    %7822 = vmatprep.subr.bf16.mxu0 %v6616
    %7823 = vmatpush1.bf16.msra.mxu0 %v6615
    %7824 = vmatprep.subr.bf16.mxu0 %v6620
    %7825 = vmatpush1.bf16.msra.mxu0 %v6619
    %7826 = vmatprep.subr.bf16.mxu0 %v6624
    %7827 = vmatpush1.bf16.msra.mxu0 %v6623
    %7828 = vmatprep.subr.bf16.mxu0 %v6628
    %7829 = vmatpush1.bf16.msra.mxu0 %v6627
    %7830 = vmatprep.subr.bf16.mxu0 %v6632
    %7831 = vmatpush1.bf16.msra.mxu0 %v6631
    %7832 = vmatprep.subr.bf16.mxu0 %v6636
    %7833 = vmatpush1.bf16.msra.mxu0 %v6635
    %7834 = vmatprep.subr.bf16.mxu0 %v6640
    %7835 = vmatpush1.bf16.msra.mxu0 %v6639
    %7836 = vmatprep.subr.bf16.mxu0 %v6644
    %7837 = vmatpush1.bf16.msra.mxu0 %v6643
    %7838 = vmatprep.subr.bf16.mxu0 %v6648
    %7839 = vmatpush1.bf16.msra.mxu0 %v6647
    %7840 = vmatprep.subr.bf16.mxu0 %v6652
    %7841 = vmatpush1.bf16.msra.mxu0 %v6651
    %7842 = vmatprep.mubr.bf16.mxu0 %v4070
    %7843 = vmatmul.mubr.bf16.gmra.mrb[0].mxu0 %v4069
    %v7844 = vpop.f32.mrb[0].mxu0
    %v7845 = vadd.f32 %v7802, %v7844
    %v7846 = vpop.f32.mrb[0].mxu0
    %v7847 = vadd.f32 %v7804, %v7846
    %v7848 = vpop.f32.mrb[0].mxu0
    %v7849 = vadd.f32 %v7806, %v7848
    %v7850 = vpop.f32.mrb[0].mxu0
    %v7851 = vadd.f32 %v7808, %v7850
    %7852 = vdwg.mxu0
    %v7853 = vmax.f32 %v7501, 0.0
    %v7854 = vmax.f32 %v7503, 0.0
    %v7855 = vmax.f32 %v7845, 0.0
    %v7856 = vmax.f32 %v7847, 0.0
    %v7857 = vmax.f32 %v7505, 0.0
    %v7858 = vmax.f32 %v7507, 0.0
    %v7859 = vmax.f32 %v7849, 0.0
    %v7860 = vmax.f32 %v7851, 0.0
    %v7861 = vpack.c.bf16 %v7857, %v7853
    %v7862 = vpack.c.bf16 %v7858, %v7854
    %v7863 = vpack.c.bf16 %v7859, %v7855
    %v7864 = vpack.c.bf16 %v7860, %v7856
    %v7865 = vld [vmem:[#allocation7] sm:$0xff]
    %v7866 = vld [vmem:[#allocation7 + $0x8] sm:$0xff]
    %v7867 = vld [vmem:[#allocation7 + $0x10] sm:$0xff]
    %v7868 = vld [vmem:[#allocation7 + $0x18] sm:$0xff]
    %v7869 = vld [vmem:[#allocation7 + $0x20] sm:$0xff]
    %v7870 = vld [vmem:[#allocation7 + $0x28] sm:$0xff]
    %v7871 = vld [vmem:[#allocation7 + $0x30] sm:$0xff]
    %v7872 = vld [vmem:[#allocation7 + $0x38] sm:$0xff]
    %v7873 = vld [vmem:[#allocation7 + $0x40] sm:$0xff]
    %v7874 = vld [vmem:[#allocation7 + $0x48] sm:$0xff]
    %v7875 = vld [vmem:[#allocation7 + $0x50] sm:$0xff]
    %v7876 = vld [vmem:[#allocation7 + $0x58] sm:$0xff]
    %v7877 = vld [vmem:[#allocation7 + $0x60] sm:$0xff]
    %v7878 = vld [vmem:[#allocation7 + $0x68] sm:$0xff]
    %v7879 = vld [vmem:[#allocation7 + $0x70] sm:$0xff]
    %v7880 = vld [vmem:[#allocation7 + $0x78] sm:$0xff]
    %v7881 = vld [vmem:[#allocation7 + $0x80] sm:$0xff]
    %v7882 = vld [vmem:[#allocation7 + $0x88] sm:$0xff]
    %v7883 = vld [vmem:[#allocation7 + $0x90] sm:$0xff]
    %v7884 = vld [vmem:[#allocation7 + $0x98] sm:$0xff]
    %v7885 = vld [vmem:[#allocation7 + $0xa0] sm:$0xff]
    %v7886 = vld [vmem:[#allocation7 + $0xa8] sm:$0xff]
    %v7887 = vld [vmem:[#allocation7 + $0xb0] sm:$0xff]
    %v7888 = vld [vmem:[#allocation7 + $0xb8] sm:$0xff]
    %v7889 = vld [vmem:[#allocation7 + $0xc0] sm:$0xff]
    %v7890 = vld [vmem:[#allocation7 + $0xc8] sm:$0xff]
    %v7891 = vld [vmem:[#allocation7 + $0xd0] sm:$0xff]
    %v7892 = vld [vmem:[#allocation7 + $0xd8] sm:$0xff]
    %v7893 = vld [vmem:[#allocation7 + $0xe0] sm:$0xff]
    %v7894 = vld [vmem:[#allocation7 + $0xe8] sm:$0xff]
    %v7895 = vld [vmem:[#allocation7 + $0xf0] sm:$0xff]
    %v7896 = vld [vmem:[#allocation7 + $0xf8] sm:$0xff]
    %v7897 = vpack.c.bf16 %v7881, %v7865
    %v7898 = vpack.c.bf16 %v7882, %v7866
    %v7899 = vpack.c.bf16 %v7883, %v7867
    %v7900 = vpack.c.bf16 %v7884, %v7868
    %v7901 = vpack.c.bf16 %v7885, %v7869
    %v7902 = vpack.c.bf16 %v7886, %v7870
    %v7903 = vpack.c.bf16 %v7887, %v7871
    %v7904 = vpack.c.bf16 %v7888, %v7872
    %v7905 = vpack.c.bf16 %v7889, %v7873
    %v7906 = vpack.c.bf16 %v7890, %v7874
    %v7907 = vpack.c.bf16 %v7891, %v7875
    %v7908 = vpack.c.bf16 %v7892, %v7876
    %v7909 = vpack.c.bf16 %v7893, %v7877
    %v7910 = vpack.c.bf16 %v7894, %v7878
    %v7911 = vpack.c.bf16 %v7895, %v7879
    %v7912 = vpack.c.bf16 %v7896, %v7880
    %v7913 = vld [vmem:[#allocation14] sm:$0xff]
    %v7914 = vld [vmem:[#allocation14 + $0x8] sm:$0xff]
    %v7915 = vld [vmem:[#allocation14 + $0x10] sm:$0xff]
    %v7916 = vld [vmem:[#allocation14 + $0x18] sm:$0xff]
    %v7917 = vld [vmem:[#allocation14 + $0x20] sm:$0xff]
    %v7918 = vld [vmem:[#allocation14 + $0x28] sm:$0xff]
    %v7919 = vld [vmem:[#allocation14 + $0x30] sm:$0xff]
    %v7920 = vld [vmem:[#allocation14 + $0x38] sm:$0xff]
    %v7921 = vld [vmem:[#allocation14 + $0x40] sm:$0xff]
    %v7922 = vld [vmem:[#allocation14 + $0x48] sm:$0xff]
    %v7923 = vld [vmem:[#allocation14 + $0x50] sm:$0xff]
    %v7924 = vld [vmem:[#allocation14 + $0x58] sm:$0xff]
    %v7925 = vld [vmem:[#allocation14 + $0x60] sm:$0xff]
    %v7926 = vld [vmem:[#allocation14 + $0x68] sm:$0xff]
    %v7927 = vld [vmem:[#allocation14 + $0x70] sm:$0xff]
    %v7928 = vld [vmem:[#allocation14 + $0x78] sm:$0xff]
    %v7929 = vld [vmem:[#allocation14 + $0x80] sm:$0xff]
    %v7930 = vld [vmem:[#allocation14 + $0x88] sm:$0xff]
    %v7931 = vld [vmem:[#allocation14 + $0x90] sm:$0xff]
    %v7932 = vld [vmem:[#allocation14 + $0x98] sm:$0xff]
    %v7933 = vld [vmem:[#allocation14 + $0xa0] sm:$0xff]
    %v7934 = vld [vmem:[#allocation14 + $0xa8] sm:$0xff]
    %v7935 = vld [vmem:[#allocation14 + $0xb0] sm:$0xff]
    %v7936 = vld [vmem:[#allocation14 + $0xb8] sm:$0xff]
    %v7937 = vld [vmem:[#allocation14 + $0xc0] sm:$0xff]
    %v7938 = vld [vmem:[#allocation14 + $0xc8] sm:$0xff]
    %v7939 = vld [vmem:[#allocation14 + $0xd0] sm:$0xff]
    %v7940 = vld [vmem:[#allocation14 + $0xd8] sm:$0xff]
    %v7941 = vld [vmem:[#allocation14 + $0xe0] sm:$0xff]
    %v7942 = vld [vmem:[#allocation14 + $0xe8] sm:$0xff]
    %v7943 = vld [vmem:[#allocation14 + $0xf0] sm:$0xff]
    %v7944 = vld [vmem:[#allocation14 + $0xf8] sm:$0xff]
    %v7945 = vld [vmem:[#allocation14 + $0x100] sm:$0xff]
    %v7946 = vld [vmem:[#allocation14 + $0x108] sm:$0xff]
    %v7947 = vld [vmem:[#allocation14 + $0x110] sm:$0xff]
    %v7948 = vld [vmem:[#allocation14 + $0x118] sm:$0xff]
    %v7949 = vld [vmem:[#allocation14 + $0x120] sm:$0xff]
    %v7950 = vld [vmem:[#allocation14 + $0x128] sm:$0xff]
    %v7951 = vld [vmem:[#allocation14 + $0x130] sm:$0xff]
    %v7952 = vld [vmem:[#allocation14 + $0x138] sm:$0xff]
    %v7953 = vld [vmem:[#allocation14 + $0x140] sm:$0xff]
    %v7954 = vld [vmem:[#allocation14 + $0x148] sm:$0xff]
    %v7955 = vld [vmem:[#allocation14 + $0x150] sm:$0xff]
    %v7956 = vld [vmem:[#allocation14 + $0x158] sm:$0xff]
    %v7957 = vld [vmem:[#allocation14 + $0x160] sm:$0xff]
    %v7958 = vld [vmem:[#allocation14 + $0x168] sm:$0xff]
    %v7959 = vld [vmem:[#allocation14 + $0x170] sm:$0xff]
    %v7960 = vld [vmem:[#allocation14 + $0x178] sm:$0xff]
    %v7961 = vld [vmem:[#allocation14 + $0x180] sm:$0xff]
    %v7962 = vld [vmem:[#allocation14 + $0x188] sm:$0xff]
    %v7963 = vld [vmem:[#allocation14 + $0x190] sm:$0xff]
    %v7964 = vld [vmem:[#allocation14 + $0x198] sm:$0xff]
    %v7965 = vld [vmem:[#allocation14 + $0x1a0] sm:$0xff]
    %v7966 = vld [vmem:[#allocation14 + $0x1a8] sm:$0xff]
    %v7967 = vld [vmem:[#allocation14 + $0x1b0] sm:$0xff]
    %v7968 = vld [vmem:[#allocation14 + $0x1b8] sm:$0xff]
    %v7969 = vld [vmem:[#allocation14 + $0x1c0] sm:$0xff]
    %v7970 = vld [vmem:[#allocation14 + $0x1c8] sm:$0xff]
    %v7971 = vld [vmem:[#allocation14 + $0x1d0] sm:$0xff]
    %v7972 = vld [vmem:[#allocation14 + $0x1d8] sm:$0xff]
    %v7973 = vld [vmem:[#allocation14 + $0x1e0] sm:$0xff]
    %v7974 = vld [vmem:[#allocation14 + $0x1e8] sm:$0xff]
    %v7975 = vld [vmem:[#allocation14 + $0x1f0] sm:$0xff]
    %v7976 = vld [vmem:[#allocation14 + $0x1f8] sm:$0xff]
    %v7977 = vld [vmem:[#allocation14 + $0x200] sm:$0xff]
    %v7978 = vld [vmem:[#allocation14 + $0x208] sm:$0xff]
    %v7979 = vld [vmem:[#allocation14 + $0x210] sm:$0xff]
    %v7980 = vld [vmem:[#allocation14 + $0x218] sm:$0xff]
    %v7981 = vld [vmem:[#allocation14 + $0x220] sm:$0xff]
    %v7982 = vld [vmem:[#allocation14 + $0x228] sm:$0xff]
    %v7983 = vld [vmem:[#allocation14 + $0x230] sm:$0xff]
    %v7984 = vld [vmem:[#allocation14 + $0x238] sm:$0xff]
    %v7985 = vld [vmem:[#allocation14 + $0x240] sm:$0xff]
    %v7986 = vld [vmem:[#allocation14 + $0x248] sm:$0xff]
    %v7987 = vld [vmem:[#allocation14 + $0x250] sm:$0xff]
    %v7988 = vld [vmem:[#allocation14 + $0x258] sm:$0xff]
    %v7989 = vld [vmem:[#allocation14 + $0x260] sm:$0xff]
    %v7990 = vld [vmem:[#allocation14 + $0x268] sm:$0xff]
    %v7991 = vld [vmem:[#allocation14 + $0x270] sm:$0xff]
    %v7992 = vld [vmem:[#allocation14 + $0x278] sm:$0xff]
    %v7993 = vld [vmem:[#allocation14 + $0x280] sm:$0xff]
    %v7994 = vld [vmem:[#allocation14 + $0x288] sm:$0xff]
    %v7995 = vld [vmem:[#allocation14 + $0x290] sm:$0xff]
    %v7996 = vld [vmem:[#allocation14 + $0x298] sm:$0xff]
    %v7997 = vld [vmem:[#allocation14 + $0x2a0] sm:$0xff]
    %v7998 = vld [vmem:[#allocation14 + $0x2a8] sm:$0xff]
    %v7999 = vld [vmem:[#allocation14 + $0x2b0] sm:$0xff]
    %v8000 = vld [vmem:[#allocation14 + $0x2b8] sm:$0xff]
    %v8001 = vld [vmem:[#allocation14 + $0x2c0] sm:$0xff]
    %v8002 = vld [vmem:[#allocation14 + $0x2c8] sm:$0xff]
    %v8003 = vld [vmem:[#allocation14 + $0x2d0] sm:$0xff]
    %v8004 = vld [vmem:[#allocation14 + $0x2d8] sm:$0xff]
    %v8005 = vld [vmem:[#allocation14 + $0x2e0] sm:$0xff]
    %v8006 = vld [vmem:[#allocation14 + $0x2e8] sm:$0xff]
    %v8007 = vld [vmem:[#allocation14 + $0x2f0] sm:$0xff]
    %v8008 = vld [vmem:[#allocation14 + $0x2f8] sm:$0xff]
    %v8009 = vld [vmem:[#allocation14 + $0x300] sm:$0xff]
    %v8010 = vld [vmem:[#allocation14 + $0x308] sm:$0xff]
    %v8011 = vld [vmem:[#allocation14 + $0x310] sm:$0xff]
    %v8012 = vld [vmem:[#allocation14 + $0x318] sm:$0xff]
    %v8013 = vld [vmem:[#allocation14 + $0x320] sm:$0xff]
    %v8014 = vld [vmem:[#allocation14 + $0x328] sm:$0xff]
    %v8015 = vld [vmem:[#allocation14 + $0x330] sm:$0xff]
    %v8016 = vld [vmem:[#allocation14 + $0x338] sm:$0xff]
    %v8017 = vld [vmem:[#allocation14 + $0x340] sm:$0xff]
    %v8018 = vld [vmem:[#allocation14 + $0x348] sm:$0xff]
    %v8019 = vld [vmem:[#allocation14 + $0x350] sm:$0xff]
    %v8020 = vld [vmem:[#allocation14 + $0x358] sm:$0xff]
    %v8021 = vld [vmem:[#allocation14 + $0x360] sm:$0xff]
    %v8022 = vld [vmem:[#allocation14 + $0x368] sm:$0xff]
    %v8023 = vld [vmem:[#allocation14 + $0x370] sm:$0xff]
    %v8024 = vld [vmem:[#allocation14 + $0x378] sm:$0xff]
    %v8025 = vld [vmem:[#allocation14 + $0x380] sm:$0xff]
    %v8026 = vld [vmem:[#allocation14 + $0x388] sm:$0xff]
    %v8027 = vld [vmem:[#allocation14 + $0x390] sm:$0xff]
    %v8028 = vld [vmem:[#allocation14 + $0x398] sm:$0xff]
    %v8029 = vld [vmem:[#allocation14 + $0x3a0] sm:$0xff]
    %v8030 = vld [vmem:[#allocation14 + $0x3a8] sm:$0xff]
    %v8031 = vld [vmem:[#allocation14 + $0x3b0] sm:$0xff]
    %v8032 = vld [vmem:[#allocation14 + $0x3b8] sm:$0xff]
    %v8033 = vld [vmem:[#allocation14 + $0x3c0] sm:$0xff]
    %v8034 = vld [vmem:[#allocation14 + $0x3c8] sm:$0xff]
    %v8035 = vld [vmem:[#allocation14 + $0x3d0] sm:$0xff]
    %v8036 = vld [vmem:[#allocation14 + $0x3d8] sm:$0xff]
    %v8037 = vld [vmem:[#allocation14 + $0x3e0] sm:$0xff]
    %v8038 = vld [vmem:[#allocation14 + $0x3e8] sm:$0xff]
    %v8039 = vld [vmem:[#allocation14 + $0x3f0] sm:$0xff]
    %v8040 = vld [vmem:[#allocation14 + $0x3f8] sm:$0xff]
    %v8041 = vld [vmem:[#allocation14 + $0x400] sm:$0xff]
    %v8042 = vld [vmem:[#allocation14 + $0x408] sm:$0xff]
    %v8043 = vld [vmem:[#allocation14 + $0x410] sm:$0xff]
    %v8044 = vld [vmem:[#allocation14 + $0x418] sm:$0xff]
    %v8045 = vld [vmem:[#allocation14 + $0x420] sm:$0xff]
    %v8046 = vld [vmem:[#allocation14 + $0x428] sm:$0xff]
    %v8047 = vld [vmem:[#allocation14 + $0x430] sm:$0xff]
    %v8048 = vld [vmem:[#allocation14 + $0x438] sm:$0xff]
    %v8049 = vld [vmem:[#allocation14 + $0x440] sm:$0xff]
    %v8050 = vld [vmem:[#allocation14 + $0x448] sm:$0xff]
    %v8051 = vld [vmem:[#allocation14 + $0x450] sm:$0xff]
    %v8052 = vld [vmem:[#allocation14 + $0x458] sm:$0xff]
    %v8053 = vld [vmem:[#allocation14 + $0x460] sm:$0xff]
    %v8054 = vld [vmem:[#allocation14 + $0x468] sm:$0xff]
    %v8055 = vld [vmem:[#allocation14 + $0x470] sm:$0xff]
    %v8056 = vld [vmem:[#allocation14 + $0x478] sm:$0xff]
    %v8057 = vld [vmem:[#allocation14 + $0x480] sm:$0xff]
    %v8058 = vld [vmem:[#allocation14 + $0x488] sm:$0xff]
    %v8059 = vld [vmem:[#allocation14 + $0x490] sm:$0xff]
    %v8060 = vld [vmem:[#allocation14 + $0x498] sm:$0xff]
    %v8061 = vld [vmem:[#allocation14 + $0x4a0] sm:$0xff]
    %v8062 = vld [vmem:[#allocation14 + $0x4a8] sm:$0xff]
    %v8063 = vld [vmem:[#allocation14 + $0x4b0] sm:$0xff]
    %v8064 = vld [vmem:[#allocation14 + $0x4b8] sm:$0xff]
    %v8065 = vld [vmem:[#allocation14 + $0x4c0] sm:$0xff]
    %v8066 = vld [vmem:[#allocation14 + $0x4c8] sm:$0xff]
    %v8067 = vld [vmem:[#allocation14 + $0x4d0] sm:$0xff]
    %v8068 = vld [vmem:[#allocation14 + $0x4d8] sm:$0xff]
    %v8069 = vld [vmem:[#allocation14 + $0x4e0] sm:$0xff]
    %v8070 = vld [vmem:[#allocation14 + $0x4e8] sm:$0xff]
    %v8071 = vld [vmem:[#allocation14 + $0x4f0] sm:$0xff]
    %v8072 = vld [vmem:[#allocation14 + $0x4f8] sm:$0xff]
    %v8073 = vld [vmem:[#allocation14 + $0x500] sm:$0xff]
    %v8074 = vld [vmem:[#allocation14 + $0x508] sm:$0xff]
    %v8075 = vld [vmem:[#allocation14 + $0x510] sm:$0xff]
    %v8076 = vld [vmem:[#allocation14 + $0x518] sm:$0xff]
    %v8077 = vld [vmem:[#allocation14 + $0x520] sm:$0xff]
    %v8078 = vld [vmem:[#allocation14 + $0x528] sm:$0xff]
    %v8079 = vld [vmem:[#allocation14 + $0x530] sm:$0xff]
    %v8080 = vld [vmem:[#allocation14 + $0x538] sm:$0xff]
    %v8081 = vld [vmem:[#allocation14 + $0x540] sm:$0xff]
    %v8082 = vld [vmem:[#allocation14 + $0x548] sm:$0xff]
    %v8083 = vld [vmem:[#allocation14 + $0x550] sm:$0xff]
    %v8084 = vld [vmem:[#allocation14 + $0x558] sm:$0xff]
    %v8085 = vld [vmem:[#allocation14 + $0x560] sm:$0xff]
    %v8086 = vld [vmem:[#allocation14 + $0x568] sm:$0xff]
    %v8087 = vld [vmem:[#allocation14 + $0x570] sm:$0xff]
    %v8088 = vld [vmem:[#allocation14 + $0x578] sm:$0xff]
    %v8089 = vld [vmem:[#allocation14 + $0x580] sm:$0xff]
    %v8090 = vld [vmem:[#allocation14 + $0x588] sm:$0xff]
    %v8091 = vld [vmem:[#allocation14 + $0x590] sm:$0xff]
    %v8092 = vld [vmem:[#allocation14 + $0x598] sm:$0xff]
    %v8093 = vld [vmem:[#allocation14 + $0x5a0] sm:$0xff]
    %v8094 = vld [vmem:[#allocation14 + $0x5a8] sm:$0xff]
    %v8095 = vld [vmem:[#allocation14 + $0x5b0] sm:$0xff]
    %v8096 = vld [vmem:[#allocation14 + $0x5b8] sm:$0xff]
    %v8097 = vld [vmem:[#allocation14 + $0x5c0] sm:$0xff]
    %v8098 = vld [vmem:[#allocation14 + $0x5c8] sm:$0xff]
    %v8099 = vld [vmem:[#allocation14 + $0x5d0] sm:$0xff]
    %v8100 = vld [vmem:[#allocation14 + $0x5d8] sm:$0xff]
    %v8101 = vld [vmem:[#allocation14 + $0x5e0] sm:$0xff]
    %v8102 = vld [vmem:[#allocation14 + $0x5e8] sm:$0xff]
    %v8103 = vld [vmem:[#allocation14 + $0x5f0] sm:$0xff]
    %v8104 = vld [vmem:[#allocation14 + $0x5f8] sm:$0xff]
    %v8105 = vld [vmem:[#allocation14 + $0x600] sm:$0xff]
    %v8106 = vld [vmem:[#allocation14 + $0x608] sm:$0xff]
    %v8107 = vld [vmem:[#allocation14 + $0x610] sm:$0xff]
    %v8108 = vld [vmem:[#allocation14 + $0x618] sm:$0xff]
    %v8109 = vld [vmem:[#allocation14 + $0x620] sm:$0xff]
    %v8110 = vld [vmem:[#allocation14 + $0x628] sm:$0xff]
    %v8111 = vld [vmem:[#allocation14 + $0x630] sm:$0xff]
    %v8112 = vld [vmem:[#allocation14 + $0x638] sm:$0xff]
    %v8113 = vld [vmem:[#allocation14 + $0x640] sm:$0xff]
    %v8114 = vld [vmem:[#allocation14 + $0x648] sm:$0xff]
    %v8115 = vld [vmem:[#allocation14 + $0x650] sm:$0xff]
    %v8116 = vld [vmem:[#allocation14 + $0x658] sm:$0xff]
    %v8117 = vld [vmem:[#allocation14 + $0x660] sm:$0xff]
    %v8118 = vld [vmem:[#allocation14 + $0x668] sm:$0xff]
    %v8119 = vld [vmem:[#allocation14 + $0x670] sm:$0xff]
    %v8120 = vld [vmem:[#allocation14 + $0x678] sm:$0xff]
    %v8121 = vld [vmem:[#allocation14 + $0x680] sm:$0xff]
    %v8122 = vld [vmem:[#allocation14 + $0x688] sm:$0xff]
    %v8123 = vld [vmem:[#allocation14 + $0x690] sm:$0xff]
    %v8124 = vld [vmem:[#allocation14 + $0x698] sm:$0xff]
    %v8125 = vld [vmem:[#allocation14 + $0x6a0] sm:$0xff]
    %v8126 = vld [vmem:[#allocation14 + $0x6a8] sm:$0xff]
    %v8127 = vld [vmem:[#allocation14 + $0x6b0] sm:$0xff]
    %v8128 = vld [vmem:[#allocation14 + $0x6b8] sm:$0xff]
    %v8129 = vld [vmem:[#allocation14 + $0x6c0] sm:$0xff]
    %v8130 = vld [vmem:[#allocation14 + $0x6c8] sm:$0xff]
    %v8131 = vld [vmem:[#allocation14 + $0x6d0] sm:$0xff]
    %v8132 = vld [vmem:[#allocation14 + $0x6d8] sm:$0xff]
    %v8133 = vld [vmem:[#allocation14 + $0x6e0] sm:$0xff]
    %v8134 = vld [vmem:[#allocation14 + $0x6e8] sm:$0xff]
    %v8135 = vld [vmem:[#allocation14 + $0x6f0] sm:$0xff]
    %v8136 = vld [vmem:[#allocation14 + $0x6f8] sm:$0xff]
    %v8137 = vld [vmem:[#allocation14 + $0x700] sm:$0xff]
    %v8138 = vld [vmem:[#allocation14 + $0x708] sm:$0xff]
    %v8139 = vld [vmem:[#allocation14 + $0x710] sm:$0xff]
    %v8140 = vld [vmem:[#allocation14 + $0x718] sm:$0xff]
    %v8141 = vld [vmem:[#allocation14 + $0x720] sm:$0xff]
    %v8142 = vld [vmem:[#allocation14 + $0x728] sm:$0xff]
    %v8143 = vld [vmem:[#allocation14 + $0x730] sm:$0xff]
    %v8144 = vld [vmem:[#allocation14 + $0x738] sm:$0xff]
    %v8145 = vld [vmem:[#allocation14 + $0x740] sm:$0xff]
    %v8146 = vld [vmem:[#allocation14 + $0x748] sm:$0xff]
    %v8147 = vld [vmem:[#allocation14 + $0x750] sm:$0xff]
    %v8148 = vld [vmem:[#allocation14 + $0x758] sm:$0xff]
    %v8149 = vld [vmem:[#allocation14 + $0x760] sm:$0xff]
    %v8150 = vld [vmem:[#allocation14 + $0x768] sm:$0xff]
    %v8151 = vld [vmem:[#allocation14 + $0x770] sm:$0xff]
    %v8152 = vld [vmem:[#allocation14 + $0x778] sm:$0xff]
    %v8153 = vld [vmem:[#allocation14 + $0x780] sm:$0xff]
    %v8154 = vld [vmem:[#allocation14 + $0x788] sm:$0xff]
    %v8155 = vld [vmem:[#allocation14 + $0x790] sm:$0xff]
    %v8156 = vld [vmem:[#allocation14 + $0x798] sm:$0xff]
    %v8157 = vld [vmem:[#allocation14 + $0x7a0] sm:$0xff]
    %v8158 = vld [vmem:[#allocation14 + $0x7a8] sm:$0xff]
    %v8159 = vld [vmem:[#allocation14 + $0x7b0] sm:$0xff]
    %v8160 = vld [vmem:[#allocation14 + $0x7b8] sm:$0xff]
    %v8161 = vld [vmem:[#allocation14 + $0x7c0] sm:$0xff]
    %v8162 = vld [vmem:[#allocation14 + $0x7c8] sm:$0xff]
    %v8163 = vld [vmem:[#allocation14 + $0x7d0] sm:$0xff]
    %v8164 = vld [vmem:[#allocation14 + $0x7d8] sm:$0xff]
    %v8165 = vld [vmem:[#allocation14 + $0x7e0] sm:$0xff]
    %v8166 = vld [vmem:[#allocation14 + $0x7e8] sm:$0xff]
    %v8167 = vld [vmem:[#allocation14 + $0x7f0] sm:$0xff]
    %v8168 = vld [vmem:[#allocation14 + $0x7f8] sm:$0xff]
    %v8169 = vld [vmem:[#allocation14 + $0x800] sm:$0xff]
    %v8170 = vld [vmem:[#allocation14 + $0x808] sm:$0xff]
    %v8171 = vld [vmem:[#allocation14 + $0x810] sm:$0xff]
    %v8172 = vld [vmem:[#allocation14 + $0x818] sm:$0xff]
    %v8173 = vld [vmem:[#allocation14 + $0x820] sm:$0xff]
    %v8174 = vld [vmem:[#allocation14 + $0x828] sm:$0xff]
    %v8175 = vld [vmem:[#allocation14 + $0x830] sm:$0xff]
    %v8176 = vld [vmem:[#allocation14 + $0x838] sm:$0xff]
    %v8177 = vld [vmem:[#allocation14 + $0x840] sm:$0xff]
    %v8178 = vld [vmem:[#allocation14 + $0x848] sm:$0xff]
    %v8179 = vld [vmem:[#allocation14 + $0x850] sm:$0xff]
    %v8180 = vld [vmem:[#allocation14 + $0x858] sm:$0xff]
    %v8181 = vld [vmem:[#allocation14 + $0x860] sm:$0xff]
    %v8182 = vld [vmem:[#allocation14 + $0x868] sm:$0xff]
    %v8183 = vld [vmem:[#allocation14 + $0x870] sm:$0xff]
    %v8184 = vld [vmem:[#allocation14 + $0x878] sm:$0xff]
    %v8185 = vld [vmem:[#allocation14 + $0x880] sm:$0xff]
    %v8186 = vld [vmem:[#allocation14 + $0x888] sm:$0xff]
    %v8187 = vld [vmem:[#allocation14 + $0x890] sm:$0xff]
    %v8188 = vld [vmem:[#allocation14 + $0x898] sm:$0xff]
    %v8189 = vld [vmem:[#allocation14 + $0x8a0] sm:$0xff]
    %v8190 = vld [vmem:[#allocation14 + $0x8a8] sm:$0xff]
    %v8191 = vld [vmem:[#allocation14 + $0x8b0] sm:$0xff]
    %v8192 = vld [vmem:[#allocation14 + $0x8b8] sm:$0xff]
    %v8193 = vld [vmem:[#allocation14 + $0x8c0] sm:$0xff]
    %v8194 = vld [vmem:[#allocation14 + $0x8c8] sm:$0xff]
    %v8195 = vld [vmem:[#allocation14 + $0x8d0] sm:$0xff]
    %v8196 = vld [vmem:[#allocation14 + $0x8d8] sm:$0xff]
    %v8197 = vld [vmem:[#allocation14 + $0x8e0] sm:$0xff]
    %v8198 = vld [vmem:[#allocation14 + $0x8e8] sm:$0xff]
    %v8199 = vld [vmem:[#allocation14 + $0x8f0] sm:$0xff]
    %v8200 = vld [vmem:[#allocation14 + $0x8f8] sm:$0xff]
    %v8201 = vld [vmem:[#allocation14 + $0x900] sm:$0xff]
    %v8202 = vld [vmem:[#allocation14 + $0x908] sm:$0xff]
    %v8203 = vld [vmem:[#allocation14 + $0x910] sm:$0xff]
    %v8204 = vld [vmem:[#allocation14 + $0x918] sm:$0xff]
    %v8205 = vld [vmem:[#allocation14 + $0x920] sm:$0xff]
    %v8206 = vld [vmem:[#allocation14 + $0x928] sm:$0xff]
    %v8207 = vld [vmem:[#allocation14 + $0x930] sm:$0xff]
    %v8208 = vld [vmem:[#allocation14 + $0x938] sm:$0xff]
    %v8209 = vld [vmem:[#allocation14 + $0x940] sm:$0xff]
    %v8210 = vld [vmem:[#allocation14 + $0x948] sm:$0xff]
    %v8211 = vld [vmem:[#allocation14 + $0x950] sm:$0xff]
    %v8212 = vld [vmem:[#allocation14 + $0x958] sm:$0xff]
    %v8213 = vld [vmem:[#allocation14 + $0x960] sm:$0xff]
    %v8214 = vld [vmem:[#allocation14 + $0x968] sm:$0xff]
    %v8215 = vld [vmem:[#allocation14 + $0x970] sm:$0xff]
    %v8216 = vld [vmem:[#allocation14 + $0x978] sm:$0xff]
    %v8217 = vld [vmem:[#allocation14 + $0x980] sm:$0xff]
    %v8218 = vld [vmem:[#allocation14 + $0x988] sm:$0xff]
    %v8219 = vld [vmem:[#allocation14 + $0x990] sm:$0xff]
    %v8220 = vld [vmem:[#allocation14 + $0x998] sm:$0xff]
    %v8221 = vld [vmem:[#allocation14 + $0x9a0] sm:$0xff]
    %v8222 = vld [vmem:[#allocation14 + $0x9a8] sm:$0xff]
    %v8223 = vld [vmem:[#allocation14 + $0x9b0] sm:$0xff]
    %v8224 = vld [vmem:[#allocation14 + $0x9b8] sm:$0xff]
    %v8225 = vld [vmem:[#allocation14 + $0x9c0] sm:$0xff]
    %v8226 = vld [vmem:[#allocation14 + $0x9c8] sm:$0xff]
    %v8227 = vld [vmem:[#allocation14 + $0x9d0] sm:$0xff]
    %v8228 = vld [vmem:[#allocation14 + $0x9d8] sm:$0xff]
    %v8229 = vld [vmem:[#allocation14 + $0x9e0] sm:$0xff]
    %v8230 = vld [vmem:[#allocation14 + $0x9e8] sm:$0xff]
    %v8231 = vld [vmem:[#allocation14 + $0x9f0] sm:$0xff]
    %v8232 = vld [vmem:[#allocation14 + $0x9f8] sm:$0xff]
    %v8233 = vld [vmem:[#allocation14 + $0xa00] sm:$0xff]
    %v8234 = vld [vmem:[#allocation14 + $0xa08] sm:$0xff]
    %v8235 = vld [vmem:[#allocation14 + $0xa10] sm:$0xff]
    %v8236 = vld [vmem:[#allocation14 + $0xa18] sm:$0xff]
    %v8237 = vld [vmem:[#allocation14 + $0xa20] sm:$0xff]
    %v8238 = vld [vmem:[#allocation14 + $0xa28] sm:$0xff]
    %v8239 = vld [vmem:[#allocation14 + $0xa30] sm:$0xff]
    %v8240 = vld [vmem:[#allocation14 + $0xa38] sm:$0xff]
    %v8241 = vld [vmem:[#allocation14 + $0xa40] sm:$0xff]
    %v8242 = vld [vmem:[#allocation14 + $0xa48] sm:$0xff]
    %v8243 = vld [vmem:[#allocation14 + $0xa50] sm:$0xff]
    %v8244 = vld [vmem:[#allocation14 + $0xa58] sm:$0xff]
    %v8245 = vld [vmem:[#allocation14 + $0xa60] sm:$0xff]
    %v8246 = vld [vmem:[#allocation14 + $0xa68] sm:$0xff]
    %v8247 = vld [vmem:[#allocation14 + $0xa70] sm:$0xff]
    %v8248 = vld [vmem:[#allocation14 + $0xa78] sm:$0xff]
    %v8249 = vld [vmem:[#allocation14 + $0xa80] sm:$0xff]
    %v8250 = vld [vmem:[#allocation14 + $0xa88] sm:$0xff]
    %v8251 = vld [vmem:[#allocation14 + $0xa90] sm:$0xff]
    %v8252 = vld [vmem:[#allocation14 + $0xa98] sm:$0xff]
    %v8253 = vld [vmem:[#allocation14 + $0xaa0] sm:$0xff]
    %v8254 = vld [vmem:[#allocation14 + $0xaa8] sm:$0xff]
    %v8255 = vld [vmem:[#allocation14 + $0xab0] sm:$0xff]
    %v8256 = vld [vmem:[#allocation14 + $0xab8] sm:$0xff]
    %v8257 = vld [vmem:[#allocation14 + $0xac0] sm:$0xff]
    %v8258 = vld [vmem:[#allocation14 + $0xac8] sm:$0xff]
    %v8259 = vld [vmem:[#allocation14 + $0xad0] sm:$0xff]
    %v8260 = vld [vmem:[#allocation14 + $0xad8] sm:$0xff]
    %v8261 = vld [vmem:[#allocation14 + $0xae0] sm:$0xff]
    %v8262 = vld [vmem:[#allocation14 + $0xae8] sm:$0xff]
    %v8263 = vld [vmem:[#allocation14 + $0xaf0] sm:$0xff]
    %v8264 = vld [vmem:[#allocation14 + $0xaf8] sm:$0xff]
    %v8265 = vld [vmem:[#allocation14 + $0xb00] sm:$0xff]
    %v8266 = vld [vmem:[#allocation14 + $0xb08] sm:$0xff]
    %v8267 = vld [vmem:[#allocation14 + $0xb10] sm:$0xff]
    %v8268 = vld [vmem:[#allocation14 + $0xb18] sm:$0xff]
    %v8269 = vld [vmem:[#allocation14 + $0xb20] sm:$0xff]
    %v8270 = vld [vmem:[#allocation14 + $0xb28] sm:$0xff]
    %v8271 = vld [vmem:[#allocation14 + $0xb30] sm:$0xff]
    %v8272 = vld [vmem:[#allocation14 + $0xb38] sm:$0xff]
    %v8273 = vld [vmem:[#allocation14 + $0xb40] sm:$0xff]
    %v8274 = vld [vmem:[#allocation14 + $0xb48] sm:$0xff]
    %v8275 = vld [vmem:[#allocation14 + $0xb50] sm:$0xff]
    %v8276 = vld [vmem:[#allocation14 + $0xb58] sm:$0xff]
    %v8277 = vld [vmem:[#allocation14 + $0xb60] sm:$0xff]
    %v8278 = vld [vmem:[#allocation14 + $0xb68] sm:$0xff]
    %v8279 = vld [vmem:[#allocation14 + $0xb70] sm:$0xff]
    %v8280 = vld [vmem:[#allocation14 + $0xb78] sm:$0xff]
    %v8281 = vld [vmem:[#allocation14 + $0xb80] sm:$0xff]
    %v8282 = vld [vmem:[#allocation14 + $0xb88] sm:$0xff]
    %v8283 = vld [vmem:[#allocation14 + $0xb90] sm:$0xff]
    %v8284 = vld [vmem:[#allocation14 + $0xb98] sm:$0xff]
    %v8285 = vld [vmem:[#allocation14 + $0xba0] sm:$0xff]
    %v8286 = vld [vmem:[#allocation14 + $0xba8] sm:$0xff]
    %v8287 = vld [vmem:[#allocation14 + $0xbb0] sm:$0xff]
    %v8288 = vld [vmem:[#allocation14 + $0xbb8] sm:$0xff]
    %v8289 = vld [vmem:[#allocation14 + $0xbc0] sm:$0xff]
    %v8290 = vld [vmem:[#allocation14 + $0xbc8] sm:$0xff]
    %v8291 = vld [vmem:[#allocation14 + $0xbd0] sm:$0xff]
    %v8292 = vld [vmem:[#allocation14 + $0xbd8] sm:$0xff]
    %v8293 = vld [vmem:[#allocation14 + $0xbe0] sm:$0xff]
    %v8294 = vld [vmem:[#allocation14 + $0xbe8] sm:$0xff]
    %v8295 = vld [vmem:[#allocation14 + $0xbf0] sm:$0xff]
    %v8296 = vld [vmem:[#allocation14 + $0xbf8] sm:$0xff]
    %v8297 = vld [vmem:[#allocation14 + $0xc00] sm:$0xff]
    %v8298 = vld [vmem:[#allocation14 + $0xc08] sm:$0xff]
    %v8299 = vld [vmem:[#allocation14 + $0xc10] sm:$0xff]
    %v8300 = vld [vmem:[#allocation14 + $0xc18] sm:$0xff]
    %v8301 = vld [vmem:[#allocation14 + $0xc20] sm:$0xff]
    %v8302 = vld [vmem:[#allocation14 + $0xc28] sm:$0xff]
    %v8303 = vld [vmem:[#allocation14 + $0xc30] sm:$0xff]
    %v8304 = vld [vmem:[#allocation14 + $0xc38] sm:$0xff]
    %v8305 = vld [vmem:[#allocation14 + $0xc40] sm:$0xff]
    %v8306 = vld [vmem:[#allocation14 + $0xc48] sm:$0xff]
    %v8307 = vld [vmem:[#allocation14 + $0xc50] sm:$0xff]
    %v8308 = vld [vmem:[#allocation14 + $0xc58] sm:$0xff]
    %v8309 = vld [vmem:[#allocation14 + $0xc60] sm:$0xff]
    %v8310 = vld [vmem:[#allocation14 + $0xc68] sm:$0xff]
    %v8311 = vld [vmem:[#allocation14 + $0xc70] sm:$0xff]
    %v8312 = vld [vmem:[#allocation14 + $0xc78] sm:$0xff]
    %v8313 = vld [vmem:[#allocation14 + $0xc80] sm:$0xff]
    %v8314 = vld [vmem:[#allocation14 + $0xc88] sm:$0xff]
    %v8315 = vld [vmem:[#allocation14 + $0xc90] sm:$0xff]
    %v8316 = vld [vmem:[#allocation14 + $0xc98] sm:$0xff]
    %v8317 = vld [vmem:[#allocation14 + $0xca0] sm:$0xff]
    %v8318 = vld [vmem:[#allocation14 + $0xca8] sm:$0xff]
    %v8319 = vld [vmem:[#allocation14 + $0xcb0] sm:$0xff]
    %v8320 = vld [vmem:[#allocation14 + $0xcb8] sm:$0xff]
    %v8321 = vld [vmem:[#allocation14 + $0xcc0] sm:$0xff]
    %v8322 = vld [vmem:[#allocation14 + $0xcc8] sm:$0xff]
    %v8323 = vld [vmem:[#allocation14 + $0xcd0] sm:$0xff]
    %v8324 = vld [vmem:[#allocation14 + $0xcd8] sm:$0xff]
    %v8325 = vld [vmem:[#allocation14 + $0xce0] sm:$0xff]
    %v8326 = vld [vmem:[#allocation14 + $0xce8] sm:$0xff]
    %v8327 = vld [vmem:[#allocation14 + $0xcf0] sm:$0xff]
    %v8328 = vld [vmem:[#allocation14 + $0xcf8] sm:$0xff]
    %v8329 = vld [vmem:[#allocation14 + $0xd00] sm:$0xff]
    %v8330 = vld [vmem:[#allocation14 + $0xd08] sm:$0xff]
    %v8331 = vld [vmem:[#allocation14 + $0xd10] sm:$0xff]
    %v8332 = vld [vmem:[#allocation14 + $0xd18] sm:$0xff]
    %v8333 = vld [vmem:[#allocation14 + $0xd20] sm:$0xff]
    %v8334 = vld [vmem:[#allocation14 + $0xd28] sm:$0xff]
    %v8335 = vld [vmem:[#allocation14 + $0xd30] sm:$0xff]
    %v8336 = vld [vmem:[#allocation14 + $0xd38] sm:$0xff]
    %v8337 = vld [vmem:[#allocation14 + $0xd40] sm:$0xff]
    %v8338 = vld [vmem:[#allocation14 + $0xd48] sm:$0xff]
    %v8339 = vld [vmem:[#allocation14 + $0xd50] sm:$0xff]
    %v8340 = vld [vmem:[#allocation14 + $0xd58] sm:$0xff]
    %v8341 = vld [vmem:[#allocation14 + $0xd60] sm:$0xff]
    %v8342 = vld [vmem:[#allocation14 + $0xd68] sm:$0xff]
    %v8343 = vld [vmem:[#allocation14 + $0xd70] sm:$0xff]
    %v8344 = vld [vmem:[#allocation14 + $0xd78] sm:$0xff]
    %v8345 = vld [vmem:[#allocation14 + $0xd80] sm:$0xff]
    %v8346 = vld [vmem:[#allocation14 + $0xd88] sm:$0xff]
    %v8347 = vld [vmem:[#allocation14 + $0xd90] sm:$0xff]
    %v8348 = vld [vmem:[#allocation14 + $0xd98] sm:$0xff]
    %v8349 = vld [vmem:[#allocation14 + $0xda0] sm:$0xff]
    %v8350 = vld [vmem:[#allocation14 + $0xda8] sm:$0xff]
    %v8351 = vld [vmem:[#allocation14 + $0xdb0] sm:$0xff]
    %v8352 = vld [vmem:[#allocation14 + $0xdb8] sm:$0xff]
    %v8353 = vld [vmem:[#allocation14 + $0xdc0] sm:$0xff]
    %v8354 = vld [vmem:[#allocation14 + $0xdc8] sm:$0xff]
    %v8355 = vld [vmem:[#allocation14 + $0xdd0] sm:$0xff]
    %v8356 = vld [vmem:[#allocation14 + $0xdd8] sm:$0xff]
    %v8357 = vld [vmem:[#allocation14 + $0xde0] sm:$0xff]
    %v8358 = vld [vmem:[#allocation14 + $0xde8] sm:$0xff]
    %v8359 = vld [vmem:[#allocation14 + $0xdf0] sm:$0xff]
    %v8360 = vld [vmem:[#allocation14 + $0xdf8] sm:$0xff]
    %v8361 = vld [vmem:[#allocation14 + $0xe00] sm:$0xff]
    %v8362 = vld [vmem:[#allocation14 + $0xe08] sm:$0xff]
    %v8363 = vld [vmem:[#allocation14 + $0xe10] sm:$0xff]
    %v8364 = vld [vmem:[#allocation14 + $0xe18] sm:$0xff]
    %v8365 = vld [vmem:[#allocation14 + $0xe20] sm:$0xff]
    %v8366 = vld [vmem:[#allocation14 + $0xe28] sm:$0xff]
    %v8367 = vld [vmem:[#allocation14 + $0xe30] sm:$0xff]
    %v8368 = vld [vmem:[#allocation14 + $0xe38] sm:$0xff]
    %v8369 = vld [vmem:[#allocation14 + $0xe40] sm:$0xff]
    %v8370 = vld [vmem:[#allocation14 + $0xe48] sm:$0xff]
    %v8371 = vld [vmem:[#allocation14 + $0xe50] sm:$0xff]
    %v8372 = vld [vmem:[#allocation14 + $0xe58] sm:$0xff]
    %v8373 = vld [vmem:[#allocation14 + $0xe60] sm:$0xff]
    %v8374 = vld [vmem:[#allocation14 + $0xe68] sm:$0xff]
    %v8375 = vld [vmem:[#allocation14 + $0xe70] sm:$0xff]
    %v8376 = vld [vmem:[#allocation14 + $0xe78] sm:$0xff]
    %v8377 = vld [vmem:[#allocation14 + $0xe80] sm:$0xff]
    %v8378 = vld [vmem:[#allocation14 + $0xe88] sm:$0xff]
    %v8379 = vld [vmem:[#allocation14 + $0xe90] sm:$0xff]
    %v8380 = vld [vmem:[#allocation14 + $0xe98] sm:$0xff]
    %v8381 = vld [vmem:[#allocation14 + $0xea0] sm:$0xff]
    %v8382 = vld [vmem:[#allocation14 + $0xea8] sm:$0xff]
    %v8383 = vld [vmem:[#allocation14 + $0xeb0] sm:$0xff]
    %v8384 = vld [vmem:[#allocation14 + $0xeb8] sm:$0xff]
    %v8385 = vld [vmem:[#allocation14 + $0xec0] sm:$0xff]
    %v8386 = vld [vmem:[#allocation14 + $0xec8] sm:$0xff]
    %v8387 = vld [vmem:[#allocation14 + $0xed0] sm:$0xff]
    %v8388 = vld [vmem:[#allocation14 + $0xed8] sm:$0xff]
    %v8389 = vld [vmem:[#allocation14 + $0xee0] sm:$0xff]
    %v8390 = vld [vmem:[#allocation14 + $0xee8] sm:$0xff]
    %v8391 = vld [vmem:[#allocation14 + $0xef0] sm:$0xff]
    %v8392 = vld [vmem:[#allocation14 + $0xef8] sm:$0xff]
    %v8393 = vld [vmem:[#allocation14 + $0xf00] sm:$0xff]
    %v8394 = vld [vmem:[#allocation14 + $0xf08] sm:$0xff]
    %v8395 = vld [vmem:[#allocation14 + $0xf10] sm:$0xff]
    %v8396 = vld [vmem:[#allocation14 + $0xf18] sm:$0xff]
    %v8397 = vld [vmem:[#allocation14 + $0xf20] sm:$0xff]
    %v8398 = vld [vmem:[#allocation14 + $0xf28] sm:$0xff]
    %v8399 = vld [vmem:[#allocation14 + $0xf30] sm:$0xff]
    %v8400 = vld [vmem:[#allocation14 + $0xf38] sm:$0xff]
    %v8401 = vld [vmem:[#allocation14 + $0xf40] sm:$0xff]
    %v8402 = vld [vmem:[#allocation14 + $0xf48] sm:$0xff]
    %v8403 = vld [vmem:[#allocation14 + $0xf50] sm:$0xff]
    %v8404 = vld [vmem:[#allocation14 + $0xf58] sm:$0xff]
    %v8405 = vld [vmem:[#allocation14 + $0xf60] sm:$0xff]
    %v8406 = vld [vmem:[#allocation14 + $0xf68] sm:$0xff]
    %v8407 = vld [vmem:[#allocation14 + $0xf70] sm:$0xff]
    %v8408 = vld [vmem:[#allocation14 + $0xf78] sm:$0xff]
    %v8409 = vld [vmem:[#allocation14 + $0xf80] sm:$0xff]
    %v8410 = vld [vmem:[#allocation14 + $0xf88] sm:$0xff]
    %v8411 = vld [vmem:[#allocation14 + $0xf90] sm:$0xff]
    %v8412 = vld [vmem:[#allocation14 + $0xf98] sm:$0xff]
    %v8413 = vld [vmem:[#allocation14 + $0xfa0] sm:$0xff]
    %v8414 = vld [vmem:[#allocation14 + $0xfa8] sm:$0xff]
    %v8415 = vld [vmem:[#allocation14 + $0xfb0] sm:$0xff]
    %v8416 = vld [vmem:[#allocation14 + $0xfb8] sm:$0xff]
    %v8417 = vld [vmem:[#allocation14 + $0xfc0] sm:$0xff]
    %v8418 = vld [vmem:[#allocation14 + $0xfc8] sm:$0xff]
    %v8419 = vld [vmem:[#allocation14 + $0xfd0] sm:$0xff]
    %v8420 = vld [vmem:[#allocation14 + $0xfd8] sm:$0xff]
    %v8421 = vld [vmem:[#allocation14 + $0xfe0] sm:$0xff]
    %v8422 = vld [vmem:[#allocation14 + $0xfe8] sm:$0xff]
    %v8423 = vld [vmem:[#allocation14 + $0xff0] sm:$0xff]
    %v8424 = vld [vmem:[#allocation14 + $0xff8] sm:$0xff]
    %v8425 = vld [vmem:[#allocation16] sm:$0xf]
    %v8427 = vlaneseq
    %v8428 = vshrl.u32 %v8427, 7
    %v8429 = vsub.s32 0, %v8428
    %v8430 = vrot.slane %v8425, %v8429
    %v8431 = vlaneseq
    %v8432 = vshrl.u32 %v8431, 7
    %v8433 = vsub.s32 1, %v8432
    %v8434 = vrot.slane %v8425, %v8433
    %v8435 = vlaneseq
    %v8436 = vshrl.u32 %v8435, 7
    %v8437 = vsub.s32 2, %v8436
    %v8438 = vrot.slane %v8425, %v8437
    %v8439 = vlaneseq
    %v8440 = vshrl.u32 %v8439, 7
    %v8441 = vsub.s32 3, %v8440
    %v8442 = vrot.slane %v8425, %v8441
    %v8959 = vunpack.c.l.b16 %v7913
    %v8960 = vunpack.c.h.b16 %v7913
    %v8961 = vunpack.c.l.b16 %v7914
    %v8962 = vunpack.c.h.b16 %v7914
    %v8963 = vunpack.c.l.b16 %v7915
    %v8964 = vunpack.c.h.b16 %v7915
    %v8965 = vunpack.c.l.b16 %v7916
    %v8966 = vunpack.c.h.b16 %v7916
    %v8967 = vunpack.c.l.b16 %v7917
    %v8968 = vunpack.c.h.b16 %v7917
    %v8969 = vunpack.c.l.b16 %v7918
    %v8970 = vunpack.c.h.b16 %v7918
    %v8971 = vunpack.c.l.b16 %v7919
    %v8972 = vunpack.c.h.b16 %v7919
    %v8973 = vunpack.c.l.b16 %v7920
    %v8974 = vunpack.c.h.b16 %v7920
    %v8975 = vunpack.c.l.b16 %v7921
    %v8976 = vunpack.c.h.b16 %v7921
    %v8977 = vunpack.c.l.b16 %v7922
    %v8978 = vunpack.c.h.b16 %v7922
    %v8979 = vunpack.c.l.b16 %v7923
    %v8980 = vunpack.c.h.b16 %v7923
    %v8981 = vunpack.c.l.b16 %v7924
    %v8982 = vunpack.c.h.b16 %v7924
    %v8983 = vunpack.c.l.b16 %v7925
    %v8984 = vunpack.c.h.b16 %v7925
    %v8985 = vunpack.c.l.b16 %v7926
    %v8986 = vunpack.c.h.b16 %v7926
    %v8987 = vunpack.c.l.b16 %v7927
    %v8988 = vunpack.c.h.b16 %v7927
    %v8989 = vunpack.c.l.b16 %v7928
    %v8990 = vunpack.c.h.b16 %v7928
    %v8991 = vunpack.c.l.b16 %v7929
    %v8992 = vunpack.c.h.b16 %v7929
    %v8993 = vunpack.c.l.b16 %v7930
    %v8994 = vunpack.c.h.b16 %v7930
    %v8995 = vunpack.c.l.b16 %v7931
    %v8996 = vunpack.c.h.b16 %v7931
    %v8997 = vunpack.c.l.b16 %v7932
    %v8998 = vunpack.c.h.b16 %v7932
    %v8999 = vunpack.c.l.b16 %v7933
    %v9000 = vunpack.c.h.b16 %v7933
    %v9001 = vunpack.c.l.b16 %v7934
    %v9002 = vunpack.c.h.b16 %v7934
    %v9003 = vunpack.c.l.b16 %v7935
    %v9004 = vunpack.c.h.b16 %v7935
    %v9005 = vunpack.c.l.b16 %v7936
    %v9006 = vunpack.c.h.b16 %v7936
    %v9007 = vunpack.c.l.b16 %v7937
    %v9008 = vunpack.c.h.b16 %v7937
    %v9009 = vunpack.c.l.b16 %v7938
    %v9010 = vunpack.c.h.b16 %v7938
    %v9011 = vunpack.c.l.b16 %v7939
    %v9012 = vunpack.c.h.b16 %v7939
    %v9013 = vunpack.c.l.b16 %v7940
    %v9014 = vunpack.c.h.b16 %v7940
    %v9015 = vunpack.c.l.b16 %v7941
    %v9016 = vunpack.c.h.b16 %v7941
    %v9017 = vunpack.c.l.b16 %v7942
    %v9018 = vunpack.c.h.b16 %v7942
    %v9019 = vunpack.c.l.b16 %v7943
    %v9020 = vunpack.c.h.b16 %v7943
    %v9021 = vunpack.c.l.b16 %v7944
    %v9022 = vunpack.c.h.b16 %v7944
    %v9023 = vunpack.c.l.b16 %v7945
    %v9024 = vunpack.c.h.b16 %v7945
    %v9025 = vunpack.c.l.b16 %v7946
    %v9026 = vunpack.c.h.b16 %v7946
    %v9027 = vunpack.c.l.b16 %v7947
    %v9028 = vunpack.c.h.b16 %v7947
    %v9029 = vunpack.c.l.b16 %v7948
    %v9030 = vunpack.c.h.b16 %v7948
    %v9031 = vunpack.c.l.b16 %v7949
    %v9032 = vunpack.c.h.b16 %v7949
    %v9033 = vunpack.c.l.b16 %v7950
    %v9034 = vunpack.c.h.b16 %v7950
    %v9035 = vunpack.c.l.b16 %v7951
    %v9036 = vunpack.c.h.b16 %v7951
    %v9037 = vunpack.c.l.b16 %v7952
    %v9038 = vunpack.c.h.b16 %v7952
    %v9039 = vunpack.c.l.b16 %v7953
    %v9040 = vunpack.c.h.b16 %v7953
    %v9041 = vunpack.c.l.b16 %v7954
    %v9042 = vunpack.c.h.b16 %v7954
    %v9043 = vunpack.c.l.b16 %v7955
    %v9044 = vunpack.c.h.b16 %v7955
    %v9045 = vunpack.c.l.b16 %v7956
    %v9046 = vunpack.c.h.b16 %v7956
    %v9047 = vunpack.c.l.b16 %v7957
    %v9048 = vunpack.c.h.b16 %v7957
    %v9049 = vunpack.c.l.b16 %v7958
    %v9050 = vunpack.c.h.b16 %v7958
    %v9051 = vunpack.c.l.b16 %v7959
    %v9052 = vunpack.c.h.b16 %v7959
    %v9053 = vunpack.c.l.b16 %v7960
    %v9054 = vunpack.c.h.b16 %v7960
    %v9055 = vunpack.c.l.b16 %v7961
    %v9056 = vunpack.c.h.b16 %v7961
    %v9057 = vunpack.c.l.b16 %v7962
    %v9058 = vunpack.c.h.b16 %v7962
    %v9059 = vunpack.c.l.b16 %v7963
    %v9060 = vunpack.c.h.b16 %v7963
    %v9061 = vunpack.c.l.b16 %v7964
    %v9062 = vunpack.c.h.b16 %v7964
    %v9063 = vunpack.c.l.b16 %v7965
    %v9064 = vunpack.c.h.b16 %v7965
    %v9065 = vunpack.c.l.b16 %v7966
    %v9066 = vunpack.c.h.b16 %v7966
    %v9067 = vunpack.c.l.b16 %v7967
    %v9068 = vunpack.c.h.b16 %v7967
    %v9069 = vunpack.c.l.b16 %v7968
    %v9070 = vunpack.c.h.b16 %v7968
    %v9071 = vunpack.c.l.b16 %v7969
    %v9072 = vunpack.c.h.b16 %v7969
    %v9073 = vunpack.c.l.b16 %v7970
    %v9074 = vunpack.c.h.b16 %v7970
    %v9075 = vunpack.c.l.b16 %v7971
    %v9076 = vunpack.c.h.b16 %v7971
    %v9077 = vunpack.c.l.b16 %v7972
    %v9078 = vunpack.c.h.b16 %v7972
    %v9079 = vunpack.c.l.b16 %v7973
    %v9080 = vunpack.c.h.b16 %v7973
    %v9081 = vunpack.c.l.b16 %v7974
    %v9082 = vunpack.c.h.b16 %v7974
    %v9083 = vunpack.c.l.b16 %v7975
    %v9084 = vunpack.c.h.b16 %v7975
    %v9085 = vunpack.c.l.b16 %v7976
    %v9086 = vunpack.c.h.b16 %v7976
    %v9087 = vunpack.c.l.b16 %v7977
    %v9088 = vunpack.c.h.b16 %v7977
    %v9089 = vunpack.c.l.b16 %v7978
    %v9090 = vunpack.c.h.b16 %v7978
    %v9091 = vunpack.c.l.b16 %v7979
    %v9092 = vunpack.c.h.b16 %v7979
    %v9093 = vunpack.c.l.b16 %v7980
    %v9094 = vunpack.c.h.b16 %v7980
    %v9095 = vunpack.c.l.b16 %v7981
    %v9096 = vunpack.c.h.b16 %v7981
    %v9097 = vunpack.c.l.b16 %v7982
    %v9098 = vunpack.c.h.b16 %v7982
    %v9099 = vunpack.c.l.b16 %v7983
    %v9100 = vunpack.c.h.b16 %v7983
    %v9101 = vunpack.c.l.b16 %v7984
    %v9102 = vunpack.c.h.b16 %v7984
    %v9103 = vunpack.c.l.b16 %v7985
    %v9104 = vunpack.c.h.b16 %v7985
    %v9105 = vunpack.c.l.b16 %v7986
    %v9106 = vunpack.c.h.b16 %v7986
    %v9107 = vunpack.c.l.b16 %v7987
    %v9108 = vunpack.c.h.b16 %v7987
    %v9109 = vunpack.c.l.b16 %v7988
    %v9110 = vunpack.c.h.b16 %v7988
    %v9111 = vunpack.c.l.b16 %v7989
    %v9112 = vunpack.c.h.b16 %v7989
    %v9113 = vunpack.c.l.b16 %v7990
    %v9114 = vunpack.c.h.b16 %v7990
    %v9115 = vunpack.c.l.b16 %v7991
    %v9116 = vunpack.c.h.b16 %v7991
    %v9117 = vunpack.c.l.b16 %v7992
    %v9118 = vunpack.c.h.b16 %v7992
    %v9119 = vunpack.c.l.b16 %v7993
    %v9120 = vunpack.c.h.b16 %v7993
    %v9121 = vunpack.c.l.b16 %v7994
    %v9122 = vunpack.c.h.b16 %v7994
    %v9123 = vunpack.c.l.b16 %v7995
    %v9124 = vunpack.c.h.b16 %v7995
    %v9125 = vunpack.c.l.b16 %v7996
    %v9126 = vunpack.c.h.b16 %v7996
    %v9127 = vunpack.c.l.b16 %v7997
    %v9128 = vunpack.c.h.b16 %v7997
    %v9129 = vunpack.c.l.b16 %v7998
    %v9130 = vunpack.c.h.b16 %v7998
    %v9131 = vunpack.c.l.b16 %v7999
    %v9132 = vunpack.c.h.b16 %v7999
    %v9133 = vunpack.c.l.b16 %v8000
    %v9134 = vunpack.c.h.b16 %v8000
    %v9135 = vunpack.c.l.b16 %v8001
    %v9136 = vunpack.c.h.b16 %v8001
    %v9137 = vunpack.c.l.b16 %v8002
    %v9138 = vunpack.c.h.b16 %v8002
    %v9139 = vunpack.c.l.b16 %v8003
    %v9140 = vunpack.c.h.b16 %v8003
    %v9141 = vunpack.c.l.b16 %v8004
    %v9142 = vunpack.c.h.b16 %v8004
    %v9143 = vunpack.c.l.b16 %v8005
    %v9144 = vunpack.c.h.b16 %v8005
    %v9145 = vunpack.c.l.b16 %v8006
    %v9146 = vunpack.c.h.b16 %v8006
    %v9147 = vunpack.c.l.b16 %v8007
    %v9148 = vunpack.c.h.b16 %v8007
    %v9149 = vunpack.c.l.b16 %v8008
    %v9150 = vunpack.c.h.b16 %v8008
    %v9151 = vunpack.c.l.b16 %v8009
    %v9152 = vunpack.c.h.b16 %v8009
    %v9153 = vunpack.c.l.b16 %v8010
    %v9154 = vunpack.c.h.b16 %v8010
    %v9155 = vunpack.c.l.b16 %v8011
    %v9156 = vunpack.c.h.b16 %v8011
    %v9157 = vunpack.c.l.b16 %v8012
    %v9158 = vunpack.c.h.b16 %v8012
    %v9159 = vunpack.c.l.b16 %v8013
    %v9160 = vunpack.c.h.b16 %v8013
    %v9161 = vunpack.c.l.b16 %v8014
    %v9162 = vunpack.c.h.b16 %v8014
    %v9163 = vunpack.c.l.b16 %v8015
    %v9164 = vunpack.c.h.b16 %v8015
    %v9165 = vunpack.c.l.b16 %v8016
    %v9166 = vunpack.c.h.b16 %v8016
    %v9167 = vunpack.c.l.b16 %v8017
    %v9168 = vunpack.c.h.b16 %v8017
    %v9169 = vunpack.c.l.b16 %v8018
    %v9170 = vunpack.c.h.b16 %v8018
    %v9171 = vunpack.c.l.b16 %v8019
    %v9172 = vunpack.c.h.b16 %v8019
    %v9173 = vunpack.c.l.b16 %v8020
    %v9174 = vunpack.c.h.b16 %v8020
    %v9175 = vunpack.c.l.b16 %v8021
    %v9176 = vunpack.c.h.b16 %v8021
    %v9177 = vunpack.c.l.b16 %v8022
    %v9178 = vunpack.c.h.b16 %v8022
    %v9179 = vunpack.c.l.b16 %v8023
    %v9180 = vunpack.c.h.b16 %v8023
    %v9181 = vunpack.c.l.b16 %v8024
    %v9182 = vunpack.c.h.b16 %v8024
    %v9183 = vunpack.c.l.b16 %v8025
    %v9184 = vunpack.c.h.b16 %v8025
    %v9185 = vunpack.c.l.b16 %v8026
    %v9186 = vunpack.c.h.b16 %v8026
    %v9187 = vunpack.c.l.b16 %v8027
    %v9188 = vunpack.c.h.b16 %v8027
    %v9189 = vunpack.c.l.b16 %v8028
    %v9190 = vunpack.c.h.b16 %v8028
    %v9191 = vunpack.c.l.b16 %v8029
    %v9192 = vunpack.c.h.b16 %v8029
    %v9193 = vunpack.c.l.b16 %v8030
    %v9194 = vunpack.c.h.b16 %v8030
    %v9195 = vunpack.c.l.b16 %v8031
    %v9196 = vunpack.c.h.b16 %v8031
    %v9197 = vunpack.c.l.b16 %v8032
    %v9198 = vunpack.c.h.b16 %v8032
    %v9199 = vunpack.c.l.b16 %v8033
    %v9200 = vunpack.c.h.b16 %v8033
    %v9201 = vunpack.c.l.b16 %v8034
    %v9202 = vunpack.c.h.b16 %v8034
    %v9203 = vunpack.c.l.b16 %v8035
    %v9204 = vunpack.c.h.b16 %v8035
    %v9205 = vunpack.c.l.b16 %v8036
    %v9206 = vunpack.c.h.b16 %v8036
    %v9207 = vunpack.c.l.b16 %v8037
    %v9208 = vunpack.c.h.b16 %v8037
    %v9209 = vunpack.c.l.b16 %v8038
    %v9210 = vunpack.c.h.b16 %v8038
    %v9211 = vunpack.c.l.b16 %v8039
    %v9212 = vunpack.c.h.b16 %v8039
    %v9213 = vunpack.c.l.b16 %v8040
    %v9214 = vunpack.c.h.b16 %v8040
    %v9215 = vunpack.c.l.b16 %v8041
    %v9216 = vunpack.c.h.b16 %v8041
    %v9217 = vunpack.c.l.b16 %v8042
    %v9218 = vunpack.c.h.b16 %v8042
    %v9219 = vunpack.c.l.b16 %v8043
    %v9220 = vunpack.c.h.b16 %v8043
    %v9221 = vunpack.c.l.b16 %v8044
    %v9222 = vunpack.c.h.b16 %v8044
    %v9223 = vunpack.c.l.b16 %v8045
    %v9224 = vunpack.c.h.b16 %v8045
    %v9225 = vunpack.c.l.b16 %v8046
    %v9226 = vunpack.c.h.b16 %v8046
    %v9227 = vunpack.c.l.b16 %v8047
    %v9228 = vunpack.c.h.b16 %v8047
    %v9229 = vunpack.c.l.b16 %v8048
    %v9230 = vunpack.c.h.b16 %v8048
    %v9231 = vunpack.c.l.b16 %v8049
    %v9232 = vunpack.c.h.b16 %v8049
    %v9233 = vunpack.c.l.b16 %v8050
    %v9234 = vunpack.c.h.b16 %v8050
    %v9235 = vunpack.c.l.b16 %v8051
    %v9236 = vunpack.c.h.b16 %v8051
    %v9237 = vunpack.c.l.b16 %v8052
    %v9238 = vunpack.c.h.b16 %v8052
    %v9239 = vunpack.c.l.b16 %v8053
    %v9240 = vunpack.c.h.b16 %v8053
    %v9241 = vunpack.c.l.b16 %v8054
    %v9242 = vunpack.c.h.b16 %v8054
    %v9243 = vunpack.c.l.b16 %v8055
    %v9244 = vunpack.c.h.b16 %v8055
    %v9245 = vunpack.c.l.b16 %v8056
    %v9246 = vunpack.c.h.b16 %v8056
    %v9247 = vunpack.c.l.b16 %v8057
    %v9248 = vunpack.c.h.b16 %v8057
    %v9249 = vunpack.c.l.b16 %v8058
    %v9250 = vunpack.c.h.b16 %v8058
    %v9251 = vunpack.c.l.b16 %v8059
    %v9252 = vunpack.c.h.b16 %v8059
    %v9253 = vunpack.c.l.b16 %v8060
    %v9254 = vunpack.c.h.b16 %v8060
    %v9255 = vunpack.c.l.b16 %v8061
    %v9256 = vunpack.c.h.b16 %v8061
    %v9257 = vunpack.c.l.b16 %v8062
    %v9258 = vunpack.c.h.b16 %v8062
    %v9259 = vunpack.c.l.b16 %v8063
    %v9260 = vunpack.c.h.b16 %v8063
    %v9261 = vunpack.c.l.b16 %v8064
    %v9262 = vunpack.c.h.b16 %v8064
    %v9263 = vunpack.c.l.b16 %v8065
    %v9264 = vunpack.c.h.b16 %v8065
    %v9265 = vunpack.c.l.b16 %v8066
    %v9266 = vunpack.c.h.b16 %v8066
    %v9267 = vunpack.c.l.b16 %v8067
    %v9268 = vunpack.c.h.b16 %v8067
    %v9269 = vunpack.c.l.b16 %v8068
    %v9270 = vunpack.c.h.b16 %v8068
    %v9271 = vunpack.c.l.b16 %v8069
    %v9272 = vunpack.c.h.b16 %v8069
    %v9273 = vunpack.c.l.b16 %v8070
    %v9274 = vunpack.c.h.b16 %v8070
    %v9275 = vunpack.c.l.b16 %v8071
    %v9276 = vunpack.c.h.b16 %v8071
    %v9277 = vunpack.c.l.b16 %v8072
    %v9278 = vunpack.c.h.b16 %v8072
    %v9279 = vunpack.c.l.b16 %v8073
    %v9280 = vunpack.c.h.b16 %v8073
    %v9281 = vunpack.c.l.b16 %v8074
    %v9282 = vunpack.c.h.b16 %v8074
    %v9283 = vunpack.c.l.b16 %v8075
    %v9284 = vunpack.c.h.b16 %v8075
    %v9285 = vunpack.c.l.b16 %v8076
    %v9286 = vunpack.c.h.b16 %v8076
    %v9287 = vunpack.c.l.b16 %v8077
    %v9288 = vunpack.c.h.b16 %v8077
    %v9289 = vunpack.c.l.b16 %v8078
    %v9290 = vunpack.c.h.b16 %v8078
    %v9291 = vunpack.c.l.b16 %v8079
    %v9292 = vunpack.c.h.b16 %v8079
    %v9293 = vunpack.c.l.b16 %v8080
    %v9294 = vunpack.c.h.b16 %v8080
    %v9295 = vunpack.c.l.b16 %v8081
    %v9296 = vunpack.c.h.b16 %v8081
    %v9297 = vunpack.c.l.b16 %v8082
    %v9298 = vunpack.c.h.b16 %v8082
    %v9299 = vunpack.c.l.b16 %v8083
    %v9300 = vunpack.c.h.b16 %v8083
    %v9301 = vunpack.c.l.b16 %v8084
    %v9302 = vunpack.c.h.b16 %v8084
    %v9303 = vunpack.c.l.b16 %v8085
    %v9304 = vunpack.c.h.b16 %v8085
    %v9305 = vunpack.c.l.b16 %v8086
    %v9306 = vunpack.c.h.b16 %v8086
    %v9307 = vunpack.c.l.b16 %v8087
    %v9308 = vunpack.c.h.b16 %v8087
    %v9309 = vunpack.c.l.b16 %v8088
    %v9310 = vunpack.c.h.b16 %v8088
    %v9311 = vunpack.c.l.b16 %v8089
    %v9312 = vunpack.c.h.b16 %v8089
    %v9313 = vunpack.c.l.b16 %v8090
    %v9314 = vunpack.c.h.b16 %v8090
    %v9315 = vunpack.c.l.b16 %v8091
    %v9316 = vunpack.c.h.b16 %v8091
    %v9317 = vunpack.c.l.b16 %v8092
    %v9318 = vunpack.c.h.b16 %v8092
    %v9319 = vunpack.c.l.b16 %v8093
    %v9320 = vunpack.c.h.b16 %v8093
    %v9321 = vunpack.c.l.b16 %v8094
    %v9322 = vunpack.c.h.b16 %v8094
    %v9323 = vunpack.c.l.b16 %v8095
    %v9324 = vunpack.c.h.b16 %v8095
    %v9325 = vunpack.c.l.b16 %v8096
    %v9326 = vunpack.c.h.b16 %v8096
    %v9327 = vunpack.c.l.b16 %v8097
    %v9328 = vunpack.c.h.b16 %v8097
    %v9329 = vunpack.c.l.b16 %v8098
    %v9330 = vunpack.c.h.b16 %v8098
    %v9331 = vunpack.c.l.b16 %v8099
    %v9332 = vunpack.c.h.b16 %v8099
    %v9333 = vunpack.c.l.b16 %v8100
    %v9334 = vunpack.c.h.b16 %v8100
    %v9335 = vunpack.c.l.b16 %v8101
    %v9336 = vunpack.c.h.b16 %v8101
    %v9337 = vunpack.c.l.b16 %v8102
    %v9338 = vunpack.c.h.b16 %v8102
    %v9339 = vunpack.c.l.b16 %v8103
    %v9340 = vunpack.c.h.b16 %v8103
    %v9341 = vunpack.c.l.b16 %v8104
    %v9342 = vunpack.c.h.b16 %v8104
    %v9343 = vunpack.c.l.b16 %v8105
    %v9344 = vunpack.c.h.b16 %v8105
    %v9345 = vunpack.c.l.b16 %v8106
    %v9346 = vunpack.c.h.b16 %v8106
    %v9347 = vunpack.c.l.b16 %v8107
    %v9348 = vunpack.c.h.b16 %v8107
    %v9349 = vunpack.c.l.b16 %v8108
    %v9350 = vunpack.c.h.b16 %v8108
    %v9351 = vunpack.c.l.b16 %v8109
    %v9352 = vunpack.c.h.b16 %v8109
    %v9353 = vunpack.c.l.b16 %v8110
    %v9354 = vunpack.c.h.b16 %v8110
    %v9355 = vunpack.c.l.b16 %v8111
    %v9356 = vunpack.c.h.b16 %v8111
    %v9357 = vunpack.c.l.b16 %v8112
    %v9358 = vunpack.c.h.b16 %v8112
    %v9359 = vunpack.c.l.b16 %v8113
    %v9360 = vunpack.c.h.b16 %v8113
    %v9361 = vunpack.c.l.b16 %v8114
    %v9362 = vunpack.c.h.b16 %v8114
    %v9363 = vunpack.c.l.b16 %v8115
    %v9364 = vunpack.c.h.b16 %v8115
    %v9365 = vunpack.c.l.b16 %v8116
    %v9366 = vunpack.c.h.b16 %v8116
    %v9367 = vunpack.c.l.b16 %v8117
    %v9368 = vunpack.c.h.b16 %v8117
    %v9369 = vunpack.c.l.b16 %v8118
    %v9370 = vunpack.c.h.b16 %v8118
    %v9371 = vunpack.c.l.b16 %v8119
    %v9372 = vunpack.c.h.b16 %v8119
    %v9373 = vunpack.c.l.b16 %v8120
    %v9374 = vunpack.c.h.b16 %v8120
    %v9375 = vunpack.c.l.b16 %v8121
    %v9376 = vunpack.c.h.b16 %v8121
    %v9377 = vunpack.c.l.b16 %v8122
    %v9378 = vunpack.c.h.b16 %v8122
    %v9379 = vunpack.c.l.b16 %v8123
    %v9380 = vunpack.c.h.b16 %v8123
    %v9381 = vunpack.c.l.b16 %v8124
    %v9382 = vunpack.c.h.b16 %v8124
    %v9383 = vunpack.c.l.b16 %v8125
    %v9384 = vunpack.c.h.b16 %v8125
    %v9385 = vunpack.c.l.b16 %v8126
    %v9386 = vunpack.c.h.b16 %v8126
    %v9387 = vunpack.c.l.b16 %v8127
    %v9388 = vunpack.c.h.b16 %v8127
    %v9389 = vunpack.c.l.b16 %v8128
    %v9390 = vunpack.c.h.b16 %v8128
    %v9391 = vunpack.c.l.b16 %v8129
    %v9392 = vunpack.c.h.b16 %v8129
    %v9393 = vunpack.c.l.b16 %v8130
    %v9394 = vunpack.c.h.b16 %v8130
    %v9395 = vunpack.c.l.b16 %v8131
    %v9396 = vunpack.c.h.b16 %v8131
    %v9397 = vunpack.c.l.b16 %v8132
    %v9398 = vunpack.c.h.b16 %v8132
    %v9399 = vunpack.c.l.b16 %v8133
    %v9400 = vunpack.c.h.b16 %v8133
    %v9401 = vunpack.c.l.b16 %v8134
    %v9402 = vunpack.c.h.b16 %v8134
    %v9403 = vunpack.c.l.b16 %v8135
    %v9404 = vunpack.c.h.b16 %v8135
    %v9405 = vunpack.c.l.b16 %v8136
    %v9406 = vunpack.c.h.b16 %v8136
    %v9407 = vunpack.c.l.b16 %v8137
    %v9408 = vunpack.c.h.b16 %v8137
    %v9409 = vunpack.c.l.b16 %v8138
    %v9410 = vunpack.c.h.b16 %v8138
    %v9411 = vunpack.c.l.b16 %v8139
    %v9412 = vunpack.c.h.b16 %v8139
    %v9413 = vunpack.c.l.b16 %v8140
    %v9414 = vunpack.c.h.b16 %v8140
    %v9415 = vunpack.c.l.b16 %v8141
    %v9416 = vunpack.c.h.b16 %v8141
    %v9417 = vunpack.c.l.b16 %v8142
    %v9418 = vunpack.c.h.b16 %v8142
    %v9419 = vunpack.c.l.b16 %v8143
    %v9420 = vunpack.c.h.b16 %v8143
    %v9421 = vunpack.c.l.b16 %v8144
    %v9422 = vunpack.c.h.b16 %v8144
    %v9423 = vunpack.c.l.b16 %v8145
    %v9424 = vunpack.c.h.b16 %v8145
    %v9425 = vunpack.c.l.b16 %v8146
    %v9426 = vunpack.c.h.b16 %v8146
    %v9427 = vunpack.c.l.b16 %v8147
    %v9428 = vunpack.c.h.b16 %v8147
    %v9429 = vunpack.c.l.b16 %v8148
    %v9430 = vunpack.c.h.b16 %v8148
    %v9431 = vunpack.c.l.b16 %v8149
    %v9432 = vunpack.c.h.b16 %v8149
    %v9433 = vunpack.c.l.b16 %v8150
    %v9434 = vunpack.c.h.b16 %v8150
    %v9435 = vunpack.c.l.b16 %v8151
    %v9436 = vunpack.c.h.b16 %v8151
    %v9437 = vunpack.c.l.b16 %v8152
    %v9438 = vunpack.c.h.b16 %v8152
    %v9439 = vunpack.c.l.b16 %v8153
    %v9440 = vunpack.c.h.b16 %v8153
    %v9441 = vunpack.c.l.b16 %v8154
    %v9442 = vunpack.c.h.b16 %v8154
    %v9443 = vunpack.c.l.b16 %v8155
    %v9444 = vunpack.c.h.b16 %v8155
    %v9445 = vunpack.c.l.b16 %v8156
    %v9446 = vunpack.c.h.b16 %v8156
    %v9447 = vunpack.c.l.b16 %v8157
    %v9448 = vunpack.c.h.b16 %v8157
    %v9449 = vunpack.c.l.b16 %v8158
    %v9450 = vunpack.c.h.b16 %v8158
    %v9451 = vunpack.c.l.b16 %v8159
    %v9452 = vunpack.c.h.b16 %v8159
    %v9453 = vunpack.c.l.b16 %v8160
    %v9454 = vunpack.c.h.b16 %v8160
    %v9455 = vunpack.c.l.b16 %v8161
    %v9456 = vunpack.c.h.b16 %v8161
    %v9457 = vunpack.c.l.b16 %v8162
    %v9458 = vunpack.c.h.b16 %v8162
    %v9459 = vunpack.c.l.b16 %v8163
    %v9460 = vunpack.c.h.b16 %v8163
    %v9461 = vunpack.c.l.b16 %v8164
    %v9462 = vunpack.c.h.b16 %v8164
    %v9463 = vunpack.c.l.b16 %v8165
    %v9464 = vunpack.c.h.b16 %v8165
    %v9465 = vunpack.c.l.b16 %v8166
    %v9466 = vunpack.c.h.b16 %v8166
    %v9467 = vunpack.c.l.b16 %v8167
    %v9468 = vunpack.c.h.b16 %v8167
    %v9469 = vunpack.c.l.b16 %v8168
    %v9470 = vunpack.c.h.b16 %v8168
    %v9471 = vunpack.c.l.b16 %v8169
    %v9472 = vunpack.c.h.b16 %v8169
    %v9473 = vunpack.c.l.b16 %v8170
    %v9474 = vunpack.c.h.b16 %v8170
    %v9475 = vunpack.c.l.b16 %v8171
    %v9476 = vunpack.c.h.b16 %v8171
    %v9477 = vunpack.c.l.b16 %v8172
    %v9478 = vunpack.c.h.b16 %v8172
    %v9479 = vunpack.c.l.b16 %v8173
    %v9480 = vunpack.c.h.b16 %v8173
    %v9481 = vunpack.c.l.b16 %v8174
    %v9482 = vunpack.c.h.b16 %v8174
    %v9483 = vunpack.c.l.b16 %v8175
    %v9484 = vunpack.c.h.b16 %v8175
    %v9485 = vunpack.c.l.b16 %v8176
    %v9486 = vunpack.c.h.b16 %v8176
    %v9487 = vunpack.c.l.b16 %v8177
    %v9488 = vunpack.c.h.b16 %v8177
    %v9489 = vunpack.c.l.b16 %v8178
    %v9490 = vunpack.c.h.b16 %v8178
    %v9491 = vunpack.c.l.b16 %v8179
    %v9492 = vunpack.c.h.b16 %v8179
    %v9493 = vunpack.c.l.b16 %v8180
    %v9494 = vunpack.c.h.b16 %v8180
    %v9495 = vunpack.c.l.b16 %v8181
    %v9496 = vunpack.c.h.b16 %v8181
    %v9497 = vunpack.c.l.b16 %v8182
    %v9498 = vunpack.c.h.b16 %v8182
    %v9499 = vunpack.c.l.b16 %v8183
    %v9500 = vunpack.c.h.b16 %v8183
    %v9501 = vunpack.c.l.b16 %v8184
    %v9502 = vunpack.c.h.b16 %v8184
    %v9503 = vunpack.c.l.b16 %v8185
    %v9504 = vunpack.c.h.b16 %v8185
    %v9505 = vunpack.c.l.b16 %v8186
    %v9506 = vunpack.c.h.b16 %v8186
    %v9507 = vunpack.c.l.b16 %v8187
    %v9508 = vunpack.c.h.b16 %v8187
    %v9509 = vunpack.c.l.b16 %v8188
    %v9510 = vunpack.c.h.b16 %v8188
    %v9511 = vunpack.c.l.b16 %v8189
    %v9512 = vunpack.c.h.b16 %v8189
    %v9513 = vunpack.c.l.b16 %v8190
    %v9514 = vunpack.c.h.b16 %v8190
    %v9515 = vunpack.c.l.b16 %v8191
    %v9516 = vunpack.c.h.b16 %v8191
    %v9517 = vunpack.c.l.b16 %v8192
    %v9518 = vunpack.c.h.b16 %v8192
    %v9519 = vunpack.c.l.b16 %v8193
    %v9520 = vunpack.c.h.b16 %v8193
    %v9521 = vunpack.c.l.b16 %v8194
    %v9522 = vunpack.c.h.b16 %v8194
    %v9523 = vunpack.c.l.b16 %v8195
    %v9524 = vunpack.c.h.b16 %v8195
    %v9525 = vunpack.c.l.b16 %v8196
    %v9526 = vunpack.c.h.b16 %v8196
    %v9527 = vunpack.c.l.b16 %v8197
    %v9528 = vunpack.c.h.b16 %v8197
    %v9529 = vunpack.c.l.b16 %v8198
    %v9530 = vunpack.c.h.b16 %v8198
    %v9531 = vunpack.c.l.b16 %v8199
    %v9532 = vunpack.c.h.b16 %v8199
    %v9533 = vunpack.c.l.b16 %v8200
    %v9534 = vunpack.c.h.b16 %v8200
    %v9535 = vunpack.c.l.b16 %v8201
    %v9536 = vunpack.c.h.b16 %v8201
    %v9537 = vunpack.c.l.b16 %v8202
    %v9538 = vunpack.c.h.b16 %v8202
    %v9539 = vunpack.c.l.b16 %v8203
    %v9540 = vunpack.c.h.b16 %v8203
    %v9541 = vunpack.c.l.b16 %v8204
    %v9542 = vunpack.c.h.b16 %v8204
    %v9543 = vunpack.c.l.b16 %v8205
    %v9544 = vunpack.c.h.b16 %v8205
    %v9545 = vunpack.c.l.b16 %v8206
    %v9546 = vunpack.c.h.b16 %v8206
    %v9547 = vunpack.c.l.b16 %v8207
    %v9548 = vunpack.c.h.b16 %v8207
    %v9549 = vunpack.c.l.b16 %v8208
    %v9550 = vunpack.c.h.b16 %v8208
    %v9551 = vunpack.c.l.b16 %v8209
    %v9552 = vunpack.c.h.b16 %v8209
    %v9553 = vunpack.c.l.b16 %v8210
    %v9554 = vunpack.c.h.b16 %v8210
    %v9555 = vunpack.c.l.b16 %v8211
    %v9556 = vunpack.c.h.b16 %v8211
    %v9557 = vunpack.c.l.b16 %v8212
    %v9558 = vunpack.c.h.b16 %v8212
    %v9559 = vunpack.c.l.b16 %v8213
    %v9560 = vunpack.c.h.b16 %v8213
    %v9561 = vunpack.c.l.b16 %v8214
    %v9562 = vunpack.c.h.b16 %v8214
    %v9563 = vunpack.c.l.b16 %v8215
    %v9564 = vunpack.c.h.b16 %v8215
    %v9565 = vunpack.c.l.b16 %v8216
    %v9566 = vunpack.c.h.b16 %v8216
    %v9567 = vunpack.c.l.b16 %v8217
    %v9568 = vunpack.c.h.b16 %v8217
    %v9569 = vunpack.c.l.b16 %v8218
    %v9570 = vunpack.c.h.b16 %v8218
    %v9571 = vunpack.c.l.b16 %v8219
    %v9572 = vunpack.c.h.b16 %v8219
    %v9573 = vunpack.c.l.b16 %v8220
    %v9574 = vunpack.c.h.b16 %v8220
    %v9575 = vunpack.c.l.b16 %v8221
    %v9576 = vunpack.c.h.b16 %v8221
    %v9577 = vunpack.c.l.b16 %v8222
    %v9578 = vunpack.c.h.b16 %v8222
    %v9579 = vunpack.c.l.b16 %v8223
    %v9580 = vunpack.c.h.b16 %v8223
    %v9581 = vunpack.c.l.b16 %v8224
    %v9582 = vunpack.c.h.b16 %v8224
    %v9583 = vunpack.c.l.b16 %v8225
    %v9584 = vunpack.c.h.b16 %v8225
    %v9585 = vunpack.c.l.b16 %v8226
    %v9586 = vunpack.c.h.b16 %v8226
    %v9587 = vunpack.c.l.b16 %v8227
    %v9588 = vunpack.c.h.b16 %v8227
    %v9589 = vunpack.c.l.b16 %v8228
    %v9590 = vunpack.c.h.b16 %v8228
    %v9591 = vunpack.c.l.b16 %v8229
    %v9592 = vunpack.c.h.b16 %v8229
    %v9593 = vunpack.c.l.b16 %v8230
    %v9594 = vunpack.c.h.b16 %v8230
    %v9595 = vunpack.c.l.b16 %v8231
    %v9596 = vunpack.c.h.b16 %v8231
    %v9597 = vunpack.c.l.b16 %v8232
    %v9598 = vunpack.c.h.b16 %v8232
    %v9599 = vunpack.c.l.b16 %v8233
    %v9600 = vunpack.c.h.b16 %v8233
    %v9601 = vunpack.c.l.b16 %v8234
    %v9602 = vunpack.c.h.b16 %v8234
    %v9603 = vunpack.c.l.b16 %v8235
    %v9604 = vunpack.c.h.b16 %v8235
    %v9605 = vunpack.c.l.b16 %v8236
    %v9606 = vunpack.c.h.b16 %v8236
    %v9607 = vunpack.c.l.b16 %v8237
    %v9608 = vunpack.c.h.b16 %v8237
    %v9609 = vunpack.c.l.b16 %v8238
    %v9610 = vunpack.c.h.b16 %v8238
    %v9611 = vunpack.c.l.b16 %v8239
    %v9612 = vunpack.c.h.b16 %v8239
    %v9613 = vunpack.c.l.b16 %v8240
    %v9614 = vunpack.c.h.b16 %v8240
    %v9615 = vunpack.c.l.b16 %v8241
    %v9616 = vunpack.c.h.b16 %v8241
    %v9617 = vunpack.c.l.b16 %v8242
    %v9618 = vunpack.c.h.b16 %v8242
    %v9619 = vunpack.c.l.b16 %v8243
    %v9620 = vunpack.c.h.b16 %v8243
    %v9621 = vunpack.c.l.b16 %v8244
    %v9622 = vunpack.c.h.b16 %v8244
    %v9623 = vunpack.c.l.b16 %v8245
    %v9624 = vunpack.c.h.b16 %v8245
    %v9625 = vunpack.c.l.b16 %v8246
    %v9626 = vunpack.c.h.b16 %v8246
    %v9627 = vunpack.c.l.b16 %v8247
    %v9628 = vunpack.c.h.b16 %v8247
    %v9629 = vunpack.c.l.b16 %v8248
    %v9630 = vunpack.c.h.b16 %v8248
    %v9631 = vunpack.c.l.b16 %v8249
    %v9632 = vunpack.c.h.b16 %v8249
    %v9633 = vunpack.c.l.b16 %v8250
    %v9634 = vunpack.c.h.b16 %v8250
    %v9635 = vunpack.c.l.b16 %v8251
    %v9636 = vunpack.c.h.b16 %v8251
    %v9637 = vunpack.c.l.b16 %v8252
    %v9638 = vunpack.c.h.b16 %v8252
    %v9639 = vunpack.c.l.b16 %v8253
    %v9640 = vunpack.c.h.b16 %v8253
    %v9641 = vunpack.c.l.b16 %v8254
    %v9642 = vunpack.c.h.b16 %v8254
    %v9643 = vunpack.c.l.b16 %v8255
    %v9644 = vunpack.c.h.b16 %v8255
    %v9645 = vunpack.c.l.b16 %v8256
    %v9646 = vunpack.c.h.b16 %v8256
    %v9647 = vunpack.c.l.b16 %v8257
    %v9648 = vunpack.c.h.b16 %v8257
    %v9649 = vunpack.c.l.b16 %v8258
    %v9650 = vunpack.c.h.b16 %v8258
    %v9651 = vunpack.c.l.b16 %v8259
    %v9652 = vunpack.c.h.b16 %v8259
    %v9653 = vunpack.c.l.b16 %v8260
    %v9654 = vunpack.c.h.b16 %v8260
    %v9655 = vunpack.c.l.b16 %v8261
    %v9656 = vunpack.c.h.b16 %v8261
    %v9657 = vunpack.c.l.b16 %v8262
    %v9658 = vunpack.c.h.b16 %v8262
    %v9659 = vunpack.c.l.b16 %v8263
    %v9660 = vunpack.c.h.b16 %v8263
    %v9661 = vunpack.c.l.b16 %v8264
    %v9662 = vunpack.c.h.b16 %v8264
    %v9663 = vunpack.c.l.b16 %v8265
    %v9664 = vunpack.c.h.b16 %v8265
    %v9665 = vunpack.c.l.b16 %v8266
    %v9666 = vunpack.c.h.b16 %v8266
    %v9667 = vunpack.c.l.b16 %v8267
    %v9668 = vunpack.c.h.b16 %v8267
    %v9669 = vunpack.c.l.b16 %v8268
    %v9670 = vunpack.c.h.b16 %v8268
    %v9671 = vunpack.c.l.b16 %v8269
    %v9672 = vunpack.c.h.b16 %v8269
    %v9673 = vunpack.c.l.b16 %v8270
    %v9674 = vunpack.c.h.b16 %v8270
    %v9675 = vunpack.c.l.b16 %v8271
    %v9676 = vunpack.c.h.b16 %v8271
    %v9677 = vunpack.c.l.b16 %v8272
    %v9678 = vunpack.c.h.b16 %v8272
    %v9679 = vunpack.c.l.b16 %v8273
    %v9680 = vunpack.c.h.b16 %v8273
    %v9681 = vunpack.c.l.b16 %v8274
    %v9682 = vunpack.c.h.b16 %v8274
    %v9683 = vunpack.c.l.b16 %v8275
    %v9684 = vunpack.c.h.b16 %v8275
    %v9685 = vunpack.c.l.b16 %v8276
    %v9686 = vunpack.c.h.b16 %v8276
    %v9687 = vunpack.c.l.b16 %v8277
    %v9688 = vunpack.c.h.b16 %v8277
    %v9689 = vunpack.c.l.b16 %v8278
    %v9690 = vunpack.c.h.b16 %v8278
    %v9691 = vunpack.c.l.b16 %v8279
    %v9692 = vunpack.c.h.b16 %v8279
    %v9693 = vunpack.c.l.b16 %v8280
    %v9694 = vunpack.c.h.b16 %v8280
    %v9695 = vunpack.c.l.b16 %v8281
    %v9696 = vunpack.c.h.b16 %v8281
    %v9697 = vunpack.c.l.b16 %v8282
    %v9698 = vunpack.c.h.b16 %v8282
    %v9699 = vunpack.c.l.b16 %v8283
    %v9700 = vunpack.c.h.b16 %v8283
    %v9701 = vunpack.c.l.b16 %v8284
    %v9702 = vunpack.c.h.b16 %v8284
    %v9703 = vunpack.c.l.b16 %v8285
    %v9704 = vunpack.c.h.b16 %v8285
    %v9705 = vunpack.c.l.b16 %v8286
    %v9706 = vunpack.c.h.b16 %v8286
    %v9707 = vunpack.c.l.b16 %v8287
    %v9708 = vunpack.c.h.b16 %v8287
    %v9709 = vunpack.c.l.b16 %v8288
    %v9710 = vunpack.c.h.b16 %v8288
    %v9711 = vunpack.c.l.b16 %v8289
    %v9712 = vunpack.c.h.b16 %v8289
    %v9713 = vunpack.c.l.b16 %v8290
    %v9714 = vunpack.c.h.b16 %v8290
    %v9715 = vunpack.c.l.b16 %v8291
    %v9716 = vunpack.c.h.b16 %v8291
    %v9717 = vunpack.c.l.b16 %v8292
    %v9718 = vunpack.c.h.b16 %v8292
    %v9719 = vunpack.c.l.b16 %v8293
    %v9720 = vunpack.c.h.b16 %v8293
    %v9721 = vunpack.c.l.b16 %v8294
    %v9722 = vunpack.c.h.b16 %v8294
    %v9723 = vunpack.c.l.b16 %v8295
    %v9724 = vunpack.c.h.b16 %v8295
    %v9725 = vunpack.c.l.b16 %v8296
    %v9726 = vunpack.c.h.b16 %v8296
    %v9727 = vunpack.c.l.b16 %v8297
    %v9728 = vunpack.c.h.b16 %v8297
    %v9729 = vunpack.c.l.b16 %v8298
    %v9730 = vunpack.c.h.b16 %v8298
    %v9731 = vunpack.c.l.b16 %v8299
    %v9732 = vunpack.c.h.b16 %v8299
    %v9733 = vunpack.c.l.b16 %v8300
    %v9734 = vunpack.c.h.b16 %v8300
    %v9735 = vunpack.c.l.b16 %v8301
    %v9736 = vunpack.c.h.b16 %v8301
    %v9737 = vunpack.c.l.b16 %v8302
    %v9738 = vunpack.c.h.b16 %v8302
    %v9739 = vunpack.c.l.b16 %v8303
    %v9740 = vunpack.c.h.b16 %v8303
    %v9741 = vunpack.c.l.b16 %v8304
    %v9742 = vunpack.c.h.b16 %v8304
    %v9743 = vunpack.c.l.b16 %v8305
    %v9744 = vunpack.c.h.b16 %v8305
    %v9745 = vunpack.c.l.b16 %v8306
    %v9746 = vunpack.c.h.b16 %v8306
    %v9747 = vunpack.c.l.b16 %v8307
    %v9748 = vunpack.c.h.b16 %v8307
    %v9749 = vunpack.c.l.b16 %v8308
    %v9750 = vunpack.c.h.b16 %v8308
    %v9751 = vunpack.c.l.b16 %v8309
    %v9752 = vunpack.c.h.b16 %v8309
    %v9753 = vunpack.c.l.b16 %v8310
    %v9754 = vunpack.c.h.b16 %v8310
    %v9755 = vunpack.c.l.b16 %v8311
    %v9756 = vunpack.c.h.b16 %v8311
    %v9757 = vunpack.c.l.b16 %v8312
    %v9758 = vunpack.c.h.b16 %v8312
    %v9759 = vunpack.c.l.b16 %v8313
    %v9760 = vunpack.c.h.b16 %v8313
    %v9761 = vunpack.c.l.b16 %v8314
    %v9762 = vunpack.c.h.b16 %v8314
    %v9763 = vunpack.c.l.b16 %v8315
    %v9764 = vunpack.c.h.b16 %v8315
    %v9765 = vunpack.c.l.b16 %v8316
    %v9766 = vunpack.c.h.b16 %v8316
    %v9767 = vunpack.c.l.b16 %v8317
    %v9768 = vunpack.c.h.b16 %v8317
    %v9769 = vunpack.c.l.b16 %v8318
    %v9770 = vunpack.c.h.b16 %v8318
    %v9771 = vunpack.c.l.b16 %v8319
    %v9772 = vunpack.c.h.b16 %v8319
    %v9773 = vunpack.c.l.b16 %v8320
    %v9774 = vunpack.c.h.b16 %v8320
    %v9775 = vunpack.c.l.b16 %v8321
    %v9776 = vunpack.c.h.b16 %v8321
    %v9777 = vunpack.c.l.b16 %v8322
    %v9778 = vunpack.c.h.b16 %v8322
    %v9779 = vunpack.c.l.b16 %v8323
    %v9780 = vunpack.c.h.b16 %v8323
    %v9781 = vunpack.c.l.b16 %v8324
    %v9782 = vunpack.c.h.b16 %v8324
    %v9783 = vunpack.c.l.b16 %v8325
    %v9784 = vunpack.c.h.b16 %v8325
    %v9785 = vunpack.c.l.b16 %v8326
    %v9786 = vunpack.c.h.b16 %v8326
    %v9787 = vunpack.c.l.b16 %v8327
    %v9788 = vunpack.c.h.b16 %v8327
    %v9789 = vunpack.c.l.b16 %v8328
    %v9790 = vunpack.c.h.b16 %v8328
    %v9791 = vunpack.c.l.b16 %v8329
    %v9792 = vunpack.c.h.b16 %v8329
    %v9793 = vunpack.c.l.b16 %v8330
    %v9794 = vunpack.c.h.b16 %v8330
    %v9795 = vunpack.c.l.b16 %v8331
    %v9796 = vunpack.c.h.b16 %v8331
    %v9797 = vunpack.c.l.b16 %v8332
    %v9798 = vunpack.c.h.b16 %v8332
    %v9799 = vunpack.c.l.b16 %v8333
    %v9800 = vunpack.c.h.b16 %v8333
    %v9801 = vunpack.c.l.b16 %v8334
    %v9802 = vunpack.c.h.b16 %v8334
    %v9803 = vunpack.c.l.b16 %v8335
    %v9804 = vunpack.c.h.b16 %v8335
    %v9805 = vunpack.c.l.b16 %v8336
    %v9806 = vunpack.c.h.b16 %v8336
    %v9807 = vunpack.c.l.b16 %v8337
    %v9808 = vunpack.c.h.b16 %v8337
    %v9809 = vunpack.c.l.b16 %v8338
    %v9810 = vunpack.c.h.b16 %v8338
    %v9811 = vunpack.c.l.b16 %v8339
    %v9812 = vunpack.c.h.b16 %v8339
    %v9813 = vunpack.c.l.b16 %v8340
    %v9814 = vunpack.c.h.b16 %v8340
    %v9815 = vunpack.c.l.b16 %v8341
    %v9816 = vunpack.c.h.b16 %v8341
    %v9817 = vunpack.c.l.b16 %v8342
    %v9818 = vunpack.c.h.b16 %v8342
    %v9819 = vunpack.c.l.b16 %v8343
    %v9820 = vunpack.c.h.b16 %v8343
    %v9821 = vunpack.c.l.b16 %v8344
    %v9822 = vunpack.c.h.b16 %v8344
    %v9823 = vunpack.c.l.b16 %v8345
    %v9824 = vunpack.c.h.b16 %v8345
    %v9825 = vunpack.c.l.b16 %v8346
    %v9826 = vunpack.c.h.b16 %v8346
    %v9827 = vunpack.c.l.b16 %v8347
    %v9828 = vunpack.c.h.b16 %v8347
    %v9829 = vunpack.c.l.b16 %v8348
    %v9830 = vunpack.c.h.b16 %v8348
    %v9831 = vunpack.c.l.b16 %v8349
    %v9832 = vunpack.c.h.b16 %v8349
    %v9833 = vunpack.c.l.b16 %v8350
    %v9834 = vunpack.c.h.b16 %v8350
    %v9835 = vunpack.c.l.b16 %v8351
    %v9836 = vunpack.c.h.b16 %v8351
    %v9837 = vunpack.c.l.b16 %v8352
    %v9838 = vunpack.c.h.b16 %v8352
    %v9839 = vunpack.c.l.b16 %v8353
    %v9840 = vunpack.c.h.b16 %v8353
    %v9841 = vunpack.c.l.b16 %v8354
    %v9842 = vunpack.c.h.b16 %v8354
    %v9843 = vunpack.c.l.b16 %v8355
    %v9844 = vunpack.c.h.b16 %v8355
    %v9845 = vunpack.c.l.b16 %v8356
    %v9846 = vunpack.c.h.b16 %v8356
    %v9847 = vunpack.c.l.b16 %v8357
    %v9848 = vunpack.c.h.b16 %v8357
    %v9849 = vunpack.c.l.b16 %v8358
    %v9850 = vunpack.c.h.b16 %v8358
    %v9851 = vunpack.c.l.b16 %v8359
    %v9852 = vunpack.c.h.b16 %v8359
    %v9853 = vunpack.c.l.b16 %v8360
    %v9854 = vunpack.c.h.b16 %v8360
    %v9855 = vunpack.c.l.b16 %v8361
    %v9856 = vunpack.c.h.b16 %v8361
    %v9857 = vunpack.c.l.b16 %v8362
    %v9858 = vunpack.c.h.b16 %v8362
    %v9859 = vunpack.c.l.b16 %v8363
    %v9860 = vunpack.c.h.b16 %v8363
    %v9861 = vunpack.c.l.b16 %v8364
    %v9862 = vunpack.c.h.b16 %v8364
    %v9863 = vunpack.c.l.b16 %v8365
    %v9864 = vunpack.c.h.b16 %v8365
    %v9865 = vunpack.c.l.b16 %v8366
    %v9866 = vunpack.c.h.b16 %v8366
    %v9867 = vunpack.c.l.b16 %v8367
    %v9868 = vunpack.c.h.b16 %v8367
    %v9869 = vunpack.c.l.b16 %v8368
    %v9870 = vunpack.c.h.b16 %v8368
    %v9871 = vunpack.c.l.b16 %v8369
    %v9872 = vunpack.c.h.b16 %v8369
    %v9873 = vunpack.c.l.b16 %v8370
    %v9874 = vunpack.c.h.b16 %v8370
    %v9875 = vunpack.c.l.b16 %v8371
    %v9876 = vunpack.c.h.b16 %v8371
    %v9877 = vunpack.c.l.b16 %v8372
    %v9878 = vunpack.c.h.b16 %v8372
    %v9879 = vunpack.c.l.b16 %v8373
    %v9880 = vunpack.c.h.b16 %v8373
    %v9881 = vunpack.c.l.b16 %v8374
    %v9882 = vunpack.c.h.b16 %v8374
    %v9883 = vunpack.c.l.b16 %v8375
    %v9884 = vunpack.c.h.b16 %v8375
    %v9885 = vunpack.c.l.b16 %v8376
    %v9886 = vunpack.c.h.b16 %v8376
    %v9887 = vunpack.c.l.b16 %v8377
    %v9888 = vunpack.c.h.b16 %v8377
    %v9889 = vunpack.c.l.b16 %v8378
    %v9890 = vunpack.c.h.b16 %v8378
    %v9891 = vunpack.c.l.b16 %v8379
    %v9892 = vunpack.c.h.b16 %v8379
    %v9893 = vunpack.c.l.b16 %v8380
    %v9894 = vunpack.c.h.b16 %v8380
    %v9895 = vunpack.c.l.b16 %v8381
    %v9896 = vunpack.c.h.b16 %v8381
    %v9897 = vunpack.c.l.b16 %v8382
    %v9898 = vunpack.c.h.b16 %v8382
    %v9899 = vunpack.c.l.b16 %v8383
    %v9900 = vunpack.c.h.b16 %v8383
    %v9901 = vunpack.c.l.b16 %v8384
    %v9902 = vunpack.c.h.b16 %v8384
    %v9903 = vunpack.c.l.b16 %v8385
    %v9904 = vunpack.c.h.b16 %v8385
    %v9905 = vunpack.c.l.b16 %v8386
    %v9906 = vunpack.c.h.b16 %v8386
    %v9907 = vunpack.c.l.b16 %v8387
    %v9908 = vunpack.c.h.b16 %v8387
    %v9909 = vunpack.c.l.b16 %v8388
    %v9910 = vunpack.c.h.b16 %v8388
    %v9911 = vunpack.c.l.b16 %v8389
    %v9912 = vunpack.c.h.b16 %v8389
    %v9913 = vunpack.c.l.b16 %v8390
    %v9914 = vunpack.c.h.b16 %v8390
    %v9915 = vunpack.c.l.b16 %v8391
    %v9916 = vunpack.c.h.b16 %v8391
    %v9917 = vunpack.c.l.b16 %v8392
    %v9918 = vunpack.c.h.b16 %v8392
    %v9919 = vunpack.c.l.b16 %v8393
    %v9920 = vunpack.c.h.b16 %v8393
    %v9921 = vunpack.c.l.b16 %v8394
    %v9922 = vunpack.c.h.b16 %v8394
    %v9923 = vunpack.c.l.b16 %v8395
    %v9924 = vunpack.c.h.b16 %v8395
    %v9925 = vunpack.c.l.b16 %v8396
    %v9926 = vunpack.c.h.b16 %v8396
    %v9927 = vunpack.c.l.b16 %v8397
    %v9928 = vunpack.c.h.b16 %v8397
    %v9929 = vunpack.c.l.b16 %v8398
    %v9930 = vunpack.c.h.b16 %v8398
    %v9931 = vunpack.c.l.b16 %v8399
    %v9932 = vunpack.c.h.b16 %v8399
    %v9933 = vunpack.c.l.b16 %v8400
    %v9934 = vunpack.c.h.b16 %v8400
    %v9935 = vunpack.c.l.b16 %v8401
    %v9936 = vunpack.c.h.b16 %v8401
    %v9937 = vunpack.c.l.b16 %v8402
    %v9938 = vunpack.c.h.b16 %v8402
    %v9939 = vunpack.c.l.b16 %v8403
    %v9940 = vunpack.c.h.b16 %v8403
    %v9941 = vunpack.c.l.b16 %v8404
    %v9942 = vunpack.c.h.b16 %v8404
    %v9943 = vunpack.c.l.b16 %v8405
    %v9944 = vunpack.c.h.b16 %v8405
    %v9945 = vunpack.c.l.b16 %v8406
    %v9946 = vunpack.c.h.b16 %v8406
    %v9947 = vunpack.c.l.b16 %v8407
    %v9948 = vunpack.c.h.b16 %v8407
    %v9949 = vunpack.c.l.b16 %v8408
    %v9950 = vunpack.c.h.b16 %v8408
    %v9951 = vunpack.c.l.b16 %v8409
    %v9952 = vunpack.c.h.b16 %v8409
    %v9953 = vunpack.c.l.b16 %v8410
    %v9954 = vunpack.c.h.b16 %v8410
    %v9955 = vunpack.c.l.b16 %v8411
    %v9956 = vunpack.c.h.b16 %v8411
    %v9957 = vunpack.c.l.b16 %v8412
    %v9958 = vunpack.c.h.b16 %v8412
    %v9959 = vunpack.c.l.b16 %v8413
    %v9960 = vunpack.c.h.b16 %v8413
    %v9961 = vunpack.c.l.b16 %v8414
    %v9962 = vunpack.c.h.b16 %v8414
    %v9963 = vunpack.c.l.b16 %v8415
    %v9964 = vunpack.c.h.b16 %v8415
    %v9965 = vunpack.c.l.b16 %v8416
    %v9966 = vunpack.c.h.b16 %v8416
    %v9967 = vunpack.c.l.b16 %v8417
    %v9968 = vunpack.c.h.b16 %v8417
    %v9969 = vunpack.c.l.b16 %v8418
    %v9970 = vunpack.c.h.b16 %v8418
    %v9971 = vunpack.c.l.b16 %v8419
    %v9972 = vunpack.c.h.b16 %v8419
    %v9973 = vunpack.c.l.b16 %v8420
    %v9974 = vunpack.c.h.b16 %v8420
    %v9975 = vunpack.c.l.b16 %v8421
    %v9976 = vunpack.c.h.b16 %v8421
    %v9977 = vunpack.c.l.b16 %v8422
    %v9978 = vunpack.c.h.b16 %v8422
    %v9979 = vunpack.c.l.b16 %v8423
    %v9980 = vunpack.c.h.b16 %v8423
    %v9981 = vunpack.c.l.b16 %v8424
    %v9982 = vunpack.c.h.b16 %v8424
    %v9983 = vpack.c.b16 %v8963, %v8959
    %v9984 = vpack.c.b16 %v8964, %v8960
    %v9985 = vpack.c.b16 %v8965, %v8961
    %v9986 = vpack.c.b16 %v8966, %v8962
    %v9987 = vpack.c.b16 %v8971, %v8967
    %v9988 = vpack.c.b16 %v8972, %v8968
    %v9989 = vpack.c.b16 %v8973, %v8969
    %v9990 = vpack.c.b16 %v8974, %v8970
    %v9991 = vpack.c.b16 %v8979, %v8975
    %v9992 = vpack.c.b16 %v8980, %v8976
    %v9993 = vpack.c.b16 %v8981, %v8977
    %v9994 = vpack.c.b16 %v8982, %v8978
    %v9995 = vpack.c.b16 %v8987, %v8983
    %v9996 = vpack.c.b16 %v8988, %v8984
    %v9997 = vpack.c.b16 %v8989, %v8985
    %v9998 = vpack.c.b16 %v8990, %v8986
    %v9999 = vpack.c.b16 %v8995, %v8991
    %v10000 = vpack.c.b16 %v8996, %v8992
    %v10001 = vpack.c.b16 %v8997, %v8993
    %v10002 = vpack.c.b16 %v8998, %v8994
    %v10003 = vpack.c.b16 %v9003, %v8999
    %v10004 = vpack.c.b16 %v9004, %v9000
    %v10005 = vpack.c.b16 %v9005, %v9001
    %v10006 = vpack.c.b16 %v9006, %v9002
    %v10007 = vpack.c.b16 %v9011, %v9007
    %v10008 = vpack.c.b16 %v9012, %v9008
    %v10009 = vpack.c.b16 %v9013, %v9009
    %v10010 = vpack.c.b16 %v9014, %v9010
    %v10011 = vpack.c.b16 %v9019, %v9015
    %v10012 = vpack.c.b16 %v9020, %v9016
    %v10013 = vpack.c.b16 %v9021, %v9017
    %v10014 = vpack.c.b16 %v9022, %v9018
    %v10015 = vpack.c.b16 %v9027, %v9023
    %v10016 = vpack.c.b16 %v9028, %v9024
    %v10017 = vpack.c.b16 %v9029, %v9025
    %v10018 = vpack.c.b16 %v9030, %v9026
    %v10019 = vpack.c.b16 %v9035, %v9031
    %v10020 = vpack.c.b16 %v9036, %v9032
    %v10021 = vpack.c.b16 %v9037, %v9033
    %v10022 = vpack.c.b16 %v9038, %v9034
    %v10023 = vpack.c.b16 %v9043, %v9039
    %v10024 = vpack.c.b16 %v9044, %v9040
    %v10025 = vpack.c.b16 %v9045, %v9041
    %v10026 = vpack.c.b16 %v9046, %v9042
    %v10027 = vpack.c.b16 %v9051, %v9047
    %v10028 = vpack.c.b16 %v9052, %v9048
    %v10029 = vpack.c.b16 %v9053, %v9049
    %v10030 = vpack.c.b16 %v9054, %v9050
    %v10031 = vpack.c.b16 %v9059, %v9055
    %v10032 = vpack.c.b16 %v9060, %v9056
    %v10033 = vpack.c.b16 %v9061, %v9057
    %v10034 = vpack.c.b16 %v9062, %v9058
    %v10035 = vpack.c.b16 %v9067, %v9063
    %v10036 = vpack.c.b16 %v9068, %v9064
    %v10037 = vpack.c.b16 %v9069, %v9065
    %v10038 = vpack.c.b16 %v9070, %v9066
    %v10039 = vpack.c.b16 %v9075, %v9071
    %v10040 = vpack.c.b16 %v9076, %v9072
    %v10041 = vpack.c.b16 %v9077, %v9073
    %v10042 = vpack.c.b16 %v9078, %v9074
    %v10043 = vpack.c.b16 %v9083, %v9079
    %v10044 = vpack.c.b16 %v9084, %v9080
    %v10045 = vpack.c.b16 %v9085, %v9081
    %v10046 = vpack.c.b16 %v9086, %v9082
    %v10047 = vpack.c.b16 %v9091, %v9087
    %v10048 = vpack.c.b16 %v9092, %v9088
    %v10049 = vpack.c.b16 %v9093, %v9089
    %v10050 = vpack.c.b16 %v9094, %v9090
    %v10051 = vpack.c.b16 %v9099, %v9095
    %v10052 = vpack.c.b16 %v9100, %v9096
    %v10053 = vpack.c.b16 %v9101, %v9097
    %v10054 = vpack.c.b16 %v9102, %v9098
    %v10055 = vpack.c.b16 %v9107, %v9103
    %v10056 = vpack.c.b16 %v9108, %v9104
    %v10057 = vpack.c.b16 %v9109, %v9105
    %v10058 = vpack.c.b16 %v9110, %v9106
    %v10059 = vpack.c.b16 %v9115, %v9111
    %v10060 = vpack.c.b16 %v9116, %v9112
    %v10061 = vpack.c.b16 %v9117, %v9113
    %v10062 = vpack.c.b16 %v9118, %v9114
    %v10063 = vpack.c.b16 %v9123, %v9119
    %v10064 = vpack.c.b16 %v9124, %v9120
    %v10065 = vpack.c.b16 %v9125, %v9121
    %v10066 = vpack.c.b16 %v9126, %v9122
    %v10067 = vpack.c.b16 %v9131, %v9127
    %v10068 = vpack.c.b16 %v9132, %v9128
    %v10069 = vpack.c.b16 %v9133, %v9129
    %v10070 = vpack.c.b16 %v9134, %v9130
    %v10071 = vpack.c.b16 %v9139, %v9135
    %v10072 = vpack.c.b16 %v9140, %v9136
    %v10073 = vpack.c.b16 %v9141, %v9137
    %v10074 = vpack.c.b16 %v9142, %v9138
    %v10075 = vpack.c.b16 %v9147, %v9143
    %v10076 = vpack.c.b16 %v9148, %v9144
    %v10077 = vpack.c.b16 %v9149, %v9145
    %v10078 = vpack.c.b16 %v9150, %v9146
    %v10079 = vpack.c.b16 %v9155, %v9151
    %v10080 = vpack.c.b16 %v9156, %v9152
    %v10081 = vpack.c.b16 %v9157, %v9153
    %v10082 = vpack.c.b16 %v9158, %v9154
    %v10083 = vpack.c.b16 %v9163, %v9159
    %v10084 = vpack.c.b16 %v9164, %v9160
    %v10085 = vpack.c.b16 %v9165, %v9161
    %v10086 = vpack.c.b16 %v9166, %v9162
    %v10087 = vpack.c.b16 %v9171, %v9167
    %v10088 = vpack.c.b16 %v9172, %v9168
    %v10089 = vpack.c.b16 %v9173, %v9169
    %v10090 = vpack.c.b16 %v9174, %v9170
    %v10091 = vpack.c.b16 %v9179, %v9175
    %v10092 = vpack.c.b16 %v9180, %v9176
    %v10093 = vpack.c.b16 %v9181, %v9177
    %v10094 = vpack.c.b16 %v9182, %v9178
    %v10095 = vpack.c.b16 %v9187, %v9183
    %v10096 = vpack.c.b16 %v9188, %v9184
    %v10097 = vpack.c.b16 %v9189, %v9185
    %v10098 = vpack.c.b16 %v9190, %v9186
    %v10099 = vpack.c.b16 %v9195, %v9191
    %v10100 = vpack.c.b16 %v9196, %v9192
    %v10101 = vpack.c.b16 %v9197, %v9193
    %v10102 = vpack.c.b16 %v9198, %v9194
    %v10103 = vpack.c.b16 %v9203, %v9199
    %v10104 = vpack.c.b16 %v9204, %v9200
    %v10105 = vpack.c.b16 %v9205, %v9201
    %v10106 = vpack.c.b16 %v9206, %v9202
    %v10107 = vpack.c.b16 %v9211, %v9207
    %v10108 = vpack.c.b16 %v9212, %v9208
    %v10109 = vpack.c.b16 %v9213, %v9209
    %v10110 = vpack.c.b16 %v9214, %v9210
    %v10111 = vpack.c.b16 %v9219, %v9215
    %v10112 = vpack.c.b16 %v9220, %v9216
    %v10113 = vpack.c.b16 %v9221, %v9217
    %v10114 = vpack.c.b16 %v9222, %v9218
    %v10115 = vpack.c.b16 %v9227, %v9223
    %v10116 = vpack.c.b16 %v9228, %v9224
    %v10117 = vpack.c.b16 %v9229, %v9225
    %v10118 = vpack.c.b16 %v9230, %v9226
    %v10119 = vpack.c.b16 %v9235, %v9231
    %v10120 = vpack.c.b16 %v9236, %v9232
    %v10121 = vpack.c.b16 %v9237, %v9233
    %v10122 = vpack.c.b16 %v9238, %v9234
    %v10123 = vpack.c.b16 %v9243, %v9239
    %v10124 = vpack.c.b16 %v9244, %v9240
    %v10125 = vpack.c.b16 %v9245, %v9241
    %v10126 = vpack.c.b16 %v9246, %v9242
    %v10127 = vpack.c.b16 %v9251, %v9247
    %v10128 = vpack.c.b16 %v9252, %v9248
    %v10129 = vpack.c.b16 %v9253, %v9249
    %v10130 = vpack.c.b16 %v9254, %v9250
    %v10131 = vpack.c.b16 %v9259, %v9255
    %v10132 = vpack.c.b16 %v9260, %v9256
    %v10133 = vpack.c.b16 %v9261, %v9257
    %v10134 = vpack.c.b16 %v9262, %v9258
    %v10135 = vpack.c.b16 %v9267, %v9263
    %v10136 = vpack.c.b16 %v9268, %v9264
    %v10137 = vpack.c.b16 %v9269, %v9265
    %v10138 = vpack.c.b16 %v9270, %v9266
    %v10139 = vpack.c.b16 %v9275, %v9271
    %v10140 = vpack.c.b16 %v9276, %v9272
    %v10141 = vpack.c.b16 %v9277, %v9273
    %v10142 = vpack.c.b16 %v9278, %v9274
    %v10143 = vpack.c.b16 %v9283, %v9279
    %v10144 = vpack.c.b16 %v9284, %v9280
    %v10145 = vpack.c.b16 %v9285, %v9281
    %v10146 = vpack.c.b16 %v9286, %v9282
    %v10147 = vpack.c.b16 %v9291, %v9287
    %v10148 = vpack.c.b16 %v9292, %v9288
    %v10149 = vpack.c.b16 %v9293, %v9289
    %v10150 = vpack.c.b16 %v9294, %v9290
    %v10151 = vpack.c.b16 %v9299, %v9295
    %v10152 = vpack.c.b16 %v9300, %v9296
    %v10153 = vpack.c.b16 %v9301, %v9297
    %v10154 = vpack.c.b16 %v9302, %v9298
    %v10155 = vpack.c.b16 %v9307, %v9303
    %v10156 = vpack.c.b16 %v9308, %v9304
    %v10157 = vpack.c.b16 %v9309, %v9305
    %v10158 = vpack.c.b16 %v9310, %v9306
    %v10159 = vpack.c.b16 %v9315, %v9311
    %v10160 = vpack.c.b16 %v9316, %v9312
    %v10161 = vpack.c.b16 %v9317, %v9313
    %v10162 = vpack.c.b16 %v9318, %v9314
    %v10163 = vpack.c.b16 %v9323, %v9319
    %v10164 = vpack.c.b16 %v9324, %v9320
    %v10165 = vpack.c.b16 %v9325, %v9321
    %v10166 = vpack.c.b16 %v9326, %v9322
    %v10167 = vpack.c.b16 %v9331, %v9327
    %v10168 = vpack.c.b16 %v9332, %v9328
    %v10169 = vpack.c.b16 %v9333, %v9329
    %v10170 = vpack.c.b16 %v9334, %v9330
    %v10171 = vpack.c.b16 %v9339, %v9335
    %v10172 = vpack.c.b16 %v9340, %v9336
    %v10173 = vpack.c.b16 %v9341, %v9337
    %v10174 = vpack.c.b16 %v9342, %v9338
    %v10175 = vpack.c.b16 %v9347, %v9343
    %v10176 = vpack.c.b16 %v9348, %v9344
    %v10177 = vpack.c.b16 %v9349, %v9345
    %v10178 = vpack.c.b16 %v9350, %v9346
    %v10179 = vpack.c.b16 %v9355, %v9351
    %v10180 = vpack.c.b16 %v9356, %v9352
    %v10181 = vpack.c.b16 %v9357, %v9353
    %v10182 = vpack.c.b16 %v9358, %v9354
    %v10183 = vpack.c.b16 %v9363, %v9359
    %v10184 = vpack.c.b16 %v9364, %v9360
    %v10185 = vpack.c.b16 %v9365, %v9361
    %v10186 = vpack.c.b16 %v9366, %v9362
    %v10187 = vpack.c.b16 %v9371, %v9367
    %v10188 = vpack.c.b16 %v9372, %v9368
    %v10189 = vpack.c.b16 %v9373, %v9369
    %v10190 = vpack.c.b16 %v9374, %v9370
    %v10191 = vpack.c.b16 %v9379, %v9375
    %v10192 = vpack.c.b16 %v9380, %v9376
    %v10193 = vpack.c.b16 %v9381, %v9377
    %v10194 = vpack.c.b16 %v9382, %v9378
    %v10195 = vpack.c.b16 %v9387, %v9383
    %v10196 = vpack.c.b16 %v9388, %v9384
    %v10197 = vpack.c.b16 %v9389, %v9385
    %v10198 = vpack.c.b16 %v9390, %v9386
    %v10199 = vpack.c.b16 %v9395, %v9391
    %v10200 = vpack.c.b16 %v9396, %v9392
    %v10201 = vpack.c.b16 %v9397, %v9393
    %v10202 = vpack.c.b16 %v9398, %v9394
    %v10203 = vpack.c.b16 %v9403, %v9399
    %v10204 = vpack.c.b16 %v9404, %v9400
    %v10205 = vpack.c.b16 %v9405, %v9401
    %v10206 = vpack.c.b16 %v9406, %v9402
    %v10207 = vpack.c.b16 %v9411, %v9407
    %v10208 = vpack.c.b16 %v9412, %v9408
    %v10209 = vpack.c.b16 %v9413, %v9409
    %v10210 = vpack.c.b16 %v9414, %v9410
    %v10211 = vpack.c.b16 %v9419, %v9415
    %v10212 = vpack.c.b16 %v9420, %v9416
    %v10213 = vpack.c.b16 %v9421, %v9417
    %v10214 = vpack.c.b16 %v9422, %v9418
    %v10215 = vpack.c.b16 %v9427, %v9423
    %v10216 = vpack.c.b16 %v9428, %v9424
    %v10217 = vpack.c.b16 %v9429, %v9425
    %v10218 = vpack.c.b16 %v9430, %v9426
    %v10219 = vpack.c.b16 %v9435, %v9431
    %v10220 = vpack.c.b16 %v9436, %v9432
    %v10221 = vpack.c.b16 %v9437, %v9433
    %v10222 = vpack.c.b16 %v9438, %v9434
    %v10223 = vpack.c.b16 %v9443, %v9439
    %v10224 = vpack.c.b16 %v9444, %v9440
    %v10225 = vpack.c.b16 %v9445, %v9441
    %v10226 = vpack.c.b16 %v9446, %v9442
    %v10227 = vpack.c.b16 %v9451, %v9447
    %v10228 = vpack.c.b16 %v9452, %v9448
    %v10229 = vpack.c.b16 %v9453, %v9449
    %v10230 = vpack.c.b16 %v9454, %v9450
    %v10231 = vpack.c.b16 %v9459, %v9455
    %v10232 = vpack.c.b16 %v9460, %v9456
    %v10233 = vpack.c.b16 %v9461, %v9457
    %v10234 = vpack.c.b16 %v9462, %v9458
    %v10235 = vpack.c.b16 %v9467, %v9463
    %v10236 = vpack.c.b16 %v9468, %v9464
    %v10237 = vpack.c.b16 %v9469, %v9465
    %v10238 = vpack.c.b16 %v9470, %v9466
    %v10239 = vpack.c.b16 %v9475, %v9471
    %v10240 = vpack.c.b16 %v9476, %v9472
    %v10241 = vpack.c.b16 %v9477, %v9473
    %v10242 = vpack.c.b16 %v9478, %v9474
    %v10243 = vpack.c.b16 %v9483, %v9479
    %v10244 = vpack.c.b16 %v9484, %v9480
    %v10245 = vpack.c.b16 %v9485, %v9481
    %v10246 = vpack.c.b16 %v9486, %v9482
    %v10247 = vpack.c.b16 %v9491, %v9487
    %v10248 = vpack.c.b16 %v9492, %v9488
    %v10249 = vpack.c.b16 %v9493, %v9489
    %v10250 = vpack.c.b16 %v9494, %v9490
    %v10251 = vpack.c.b16 %v9499, %v9495
    %v10252 = vpack.c.b16 %v9500, %v9496
    %v10253 = vpack.c.b16 %v9501, %v9497
    %v10254 = vpack.c.b16 %v9502, %v9498
    %v10255 = vpack.c.b16 %v9507, %v9503
    %v10256 = vpack.c.b16 %v9508, %v9504
    %v10257 = vpack.c.b16 %v9509, %v9505
    %v10258 = vpack.c.b16 %v9510, %v9506
    %v10259 = vpack.c.b16 %v9515, %v9511
    %v10260 = vpack.c.b16 %v9516, %v9512
    %v10261 = vpack.c.b16 %v9517, %v9513
    %v10262 = vpack.c.b16 %v9518, %v9514
    %v10263 = vpack.c.b16 %v9523, %v9519
    %v10264 = vpack.c.b16 %v9524, %v9520
    %v10265 = vpack.c.b16 %v9525, %v9521
    %v10266 = vpack.c.b16 %v9526, %v9522
    %v10267 = vpack.c.b16 %v9531, %v9527
    %v10268 = vpack.c.b16 %v9532, %v9528
    %v10269 = vpack.c.b16 %v9533, %v9529
    %v10270 = vpack.c.b16 %v9534, %v9530
    %v10271 = vpack.c.b16 %v9539, %v9535
    %v10272 = vpack.c.b16 %v9540, %v9536
    %v10273 = vpack.c.b16 %v9541, %v9537
    %v10274 = vpack.c.b16 %v9542, %v9538
    %v10275 = vpack.c.b16 %v9547, %v9543
    %v10276 = vpack.c.b16 %v9548, %v9544
    %v10277 = vpack.c.b16 %v9549, %v9545
    %v10278 = vpack.c.b16 %v9550, %v9546
    %v10279 = vpack.c.b16 %v9555, %v9551
    %v10280 = vpack.c.b16 %v9556, %v9552
    %v10281 = vpack.c.b16 %v9557, %v9553
    %v10282 = vpack.c.b16 %v9558, %v9554
    %v10283 = vpack.c.b16 %v9563, %v9559
    %v10284 = vpack.c.b16 %v9564, %v9560
    %v10285 = vpack.c.b16 %v9565, %v9561
    %v10286 = vpack.c.b16 %v9566, %v9562
    %v10287 = vpack.c.b16 %v9571, %v9567
    %v10288 = vpack.c.b16 %v9572, %v9568
    %v10289 = vpack.c.b16 %v9573, %v9569
    %v10290 = vpack.c.b16 %v9574, %v9570
    %v10291 = vpack.c.b16 %v9579, %v9575
    %v10292 = vpack.c.b16 %v9580, %v9576
    %v10293 = vpack.c.b16 %v9581, %v9577
    %v10294 = vpack.c.b16 %v9582, %v9578
    %v10295 = vpack.c.b16 %v9587, %v9583
    %v10296 = vpack.c.b16 %v9588, %v9584
    %v10297 = vpack.c.b16 %v9589, %v9585
    %v10298 = vpack.c.b16 %v9590, %v9586
    %v10299 = vpack.c.b16 %v9595, %v9591
    %v10300 = vpack.c.b16 %v9596, %v9592
    %v10301 = vpack.c.b16 %v9597, %v9593
    %v10302 = vpack.c.b16 %v9598, %v9594
    %v10303 = vpack.c.b16 %v9603, %v9599
    %v10304 = vpack.c.b16 %v9604, %v9600
    %v10305 = vpack.c.b16 %v9605, %v9601
    %v10306 = vpack.c.b16 %v9606, %v9602
    %v10307 = vpack.c.b16 %v9611, %v9607
    %v10308 = vpack.c.b16 %v9612, %v9608
    %v10309 = vpack.c.b16 %v9613, %v9609
    %v10310 = vpack.c.b16 %v9614, %v9610
    %v10311 = vpack.c.b16 %v9619, %v9615
    %v10312 = vpack.c.b16 %v9620, %v9616
    %v10313 = vpack.c.b16 %v9621, %v9617
    %v10314 = vpack.c.b16 %v9622, %v9618
    %v10315 = vpack.c.b16 %v9627, %v9623
    %v10316 = vpack.c.b16 %v9628, %v9624
    %v10317 = vpack.c.b16 %v9629, %v9625
    %v10318 = vpack.c.b16 %v9630, %v9626
    %v10319 = vpack.c.b16 %v9635, %v9631
    %v10320 = vpack.c.b16 %v9636, %v9632
    %v10321 = vpack.c.b16 %v9637, %v9633
    %v10322 = vpack.c.b16 %v9638, %v9634
    %v10323 = vpack.c.b16 %v9643, %v9639
    %v10324 = vpack.c.b16 %v9644, %v9640
    %v10325 = vpack.c.b16 %v9645, %v9641
    %v10326 = vpack.c.b16 %v9646, %v9642
    %v10327 = vpack.c.b16 %v9651, %v9647
    %v10328 = vpack.c.b16 %v9652, %v9648
    %v10329 = vpack.c.b16 %v9653, %v9649
    %v10330 = vpack.c.b16 %v9654, %v9650
    %v10331 = vpack.c.b16 %v9659, %v9655
    %v10332 = vpack.c.b16 %v9660, %v9656
    %v10333 = vpack.c.b16 %v9661, %v9657
    %v10334 = vpack.c.b16 %v9662, %v9658
    %v10335 = vpack.c.b16 %v9667, %v9663
    %v10336 = vpack.c.b16 %v9668, %v9664
    %v10337 = vpack.c.b16 %v9669, %v9665
    %v10338 = vpack.c.b16 %v9670, %v9666
    %v10339 = vpack.c.b16 %v9675, %v9671
    %v10340 = vpack.c.b16 %v9676, %v9672
    %v10341 = vpack.c.b16 %v9677, %v9673
    %v10342 = vpack.c.b16 %v9678, %v9674
    %v10343 = vpack.c.b16 %v9683, %v9679
    %v10344 = vpack.c.b16 %v9684, %v9680
    %v10345 = vpack.c.b16 %v9685, %v9681
    %v10346 = vpack.c.b16 %v9686, %v9682
    %v10347 = vpack.c.b16 %v9691, %v9687
    %v10348 = vpack.c.b16 %v9692, %v9688
    %v10349 = vpack.c.b16 %v9693, %v9689
    %v10350 = vpack.c.b16 %v9694, %v9690
    %v10351 = vpack.c.b16 %v9699, %v9695
    %v10352 = vpack.c.b16 %v9700, %v9696
    %v10353 = vpack.c.b16 %v9701, %v9697
    %v10354 = vpack.c.b16 %v9702, %v9698
    %v10355 = vpack.c.b16 %v9707, %v9703
    %v10356 = vpack.c.b16 %v9708, %v9704
    %v10357 = vpack.c.b16 %v9709, %v9705
    %v10358 = vpack.c.b16 %v9710, %v9706
    %v10359 = vpack.c.b16 %v9715, %v9711
    %v10360 = vpack.c.b16 %v9716, %v9712
    %v10361 = vpack.c.b16 %v9717, %v9713
    %v10362 = vpack.c.b16 %v9718, %v9714
    %v10363 = vpack.c.b16 %v9723, %v9719
    %v10364 = vpack.c.b16 %v9724, %v9720
    %v10365 = vpack.c.b16 %v9725, %v9721
    %v10366 = vpack.c.b16 %v9726, %v9722
    %v10367 = vpack.c.b16 %v9731, %v9727
    %v10368 = vpack.c.b16 %v9732, %v9728
    %v10369 = vpack.c.b16 %v9733, %v9729
    %v10370 = vpack.c.b16 %v9734, %v9730
    %v10371 = vpack.c.b16 %v9739, %v9735
    %v10372 = vpack.c.b16 %v9740, %v9736
    %v10373 = vpack.c.b16 %v9741, %v9737
    %v10374 = vpack.c.b16 %v9742, %v9738
    %v10375 = vpack.c.b16 %v9747, %v9743
    %v10376 = vpack.c.b16 %v9748, %v9744
    %v10377 = vpack.c.b16 %v9749, %v9745
    %v10378 = vpack.c.b16 %v9750, %v9746
    %v10379 = vpack.c.b16 %v9755, %v9751
    %v10380 = vpack.c.b16 %v9756, %v9752
    %v10381 = vpack.c.b16 %v9757, %v9753
    %v10382 = vpack.c.b16 %v9758, %v9754
    %v10383 = vpack.c.b16 %v9763, %v9759
    %v10384 = vpack.c.b16 %v9764, %v9760
    %v10385 = vpack.c.b16 %v9765, %v9761
    %v10386 = vpack.c.b16 %v9766, %v9762
    %v10387 = vpack.c.b16 %v9771, %v9767
    %v10388 = vpack.c.b16 %v9772, %v9768
    %v10389 = vpack.c.b16 %v9773, %v9769
    %v10390 = vpack.c.b16 %v9774, %v9770
    %v10391 = vpack.c.b16 %v9779, %v9775
    %v10392 = vpack.c.b16 %v9780, %v9776
    %v10393 = vpack.c.b16 %v9781, %v9777
    %v10394 = vpack.c.b16 %v9782, %v9778
    %v10395 = vpack.c.b16 %v9787, %v9783
    %v10396 = vpack.c.b16 %v9788, %v9784
    %v10397 = vpack.c.b16 %v9789, %v9785
    %v10398 = vpack.c.b16 %v9790, %v9786
    %v10399 = vpack.c.b16 %v9795, %v9791
    %v10400 = vpack.c.b16 %v9796, %v9792
    %v10401 = vpack.c.b16 %v9797, %v9793
    %v10402 = vpack.c.b16 %v9798, %v9794
    %v10403 = vpack.c.b16 %v9803, %v9799
    %v10404 = vpack.c.b16 %v9804, %v9800
    %v10405 = vpack.c.b16 %v9805, %v9801
    %v10406 = vpack.c.b16 %v9806, %v9802
    %v10407 = vpack.c.b16 %v9811, %v9807
    %v10408 = vpack.c.b16 %v9812, %v9808
    %v10409 = vpack.c.b16 %v9813, %v9809
    %v10410 = vpack.c.b16 %v9814, %v9810
    %v10411 = vpack.c.b16 %v9819, %v9815
    %v10412 = vpack.c.b16 %v9820, %v9816
    %v10413 = vpack.c.b16 %v9821, %v9817
    %v10414 = vpack.c.b16 %v9822, %v9818
    %v10415 = vpack.c.b16 %v9827, %v9823
    %v10416 = vpack.c.b16 %v9828, %v9824
    %v10417 = vpack.c.b16 %v9829, %v9825
    %v10418 = vpack.c.b16 %v9830, %v9826
    %v10419 = vpack.c.b16 %v9835, %v9831
    %v10420 = vpack.c.b16 %v9836, %v9832
    %v10421 = vpack.c.b16 %v9837, %v9833
    %v10422 = vpack.c.b16 %v9838, %v9834
    %v10423 = vpack.c.b16 %v9843, %v9839
    %v10424 = vpack.c.b16 %v9844, %v9840
    %v10425 = vpack.c.b16 %v9845, %v9841
    %v10426 = vpack.c.b16 %v9846, %v9842
    %v10427 = vpack.c.b16 %v9851, %v9847
    %v10428 = vpack.c.b16 %v9852, %v9848
    %v10429 = vpack.c.b16 %v9853, %v9849
    %v10430 = vpack.c.b16 %v9854, %v9850
    %v10431 = vpack.c.b16 %v9859, %v9855
    %v10432 = vpack.c.b16 %v9860, %v9856
    %v10433 = vpack.c.b16 %v9861, %v9857
    %v10434 = vpack.c.b16 %v9862, %v9858
    %v10435 = vpack.c.b16 %v9867, %v9863
    %v10436 = vpack.c.b16 %v9868, %v9864
    %v10437 = vpack.c.b16 %v9869, %v9865
    %v10438 = vpack.c.b16 %v9870, %v9866
    %v10439 = vpack.c.b16 %v9875, %v9871
    %v10440 = vpack.c.b16 %v9876, %v9872
    %v10441 = vpack.c.b16 %v9877, %v9873
    %v10442 = vpack.c.b16 %v9878, %v9874
    %v10443 = vpack.c.b16 %v9883, %v9879
    %v10444 = vpack.c.b16 %v9884, %v9880
    %v10445 = vpack.c.b16 %v9885, %v9881
    %v10446 = vpack.c.b16 %v9886, %v9882
    %v10447 = vpack.c.b16 %v9891, %v9887
    %v10448 = vpack.c.b16 %v9892, %v9888
    %v10449 = vpack.c.b16 %v9893, %v9889
    %v10450 = vpack.c.b16 %v9894, %v9890
    %v10451 = vpack.c.b16 %v9899, %v9895
    %v10452 = vpack.c.b16 %v9900, %v9896
    %v10453 = vpack.c.b16 %v9901, %v9897
    %v10454 = vpack.c.b16 %v9902, %v9898
    %v10455 = vpack.c.b16 %v9907, %v9903
    %v10456 = vpack.c.b16 %v9908, %v9904
    %v10457 = vpack.c.b16 %v9909, %v9905
    %v10458 = vpack.c.b16 %v9910, %v9906
    %v10459 = vpack.c.b16 %v9915, %v9911
    %v10460 = vpack.c.b16 %v9916, %v9912
    %v10461 = vpack.c.b16 %v9917, %v9913
    %v10462 = vpack.c.b16 %v9918, %v9914
    %v10463 = vpack.c.b16 %v9923, %v9919
    %v10464 = vpack.c.b16 %v9924, %v9920
    %v10465 = vpack.c.b16 %v9925, %v9921
    %v10466 = vpack.c.b16 %v9926, %v9922
    %v10467 = vpack.c.b16 %v9931, %v9927
    %v10468 = vpack.c.b16 %v9932, %v9928
    %v10469 = vpack.c.b16 %v9933, %v9929
    %v10470 = vpack.c.b16 %v9934, %v9930
    %v10471 = vpack.c.b16 %v9939, %v9935
    %v10472 = vpack.c.b16 %v9940, %v9936
    %v10473 = vpack.c.b16 %v9941, %v9937
    %v10474 = vpack.c.b16 %v9942, %v9938
    %v10475 = vpack.c.b16 %v9947, %v9943
    %v10476 = vpack.c.b16 %v9948, %v9944
    %v10477 = vpack.c.b16 %v9949, %v9945
    %v10478 = vpack.c.b16 %v9950, %v9946
    %v10479 = vpack.c.b16 %v9955, %v9951
    %v10480 = vpack.c.b16 %v9956, %v9952
    %v10481 = vpack.c.b16 %v9957, %v9953
    %v10482 = vpack.c.b16 %v9958, %v9954
    %v10483 = vpack.c.b16 %v9963, %v9959
    %v10484 = vpack.c.b16 %v9964, %v9960
    %v10485 = vpack.c.b16 %v9965, %v9961
    %v10486 = vpack.c.b16 %v9966, %v9962
    %v10487 = vpack.c.b16 %v9971, %v9967
    %v10488 = vpack.c.b16 %v9972, %v9968
    %v10489 = vpack.c.b16 %v9973, %v9969
    %v10490 = vpack.c.b16 %v9974, %v9970
    %v10491 = vpack.c.b16 %v9979, %v9975
    %v10492 = vpack.c.b16 %v9980, %v9976
    %v10493 = vpack.c.b16 %v9981, %v9977
    %v10494 = vpack.c.b16 %v9982, %v9978
    %11007 = vmatprep.subr.bf16.mxu0 %v9984
    %11008 = vmatpush1.bf16.msra.mxu0 %v9983
    %11009 = vmatprep.subr.bf16.mxu0 %v9988
    %11010 = vmatpush1.bf16.msra.mxu0 %v9987
    %11011 = vmatprep.subr.bf16.mxu0 %v9992
    %11012 = vmatpush1.bf16.msra.mxu0 %v9991
    %11013 = vmatprep.subr.bf16.mxu0 %v9996
    %11014 = vmatpush1.bf16.msra.mxu0 %v9995
    %11015 = vmatprep.subr.bf16.mxu0 %v10000
    %11016 = vmatpush1.bf16.msra.mxu0 %v9999
    %11017 = vmatprep.subr.bf16.mxu0 %v10004
    %11018 = vmatpush1.bf16.msra.mxu0 %v10003
    %11019 = vmatprep.subr.bf16.mxu0 %v10008
    %11020 = vmatpush1.bf16.msra.mxu0 %v10007
    %11021 = vmatprep.subr.bf16.mxu0 %v10012
    %11022 = vmatpush1.bf16.msra.mxu0 %v10011
    %11023 = vmatprep.subr.bf16.mxu0 %v10016
    %11024 = vmatpush1.bf16.msra.mxu0 %v10015
    %11025 = vmatprep.subr.bf16.mxu0 %v10020
    %11026 = vmatpush1.bf16.msra.mxu0 %v10019
    %11027 = vmatprep.subr.bf16.mxu0 %v10024
    %11028 = vmatpush1.bf16.msra.mxu0 %v10023
    %11029 = vmatprep.subr.bf16.mxu0 %v10028
    %11030 = vmatpush1.bf16.msra.mxu0 %v10027
    %11031 = vmatprep.subr.bf16.mxu0 %v10032
    %11032 = vmatpush1.bf16.msra.mxu0 %v10031
    %11033 = vmatprep.subr.bf16.mxu0 %v10036
    %11034 = vmatpush1.bf16.msra.mxu0 %v10035
    %11035 = vmatprep.subr.bf16.mxu0 %v10040
    %11036 = vmatpush1.bf16.msra.mxu0 %v10039
    %11037 = vmatprep.subr.bf16.mxu0 %v10044
    %11038 = vmatpush1.bf16.msra.mxu0 %v10043
    %11039 = vmatprep.mubr.bf16.mxu0 %v7898
    %11040 = vmatmul.mubr.bf16.gmra.mrb[0].mxu0 %v7897
    %v11041 = vpop.f32.mrb[0].mxu0
    %v11042 = vadd.f32 %v8430, %v11041
    %v11043 = vpop.f32.mrb[0].mxu0
    %v11044 = vadd.f32 %v8434, %v11043
    %v11045 = vpop.f32.mrb[0].mxu0
    %v11046 = vadd.f32 %v8430, %v11045
    %v11047 = vpop.f32.mrb[0].mxu0
    %v11048 = vadd.f32 %v8434, %v11047
    %11049 = vdwg.mxu0
    %11050 = vmatprep.subr.bf16.mxu0 %v10048
    %11051 = vmatpush1.bf16.msra.mxu0 %v10047
    %11052 = vmatprep.subr.bf16.mxu0 %v10052
    %11053 = vmatpush1.bf16.msra.mxu0 %v10051
    %11054 = vmatprep.subr.bf16.mxu0 %v10056
    %11055 = vmatpush1.bf16.msra.mxu0 %v10055
    %11056 = vmatprep.subr.bf16.mxu0 %v10060
    %11057 = vmatpush1.bf16.msra.mxu0 %v10059
    %11058 = vmatprep.subr.bf16.mxu0 %v10064
    %11059 = vmatpush1.bf16.msra.mxu0 %v10063
    %11060 = vmatprep.subr.bf16.mxu0 %v10068
    %11061 = vmatpush1.bf16.msra.mxu0 %v10067
    %11062 = vmatprep.subr.bf16.mxu0 %v10072
    %11063 = vmatpush1.bf16.msra.mxu0 %v10071
    %11064 = vmatprep.subr.bf16.mxu0 %v10076
    %11065 = vmatpush1.bf16.msra.mxu0 %v10075
    %11066 = vmatprep.subr.bf16.mxu0 %v10080
    %11067 = vmatpush1.bf16.msra.mxu0 %v10079
    %11068 = vmatprep.subr.bf16.mxu0 %v10084
    %11069 = vmatpush1.bf16.msra.mxu0 %v10083
    %11070 = vmatprep.subr.bf16.mxu0 %v10088
    %11071 = vmatpush1.bf16.msra.mxu0 %v10087
    %11072 = vmatprep.subr.bf16.mxu0 %v10092
    %11073 = vmatpush1.bf16.msra.mxu0 %v10091
    %11074 = vmatprep.subr.bf16.mxu0 %v10096
    %11075 = vmatpush1.bf16.msra.mxu0 %v10095
    %11076 = vmatprep.subr.bf16.mxu0 %v10100
    %11077 = vmatpush1.bf16.msra.mxu0 %v10099
    %11078 = vmatprep.subr.bf16.mxu0 %v10104
    %11079 = vmatpush1.bf16.msra.mxu0 %v10103
    %11080 = vmatprep.subr.bf16.mxu0 %v10108
    %11081 = vmatpush1.bf16.msra.mxu0 %v10107
    %11082 = vmatprep.mubr.bf16.mxu0 %v7900
    %11083 = vmatmul.mubr.bf16.gmra.mrb[0].mxu0 %v7899
    %v11084 = vpop.f32.mrb[0].mxu0
    %v11085 = vadd.f32 %v11042, %v11084
    %v11086 = vpop.f32.mrb[0].mxu0
    %v11087 = vadd.f32 %v11044, %v11086
    %v11088 = vpop.f32.mrb[0].mxu0
    %v11089 = vadd.f32 %v11046, %v11088
    %v11090 = vpop.f32.mrb[0].mxu0
    %v11091 = vadd.f32 %v11048, %v11090
    %11092 = vdwg.mxu0
    %11093 = vmatprep.subr.bf16.mxu0 %v10112
    %11094 = vmatpush1.bf16.msra.mxu0 %v10111
    %11095 = vmatprep.subr.bf16.mxu0 %v10116
    %11096 = vmatpush1.bf16.msra.mxu0 %v10115
    %11097 = vmatprep.subr.bf16.mxu0 %v10120
    %11098 = vmatpush1.bf16.msra.mxu0 %v10119
    %11099 = vmatprep.subr.bf16.mxu0 %v10124
    %11100 = vmatpush1.bf16.msra.mxu0 %v10123
    %11101 = vmatprep.subr.bf16.mxu0 %v10128
    %11102 = vmatpush1.bf16.msra.mxu0 %v10127
    %11103 = vmatprep.subr.bf16.mxu0 %v10132
    %11104 = vmatpush1.bf16.msra.mxu0 %v10131
    %11105 = vmatprep.subr.bf16.mxu0 %v10136
    %11106 = vmatpush1.bf16.msra.mxu0 %v10135
    %11107 = vmatprep.subr.bf16.mxu0 %v10140
    %11108 = vmatpush1.bf16.msra.mxu0 %v10139
    %11109 = vmatprep.subr.bf16.mxu0 %v10144
    %11110 = vmatpush1.bf16.msra.mxu0 %v10143
    %11111 = vmatprep.subr.bf16.mxu0 %v10148
    %11112 = vmatpush1.bf16.msra.mxu0 %v10147
    %11113 = vmatprep.subr.bf16.mxu0 %v10152
    %11114 = vmatpush1.bf16.msra.mxu0 %v10151
    %11115 = vmatprep.subr.bf16.mxu0 %v10156
    %11116 = vmatpush1.bf16.msra.mxu0 %v10155
    %11117 = vmatprep.subr.bf16.mxu0 %v10160
    %11118 = vmatpush1.bf16.msra.mxu0 %v10159
    %11119 = vmatprep.subr.bf16.mxu0 %v10164
    %11120 = vmatpush1.bf16.msra.mxu0 %v10163
    %11121 = vmatprep.subr.bf16.mxu0 %v10168
    %11122 = vmatpush1.bf16.msra.mxu0 %v10167
    %11123 = vmatprep.subr.bf16.mxu0 %v10172
    %11124 = vmatpush1.bf16.msra.mxu0 %v10171
    %11125 = vmatprep.mubr.bf16.mxu0 %v7902
    %11126 = vmatmul.mubr.bf16.gmra.mrb[0].mxu0 %v7901
    %v11127 = vpop.f32.mrb[0].mxu0
    %v11128 = vadd.f32 %v11085, %v11127
    %v11129 = vpop.f32.mrb[0].mxu0
    %v11130 = vadd.f32 %v11087, %v11129
    %v11131 = vpop.f32.mrb[0].mxu0
    %v11132 = vadd.f32 %v11089, %v11131
    %v11133 = vpop.f32.mrb[0].mxu0
    %v11134 = vadd.f32 %v11091, %v11133
    %11135 = vdwg.mxu0
    %11136 = vmatprep.subr.bf16.mxu0 %v10176
    %11137 = vmatpush1.bf16.msra.mxu0 %v10175
    %11138 = vmatprep.subr.bf16.mxu0 %v10180
    %11139 = vmatpush1.bf16.msra.mxu0 %v10179
    %11140 = vmatprep.subr.bf16.mxu0 %v10184
    %11141 = vmatpush1.bf16.msra.mxu0 %v10183
    %11142 = vmatprep.subr.bf16.mxu0 %v10188
    %11143 = vmatpush1.bf16.msra.mxu0 %v10187
    %11144 = vmatprep.subr.bf16.mxu0 %v10192
    %11145 = vmatpush1.bf16.msra.mxu0 %v10191
    %11146 = vmatprep.subr.bf16.mxu0 %v10196
    %11147 = vmatpush1.bf16.msra.mxu0 %v10195
    %11148 = vmatprep.subr.bf16.mxu0 %v10200
    %11149 = vmatpush1.bf16.msra.mxu0 %v10199
    %11150 = vmatprep.subr.bf16.mxu0 %v10204
    %11151 = vmatpush1.bf16.msra.mxu0 %v10203
    %11152 = vmatprep.subr.bf16.mxu0 %v10208
    %11153 = vmatpush1.bf16.msra.mxu0 %v10207
    %11154 = vmatprep.subr.bf16.mxu0 %v10212
    %11155 = vmatpush1.bf16.msra.mxu0 %v10211
    %11156 = vmatprep.subr.bf16.mxu0 %v10216
    %11157 = vmatpush1.bf16.msra.mxu0 %v10215
    %11158 = vmatprep.subr.bf16.mxu0 %v10220
    %11159 = vmatpush1.bf16.msra.mxu0 %v10219
    %11160 = vmatprep.subr.bf16.mxu0 %v10224
    %11161 = vmatpush1.bf16.msra.mxu0 %v10223
    %11162 = vmatprep.subr.bf16.mxu0 %v10228
    %11163 = vmatpush1.bf16.msra.mxu0 %v10227
    %11164 = vmatprep.subr.bf16.mxu0 %v10232
    %11165 = vmatpush1.bf16.msra.mxu0 %v10231
    %11166 = vmatprep.subr.bf16.mxu0 %v10236
    %11167 = vmatpush1.bf16.msra.mxu0 %v10235
    %11168 = vmatprep.mubr.bf16.mxu0 %v7904
    %11169 = vmatmul.mubr.bf16.gmra.mrb[0].mxu0 %v7903
    %v11170 = vpop.f32.mrb[0].mxu0
    %v11171 = vadd.f32 %v11128, %v11170
    %v11172 = vpop.f32.mrb[0].mxu0
    %v11173 = vadd.f32 %v11130, %v11172
    %v11174 = vpop.f32.mrb[0].mxu0
    %v11175 = vadd.f32 %v11132, %v11174
    %v11176 = vpop.f32.mrb[0].mxu0
    %v11177 = vadd.f32 %v11134, %v11176
    %11178 = vdwg.mxu0
    %11179 = vmatprep.subr.bf16.mxu0 %v10240
    %11180 = vmatpush1.bf16.msra.mxu0 %v10239
    %11181 = vmatprep.subr.bf16.mxu0 %v10244
    %11182 = vmatpush1.bf16.msra.mxu0 %v10243
    %11183 = vmatprep.subr.bf16.mxu0 %v10248
    %11184 = vmatpush1.bf16.msra.mxu0 %v10247
    %11185 = vmatprep.subr.bf16.mxu0 %v10252
    %11186 = vmatpush1.bf16.msra.mxu0 %v10251
    %11187 = vmatprep.subr.bf16.mxu0 %v10256
    %11188 = vmatpush1.bf16.msra.mxu0 %v10255
    %11189 = vmatprep.subr.bf16.mxu0 %v10260
    %11190 = vmatpush1.bf16.msra.mxu0 %v10259
    %11191 = vmatprep.subr.bf16.mxu0 %v10264
    %11192 = vmatpush1.bf16.msra.mxu0 %v10263
    %11193 = vmatprep.subr.bf16.mxu0 %v10268
    %11194 = vmatpush1.bf16.msra.mxu0 %v10267
    %11195 = vmatprep.subr.bf16.mxu0 %v10272
    %11196 = vmatpush1.bf16.msra.mxu0 %v10271
    %11197 = vmatprep.subr.bf16.mxu0 %v10276
    %11198 = vmatpush1.bf16.msra.mxu0 %v10275
    %11199 = vmatprep.subr.bf16.mxu0 %v10280
    %11200 = vmatpush1.bf16.msra.mxu0 %v10279
    %11201 = vmatprep.subr.bf16.mxu0 %v10284
    %11202 = vmatpush1.bf16.msra.mxu0 %v10283
    %11203 = vmatprep.subr.bf16.mxu0 %v10288
    %11204 = vmatpush1.bf16.msra.mxu0 %v10287
    %11205 = vmatprep.subr.bf16.mxu0 %v10292
    %11206 = vmatpush1.bf16.msra.mxu0 %v10291
    %11207 = vmatprep.subr.bf16.mxu0 %v10296
    %11208 = vmatpush1.bf16.msra.mxu0 %v10295
    %11209 = vmatprep.subr.bf16.mxu0 %v10300
    %11210 = vmatpush1.bf16.msra.mxu0 %v10299
    %11211 = vmatprep.mubr.bf16.mxu0 %v7906
    %11212 = vmatmul.mubr.bf16.gmra.mrb[0].mxu0 %v7905
    %v11213 = vpop.f32.mrb[0].mxu0
    %v11214 = vadd.f32 %v11171, %v11213
    %v11215 = vpop.f32.mrb[0].mxu0
    %v11216 = vadd.f32 %v11173, %v11215
    %v11217 = vpop.f32.mrb[0].mxu0
    %v11218 = vadd.f32 %v11175, %v11217
    %v11219 = vpop.f32.mrb[0].mxu0
    %v11220 = vadd.f32 %v11177, %v11219
    %11221 = vdwg.mxu0
    %11222 = vmatprep.subr.bf16.mxu0 %v10304
    %11223 = vmatpush1.bf16.msra.mxu0 %v10303
    %11224 = vmatprep.subr.bf16.mxu0 %v10308
    %11225 = vmatpush1.bf16.msra.mxu0 %v10307
    %11226 = vmatprep.subr.bf16.mxu0 %v10312
    %11227 = vmatpush1.bf16.msra.mxu0 %v10311
    %11228 = vmatprep.subr.bf16.mxu0 %v10316
    %11229 = vmatpush1.bf16.msra.mxu0 %v10315
    %11230 = vmatprep.subr.bf16.mxu0 %v10320
    %11231 = vmatpush1.bf16.msra.mxu0 %v10319
    %11232 = vmatprep.subr.bf16.mxu0 %v10324
    %11233 = vmatpush1.bf16.msra.mxu0 %v10323
    %11234 = vmatprep.subr.bf16.mxu0 %v10328
    %11235 = vmatpush1.bf16.msra.mxu0 %v10327
    %11236 = vmatprep.subr.bf16.mxu0 %v10332
    %11237 = vmatpush1.bf16.msra.mxu0 %v10331
    %11238 = vmatprep.subr.bf16.mxu0 %v10336
    %11239 = vmatpush1.bf16.msra.mxu0 %v10335
    %11240 = vmatprep.subr.bf16.mxu0 %v10340
    %11241 = vmatpush1.bf16.msra.mxu0 %v10339
    %11242 = vmatprep.subr.bf16.mxu0 %v10344
    %11243 = vmatpush1.bf16.msra.mxu0 %v10343
    %11244 = vmatprep.subr.bf16.mxu0 %v10348
    %11245 = vmatpush1.bf16.msra.mxu0 %v10347
    %11246 = vmatprep.subr.bf16.mxu0 %v10352
    %11247 = vmatpush1.bf16.msra.mxu0 %v10351
    %11248 = vmatprep.subr.bf16.mxu0 %v10356
    %11249 = vmatpush1.bf16.msra.mxu0 %v10355
    %11250 = vmatprep.subr.bf16.mxu0 %v10360
    %11251 = vmatpush1.bf16.msra.mxu0 %v10359
    %11252 = vmatprep.subr.bf16.mxu0 %v10364
    %11253 = vmatpush1.bf16.msra.mxu0 %v10363
    %11254 = vmatprep.mubr.bf16.mxu0 %v7908
    %11255 = vmatmul.mubr.bf16.gmra.mrb[0].mxu0 %v7907
    %v11256 = vpop.f32.mrb[0].mxu0
    %v11257 = vadd.f32 %v11214, %v11256
    %v11258 = vpop.f32.mrb[0].mxu0
    %v11259 = vadd.f32 %v11216, %v11258
    %v11260 = vpop.f32.mrb[0].mxu0
    %v11261 = vadd.f32 %v11218, %v11260
    %v11262 = vpop.f32.mrb[0].mxu0
    %v11263 = vadd.f32 %v11220, %v11262
    %11264 = vdwg.mxu0
    %11265 = vmatprep.subr.bf16.mxu0 %v10368
    %11266 = vmatpush1.bf16.msra.mxu0 %v10367
    %11267 = vmatprep.subr.bf16.mxu0 %v10372
    %11268 = vmatpush1.bf16.msra.mxu0 %v10371
    %11269 = vmatprep.subr.bf16.mxu0 %v10376
    %11270 = vmatpush1.bf16.msra.mxu0 %v10375
    %11271 = vmatprep.subr.bf16.mxu0 %v10380
    %11272 = vmatpush1.bf16.msra.mxu0 %v10379
    %11273 = vmatprep.subr.bf16.mxu0 %v10384
    %11274 = vmatpush1.bf16.msra.mxu0 %v10383
    %11275 = vmatprep.subr.bf16.mxu0 %v10388
    %11276 = vmatpush1.bf16.msra.mxu0 %v10387
    %11277 = vmatprep.subr.bf16.mxu0 %v10392
    %11278 = vmatpush1.bf16.msra.mxu0 %v10391
    %11279 = vmatprep.subr.bf16.mxu0 %v10396
    %11280 = vmatpush1.bf16.msra.mxu0 %v10395
    %11281 = vmatprep.subr.bf16.mxu0 %v10400
    %11282 = vmatpush1.bf16.msra.mxu0 %v10399
    %11283 = vmatprep.subr.bf16.mxu0 %v10404
    %11284 = vmatpush1.bf16.msra.mxu0 %v10403
    %11285 = vmatprep.subr.bf16.mxu0 %v10408
    %11286 = vmatpush1.bf16.msra.mxu0 %v10407
    %11287 = vmatprep.subr.bf16.mxu0 %v10412
    %11288 = vmatpush1.bf16.msra.mxu0 %v10411
    %11289 = vmatprep.subr.bf16.mxu0 %v10416
    %11290 = vmatpush1.bf16.msra.mxu0 %v10415
    %11291 = vmatprep.subr.bf16.mxu0 %v10420
    %11292 = vmatpush1.bf16.msra.mxu0 %v10419
    %11293 = vmatprep.subr.bf16.mxu0 %v10424
    %11294 = vmatpush1.bf16.msra.mxu0 %v10423
    %11295 = vmatprep.subr.bf16.mxu0 %v10428
    %11296 = vmatpush1.bf16.msra.mxu0 %v10427
    %11297 = vmatprep.mubr.bf16.mxu0 %v7910
    %11298 = vmatmul.mubr.bf16.gmra.mrb[0].mxu0 %v7909
    %v11299 = vpop.f32.mrb[0].mxu0
    %v11300 = vadd.f32 %v11257, %v11299
    %v11301 = vpop.f32.mrb[0].mxu0
    %v11302 = vadd.f32 %v11259, %v11301
    %v11303 = vpop.f32.mrb[0].mxu0
    %v11304 = vadd.f32 %v11261, %v11303
    %v11305 = vpop.f32.mrb[0].mxu0
    %v11306 = vadd.f32 %v11263, %v11305
    %11307 = vdwg.mxu0
    %11308 = vmatprep.subr.bf16.mxu0 %v10432
    %11309 = vmatpush1.bf16.msra.mxu0 %v10431
    %11310 = vmatprep.subr.bf16.mxu0 %v10436
    %11311 = vmatpush1.bf16.msra.mxu0 %v10435
    %11312 = vmatprep.subr.bf16.mxu0 %v10440
    %11313 = vmatpush1.bf16.msra.mxu0 %v10439
    %11314 = vmatprep.subr.bf16.mxu0 %v10444
    %11315 = vmatpush1.bf16.msra.mxu0 %v10443
    %11316 = vmatprep.subr.bf16.mxu0 %v10448
    %11317 = vmatpush1.bf16.msra.mxu0 %v10447
    %11318 = vmatprep.subr.bf16.mxu0 %v10452
    %11319 = vmatpush1.bf16.msra.mxu0 %v10451
    %11320 = vmatprep.subr.bf16.mxu0 %v10456
    %11321 = vmatpush1.bf16.msra.mxu0 %v10455
    %11322 = vmatprep.subr.bf16.mxu0 %v10460
    %11323 = vmatpush1.bf16.msra.mxu0 %v10459
    %11324 = vmatprep.subr.bf16.mxu0 %v10464
    %11325 = vmatpush1.bf16.msra.mxu0 %v10463
    %11326 = vmatprep.subr.bf16.mxu0 %v10468
    %11327 = vmatpush1.bf16.msra.mxu0 %v10467
    %11328 = vmatprep.subr.bf16.mxu0 %v10472
    %11329 = vmatpush1.bf16.msra.mxu0 %v10471
    %11330 = vmatprep.subr.bf16.mxu0 %v10476
    %11331 = vmatpush1.bf16.msra.mxu0 %v10475
    %11332 = vmatprep.subr.bf16.mxu0 %v10480
    %11333 = vmatpush1.bf16.msra.mxu0 %v10479
    %11334 = vmatprep.subr.bf16.mxu0 %v10484
    %11335 = vmatpush1.bf16.msra.mxu0 %v10483
    %11336 = vmatprep.subr.bf16.mxu0 %v10488
    %11337 = vmatpush1.bf16.msra.mxu0 %v10487
    %11338 = vmatprep.subr.bf16.mxu0 %v10492
    %11339 = vmatpush1.bf16.msra.mxu0 %v10491
    %11340 = vmatprep.mubr.bf16.mxu0 %v7912
    %11341 = vmatmul.mubr.bf16.gmra.mrb[0].mxu0 %v7911
    %v11342 = vpop.f32.mrb[0].mxu0
    %v11343 = vadd.f32 %v11300, %v11342
    %v11344 = vpop.f32.mrb[0].mxu0
    %v11345 = vadd.f32 %v11302, %v11344
    %v11346 = vpop.f32.mrb[0].mxu0
    %v11347 = vadd.f32 %v11304, %v11346
    %v11348 = vpop.f32.mrb[0].mxu0
    %v11349 = vadd.f32 %v11306, %v11348
    %11350 = vdwg.mxu0
    %11351 = vmatprep.subr.bf16.mxu0 %v9986
    %11352 = vmatpush1.bf16.msra.mxu0 %v9985
    %11353 = vmatprep.subr.bf16.mxu0 %v9990
    %11354 = vmatpush1.bf16.msra.mxu0 %v9989
    %11355 = vmatprep.subr.bf16.mxu0 %v9994
    %11356 = vmatpush1.bf16.msra.mxu0 %v9993
    %11357 = vmatprep.subr.bf16.mxu0 %v9998
    %11358 = vmatpush1.bf16.msra.mxu0 %v9997
    %11359 = vmatprep.subr.bf16.mxu0 %v10002
    %11360 = vmatpush1.bf16.msra.mxu0 %v10001
    %11361 = vmatprep.subr.bf16.mxu0 %v10006
    %11362 = vmatpush1.bf16.msra.mxu0 %v10005
    %11363 = vmatprep.subr.bf16.mxu0 %v10010
    %11364 = vmatpush1.bf16.msra.mxu0 %v10009
    %11365 = vmatprep.subr.bf16.mxu0 %v10014
    %11366 = vmatpush1.bf16.msra.mxu0 %v10013
    %11367 = vmatprep.subr.bf16.mxu0 %v10018
    %11368 = vmatpush1.bf16.msra.mxu0 %v10017
    %11369 = vmatprep.subr.bf16.mxu0 %v10022
    %11370 = vmatpush1.bf16.msra.mxu0 %v10021
    %11371 = vmatprep.subr.bf16.mxu0 %v10026
    %11372 = vmatpush1.bf16.msra.mxu0 %v10025
    %11373 = vmatprep.subr.bf16.mxu0 %v10030
    %11374 = vmatpush1.bf16.msra.mxu0 %v10029
    %11375 = vmatprep.subr.bf16.mxu0 %v10034
    %11376 = vmatpush1.bf16.msra.mxu0 %v10033
    %11377 = vmatprep.subr.bf16.mxu0 %v10038
    %11378 = vmatpush1.bf16.msra.mxu0 %v10037
    %11379 = vmatprep.subr.bf16.mxu0 %v10042
    %11380 = vmatpush1.bf16.msra.mxu0 %v10041
    %11381 = vmatprep.subr.bf16.mxu0 %v10046
    %11382 = vmatpush1.bf16.msra.mxu0 %v10045
    %11383 = vmatprep.mubr.bf16.mxu0 %v7898
    %11384 = vmatmul.mubr.bf16.gmra.mrb[0].mxu0 %v7897
    %v11385 = vpop.f32.mrb[0].mxu0
    %v11386 = vadd.f32 %v8438, %v11385
    %v11387 = vpop.f32.mrb[0].mxu0
    %v11388 = vadd.f32 %v8442, %v11387
    %v11389 = vpop.f32.mrb[0].mxu0
    %v11390 = vadd.f32 %v8438, %v11389
    %v11391 = vpop.f32.mrb[0].mxu0
    %v11392 = vadd.f32 %v8442, %v11391
    %11393 = vdwg.mxu0
    %11394 = vmatprep.subr.bf16.mxu0 %v10050
    %11395 = vmatpush1.bf16.msra.mxu0 %v10049
    %11396 = vmatprep.subr.bf16.mxu0 %v10054
    %11397 = vmatpush1.bf16.msra.mxu0 %v10053
    %11398 = vmatprep.subr.bf16.mxu0 %v10058
    %11399 = vmatpush1.bf16.msra.mxu0 %v10057
    %11400 = vmatprep.subr.bf16.mxu0 %v10062
    %11401 = vmatpush1.bf16.msra.mxu0 %v10061
    %11402 = vmatprep.subr.bf16.mxu0 %v10066
    %11403 = vmatpush1.bf16.msra.mxu0 %v10065
    %11404 = vmatprep.subr.bf16.mxu0 %v10070
    %11405 = vmatpush1.bf16.msra.mxu0 %v10069
    %11406 = vmatprep.subr.bf16.mxu0 %v10074
    %11407 = vmatpush1.bf16.msra.mxu0 %v10073
    %11408 = vmatprep.subr.bf16.mxu0 %v10078
    %11409 = vmatpush1.bf16.msra.mxu0 %v10077
    %11410 = vmatprep.subr.bf16.mxu0 %v10082
    %11411 = vmatpush1.bf16.msra.mxu0 %v10081
    %11412 = vmatprep.subr.bf16.mxu0 %v10086
    %11413 = vmatpush1.bf16.msra.mxu0 %v10085
    %11414 = vmatprep.subr.bf16.mxu0 %v10090
    %11415 = vmatpush1.bf16.msra.mxu0 %v10089
    %11416 = vmatprep.subr.bf16.mxu0 %v10094
    %11417 = vmatpush1.bf16.msra.mxu0 %v10093
    %11418 = vmatprep.subr.bf16.mxu0 %v10098
    %11419 = vmatpush1.bf16.msra.mxu0 %v10097
    %11420 = vmatprep.subr.bf16.mxu0 %v10102
    %11421 = vmatpush1.bf16.msra.mxu0 %v10101
    %11422 = vmatprep.subr.bf16.mxu0 %v10106
    %11423 = vmatpush1.bf16.msra.mxu0 %v10105
    %11424 = vmatprep.subr.bf16.mxu0 %v10110
    %11425 = vmatpush1.bf16.msra.mxu0 %v10109
    %11426 = vmatprep.mubr.bf16.mxu0 %v7900
    %11427 = vmatmul.mubr.bf16.gmra.mrb[0].mxu0 %v7899
    %v11428 = vpop.f32.mrb[0].mxu0
    %v11429 = vadd.f32 %v11386, %v11428
    %v11430 = vpop.f32.mrb[0].mxu0
    %v11431 = vadd.f32 %v11388, %v11430
    %v11432 = vpop.f32.mrb[0].mxu0
    %v11433 = vadd.f32 %v11390, %v11432
    %v11434 = vpop.f32.mrb[0].mxu0
    %v11435 = vadd.f32 %v11392, %v11434
    %11436 = vdwg.mxu0
    %11437 = vmatprep.subr.bf16.mxu0 %v10114
    %11438 = vmatpush1.bf16.msra.mxu0 %v10113
    %11439 = vmatprep.subr.bf16.mxu0 %v10118
    %11440 = vmatpush1.bf16.msra.mxu0 %v10117
    %11441 = vmatprep.subr.bf16.mxu0 %v10122
    %11442 = vmatpush1.bf16.msra.mxu0 %v10121
    %11443 = vmatprep.subr.bf16.mxu0 %v10126
    %11444 = vmatpush1.bf16.msra.mxu0 %v10125
    %11445 = vmatprep.subr.bf16.mxu0 %v10130
    %11446 = vmatpush1.bf16.msra.mxu0 %v10129
    %11447 = vmatprep.subr.bf16.mxu0 %v10134
    %11448 = vmatpush1.bf16.msra.mxu0 %v10133
    %11449 = vmatprep.subr.bf16.mxu0 %v10138
    %11450 = vmatpush1.bf16.msra.mxu0 %v10137
    %11451 = vmatprep.subr.bf16.mxu0 %v10142
    %11452 = vmatpush1.bf16.msra.mxu0 %v10141
    %11453 = vmatprep.subr.bf16.mxu0 %v10146
    %11454 = vmatpush1.bf16.msra.mxu0 %v10145
    %11455 = vmatprep.subr.bf16.mxu0 %v10150
    %11456 = vmatpush1.bf16.msra.mxu0 %v10149
    %11457 = vmatprep.subr.bf16.mxu0 %v10154
    %11458 = vmatpush1.bf16.msra.mxu0 %v10153
    %11459 = vmatprep.subr.bf16.mxu0 %v10158
    %11460 = vmatpush1.bf16.msra.mxu0 %v10157
    %11461 = vmatprep.subr.bf16.mxu0 %v10162
    %11462 = vmatpush1.bf16.msra.mxu0 %v10161
    %11463 = vmatprep.subr.bf16.mxu0 %v10166
    %11464 = vmatpush1.bf16.msra.mxu0 %v10165
    %11465 = vmatprep.subr.bf16.mxu0 %v10170
    %11466 = vmatpush1.bf16.msra.mxu0 %v10169
    %11467 = vmatprep.subr.bf16.mxu0 %v10174
    %11468 = vmatpush1.bf16.msra.mxu0 %v10173
    %11469 = vmatprep.mubr.bf16.mxu0 %v7902
    %11470 = vmatmul.mubr.bf16.gmra.mrb[0].mxu0 %v7901
    %v11471 = vpop.f32.mrb[0].mxu0
    %v11472 = vadd.f32 %v11429, %v11471
    %v11473 = vpop.f32.mrb[0].mxu0
    %v11474 = vadd.f32 %v11431, %v11473
    %v11475 = vpop.f32.mrb[0].mxu0
    %v11476 = vadd.f32 %v11433, %v11475
    %v11477 = vpop.f32.mrb[0].mxu0
    %v11478 = vadd.f32 %v11435, %v11477
    %11479 = vdwg.mxu0
    %11480 = vmatprep.subr.bf16.mxu0 %v10178
    %11481 = vmatpush1.bf16.msra.mxu0 %v10177
    %11482 = vmatprep.subr.bf16.mxu0 %v10182
    %11483 = vmatpush1.bf16.msra.mxu0 %v10181
    %11484 = vmatprep.subr.bf16.mxu0 %v10186
    %11485 = vmatpush1.bf16.msra.mxu0 %v10185
    %11486 = vmatprep.subr.bf16.mxu0 %v10190
    %11487 = vmatpush1.bf16.msra.mxu0 %v10189
    %11488 = vmatprep.subr.bf16.mxu0 %v10194
    %11489 = vmatpush1.bf16.msra.mxu0 %v10193
    %11490 = vmatprep.subr.bf16.mxu0 %v10198
    %11491 = vmatpush1.bf16.msra.mxu0 %v10197
    %11492 = vmatprep.subr.bf16.mxu0 %v10202
    %11493 = vmatpush1.bf16.msra.mxu0 %v10201
    %11494 = vmatprep.subr.bf16.mxu0 %v10206
    %11495 = vmatpush1.bf16.msra.mxu0 %v10205
    %11496 = vmatprep.subr.bf16.mxu0 %v10210
    %11497 = vmatpush1.bf16.msra.mxu0 %v10209
    %11498 = vmatprep.subr.bf16.mxu0 %v10214
    %11499 = vmatpush1.bf16.msra.mxu0 %v10213
    %11500 = vmatprep.subr.bf16.mxu0 %v10218
    %11501 = vmatpush1.bf16.msra.mxu0 %v10217
    %11502 = vmatprep.subr.bf16.mxu0 %v10222
    %11503 = vmatpush1.bf16.msra.mxu0 %v10221
    %11504 = vmatprep.subr.bf16.mxu0 %v10226
    %11505 = vmatpush1.bf16.msra.mxu0 %v10225
    %11506 = vmatprep.subr.bf16.mxu0 %v10230
    %11507 = vmatpush1.bf16.msra.mxu0 %v10229
    %11508 = vmatprep.subr.bf16.mxu0 %v10234
    %11509 = vmatpush1.bf16.msra.mxu0 %v10233
    %11510 = vmatprep.subr.bf16.mxu0 %v10238
    %11511 = vmatpush1.bf16.msra.mxu0 %v10237
    %11512 = vmatprep.mubr.bf16.mxu0 %v7904
    %11513 = vmatmul.mubr.bf16.gmra.mrb[0].mxu0 %v7903
    %v11514 = vpop.f32.mrb[0].mxu0
    %v11515 = vadd.f32 %v11472, %v11514
    %v11516 = vpop.f32.mrb[0].mxu0
    %v11517 = vadd.f32 %v11474, %v11516
    %v11518 = vpop.f32.mrb[0].mxu0
    %v11519 = vadd.f32 %v11476, %v11518
    %v11520 = vpop.f32.mrb[0].mxu0
    %v11521 = vadd.f32 %v11478, %v11520
    %11522 = vdwg.mxu0
    %11523 = vmatprep.subr.bf16.mxu0 %v10242
    %11524 = vmatpush1.bf16.msra.mxu0 %v10241
    %11525 = vmatprep.subr.bf16.mxu0 %v10246
    %11526 = vmatpush1.bf16.msra.mxu0 %v10245
    %11527 = vmatprep.subr.bf16.mxu0 %v10250
    %11528 = vmatpush1.bf16.msra.mxu0 %v10249
    %11529 = vmatprep.subr.bf16.mxu0 %v10254
    %11530 = vmatpush1.bf16.msra.mxu0 %v10253
    %11531 = vmatprep.subr.bf16.mxu0 %v10258
    %11532 = vmatpush1.bf16.msra.mxu0 %v10257
    %11533 = vmatprep.subr.bf16.mxu0 %v10262
    %11534 = vmatpush1.bf16.msra.mxu0 %v10261
    %11535 = vmatprep.subr.bf16.mxu0 %v10266
    %11536 = vmatpush1.bf16.msra.mxu0 %v10265
    %11537 = vmatprep.subr.bf16.mxu0 %v10270
    %11538 = vmatpush1.bf16.msra.mxu0 %v10269
    %11539 = vmatprep.subr.bf16.mxu0 %v10274
    %11540 = vmatpush1.bf16.msra.mxu0 %v10273
    %11541 = vmatprep.subr.bf16.mxu0 %v10278
    %11542 = vmatpush1.bf16.msra.mxu0 %v10277
    %11543 = vmatprep.subr.bf16.mxu0 %v10282
    %11544 = vmatpush1.bf16.msra.mxu0 %v10281
    %11545 = vmatprep.subr.bf16.mxu0 %v10286
    %11546 = vmatpush1.bf16.msra.mxu0 %v10285
    %11547 = vmatprep.subr.bf16.mxu0 %v10290
    %11548 = vmatpush1.bf16.msra.mxu0 %v10289
    %11549 = vmatprep.subr.bf16.mxu0 %v10294
    %11550 = vmatpush1.bf16.msra.mxu0 %v10293
    %11551 = vmatprep.subr.bf16.mxu0 %v10298
    %11552 = vmatpush1.bf16.msra.mxu0 %v10297
    %11553 = vmatprep.subr.bf16.mxu0 %v10302
    %11554 = vmatpush1.bf16.msra.mxu0 %v10301
    %11555 = vmatprep.mubr.bf16.mxu0 %v7906
    %11556 = vmatmul.mubr.bf16.gmra.mrb[0].mxu0 %v7905
    %v11557 = vpop.f32.mrb[0].mxu0
    %v11558 = vadd.f32 %v11515, %v11557
    %v11559 = vpop.f32.mrb[0].mxu0
    %v11560 = vadd.f32 %v11517, %v11559
    %v11561 = vpop.f32.mrb[0].mxu0
    %v11562 = vadd.f32 %v11519, %v11561
    %v11563 = vpop.f32.mrb[0].mxu0
    %v11564 = vadd.f32 %v11521, %v11563
    %11565 = vdwg.mxu0
    %11566 = vmatprep.subr.bf16.mxu0 %v10306
    %11567 = vmatpush1.bf16.msra.mxu0 %v10305
    %11568 = vmatprep.subr.bf16.mxu0 %v10310
    %11569 = vmatpush1.bf16.msra.mxu0 %v10309
    %11570 = vmatprep.subr.bf16.mxu0 %v10314
    %11571 = vmatpush1.bf16.msra.mxu0 %v10313
    %11572 = vmatprep.subr.bf16.mxu0 %v10318
    %11573 = vmatpush1.bf16.msra.mxu0 %v10317
    %11574 = vmatprep.subr.bf16.mxu0 %v10322
    %11575 = vmatpush1.bf16.msra.mxu0 %v10321
    %11576 = vmatprep.subr.bf16.mxu0 %v10326
    %11577 = vmatpush1.bf16.msra.mxu0 %v10325
    %11578 = vmatprep.subr.bf16.mxu0 %v10330
    %11579 = vmatpush1.bf16.msra.mxu0 %v10329
    %11580 = vmatprep.subr.bf16.mxu0 %v10334
    %11581 = vmatpush1.bf16.msra.mxu0 %v10333
    %11582 = vmatprep.subr.bf16.mxu0 %v10338
    %11583 = vmatpush1.bf16.msra.mxu0 %v10337
    %11584 = vmatprep.subr.bf16.mxu0 %v10342
    %11585 = vmatpush1.bf16.msra.mxu0 %v10341
    %11586 = vmatprep.subr.bf16.mxu0 %v10346
    %11587 = vmatpush1.bf16.msra.mxu0 %v10345
    %11588 = vmatprep.subr.bf16.mxu0 %v10350
    %11589 = vmatpush1.bf16.msra.mxu0 %v10349
    %11590 = vmatprep.subr.bf16.mxu0 %v10354
    %11591 = vmatpush1.bf16.msra.mxu0 %v10353
    %11592 = vmatprep.subr.bf16.mxu0 %v10358
    %11593 = vmatpush1.bf16.msra.mxu0 %v10357
    %11594 = vmatprep.subr.bf16.mxu0 %v10362
    %11595 = vmatpush1.bf16.msra.mxu0 %v10361
    %11596 = vmatprep.subr.bf16.mxu0 %v10366
    %11597 = vmatpush1.bf16.msra.mxu0 %v10365
    %11598 = vmatprep.mubr.bf16.mxu0 %v7908
    %11599 = vmatmul.mubr.bf16.gmra.mrb[0].mxu0 %v7907
    %v11600 = vpop.f32.mrb[0].mxu0
    %v11601 = vadd.f32 %v11558, %v11600
    %v11602 = vpop.f32.mrb[0].mxu0
    %v11603 = vadd.f32 %v11560, %v11602
    %v11604 = vpop.f32.mrb[0].mxu0
    %v11605 = vadd.f32 %v11562, %v11604
    %v11606 = vpop.f32.mrb[0].mxu0
    %v11607 = vadd.f32 %v11564, %v11606
    %11608 = vdwg.mxu0
    %11609 = vmatprep.subr.bf16.mxu0 %v10370
    %11610 = vmatpush1.bf16.msra.mxu0 %v10369
    %11611 = vmatprep.subr.bf16.mxu0 %v10374
    %11612 = vmatpush1.bf16.msra.mxu0 %v10373
    %11613 = vmatprep.subr.bf16.mxu0 %v10378
    %11614 = vmatpush1.bf16.msra.mxu0 %v10377
    %11615 = vmatprep.subr.bf16.mxu0 %v10382
    %11616 = vmatpush1.bf16.msra.mxu0 %v10381
    %11617 = vmatprep.subr.bf16.mxu0 %v10386
    %11618 = vmatpush1.bf16.msra.mxu0 %v10385
    %11619 = vmatprep.subr.bf16.mxu0 %v10390
    %11620 = vmatpush1.bf16.msra.mxu0 %v10389
    %11621 = vmatprep.subr.bf16.mxu0 %v10394
    %11622 = vmatpush1.bf16.msra.mxu0 %v10393
    %11623 = vmatprep.subr.bf16.mxu0 %v10398
    %11624 = vmatpush1.bf16.msra.mxu0 %v10397
    %11625 = vmatprep.subr.bf16.mxu0 %v10402
    %11626 = vmatpush1.bf16.msra.mxu0 %v10401
    %11627 = vmatprep.subr.bf16.mxu0 %v10406
    %11628 = vmatpush1.bf16.msra.mxu0 %v10405
    %11629 = vmatprep.subr.bf16.mxu0 %v10410
    %11630 = vmatpush1.bf16.msra.mxu0 %v10409
    %11631 = vmatprep.subr.bf16.mxu0 %v10414
    %11632 = vmatpush1.bf16.msra.mxu0 %v10413
    %11633 = vmatprep.subr.bf16.mxu0 %v10418
    %11634 = vmatpush1.bf16.msra.mxu0 %v10417
    %11635 = vmatprep.subr.bf16.mxu0 %v10422
    %11636 = vmatpush1.bf16.msra.mxu0 %v10421
    %11637 = vmatprep.subr.bf16.mxu0 %v10426
    %11638 = vmatpush1.bf16.msra.mxu0 %v10425
    %11639 = vmatprep.subr.bf16.mxu0 %v10430
    %11640 = vmatpush1.bf16.msra.mxu0 %v10429
    %11641 = vmatprep.mubr.bf16.mxu0 %v7910
    %11642 = vmatmul.mubr.bf16.gmra.mrb[0].mxu0 %v7909
    %v11643 = vpop.f32.mrb[0].mxu0
    %v11644 = vadd.f32 %v11601, %v11643
    %v11645 = vpop.f32.mrb[0].mxu0
    %v11646 = vadd.f32 %v11603, %v11645
    %v11647 = vpop.f32.mrb[0].mxu0
    %v11648 = vadd.f32 %v11605, %v11647
    %v11649 = vpop.f32.mrb[0].mxu0
    %v11650 = vadd.f32 %v11607, %v11649
    %11651 = vdwg.mxu0
    %11652 = vmatprep.subr.bf16.mxu0 %v10434
    %11653 = vmatpush1.bf16.msra.mxu0 %v10433
    %11654 = vmatprep.subr.bf16.mxu0 %v10438
    %11655 = vmatpush1.bf16.msra.mxu0 %v10437
    %11656 = vmatprep.subr.bf16.mxu0 %v10442
    %11657 = vmatpush1.bf16.msra.mxu0 %v10441
    %11658 = vmatprep.subr.bf16.mxu0 %v10446
    %11659 = vmatpush1.bf16.msra.mxu0 %v10445
    %11660 = vmatprep.subr.bf16.mxu0 %v10450
    %11661 = vmatpush1.bf16.msra.mxu0 %v10449
    %11662 = vmatprep.subr.bf16.mxu0 %v10454
    %11663 = vmatpush1.bf16.msra.mxu0 %v10453
    %11664 = vmatprep.subr.bf16.mxu0 %v10458
    %11665 = vmatpush1.bf16.msra.mxu0 %v10457
    %11666 = vmatprep.subr.bf16.mxu0 %v10462
    %11667 = vmatpush1.bf16.msra.mxu0 %v10461
    %11668 = vmatprep.subr.bf16.mxu0 %v10466
    %11669 = vmatpush1.bf16.msra.mxu0 %v10465
    %11670 = vmatprep.subr.bf16.mxu0 %v10470
    %11671 = vmatpush1.bf16.msra.mxu0 %v10469
    %11672 = vmatprep.subr.bf16.mxu0 %v10474
    %11673 = vmatpush1.bf16.msra.mxu0 %v10473
    %11674 = vmatprep.subr.bf16.mxu0 %v10478
    %11675 = vmatpush1.bf16.msra.mxu0 %v10477
    %11676 = vmatprep.subr.bf16.mxu0 %v10482
    %11677 = vmatpush1.bf16.msra.mxu0 %v10481
    %11678 = vmatprep.subr.bf16.mxu0 %v10486
    %11679 = vmatpush1.bf16.msra.mxu0 %v10485
    %11680 = vmatprep.subr.bf16.mxu0 %v10490
    %11681 = vmatpush1.bf16.msra.mxu0 %v10489
    %11682 = vmatprep.subr.bf16.mxu0 %v10494
    %11683 = vmatpush1.bf16.msra.mxu0 %v10493
    %11684 = vmatprep.mubr.bf16.mxu0 %v7912
    %11685 = vmatmul.mubr.bf16.gmra.mrb[0].mxu0 %v7911
    %v11686 = vpop.f32.mrb[0].mxu0
    %v11687 = vadd.f32 %v11644, %v11686
    %v11688 = vpop.f32.mrb[0].mxu0
    %v11689 = vadd.f32 %v11646, %v11688
    %v11690 = vpop.f32.mrb[0].mxu0
    %v11691 = vadd.f32 %v11648, %v11690
    %v11692 = vpop.f32.mrb[0].mxu0
    %v11693 = vadd.f32 %v11650, %v11692
    %11694 = vdwg.mxu0
    %v11695 = vmax.f32 %v11343, 0.0
    %v11696 = vmax.f32 %v11345, 0.0
    %v11697 = vmax.f32 %v11687, 0.0
    %v11698 = vmax.f32 %v11689, 0.0
    %v11699 = vmax.f32 %v11347, 0.0
    %v11700 = vmax.f32 %v11349, 0.0
    %v11701 = vmax.f32 %v11691, 0.0
    %v11702 = vmax.f32 %v11693, 0.0
    %v11703 = vpack.c.bf16 %v11699, %v11695
    %v11704 = vpack.c.bf16 %v11700, %v11696
    %v11705 = vpack.c.bf16 %v11701, %v11697
    %v11706 = vpack.c.bf16 %v11702, %v11698
    %v11707 = vld [vmem:[#allocation17] sm:$0xf]
    %v11708 = vld [vmem:[#allocation17 + $0x4] sm:$0xf]
    %v11709 = vld [vmem:[#allocation17 + $0x8] sm:$0xf]
    %v11710 = vld [vmem:[#allocation17 + $0xc] sm:$0xf]
    %v11711 = vld [vmem:[#allocation17 + $0x10] sm:$0xf]
    %v11712 = vld [vmem:[#allocation17 + $0x14] sm:$0xf]
    %v11713 = vld [vmem:[#allocation17 + $0x18] sm:$0xf]
    %v11714 = vld [vmem:[#allocation17 + $0x1c] sm:$0xf]
    %v11715 = vld [vmem:[#allocation17 + $0x20] sm:$0xf]
    %v11716 = vld [vmem:[#allocation17 + $0x24] sm:$0xf]
    %v11717 = vld [vmem:[#allocation17 + $0x28] sm:$0xf]
    %v11718 = vld [vmem:[#allocation17 + $0x2c] sm:$0xf]
    %v11719 = vld [vmem:[#allocation17 + $0x30] sm:$0xf]
    %v11720 = vld [vmem:[#allocation17 + $0x34] sm:$0xf]
    %v11721 = vld [vmem:[#allocation17 + $0x38] sm:$0xf]
    %v11722 = vld [vmem:[#allocation17 + $0x3c] sm:$0xf]
    %v11723 = vld [vmem:[#allocation17 + $0x40] sm:$0xf]
    %v11724 = vld [vmem:[#allocation17 + $0x44] sm:$0xf]
    %v11725 = vld [vmem:[#allocation17 + $0x48] sm:$0xf]
    %v11726 = vld [vmem:[#allocation17 + $0x4c] sm:$0xf]
    %v11727 = vld [vmem:[#allocation17 + $0x50] sm:$0xf]
    %v11728 = vld [vmem:[#allocation17 + $0x54] sm:$0xf]
    %v11729 = vld [vmem:[#allocation17 + $0x58] sm:$0xf]
    %v11730 = vld [vmem:[#allocation17 + $0x5c] sm:$0xf]
    %v11731 = vld [vmem:[#allocation17 + $0x60] sm:$0xf]
    %v11732 = vld [vmem:[#allocation17 + $0x64] sm:$0xf]
    %v11733 = vld [vmem:[#allocation17 + $0x68] sm:$0xf]
    %v11734 = vld [vmem:[#allocation17 + $0x6c] sm:$0xf]
    %v11735 = vld [vmem:[#allocation17 + $0x70] sm:$0xf]
    %v11736 = vld [vmem:[#allocation17 + $0x74] sm:$0xf]
    %v11737 = vld [vmem:[#allocation17 + $0x78] sm:$0xf]
    %v11738 = vld [vmem:[#allocation17 + $0x7c] sm:$0xf]
    %v11739 = vld [vmem:[#allocation17 + $0x80] sm:$0xf]
    %v11740 = vld [vmem:[#allocation17 + $0x84] sm:$0xf]
    %v11741 = vld [vmem:[#allocation17 + $0x88] sm:$0xf]
    %v11742 = vld [vmem:[#allocation17 + $0x8c] sm:$0xf]
    %v11743 = vld [vmem:[#allocation17 + $0x90] sm:$0xf]
    %v11744 = vld [vmem:[#allocation17 + $0x94] sm:$0xf]
    %v11745 = vld [vmem:[#allocation17 + $0x98] sm:$0xf]
    %v11746 = vld [vmem:[#allocation17 + $0x9c] sm:$0xf]
    %v11747 = vld [vmem:[#allocation17 + $0xa0] sm:$0xf]
    %v11748 = vld [vmem:[#allocation17 + $0xa4] sm:$0xf]
    %v11749 = vld [vmem:[#allocation17 + $0xa8] sm:$0xf]
    %v11750 = vld [vmem:[#allocation17 + $0xac] sm:$0xf]
    %v11751 = vld [vmem:[#allocation17 + $0xb0] sm:$0xf]
    %v11752 = vld [vmem:[#allocation17 + $0xb4] sm:$0xf]
    %v11753 = vld [vmem:[#allocation17 + $0xb8] sm:$0xf]
    %v11754 = vld [vmem:[#allocation17 + $0xbc] sm:$0xf]
    %v11755 = vld [vmem:[#allocation17 + $0xc0] sm:$0xf]
    %v11756 = vld [vmem:[#allocation17 + $0xc4] sm:$0xf]
    %v11757 = vld [vmem:[#allocation17 + $0xc8] sm:$0xf]
    %v11758 = vld [vmem:[#allocation17 + $0xcc] sm:$0xf]
    %v11759 = vld [vmem:[#allocation17 + $0xd0] sm:$0xf]
    %v11760 = vld [vmem:[#allocation17 + $0xd4] sm:$0xf]
    %v11761 = vld [vmem:[#allocation17 + $0xd8] sm:$0xf]
    %v11762 = vld [vmem:[#allocation17 + $0xdc] sm:$0xf]
    %v11763 = vld [vmem:[#allocation17 + $0xe0] sm:$0xf]
    %v11764 = vld [vmem:[#allocation17 + $0xe4] sm:$0xf]
    %v11765 = vld [vmem:[#allocation17 + $0xe8] sm:$0xf]
    %v11766 = vld [vmem:[#allocation17 + $0xec] sm:$0xf]
    %v11767 = vld [vmem:[#allocation17 + $0xf0] sm:$0xf]
    %v11768 = vld [vmem:[#allocation17 + $0xf4] sm:$0xf]
    %v11769 = vld [vmem:[#allocation17 + $0xf8] sm:$0xf]
    %v11770 = vld [vmem:[#allocation17 + $0xfc] sm:$0xf]
    %v11771 = vld [vmem:[#allocation17 + $0x100] sm:$0xf]
    %v11772 = vld [vmem:[#allocation17 + $0x104] sm:$0xf]
    %v11773 = vld [vmem:[#allocation17 + $0x108] sm:$0xf]
    %v11774 = vld [vmem:[#allocation17 + $0x10c] sm:$0xf]
    %v11775 = vld [vmem:[#allocation17 + $0x110] sm:$0xf]
    %v11776 = vld [vmem:[#allocation17 + $0x114] sm:$0xf]
    %v11777 = vld [vmem:[#allocation17 + $0x118] sm:$0xf]
    %v11778 = vld [vmem:[#allocation17 + $0x11c] sm:$0xf]
    %v11779 = vld [vmem:[#allocation17 + $0x120] sm:$0xf]
    %v11780 = vld [vmem:[#allocation17 + $0x124] sm:$0xf]
    %v11781 = vld [vmem:[#allocation17 + $0x128] sm:$0xf]
    %v11782 = vld [vmem:[#allocation17 + $0x12c] sm:$0xf]
    %v11783 = vld [vmem:[#allocation17 + $0x130] sm:$0xf]
    %v11784 = vld [vmem:[#allocation17 + $0x134] sm:$0xf]
    %v11785 = vld [vmem:[#allocation17 + $0x138] sm:$0xf]
    %v11786 = vld [vmem:[#allocation17 + $0x13c] sm:$0xf]
    %v11787 = vld [vmem:[#allocation17 + $0x140] sm:$0xf]
    %v11788 = vld [vmem:[#allocation17 + $0x144] sm:$0xf]
    %v11789 = vld [vmem:[#allocation17 + $0x148] sm:$0xf]
    %v11790 = vld [vmem:[#allocation17 + $0x14c] sm:$0xf]
    %v11791 = vld [vmem:[#allocation17 + $0x150] sm:$0xf]
    %v11792 = vld [vmem:[#allocation17 + $0x154] sm:$0xf]
    %v11793 = vld [vmem:[#allocation17 + $0x158] sm:$0xf]
    %v11794 = vld [vmem:[#allocation17 + $0x15c] sm:$0xf]
    %v11795 = vld [vmem:[#allocation17 + $0x160] sm:$0xf]
    %v11796 = vld [vmem:[#allocation17 + $0x164] sm:$0xf]
    %v11797 = vld [vmem:[#allocation17 + $0x168] sm:$0xf]
    %v11798 = vld [vmem:[#allocation17 + $0x16c] sm:$0xf]
    %v11799 = vld [vmem:[#allocation17 + $0x170] sm:$0xf]
    %v11800 = vld [vmem:[#allocation17 + $0x174] sm:$0xf]
    %v11801 = vld [vmem:[#allocation17 + $0x178] sm:$0xf]
    %v11802 = vld [vmem:[#allocation17 + $0x17c] sm:$0xf]
    %v11803 = vld [vmem:[#allocation17 + $0x180] sm:$0xf]
    %v11804 = vld [vmem:[#allocation17 + $0x184] sm:$0xf]
    %v11805 = vld [vmem:[#allocation17 + $0x188] sm:$0xf]
    %v11806 = vld [vmem:[#allocation17 + $0x18c] sm:$0xf]
    %v11807 = vld [vmem:[#allocation17 + $0x190] sm:$0xf]
    %v11808 = vld [vmem:[#allocation17 + $0x194] sm:$0xf]
    %v11809 = vld [vmem:[#allocation17 + $0x198] sm:$0xf]
    %v11810 = vld [vmem:[#allocation17 + $0x19c] sm:$0xf]
    %v11811 = vld [vmem:[#allocation17 + $0x1a0] sm:$0xf]
    %v11812 = vld [vmem:[#allocation17 + $0x1a4] sm:$0xf]
    %v11813 = vld [vmem:[#allocation17 + $0x1a8] sm:$0xf]
    %v11814 = vld [vmem:[#allocation17 + $0x1ac] sm:$0xf]
    %v11815 = vld [vmem:[#allocation17 + $0x1b0] sm:$0xf]
    %v11816 = vld [vmem:[#allocation17 + $0x1b4] sm:$0xf]
    %v11817 = vld [vmem:[#allocation17 + $0x1b8] sm:$0xf]
    %v11818 = vld [vmem:[#allocation17 + $0x1bc] sm:$0xf]
    %v11819 = vld [vmem:[#allocation17 + $0x1c0] sm:$0xf]
    %v11820 = vld [vmem:[#allocation17 + $0x1c4] sm:$0xf]
    %v11821 = vld [vmem:[#allocation17 + $0x1c8] sm:$0xf]
    %v11822 = vld [vmem:[#allocation17 + $0x1cc] sm:$0xf]
    %v11823 = vld [vmem:[#allocation17 + $0x1d0] sm:$0xf]
    %v11824 = vld [vmem:[#allocation17 + $0x1d4] sm:$0xf]
    %v11825 = vld [vmem:[#allocation17 + $0x1d8] sm:$0xf]
    %v11826 = vld [vmem:[#allocation17 + $0x1dc] sm:$0xf]
    %v11827 = vld [vmem:[#allocation17 + $0x1e0] sm:$0xf]
    %v11828 = vld [vmem:[#allocation17 + $0x1e4] sm:$0xf]
    %v11829 = vld [vmem:[#allocation17 + $0x1e8] sm:$0xf]
    %v11830 = vld [vmem:[#allocation17 + $0x1ec] sm:$0xf]
    %v11831 = vld [vmem:[#allocation17 + $0x1f0] sm:$0xf]
    %v11832 = vld [vmem:[#allocation17 + $0x1f4] sm:$0xf]
    %v11833 = vld [vmem:[#allocation17 + $0x1f8] sm:$0xf]
    %v11834 = vld [vmem:[#allocation17 + $0x1fc] sm:$0xf]
    %v11899 = vunpack.c.l.b16 %v11771
    %v11900 = vunpack.c.l.b16 %v11772
    %v11901 = vunpack.c.l.b16 %v11773
    %v11902 = vunpack.c.l.b16 %v11774
    %v11903 = vunpack.c.l.b16 %v11775
    %v11904 = vunpack.c.l.b16 %v11776
    %v11905 = vunpack.c.l.b16 %v11777
    %v11906 = vunpack.c.l.b16 %v11778
    %v11907 = vunpack.c.l.b16 %v11779
    %v11908 = vunpack.c.l.b16 %v11780
    %v11909 = vunpack.c.l.b16 %v11781
    %v11910 = vunpack.c.l.b16 %v11782
    %v11911 = vunpack.c.l.b16 %v11783
    %v11912 = vunpack.c.l.b16 %v11784
    %v11913 = vunpack.c.l.b16 %v11785
    %v11914 = vunpack.c.l.b16 %v11786
    %v11915 = vunpack.c.l.b16 %v11787
    %v11916 = vunpack.c.l.b16 %v11788
    %v11917 = vunpack.c.l.b16 %v11789
    %v11918 = vunpack.c.l.b16 %v11790
    %v11919 = vunpack.c.l.b16 %v11791
    %v11920 = vunpack.c.l.b16 %v11792
    %v11921 = vunpack.c.l.b16 %v11793
    %v11922 = vunpack.c.l.b16 %v11794
    %v11923 = vunpack.c.l.b16 %v11795
    %v11924 = vunpack.c.l.b16 %v11796
    %v11925 = vunpack.c.l.b16 %v11797
    %v11926 = vunpack.c.l.b16 %v11798
    %v11927 = vunpack.c.l.b16 %v11799
    %v11928 = vunpack.c.l.b16 %v11800
    %v11929 = vunpack.c.l.b16 %v11801
    %v11930 = vunpack.c.l.b16 %v11802
    %v11931 = vunpack.c.l.b16 %v11803
    %v11932 = vunpack.c.l.b16 %v11804
    %v11933 = vunpack.c.l.b16 %v11805
    %v11934 = vunpack.c.l.b16 %v11806
    %v11935 = vunpack.c.l.b16 %v11807
    %v11936 = vunpack.c.l.b16 %v11808
    %v11937 = vunpack.c.l.b16 %v11809
    %v11938 = vunpack.c.l.b16 %v11810
    %v11939 = vunpack.c.l.b16 %v11811
    %v11940 = vunpack.c.l.b16 %v11812
    %v11941 = vunpack.c.l.b16 %v11813
    %v11942 = vunpack.c.l.b16 %v11814
    %v11943 = vunpack.c.l.b16 %v11815
    %v11944 = vunpack.c.l.b16 %v11816
    %v11945 = vunpack.c.l.b16 %v11817
    %v11946 = vunpack.c.l.b16 %v11818
    %v11947 = vunpack.c.l.b16 %v11819
    %v11948 = vunpack.c.l.b16 %v11820
    %v11949 = vunpack.c.l.b16 %v11821
    %v11950 = vunpack.c.l.b16 %v11822
    %v11951 = vunpack.c.l.b16 %v11823
    %v11952 = vunpack.c.l.b16 %v11824
    %v11953 = vunpack.c.l.b16 %v11825
    %v11954 = vunpack.c.l.b16 %v11826
    %v11955 = vunpack.c.l.b16 %v11827
    %v11956 = vunpack.c.l.b16 %v11828
    %v11957 = vunpack.c.l.b16 %v11829
    %v11958 = vunpack.c.l.b16 %v11830
    %v11959 = vunpack.c.l.b16 %v11831
    %v11960 = vunpack.c.l.b16 %v11832
    %v11961 = vunpack.c.l.b16 %v11833
    %v11962 = vunpack.c.l.b16 %v11834
    %v11963 = vpack.c.b16 %v11900, %v11899
    %v11964 = vpack.c.b16 %v11902, %v11901
    %v11965 = vpack.c.b16 %v11904, %v11903
    %v11966 = vpack.c.b16 %v11906, %v11905
    %v11967 = vpack.c.b16 %v11908, %v11907
    %v11968 = vpack.c.b16 %v11910, %v11909
    %v11969 = vpack.c.b16 %v11912, %v11911
    %v11970 = vpack.c.b16 %v11914, %v11913
    %v11971 = vpack.c.b16 %v11916, %v11915
    %v11972 = vpack.c.b16 %v11918, %v11917
    %v11973 = vpack.c.b16 %v11920, %v11919
    %v11974 = vpack.c.b16 %v11922, %v11921
    %v11975 = vpack.c.b16 %v11924, %v11923
    %v11976 = vpack.c.b16 %v11926, %v11925
    %v11977 = vpack.c.b16 %v11928, %v11927
    %v11978 = vpack.c.b16 %v11930, %v11929
    %v11979 = vpack.c.b16 %v11932, %v11931
    %v11980 = vpack.c.b16 %v11934, %v11933
    %v11981 = vpack.c.b16 %v11936, %v11935
    %v11982 = vpack.c.b16 %v11938, %v11937
    %v11983 = vpack.c.b16 %v11940, %v11939
    %v11984 = vpack.c.b16 %v11942, %v11941
    %v11985 = vpack.c.b16 %v11944, %v11943
    %v11986 = vpack.c.b16 %v11946, %v11945
    %v11987 = vpack.c.b16 %v11948, %v11947
    %v11988 = vpack.c.b16 %v11950, %v11949
    %v11989 = vpack.c.b16 %v11952, %v11951
    %v11990 = vpack.c.b16 %v11954, %v11953
    %v11991 = vpack.c.b16 %v11956, %v11955
    %v11992 = vpack.c.b16 %v11958, %v11957
    %v11993 = vpack.c.b16 %v11960, %v11959
    %v11994 = vpack.c.b16 %v11962, %v11961
    %12027 = vmatprep.subr.bf16.mxu0 0
    %12028 = vmatpush1.bf16.msra.mxu0 %v11963
    %12029 = vmatprep.subr.bf16.mxu0 0
    %12030 = vmatpush1.bf16.msra.mxu0 %v11964
    %12031 = vmatprep.subr.bf16.mxu0 0
    %12032 = vmatpush1.bf16.msra.mxu0 %v11965
    %12033 = vmatprep.subr.bf16.mxu0 0
    %12034 = vmatpush1.bf16.msra.mxu0 %v11966
    %12035 = vmatprep.subr.bf16.mxu0 0
    %12036 = vmatpush1.bf16.msra.mxu0 %v11967
    %12037 = vmatprep.subr.bf16.mxu0 0
    %12038 = vmatpush1.bf16.msra.mxu0 %v11968
    %12039 = vmatprep.subr.bf16.mxu0 0
    %12040 = vmatpush1.bf16.msra.mxu0 %v11969
    %12041 = vmatprep.subr.bf16.mxu0 0
    %12042 = vmatpush1.bf16.msra.mxu0 %v11970
    %12043 = vmatprep.subr.bf16.mxu0 0
    %12044 = vmatpush1.bf16.msra.mxu0 %v11971
    %12045 = vmatprep.subr.bf16.mxu0 0
    %12046 = vmatpush1.bf16.msra.mxu0 %v11972
    %12047 = vmatprep.subr.bf16.mxu0 0
    %12048 = vmatpush1.bf16.msra.mxu0 %v11973
    %12049 = vmatprep.subr.bf16.mxu0 0
    %12050 = vmatpush1.bf16.msra.mxu0 %v11974
    %12051 = vmatprep.subr.bf16.mxu0 0
    %12052 = vmatpush1.bf16.msra.mxu0 %v11975
    %12053 = vmatprep.subr.bf16.mxu0 0
    %12054 = vmatpush1.bf16.msra.mxu0 %v11976
    %12055 = vmatprep.subr.bf16.mxu0 0
    %12056 = vmatpush1.bf16.msra.mxu0 %v11977
    %12057 = vmatprep.subr.bf16.mxu0 0
    %12058 = vmatpush1.bf16.msra.mxu0 %v11978
    %12059 = vmatprep.mubr.bf16.mxu0 %v7862
    %12060 = vmatmul.mubr.bf16.gmra.mrb[0].mxu0 %v7861
    %v12061 = vpop.f32.mrb[0].mxu0
    %v12062 = vadd.f32 0.0, %v12061
    %v12063 = vpop.f32.mrb[0].mxu0
    %v12064 = vpop.f32.mrb[0].mxu0
    %v12065 = vadd.f32 0.0, %v12064
    %v12066 = vpop.f32.mrb[0].mxu0
    %12067 = vdwg.mxu0
    %12068 = vmatprep.subr.bf16.mxu0 0
    %12069 = vmatpush1.bf16.msra.mxu0 %v11979
    %12070 = vmatprep.subr.bf16.mxu0 0
    %12071 = vmatpush1.bf16.msra.mxu0 %v11980
    %12072 = vmatprep.subr.bf16.mxu0 0
    %12073 = vmatpush1.bf16.msra.mxu0 %v11981
    %12074 = vmatprep.subr.bf16.mxu0 0
    %12075 = vmatpush1.bf16.msra.mxu0 %v11982
    %12076 = vmatprep.subr.bf16.mxu0 0
    %12077 = vmatpush1.bf16.msra.mxu0 %v11983
    %12078 = vmatprep.subr.bf16.mxu0 0
    %12079 = vmatpush1.bf16.msra.mxu0 %v11984
    %12080 = vmatprep.subr.bf16.mxu0 0
    %12081 = vmatpush1.bf16.msra.mxu0 %v11985
    %12082 = vmatprep.subr.bf16.mxu0 0
    %12083 = vmatpush1.bf16.msra.mxu0 %v11986
    %12084 = vmatprep.subr.bf16.mxu0 0
    %12085 = vmatpush1.bf16.msra.mxu0 %v11987
    %12086 = vmatprep.subr.bf16.mxu0 0
    %12087 = vmatpush1.bf16.msra.mxu0 %v11988
    %12088 = vmatprep.subr.bf16.mxu0 0
    %12089 = vmatpush1.bf16.msra.mxu0 %v11989
    %12090 = vmatprep.subr.bf16.mxu0 0
    %12091 = vmatpush1.bf16.msra.mxu0 %v11990
    %12092 = vmatprep.subr.bf16.mxu0 0
    %12093 = vmatpush1.bf16.msra.mxu0 %v11991
    %12094 = vmatprep.subr.bf16.mxu0 0
    %12095 = vmatpush1.bf16.msra.mxu0 %v11992
    %12096 = vmatprep.subr.bf16.mxu0 0
    %12097 = vmatpush1.bf16.msra.mxu0 %v11993
    %12098 = vmatprep.subr.bf16.mxu0 0
    %12099 = vmatpush1.bf16.msra.mxu0 %v11994
    %12100 = vmatprep.mubr.bf16.mxu0 %v7864
    %12101 = vmatmul.mubr.bf16.gmra.mrb[0].mxu0 %v7863
    %v12102 = vpop.f32.mrb[0].mxu0
    %v12103 = vadd.f32 %v12062, %v12102
    %v12104 = vpop.f32.mrb[0].mxu0
    %v12105 = vpop.f32.mrb[0].mxu0
    %v12106 = vadd.f32 %v12065, %v12105
    %v12107 = vpop.f32.mrb[0].mxu0
    %12108 = vdwg.mxu0
    %v12173 = vunpack.c.l.b16 %v11707
    %v12174 = vunpack.c.l.b16 %v11708
    %v12175 = vunpack.c.l.b16 %v11709
    %v12176 = vunpack.c.l.b16 %v11710
    %v12177 = vunpack.c.l.b16 %v11711
    %v12178 = vunpack.c.l.b16 %v11712
    %v12179 = vunpack.c.l.b16 %v11713
    %v12180 = vunpack.c.l.b16 %v11714
    %v12181 = vunpack.c.l.b16 %v11715
    %v12182 = vunpack.c.l.b16 %v11716
    %v12183 = vunpack.c.l.b16 %v11717
    %v12184 = vunpack.c.l.b16 %v11718
    %v12185 = vunpack.c.l.b16 %v11719
    %v12186 = vunpack.c.l.b16 %v11720
    %v12187 = vunpack.c.l.b16 %v11721
    %v12188 = vunpack.c.l.b16 %v11722
    %v12189 = vunpack.c.l.b16 %v11723
    %v12190 = vunpack.c.l.b16 %v11724
    %v12191 = vunpack.c.l.b16 %v11725
    %v12192 = vunpack.c.l.b16 %v11726
    %v12193 = vunpack.c.l.b16 %v11727
    %v12194 = vunpack.c.l.b16 %v11728
    %v12195 = vunpack.c.l.b16 %v11729
    %v12196 = vunpack.c.l.b16 %v11730
    %v12197 = vunpack.c.l.b16 %v11731
    %v12198 = vunpack.c.l.b16 %v11732
    %v12199 = vunpack.c.l.b16 %v11733
    %v12200 = vunpack.c.l.b16 %v11734
    %v12201 = vunpack.c.l.b16 %v11735
    %v12202 = vunpack.c.l.b16 %v11736
    %v12203 = vunpack.c.l.b16 %v11737
    %v12204 = vunpack.c.l.b16 %v11738
    %v12205 = vunpack.c.l.b16 %v11739
    %v12206 = vunpack.c.l.b16 %v11740
    %v12207 = vunpack.c.l.b16 %v11741
    %v12208 = vunpack.c.l.b16 %v11742
    %v12209 = vunpack.c.l.b16 %v11743
    %v12210 = vunpack.c.l.b16 %v11744
    %v12211 = vunpack.c.l.b16 %v11745
    %v12212 = vunpack.c.l.b16 %v11746
    %v12213 = vunpack.c.l.b16 %v11747
    %v12214 = vunpack.c.l.b16 %v11748
    %v12215 = vunpack.c.l.b16 %v11749
    %v12216 = vunpack.c.l.b16 %v11750
    %v12217 = vunpack.c.l.b16 %v11751
    %v12218 = vunpack.c.l.b16 %v11752
    %v12219 = vunpack.c.l.b16 %v11753
    %v12220 = vunpack.c.l.b16 %v11754
    %v12221 = vunpack.c.l.b16 %v11755
    %v12222 = vunpack.c.l.b16 %v11756
    %v12223 = vunpack.c.l.b16 %v11757
    %v12224 = vunpack.c.l.b16 %v11758
    %v12225 = vunpack.c.l.b16 %v11759
    %v12226 = vunpack.c.l.b16 %v11760
    %v12227 = vunpack.c.l.b16 %v11761
    %v12228 = vunpack.c.l.b16 %v11762
    %v12229 = vunpack.c.l.b16 %v11763
    %v12230 = vunpack.c.l.b16 %v11764
    %v12231 = vunpack.c.l.b16 %v11765
    %v12232 = vunpack.c.l.b16 %v11766
    %v12233 = vunpack.c.l.b16 %v11767
    %v12234 = vunpack.c.l.b16 %v11768
    %v12235 = vunpack.c.l.b16 %v11769
    %v12236 = vunpack.c.l.b16 %v11770
    %v12237 = vpack.c.b16 %v12174, %v12173
    %v12238 = vpack.c.b16 %v12176, %v12175
    %v12239 = vpack.c.b16 %v12178, %v12177
    %v12240 = vpack.c.b16 %v12180, %v12179
    %v12241 = vpack.c.b16 %v12182, %v12181
    %v12242 = vpack.c.b16 %v12184, %v12183
    %v12243 = vpack.c.b16 %v12186, %v12185
    %v12244 = vpack.c.b16 %v12188, %v12187
    %v12245 = vpack.c.b16 %v12190, %v12189
    %v12246 = vpack.c.b16 %v12192, %v12191
    %v12247 = vpack.c.b16 %v12194, %v12193
    %v12248 = vpack.c.b16 %v12196, %v12195
    %v12249 = vpack.c.b16 %v12198, %v12197
    %v12250 = vpack.c.b16 %v12200, %v12199
    %v12251 = vpack.c.b16 %v12202, %v12201
    %v12252 = vpack.c.b16 %v12204, %v12203
    %v12253 = vpack.c.b16 %v12206, %v12205
    %v12254 = vpack.c.b16 %v12208, %v12207
    %v12255 = vpack.c.b16 %v12210, %v12209
    %v12256 = vpack.c.b16 %v12212, %v12211
    %v12257 = vpack.c.b16 %v12214, %v12213
    %v12258 = vpack.c.b16 %v12216, %v12215
    %v12259 = vpack.c.b16 %v12218, %v12217
    %v12260 = vpack.c.b16 %v12220, %v12219
    %v12261 = vpack.c.b16 %v12222, %v12221
    %v12262 = vpack.c.b16 %v12224, %v12223
    %v12263 = vpack.c.b16 %v12226, %v12225
    %v12264 = vpack.c.b16 %v12228, %v12227
    %v12265 = vpack.c.b16 %v12230, %v12229
    %v12266 = vpack.c.b16 %v12232, %v12231
    %v12267 = vpack.c.b16 %v12234, %v12233
    %v12268 = vpack.c.b16 %v12236, %v12235
    %12301 = vmatprep.subr.bf16.mxu0 0
    %12302 = vmatpush1.bf16.msra.mxu0 %v12237
    %12303 = vmatprep.subr.bf16.mxu0 0
    %12304 = vmatpush1.bf16.msra.mxu0 %v12238
    %12305 = vmatprep.subr.bf16.mxu0 0
    %12306 = vmatpush1.bf16.msra.mxu0 %v12239
    %12307 = vmatprep.subr.bf16.mxu0 0
    %12308 = vmatpush1.bf16.msra.mxu0 %v12240
    %12309 = vmatprep.subr.bf16.mxu0 0
    %12310 = vmatpush1.bf16.msra.mxu0 %v12241
    %12311 = vmatprep.subr.bf16.mxu0 0
    %12312 = vmatpush1.bf16.msra.mxu0 %v12242
    %12313 = vmatprep.subr.bf16.mxu0 0
    %12314 = vmatpush1.bf16.msra.mxu0 %v12243
    %12315 = vmatprep.subr.bf16.mxu0 0
    %12316 = vmatpush1.bf16.msra.mxu0 %v12244
    %12317 = vmatprep.subr.bf16.mxu0 0
    %12318 = vmatpush1.bf16.msra.mxu0 %v12245
    %12319 = vmatprep.subr.bf16.mxu0 0
    %12320 = vmatpush1.bf16.msra.mxu0 %v12246
    %12321 = vmatprep.subr.bf16.mxu0 0
    %12322 = vmatpush1.bf16.msra.mxu0 %v12247
    %12323 = vmatprep.subr.bf16.mxu0 0
    %12324 = vmatpush1.bf16.msra.mxu0 %v12248
    %12325 = vmatprep.subr.bf16.mxu0 0
    %12326 = vmatpush1.bf16.msra.mxu0 %v12249
    %12327 = vmatprep.subr.bf16.mxu0 0
    %12328 = vmatpush1.bf16.msra.mxu0 %v12250
    %12329 = vmatprep.subr.bf16.mxu0 0
    %12330 = vmatpush1.bf16.msra.mxu0 %v12251
    %12331 = vmatprep.subr.bf16.mxu0 0
    %12332 = vmatpush1.bf16.msra.mxu0 %v12252
    %12333 = vmatprep.mubr.bf16.mxu0 %v4020
    %12334 = vmatmul.mubr.bf16.gmra.mrb[0].mxu0 %v4019
    %v12335 = vpop.f32.mrb[0].mxu0
    %v12336 = vadd.f32 %v12103, %v12335
    %v12337 = vpop.f32.mrb[0].mxu0
    %v12338 = vpop.f32.mrb[0].mxu0
    %v12339 = vadd.f32 %v12106, %v12338
    %v12340 = vpop.f32.mrb[0].mxu0
    %12341 = vdwg.mxu0
    %12342 = vmatprep.subr.bf16.mxu0 0
    %12343 = vmatpush1.bf16.msra.mxu0 %v12253
    %12344 = vmatprep.subr.bf16.mxu0 0
    %12345 = vmatpush1.bf16.msra.mxu0 %v12254
    %12346 = vmatprep.subr.bf16.mxu0 0
    %12347 = vmatpush1.bf16.msra.mxu0 %v12255
    %12348 = vmatprep.subr.bf16.mxu0 0
    %12349 = vmatpush1.bf16.msra.mxu0 %v12256
    %12350 = vmatprep.subr.bf16.mxu0 0
    %12351 = vmatpush1.bf16.msra.mxu0 %v12257
    %12352 = vmatprep.subr.bf16.mxu0 0
    %12353 = vmatpush1.bf16.msra.mxu0 %v12258
    %12354 = vmatprep.subr.bf16.mxu0 0
    %12355 = vmatpush1.bf16.msra.mxu0 %v12259
    %12356 = vmatprep.subr.bf16.mxu0 0
    %12357 = vmatpush1.bf16.msra.mxu0 %v12260
    %12358 = vmatprep.subr.bf16.mxu0 0
    %12359 = vmatpush1.bf16.msra.mxu0 %v12261
    %12360 = vmatprep.subr.bf16.mxu0 0
    %12361 = vmatpush1.bf16.msra.mxu0 %v12262
    %12362 = vmatprep.subr.bf16.mxu0 0
    %12363 = vmatpush1.bf16.msra.mxu0 %v12263
    %12364 = vmatprep.subr.bf16.mxu0 0
    %12365 = vmatpush1.bf16.msra.mxu0 %v12264
    %12366 = vmatprep.subr.bf16.mxu0 0
    %12367 = vmatpush1.bf16.msra.mxu0 %v12265
    %12368 = vmatprep.subr.bf16.mxu0 0
    %12369 = vmatpush1.bf16.msra.mxu0 %v12266
    %12370 = vmatprep.subr.bf16.mxu0 0
    %12371 = vmatpush1.bf16.msra.mxu0 %v12267
    %12372 = vmatprep.subr.bf16.mxu0 0
    %12373 = vmatpush1.bf16.msra.mxu0 %v12268
    %12374 = vmatprep.mubr.bf16.mxu0 %v4022
    %12375 = vmatmul.mubr.bf16.gmra.mrb[0].mxu0 %v4021
    %v12376 = vpop.f32.mrb[0].mxu0
    %v12377 = vadd.f32 %v12336, %v12376
    %v12378 = vpop.f32.mrb[0].mxu0
    %v12379 = vpop.f32.mrb[0].mxu0
    %v12380 = vadd.f32 %v12339, %v12379
    %v12381 = vpop.f32.mrb[0].mxu0
    %12382 = vdwg.mxu0
    %v12383 = vld [vmem:[#allocation17 + $0x200] sm:$0xf]
    %v12384 = vld [vmem:[#allocation17 + $0x204] sm:$0xf]
    %v12385 = vld [vmem:[#allocation17 + $0x208] sm:$0xf]
    %v12386 = vld [vmem:[#allocation17 + $0x20c] sm:$0xf]
    %v12387 = vld [vmem:[#allocation17 + $0x210] sm:$0xf]
    %v12388 = vld [vmem:[#allocation17 + $0x214] sm:$0xf]
    %v12389 = vld [vmem:[#allocation17 + $0x218] sm:$0xf]
    %v12390 = vld [vmem:[#allocation17 + $0x21c] sm:$0xf]
    %v12391 = vld [vmem:[#allocation17 + $0x220] sm:$0xf]
    %v12392 = vld [vmem:[#allocation17 + $0x224] sm:$0xf]
    %v12393 = vld [vmem:[#allocation17 + $0x228] sm:$0xf]
    %v12394 = vld [vmem:[#allocation17 + $0x22c] sm:$0xf]
    %v12395 = vld [vmem:[#allocation17 + $0x230] sm:$0xf]
    %v12396 = vld [vmem:[#allocation17 + $0x234] sm:$0xf]
    %v12397 = vld [vmem:[#allocation17 + $0x238] sm:$0xf]
    %v12398 = vld [vmem:[#allocation17 + $0x23c] sm:$0xf]
    %v12399 = vld [vmem:[#allocation17 + $0x240] sm:$0xf]
    %v12400 = vld [vmem:[#allocation17 + $0x244] sm:$0xf]
    %v12401 = vld [vmem:[#allocation17 + $0x248] sm:$0xf]
    %v12402 = vld [vmem:[#allocation17 + $0x24c] sm:$0xf]
    %v12403 = vld [vmem:[#allocation17 + $0x250] sm:$0xf]
    %v12404 = vld [vmem:[#allocation17 + $0x254] sm:$0xf]
    %v12405 = vld [vmem:[#allocation17 + $0x258] sm:$0xf]
    %v12406 = vld [vmem:[#allocation17 + $0x25c] sm:$0xf]
    %v12407 = vld [vmem:[#allocation17 + $0x260] sm:$0xf]
    %v12408 = vld [vmem:[#allocation17 + $0x264] sm:$0xf]
    %v12409 = vld [vmem:[#allocation17 + $0x268] sm:$0xf]
    %v12410 = vld [vmem:[#allocation17 + $0x26c] sm:$0xf]
    %v12411 = vld [vmem:[#allocation17 + $0x270] sm:$0xf]
    %v12412 = vld [vmem:[#allocation17 + $0x274] sm:$0xf]
    %v12413 = vld [vmem:[#allocation17 + $0x278] sm:$0xf]
    %v12414 = vld [vmem:[#allocation17 + $0x27c] sm:$0xf]
    %v12415 = vld [vmem:[#allocation17 + $0x280] sm:$0xf]
    %v12416 = vld [vmem:[#allocation17 + $0x284] sm:$0xf]
    %v12417 = vld [vmem:[#allocation17 + $0x288] sm:$0xf]
    %v12418 = vld [vmem:[#allocation17 + $0x28c] sm:$0xf]
    %v12419 = vld [vmem:[#allocation17 + $0x290] sm:$0xf]
    %v12420 = vld [vmem:[#allocation17 + $0x294] sm:$0xf]
    %v12421 = vld [vmem:[#allocation17 + $0x298] sm:$0xf]
    %v12422 = vld [vmem:[#allocation17 + $0x29c] sm:$0xf]
    %v12423 = vld [vmem:[#allocation17 + $0x2a0] sm:$0xf]
    %v12424 = vld [vmem:[#allocation17 + $0x2a4] sm:$0xf]
    %v12425 = vld [vmem:[#allocation17 + $0x2a8] sm:$0xf]
    %v12426 = vld [vmem:[#allocation17 + $0x2ac] sm:$0xf]
    %v12427 = vld [vmem:[#allocation17 + $0x2b0] sm:$0xf]
    %v12428 = vld [vmem:[#allocation17 + $0x2b4] sm:$0xf]
    %v12429 = vld [vmem:[#allocation17 + $0x2b8] sm:$0xf]
    %v12430 = vld [vmem:[#allocation17 + $0x2bc] sm:$0xf]
    %v12431 = vld [vmem:[#allocation17 + $0x2c0] sm:$0xf]
    %v12432 = vld [vmem:[#allocation17 + $0x2c4] sm:$0xf]
    %v12433 = vld [vmem:[#allocation17 + $0x2c8] sm:$0xf]
    %v12434 = vld [vmem:[#allocation17 + $0x2cc] sm:$0xf]
    %v12435 = vld [vmem:[#allocation17 + $0x2d0] sm:$0xf]
    %v12436 = vld [vmem:[#allocation17 + $0x2d4] sm:$0xf]
    %v12437 = vld [vmem:[#allocation17 + $0x2d8] sm:$0xf]
    %v12438 = vld [vmem:[#allocation17 + $0x2dc] sm:$0xf]
    %v12439 = vld [vmem:[#allocation17 + $0x2e0] sm:$0xf]
    %v12440 = vld [vmem:[#allocation17 + $0x2e4] sm:$0xf]
    %v12441 = vld [vmem:[#allocation17 + $0x2e8] sm:$0xf]
    %v12442 = vld [vmem:[#allocation17 + $0x2ec] sm:$0xf]
    %v12443 = vld [vmem:[#allocation17 + $0x2f0] sm:$0xf]
    %v12444 = vld [vmem:[#allocation17 + $0x2f4] sm:$0xf]
    %v12445 = vld [vmem:[#allocation17 + $0x2f8] sm:$0xf]
    %v12446 = vld [vmem:[#allocation17 + $0x2fc] sm:$0xf]
    %v12511 = vunpack.c.l.b16 %v12383
    %v12512 = vunpack.c.l.b16 %v12384
    %v12513 = vunpack.c.l.b16 %v12385
    %v12514 = vunpack.c.l.b16 %v12386
    %v12515 = vunpack.c.l.b16 %v12387
    %v12516 = vunpack.c.l.b16 %v12388
    %v12517 = vunpack.c.l.b16 %v12389
    %v12518 = vunpack.c.l.b16 %v12390
    %v12519 = vunpack.c.l.b16 %v12391
    %v12520 = vunpack.c.l.b16 %v12392
    %v12521 = vunpack.c.l.b16 %v12393
    %v12522 = vunpack.c.l.b16 %v12394
    %v12523 = vunpack.c.l.b16 %v12395
    %v12524 = vunpack.c.l.b16 %v12396
    %v12525 = vunpack.c.l.b16 %v12397
    %v12526 = vunpack.c.l.b16 %v12398
    %v12527 = vunpack.c.l.b16 %v12399
    %v12528 = vunpack.c.l.b16 %v12400
    %v12529 = vunpack.c.l.b16 %v12401
    %v12530 = vunpack.c.l.b16 %v12402
    %v12531 = vunpack.c.l.b16 %v12403
    %v12532 = vunpack.c.l.b16 %v12404
    %v12533 = vunpack.c.l.b16 %v12405
    %v12534 = vunpack.c.l.b16 %v12406
    %v12535 = vunpack.c.l.b16 %v12407
    %v12536 = vunpack.c.l.b16 %v12408
    %v12537 = vunpack.c.l.b16 %v12409
    %v12538 = vunpack.c.l.b16 %v12410
    %v12539 = vunpack.c.l.b16 %v12411
    %v12540 = vunpack.c.l.b16 %v12412
    %v12541 = vunpack.c.l.b16 %v12413
    %v12542 = vunpack.c.l.b16 %v12414
    %v12543 = vunpack.c.l.b16 %v12415
    %v12544 = vunpack.c.l.b16 %v12416
    %v12545 = vunpack.c.l.b16 %v12417
    %v12546 = vunpack.c.l.b16 %v12418
    %v12547 = vunpack.c.l.b16 %v12419
    %v12548 = vunpack.c.l.b16 %v12420
    %v12549 = vunpack.c.l.b16 %v12421
    %v12550 = vunpack.c.l.b16 %v12422
    %v12551 = vunpack.c.l.b16 %v12423
    %v12552 = vunpack.c.l.b16 %v12424
    %v12553 = vunpack.c.l.b16 %v12425
    %v12554 = vunpack.c.l.b16 %v12426
    %v12555 = vunpack.c.l.b16 %v12427
    %v12556 = vunpack.c.l.b16 %v12428
    %v12557 = vunpack.c.l.b16 %v12429
    %v12558 = vunpack.c.l.b16 %v12430
    %v12559 = vunpack.c.l.b16 %v12431
    %v12560 = vunpack.c.l.b16 %v12432
    %v12561 = vunpack.c.l.b16 %v12433
    %v12562 = vunpack.c.l.b16 %v12434
    %v12563 = vunpack.c.l.b16 %v12435
    %v12564 = vunpack.c.l.b16 %v12436
    %v12565 = vunpack.c.l.b16 %v12437
    %v12566 = vunpack.c.l.b16 %v12438
    %v12567 = vunpack.c.l.b16 %v12439
    %v12568 = vunpack.c.l.b16 %v12440
    %v12569 = vunpack.c.l.b16 %v12441
    %v12570 = vunpack.c.l.b16 %v12442
    %v12571 = vunpack.c.l.b16 %v12443
    %v12572 = vunpack.c.l.b16 %v12444
    %v12573 = vunpack.c.l.b16 %v12445
    %v12574 = vunpack.c.l.b16 %v12446
    %v12575 = vpack.c.b16 %v12512, %v12511
    %v12576 = vpack.c.b16 %v12514, %v12513
    %v12577 = vpack.c.b16 %v12516, %v12515
    %v12578 = vpack.c.b16 %v12518, %v12517
    %v12579 = vpack.c.b16 %v12520, %v12519
    %v12580 = vpack.c.b16 %v12522, %v12521
    %v12581 = vpack.c.b16 %v12524, %v12523
    %v12582 = vpack.c.b16 %v12526, %v12525
    %v12583 = vpack.c.b16 %v12528, %v12527
    %v12584 = vpack.c.b16 %v12530, %v12529
    %v12585 = vpack.c.b16 %v12532, %v12531
    %v12586 = vpack.c.b16 %v12534, %v12533
    %v12587 = vpack.c.b16 %v12536, %v12535
    %v12588 = vpack.c.b16 %v12538, %v12537
    %v12589 = vpack.c.b16 %v12540, %v12539
    %v12590 = vpack.c.b16 %v12542, %v12541
    %v12591 = vpack.c.b16 %v12544, %v12543
    %v12592 = vpack.c.b16 %v12546, %v12545
    %v12593 = vpack.c.b16 %v12548, %v12547
    %v12594 = vpack.c.b16 %v12550, %v12549
    %v12595 = vpack.c.b16 %v12552, %v12551
    %v12596 = vpack.c.b16 %v12554, %v12553
    %v12597 = vpack.c.b16 %v12556, %v12555
    %v12598 = vpack.c.b16 %v12558, %v12557
    %v12599 = vpack.c.b16 %v12560, %v12559
    %v12600 = vpack.c.b16 %v12562, %v12561
    %v12601 = vpack.c.b16 %v12564, %v12563
    %v12602 = vpack.c.b16 %v12566, %v12565
    %v12603 = vpack.c.b16 %v12568, %v12567
    %v12604 = vpack.c.b16 %v12570, %v12569
    %v12605 = vpack.c.b16 %v12572, %v12571
    %v12606 = vpack.c.b16 %v12574, %v12573
    %12639 = vmatprep.subr.bf16.mxu0 0
    %12640 = vmatpush1.bf16.msra.mxu0 %v12575
    %12641 = vmatprep.subr.bf16.mxu0 0
    %12642 = vmatpush1.bf16.msra.mxu0 %v12576
    %12643 = vmatprep.subr.bf16.mxu0 0
    %12644 = vmatpush1.bf16.msra.mxu0 %v12577
    %12645 = vmatprep.subr.bf16.mxu0 0
    %12646 = vmatpush1.bf16.msra.mxu0 %v12578
    %12647 = vmatprep.subr.bf16.mxu0 0
    %12648 = vmatpush1.bf16.msra.mxu0 %v12579
    %12649 = vmatprep.subr.bf16.mxu0 0
    %12650 = vmatpush1.bf16.msra.mxu0 %v12580
    %12651 = vmatprep.subr.bf16.mxu0 0
    %12652 = vmatpush1.bf16.msra.mxu0 %v12581
    %12653 = vmatprep.subr.bf16.mxu0 0
    %12654 = vmatpush1.bf16.msra.mxu0 %v12582
    %12655 = vmatprep.subr.bf16.mxu0 0
    %12656 = vmatpush1.bf16.msra.mxu0 %v12583
    %12657 = vmatprep.subr.bf16.mxu0 0
    %12658 = vmatpush1.bf16.msra.mxu0 %v12584
    %12659 = vmatprep.subr.bf16.mxu0 0
    %12660 = vmatpush1.bf16.msra.mxu0 %v12585
    %12661 = vmatprep.subr.bf16.mxu0 0
    %12662 = vmatpush1.bf16.msra.mxu0 %v12586
    %12663 = vmatprep.subr.bf16.mxu0 0
    %12664 = vmatpush1.bf16.msra.mxu0 %v12587
    %12665 = vmatprep.subr.bf16.mxu0 0
    %12666 = vmatpush1.bf16.msra.mxu0 %v12588
    %12667 = vmatprep.subr.bf16.mxu0 0
    %12668 = vmatpush1.bf16.msra.mxu0 %v12589
    %12669 = vmatprep.subr.bf16.mxu0 0
    %12670 = vmatpush1.bf16.msra.mxu0 %v12590
    %12671 = vmatprep.mubr.bf16.mxu0 %v11704
    %12672 = vmatmul.mubr.bf16.gmra.mrb[0].mxu0 %v11703
    %v12673 = vpop.f32.mrb[0].mxu0
    %v12674 = vadd.f32 0.0, %v12673
    %v12675 = vpop.f32.mrb[0].mxu0
    %v12676 = vpop.f32.mrb[0].mxu0
    %v12677 = vadd.f32 0.0, %v12676
    %v12678 = vpop.f32.mrb[0].mxu0
    %12679 = vdwg.mxu0
    %12680 = vmatprep.subr.bf16.mxu0 0
    %12681 = vmatpush1.bf16.msra.mxu0 %v12591
    %12682 = vmatprep.subr.bf16.mxu0 0
    %12683 = vmatpush1.bf16.msra.mxu0 %v12592
    %12684 = vmatprep.subr.bf16.mxu0 0
    %12685 = vmatpush1.bf16.msra.mxu0 %v12593
    %12686 = vmatprep.subr.bf16.mxu0 0
    %12687 = vmatpush1.bf16.msra.mxu0 %v12594
    %12688 = vmatprep.subr.bf16.mxu0 0
    %12689 = vmatpush1.bf16.msra.mxu0 %v12595
    %12690 = vmatprep.subr.bf16.mxu0 0
    %12691 = vmatpush1.bf16.msra.mxu0 %v12596
    %12692 = vmatprep.subr.bf16.mxu0 0
    %12693 = vmatpush1.bf16.msra.mxu0 %v12597
    %12694 = vmatprep.subr.bf16.mxu0 0
    %12695 = vmatpush1.bf16.msra.mxu0 %v12598
    %12696 = vmatprep.subr.bf16.mxu0 0
    %12697 = vmatpush1.bf16.msra.mxu0 %v12599
    %12698 = vmatprep.subr.bf16.mxu0 0
    %12699 = vmatpush1.bf16.msra.mxu0 %v12600
    %12700 = vmatprep.subr.bf16.mxu0 0
    %12701 = vmatpush1.bf16.msra.mxu0 %v12601
    %12702 = vmatprep.subr.bf16.mxu0 0
    %12703 = vmatpush1.bf16.msra.mxu0 %v12602
    %12704 = vmatprep.subr.bf16.mxu0 0
    %12705 = vmatpush1.bf16.msra.mxu0 %v12603
    %12706 = vmatprep.subr.bf16.mxu0 0
    %12707 = vmatpush1.bf16.msra.mxu0 %v12604
    %12708 = vmatprep.subr.bf16.mxu0 0
    %12709 = vmatpush1.bf16.msra.mxu0 %v12605
    %12710 = vmatprep.subr.bf16.mxu0 0
    %12711 = vmatpush1.bf16.msra.mxu0 %v12606
    %12712 = vmatprep.mubr.bf16.mxu0 %v11706
    %12713 = vmatmul.mubr.bf16.gmra.mrb[0].mxu0 %v11705
    %v12714 = vpop.f32.mrb[0].mxu0
    %v12715 = vadd.f32 %v12674, %v12714
    %v12716 = vpop.f32.mrb[0].mxu0
    %v12717 = vpop.f32.mrb[0].mxu0
    %v12718 = vadd.f32 %v12677, %v12717
    %v12719 = vpop.f32.mrb[0].mxu0
    %12720 = vdwg.mxu0
    %v12721 = vadd.f32 %v12377, %v12715
    %v12722 = vadd.f32 %v12380, %v12718
    %v12723 = vld [vmem:[#allocation19] sm:$0x1]
    %v12725 = vlaneseq
    %v12726 = vshrl.u32 %v12725, 7
    %v12727 = vsub.s32 0, %v12726
    %v12728 = vrot.slane %v12723, %v12727
    %v12730 = vadd.f32 %v12721, %v12728
    %v12731 = vadd.f32 %v12722, %v12728
    %12732 = vst [vmem:[#allocation20] sm:$0xff] %v12730
    %12733 = vst [vmem:[#allocation20 + $0x8] sm:$0xff] %v12731
    // Predicated region
    $region90: #{tpu_custom_call.1} parent=1 // pred_check
      _
    $region91: #{tpu_custom_call.1} parent=1 // pred_check_branch
      %12735 = sbr.rel (0) target = $region93
    $region92: #{tpu_custom_call.1} parent=1 // pred_region
      %s12737 = ssub.s32 256, 256
      %12738 = vsyncadd [#allocation4], %s12737
      %s12739 = sshll.u32 [#allocation20], 4
      %s12740 = int_to_ptr.vmem [resolvable:$true] %s12739
      %12745 = dma.vmem_to_hbm [thread:$0]  %s12740, 256, %s11, [#allocation4], 128, 128, 8
    $region93: #{tpu_custom_call.1} parent=1 // pred_fallthru
      _
    // Predicated region
    $region94: #{tpu_custom_call.1} parent=1 // pred_check
      _
    $region95: #{tpu_custom_call.1} parent=1 // pred_check_branch
      %12747 = sbr.rel (0) target = $region97
    $region96: #{tpu_custom_call.1} parent=1 // pred_region
      %12748 = dma.done [#allocation4], 256
    $region97: #{tpu_custom_call.1} parent=1 // pred_fallthru
      _
    %12749 = vsyncpa [#allocation3], 1
    %12750 = vsyncpa [#allocation6], 1
    %12751 = vsyncpa [#allocation9], 1
    %12752 = vsyncpa [#allocation12], 1
    %12753 = vsyncpa [#allocation15], 1
    %12754 = vsyncpa [#allocation18], 1
    %12755 = vsyncpa [#allocation4], 1

</llo_original>
